<compile_context>
chip_gen: v7x
topology: tpu7x:2x2x1
jax: 0.10.0
libtpu: 0.0.40
codegen_flags: <defaults>
</compile_context>

<pallas_src>
from functools import partial

import jax
import jax.numpy as jnp
from jax import lax
from jax.experimental import pallas as pl
from jax.experimental.pallas import tpu as pltpu


_VMEM = pl.BlockSpec(memory_space=pltpu.MemorySpace.VMEM)


# --------------------------------------------------------------------------
# Fused kernel
# --------------------------------------------------------------------------

def _make_fused_kernel(n_layers, T, B, H):
    H2, H8 = 2 * H, 8 * H

    def kernel(*refs):
        it = iter(refs)
        x_ref = next(it)                                   # (T, B, In)
        cin_w, cin_b = next(it), next(it)                  # (3*In, H), (1, H)
        layer_params = [tuple(next(it) for _ in range(8)) for _ in range(n_layers)]
        cout_w, cout_b = next(it), next(it)                # (6H, 2H), (1, 2H)
        ln_w, ln_b = next(it), next(it)                    # (1, 2H) each
        hd_w, hd_b = next(it), next(it)                    # (2H, In), (1, In)
        o_ref = next(it)                                   # (B, In) output
        gin_f_ref = next(it)                               # (T, B, 8H) scratch
        gin_b_ref = next(it)                               # (T, B, 8H) scratch
        seq_f_ref = next(it)                               # (T, B, H)  scratch
        seq_b_ref = next(it)                               # (T, B, H)  scratch

        def conv3(x, w_ref, b_ref):
            # Conv1d(kernel=3, padding=1) over time as ONE stacked-tap matmul.
            # x: (T, B, C); w: (3C, Cout); b: (1, Cout).
            C = x.shape[-1]
            zrow = jnp.zeros((1, B, C), jnp.float32)
            xp = jnp.concatenate([zrow, x[:-1]], axis=0)        # x[t-1] (zero pad)
            xn = jnp.concatenate([x[1:], zrow], axis=0)         # x[t+1] (zero pad)
            xs = jnp.concatenate([xp, x, xn], axis=-1).reshape(T * B, 3 * C)
            y = (jnp.dot(xs, w_ref[...], preferred_element_type=jnp.float32)
                 + b_ref[...])
            return y.reshape(T, B, w_ref.shape[-1])

        act = conv3(x_ref[...], cin_w, cin_b)                   # (T, B, H)

        for wihf, wihb, whh, b8, sw1, sb1, sw2, sb2 in layer_params:
            # ---- hoisted input projections (one big matmul per direction) ----
            cin = act.shape[-1]
            xf = act.reshape(T * B, cin)
            gin_f_ref[...] = (jnp.dot(xf, wihf[...],
                                      preferred_element_type=jnp.float32)
                              + b8[...]).reshape(T, B, H8)
            gin_b_ref[...] = jnp.dot(xf, wihb[...],
                                     preferred_element_type=jnp.float32
                                     ).reshape(T, B, H8)
            whh_m = whh[...]                                    # (2H, 8H) block-diag

            # ---- fused fwd+bwd recurrence, fully unrolled ----
            def step(s, carry):
                h, c = carry                                    # (B, 2H) = [fwd|bwd]
                g = (gin_f_ref[s] + gin_b_ref[T - 1 - s]
                     + jnp.dot(h, whh_m, preferred_element_type=jnp.float32))
                i_g = jax.nn.sigmoid(g[:, 0 * H2:1 * H2])
                f_g = jax.nn.sigmoid(g[:, 1 * H2:2 * H2])
                g_g = jnp.tanh(g[:, 2 * H2:3 * H2])
                o_g = jax.nn.sigmoid(g[:, 3 * H2:4 * H2])
                c_n = f_g * c + i_g * g_g
                h_n = o_g * jnp.tanh(c_n)
                seq_f_ref[s] = h_n[:, :H]                       # fwd out at time s
                seq_b_ref[T - 1 - s] = h_n[:, H:]               # bwd out at time T-1-s
                return h_n, c_n

            zero_hc = jnp.zeros((B, H2), jnp.float32)
            lax.fori_loop(0, T, step, (zero_hc, zero_hc), unroll=True)

            seq = jnp.concatenate([seq_f_ref[...], seq_b_ref[...]], axis=-1)  # (T,B,2H)

            # ---- SE layer (squeeze over time, excite over channels) ----
            y = jnp.mean(seq, axis=0)                           # (B, 2H)
            z = jnp.maximum(
                jnp.dot(y, sw1[...], preferred_element_type=jnp.float32)
                + sb1[...], 0.0)
            sc = jax.nn.sigmoid(
                jnp.dot(z, sw2[...], preferred_element_type=jnp.float32)
                + sb2[...])
            act = seq * sc[None, :, :]

        act = conv3(act, cout_w, cout_b)                        # (T, B, 2H)

        # ---- LayerNorm(2H) -> mean over time -> linear head ----
        mu = jnp.mean(act, axis=-1, keepdims=True)
        var = jnp.mean(jnp.square(act - mu), axis=-1, keepdims=True)
        xn = (act - mu) * lax.rsqrt(var + 1e-5) * ln_w[...] + ln_b[...]
        v = jnp.mean(xn, axis=0)                                # (B, 2H)
        o_ref[...] = (jnp.dot(v, hd_w[...], preferred_element_type=jnp.float32)
                      + hd_b[...])

    return kernel


# --------------------------------------------------------------------------
# One-time parameter preprocessing (PyTorch layout -> kernel layout)
# --------------------------------------------------------------------------

def _gate_major_expand(w, half, H):
    # w: (K, 4H) with columns in PyTorch gate order [i, f, g, o] (each H wide).
    # Place gate k into block (2k + half) of the 8H gate-major layout
    # [i_f i_b f_f f_b g_f g_b o_f o_b]; other blocks are zero.
    K = w.shape[0]
    out = jnp.zeros((K, 8 * H), w.dtype)
    for k in range(4):
        blk = 2 * k + half
        out = out.at[:, blk * H:(blk + 1) * H].set(w[:, k * H:(k + 1) * H])
    return out


def _stack_conv(w, b):
    # PyTorch conv1d weight (Cout, Cin, 3) -> stacked (3*Cin, Cout); bias -> (1, Cout)
    wt = jnp.concatenate([w[:, :, 0].T, w[:, :, 1].T, w[:, :, 2].T], axis=0)
    return wt, b.reshape(1, -1)


def preprocess_params(p, hidden):
    """Run once; returns the flat tuple of arrays in kernel input order."""
    H = hidden
    flat = list(_stack_conv(p['conv_in_w'], p['conv_in_b']))
    for lp, sp in zip(p['lstm'], p['se']):
        wih_f = _gate_major_expand(lp['wih_f'].T, 0, H)          # (Cin, 8H)
        wih_b = _gate_major_expand(lp['wih_b'].T, 1, H)          # (Cin, 8H)
        whh = jnp.concatenate(
            [_gate_major_expand(lp['whh_f'].T, 0, H),
             _gate_major_expand(lp['whh_b'].T, 1, H)], axis=0)   # (2H, 8H) block-diag
        b8 = (_gate_major_expand((lp['bih_f'] + lp['bhh_f']).reshape(1, -1), 0, H)
              + _gate_major_expand((lp['bih_b'] + lp['bhh_b']).reshape(1, -1), 1, H))
        flat += [wih_f, wih_b, whh, b8,
                 sp['w1'].T, sp['b1'].reshape(1, -1),
                 sp['w2'].T, sp['b2'].reshape(1, -1)]
    flat += list(_stack_conv(p['conv_out_w'], p['conv_out_b']))
    flat += [p['ln_w'].reshape(1, -1), p['ln_b'].reshape(1, -1),
             p['head_w'].T, p['head_b'].reshape(1, -1)]
    return tuple(flat)


# --------------------------------------------------------------------------
# Forward
# --------------------------------------------------------------------------

@partial(jax.jit, static_argnames=('hidden', 'layers'))
def lstm_separator_forward(x, flat_params, *, hidden, layers):
    # x: (B, T, input_size) — same as the nn.Module input.
    B, T, _ = x.shape
    H = hidden
    x_tbc = jnp.transpose(x, (1, 0, 2)).astype(jnp.float32)     # time-major
    kernel = _make_fused_kernel(layers, T, B, H)
    gain = pl.pallas_call(
        kernel,
        out_shape=jax.ShapeDtypeStruct((B, x.shape[-1]), jnp.float32),
        in_specs=[_VMEM] * (1 + len(flat_params)),
        out_specs=_VMEM,
        scratch_shapes=[
            pltpu.VMEM((T, B, 8 * H), jnp.float32),   # hoisted fwd input gates
            pltpu.VMEM((T, B, 8 * H), jnp.float32),   # hoisted bwd input gates
            pltpu.VMEM((T, B, H), jnp.float32),       # fwd hidden sequence
            pltpu.VMEM((T, B, H), jnp.float32),       # bwd hidden sequence
        ],
    )(x_tbc, *flat_params)
    return {'gain': gain}


# --------------------------------------------------------------------------
# Parameter init (PyTorch-shaped, as in the reference module)
# --------------------------------------------------------------------------

def init_params(key, input_size=2, hidden=32, layers=2, r=16):
    C2 = 2 * hidden

    def nrm(k, shape, scale=0.1):
        return scale * jax.random.normal(k, shape, dtype=jnp.float32)

    keys = iter(jax.random.split(key, 128))
    p = {
        'conv_in_w': nrm(next(keys), (hidden, input_size, 3)),
        'conv_in_b': nrm(next(keys), (hidden,)),
        'lstm': [],
        'se': [],
    }
    for i in range(layers):
        in_dim = hidden if i == 0 else C2
        p['lstm'].append({
            'wih_f': nrm(next(keys), (4 * hidden, in_dim)),
            'whh_f': nrm(next(keys), (4 * hidden, hidden)),
            'bih_f': nrm(next(keys), (4 * hidden,)),
            'bhh_f': nrm(next(keys), (4 * hidden,)),
            'wih_b': nrm(next(keys), (4 * hidden, in_dim)),
            'whh_b': nrm(next(keys), (4 * hidden, hidden)),
            'bih_b': nrm(next(keys), (4 * hidden,)),
            'bhh_b': nrm(next(keys), (4 * hidden,)),
        })
        p['se'].append({
            'w1': nrm(next(keys), (C2 // r, C2)),
            'b1': nrm(next(keys), (C2 // r,)),
            'w2': nrm(next(keys), (C2, C2 // r)),
            'b2': nrm(next(keys), (C2,)),
        })
    p['conv_out_w'] = nrm(next(keys), (C2, C2, 3))
    p['conv_out_b'] = nrm(next(keys), (C2,))
    p['ln_w'] = jnp.ones((C2,), jnp.float32)
    p['ln_b'] = jnp.zeros((C2,), jnp.float32)
    p['head_w'] = nrm(next(keys), (input_size, C2))
    p['head_b'] = nrm(next(keys), (input_size,))
    return p


# --------------------------------------------------------------------------

if __name__ == "__main__":
    INPUT_SIZE, HIDDEN, LAYERS = 2, 32, 2
    B, T = 2, 16

    key = jax.random.PRNGKey(0)
    k_x, k_p = jax.random.split(key)
    x = jax.random.normal(k_x, (B, T, INPUT_SIZE), dtype=jnp.float32)

    params = init_params(k_p, input_size=INPUT_SIZE, hidden=HIDDEN, layers=LAYERS)
    flat_params = preprocess_params(params, HIDDEN)      # one-time packing

    out = lstm_separator_forward(x, flat_params, hidden=HIDDEN, layers=LAYERS)
    gain = jax.block_until_ready(out['gain'])

    assert gain.shape == (B, INPUT_SIZE), gain.shape
    assert bool(jnp.all(jnp.isfinite(gain)))
    print("KERNEL_OK")
</pallas_src>

<mosaic_0001>
module attributes {stable_mosaic.version = 11 : i64} {
  func.func @kernel(%arg0: memref<16x2x2xf32, #tpu.memory_space<vmem>>, %arg1: memref<6x32xf32, #tpu.memory_space<vmem>>, %arg2: memref<1x32xf32, #tpu.memory_space<vmem>>, %arg3: memref<32x256xf32, #tpu.memory_space<vmem>>, %arg4: memref<32x256xf32, #tpu.memory_space<vmem>>, %arg5: memref<64x256xf32, #tpu.memory_space<vmem>>, %arg6: memref<1x256xf32, #tpu.memory_space<vmem>>, %arg7: memref<64x4xf32, #tpu.memory_space<vmem>>, %arg8: memref<1x4xf32, #tpu.memory_space<vmem>>, %arg9: memref<4x64xf32, #tpu.memory_space<vmem>>, %arg10: memref<1x64xf32, #tpu.memory_space<vmem>>, %arg11: memref<64x256xf32, #tpu.memory_space<vmem>>, %arg12: memref<64x256xf32, #tpu.memory_space<vmem>>, %arg13: memref<64x256xf32, #tpu.memory_space<vmem>>, %arg14: memref<1x256xf32, #tpu.memory_space<vmem>>, %arg15: memref<64x4xf32, #tpu.memory_space<vmem>>, %arg16: memref<1x4xf32, #tpu.memory_space<vmem>>, %arg17: memref<4x64xf32, #tpu.memory_space<vmem>>, %arg18: memref<1x64xf32, #tpu.memory_space<vmem>>, %arg19: memref<192x64xf32, #tpu.memory_space<vmem>>, %arg20: memref<1x64xf32, #tpu.memory_space<vmem>>, %arg21: memref<1x64xf32, #tpu.memory_space<vmem>>, %arg22: memref<1x64xf32, #tpu.memory_space<vmem>>, %arg23: memref<64x2xf32, #tpu.memory_space<vmem>>, %arg24: memref<1x2xf32, #tpu.memory_space<vmem>>, %arg25: memref<2x2xf32, #tpu.memory_space<vmem>>, %arg26: memref<16x2x256xf32, #tpu.memory_space<vmem>>, %arg27: memref<16x2x256xf32, #tpu.memory_space<vmem>>, %arg28: memref<16x2x32xf32, #tpu.memory_space<vmem>>, %arg29: memref<16x2x32xf32, #tpu.memory_space<vmem>>) attributes {dimension_semantics = [], scalar_prefetch = 0 : i64, scratch_operands = 4 : i64, tpu.core_type = #tpu.core_type<tc>} {
    %c0 = arith.constant 0 : index
    %c0_0 = arith.constant 0 : index
    %c0_1 = arith.constant 0 : index
    %0 = vector.load %arg0[%c0, %c0_0, %c0_1] : memref<16x2x2xf32, #tpu.memory_space<vmem>>, vector<16x2x2xf32>
    %cst = arith.constant 0.000000e+00 : f32
    %1 = vector.broadcast %cst : f32 to vector<1x2x2xf32>
    %2 = vector.extract_strided_slice %0 {offsets = [0, 0, 0], sizes = [15, 2, 2], strides = [1, 1, 1]} : vector<16x2x2xf32> to vector<15x2x2xf32>
    %3 = tpu.concatenate %1, %2 in 0 : vector<1x2x2xf32>, vector<15x2x2xf32> -> vector<16x2x2xf32>
    %4 = vector.extract_strided_slice %0 {offsets = [1, 0, 0], sizes = [15, 2, 2], strides = [1, 1, 1]} : vector<16x2x2xf32> to vector<15x2x2xf32>
    %5 = tpu.concatenate %4, %1 in 0 : vector<15x2x2xf32>, vector<1x2x2xf32> -> vector<16x2x2xf32>
    %6 = tpu.concatenate %3, %0, %5 in 2 : vector<16x2x2xf32>, vector<16x2x2xf32>, vector<16x2x2xf32> -> vector<16x2x6xf32>
    %7 = vector.shape_cast %6 : vector<16x2x6xf32> to vector<32x6xf32>
    %c0_2 = arith.constant 0 : index
    %c0_3 = arith.constant 0 : index
    %8 = vector.load %arg1[%c0_2, %c0_3] : memref<6x32xf32, #tpu.memory_space<vmem>>, vector<6x32xf32>
    %cst_4 = arith.constant dense<0.000000e+00> : vector<32x32xf32>
    %9 = tpu.matmul %7, %8, %cst_4 {dimension_numbers = #tpu.dot_dimension_numbers<[1], [0], [0], [1], [0, 0, 1, 1], [], []>} : vector<32x6xf32>, vector<6x32xf32>, vector<32x32xf32> -> vector<32x32xf32>
    %c0_5 = arith.constant 0 : index
    %c0_6 = arith.constant 0 : index
    %10 = vector.load %arg2[%c0_5, %c0_6] : memref<1x32xf32, #tpu.memory_space<vmem>>, vector<1x32xf32>
    %11 = vector.broadcast %10 : vector<1x32xf32> to vector<32x32xf32>
    %12 = arith.addf %9, %11 : vector<32x32xf32>
    %13 = vector.shape_cast %12 : vector<32x32xf32> to vector<16x2x32xf32>
    %14 = vector.shape_cast %13 : vector<16x2x32xf32> to vector<32x32xf32>
    %c0_7 = arith.constant 0 : index
    %c0_8 = arith.constant 0 : index
    %15 = vector.load %arg3[%c0_7, %c0_8] : memref<32x256xf32, #tpu.memory_space<vmem>>, vector<32x256xf32>
    %cst_9 = arith.constant dense<0.000000e+00> : vector<32x256xf32>
    %16 = tpu.matmul %14, %15, %cst_9 {dimension_numbers = #tpu.dot_dimension_numbers<[1], [0], [0], [1], [0, 0, 1, 1], [], []>} : vector<32x32xf32>, vector<32x256xf32>, vector<32x256xf32> -> vector<32x256xf32>
    %c0_10 = arith.constant 0 : index
    %c0_11 = arith.constant 0 : index
    %17 = vector.load %arg6[%c0_10, %c0_11] : memref<1x256xf32, #tpu.memory_space<vmem>>, vector<1x256xf32>
    %18 = vector.broadcast %17 : vector<1x256xf32> to vector<32x256xf32>
    %19 = arith.addf %16, %18 : vector<32x256xf32>
    %20 = vector.shape_cast %19 : vector<32x256xf32> to vector<16x2x256xf32>
    %c0_12 = arith.constant 0 : index
    %c0_13 = arith.constant 0 : index
    %c0_14 = arith.constant 0 : index
    %21 = vector.load %arg26[%c0_12, %c0_13, %c0_14] : memref<16x2x256xf32, #tpu.memory_space<vmem>>, vector<16x2x256xf32>
    tpu.vector_store %arg26[%c0_12, %c0_13, %c0_14], %20 {strides = array<i32>} : memref<16x2x256xf32, #tpu.memory_space<vmem>>, vector<16x2x256xf32>,
    %c0_15 = arith.constant 0 : index
    %c0_16 = arith.constant 0 : index
    %22 = vector.load %arg4[%c0_15, %c0_16] : memref<32x256xf32, #tpu.memory_space<vmem>>, vector<32x256xf32>
    %cst_17 = arith.constant dense<0.000000e+00> : vector<32x256xf32>
    %23 = tpu.matmul %14, %22, %cst_17 {dimension_numbers = #tpu.dot_dimension_numbers<[1], [0], [0], [1], [0, 0, 1, 1], [], []>} : vector<32x32xf32>, vector<32x256xf32>, vector<32x256xf32> -> vector<32x256xf32>
    %24 = vector.shape_cast %23 : vector<32x256xf32> to vector<16x2x256xf32>
    %c0_18 = arith.constant 0 : index
    %c0_19 = arith.constant 0 : index
    %c0_20 = arith.constant 0 : index
    %25 = vector.load %arg27[%c0_18, %c0_19, %c0_20] : memref<16x2x256xf32, #tpu.memory_space<vmem>>, vector<16x2x256xf32>
    tpu.vector_store %arg27[%c0_18, %c0_19, %c0_20], %24 {strides = array<i32>} : memref<16x2x256xf32, #tpu.memory_space<vmem>>, vector<16x2x256xf32>,
    %c0_21 = arith.constant 0 : index
    %c0_22 = arith.constant 0 : index
    %26 = vector.load %arg5[%c0_21, %c0_22] : memref<64x256xf32, #tpu.memory_space<vmem>>, vector<64x256xf32>
    %cst_23 = arith.constant 0.000000e+00 : f32
    %27 = vector.broadcast %cst_23 : f32 to vector<2x64xf32>
    %c0_i32 = arith.constant 0 : i32
    %28 = arith.index_cast %c0_i32 : i32 to index
    %c0_24 = arith.constant 0 : index
    %c0_25 = arith.constant 0 : index
    %29 = vector.load %arg26[%28, %c0_24, %c0_25] : memref<16x2x256xf32, #tpu.memory_space<vmem>>, vector<1x2x256xf32>
    %30 = vector.shape_cast %29 : vector<1x2x256xf32> to vector<2x256xf32>
    %c15_i32 = arith.constant 15 : i32
    %31 = arith.subi %c15_i32, %c0_i32 : i32
    %32 = arith.index_cast %31 : i32 to index
    %c0_26 = arith.constant 0 : index
    %c0_27 = arith.constant 0 : index
    %33 = vector.load %arg27[%32, %c0_26, %c0_27] : memref<16x2x256xf32, #tpu.memory_space<vmem>>, vector<1x2x256xf32>
    %34 = vector.shape_cast %33 : vector<1x2x256xf32> to vector<2x256xf32>
    %35 = arith.addf %30, %34 : vector<2x256xf32>
    %cst_28 = arith.constant dense<0.000000e+00> : vector<2x256xf32>
    %36 = tpu.matmul %27, %26, %cst_28 {dimension_numbers = #tpu.dot_dimension_numbers<[1], [0], [0], [1], [0, 0, 1, 1], [], []>} : vector<2x64xf32>, vector<64x256xf32>, vector<2x256xf32> -> vector<2x256xf32>
    %37 = arith.addf %35, %36 : vector<2x256xf32>
    %38 = vector.extract_strided_slice %37 {offsets = [0, 0], sizes = [2, 64], strides = [1, 1]} : vector<2x256xf32> to vector<2x64xf32>
    %39 = arith.negf %38 : vector<2x64xf32>
    %40 = math.exp %39 : vector<2x64xf32>
    %cst_29 = arith.constant 1.000000e+00 : f32
    %41 = vector.broadcast %cst_29 : f32 to vector<2x64xf32>
    %42 = arith.addf %41, %40 : vector<2x64xf32>
    %43 = arith.divf %41, %42 : vector<2x64xf32>
    %44 = vector.extract_strided_slice %37 {offsets = [0, 64], sizes = [2, 64], strides = [1, 1]} : vector<2x256xf32> to vector<2x64xf32>
    %45 = arith.negf %44 : vector<2x64xf32>
    %46 = math.exp %45 : vector<2x64xf32>
    %cst_30 = arith.constant 1.000000e+00 : f32
    %47 = vector.broadcast %cst_30 : f32 to vector<2x64xf32>
    %48 = arith.addf %47, %46 : vector<2x64xf32>
    %49 = arith.divf %47, %48 : vector<2x64xf32>
    %50 = vector.extract_strided_slice %37 {offsets = [0, 128], sizes = [2, 64], strides = [1, 1]} : vector<2x256xf32> to vector<2x64xf32>
    %51 = math.tanh %50 : vector<2x64xf32>
    %52 = vector.extract_strided_slice %37 {offsets = [0, 192], sizes = [2, 64], strides = [1, 1]} : vector<2x256xf32> to vector<2x64xf32>
    %53 = arith.negf %52 : vector<2x64xf32>
    %54 = math.exp %53 : vector<2x64xf32>
    %cst_31 = arith.constant 1.000000e+00 : f32
    %55 = vector.broadcast %cst_31 : f32 to vector<2x64xf32>
    %56 = arith.addf %55, %54 : vector<2x64xf32>
    %57 = arith.divf %55, %56 : vector<2x64xf32>
    %58 = arith.mulf %49, %27 : vector<2x64xf32>
    %59 = arith.mulf %43, %51 : vector<2x64xf32>
    %60 = arith.addf %58, %59 : vector<2x64xf32>
    %61 = math.tanh %60 : vector<2x64xf32>
    %62 = arith.mulf %57, %61 : vector<2x64xf32>
    %63 = vector.extract_strided_slice %62 {offsets = [0, 0], sizes = [2, 32], strides = [1, 1]} : vector<2x64xf32> to vector<2x32xf32>
    %64 = arith.index_cast %c0_i32 : i32 to index
    %c0_32 = arith.constant 0 : index
    %c0_33 = arith.constant 0 : index
    %65 = vector.load %arg28[%64, %c0_32, %c0_33] : memref<16x2x32xf32, #tpu.memory_space<vmem>>, vector<1x2x32xf32>
    %66 = vector.shape_cast %65 : vector<1x2x32xf32> to vector<2x32xf32>
    %67 = vector.shape_cast %63 : vector<2x32xf32> to vector<1x2x32xf32>
    tpu.vector_store %arg28[%64, %c0_32, %c0_33], %67 {strides = array<i32>} : memref<16x2x32xf32, #tpu.memory_space<vmem>>, vector<1x2x32xf32>,
    %68 = vector.extract_strided_slice %62 {offsets = [0, 32], sizes = [2, 32], strides = [1, 1]} : vector<2x64xf32> to vector<2x32xf32>
    %c15_i32_34 = arith.constant 15 : i32
    %69 = arith.subi %c15_i32_34, %c0_i32 : i32
    %70 = arith.index_cast %69 : i32 to index
    %c0_35 = arith.constant 0 : index
    %c0_36 = arith.constant 0 : index
    %71 = vector.load %arg29[%70, %c0_35, %c0_36] : memref<16x2x32xf32, #tpu.memory_space<vmem>>, vector<1x2x32xf32>
    %72 = vector.shape_cast %71 : vector<1x2x32xf32> to vector<2x32xf32>
    %73 = vector.shape_cast %68 : vector<2x32xf32> to vector<1x2x32xf32>
    tpu.vector_store %arg29[%70, %c0_35, %c0_36], %73 {strides = array<i32>} : memref<16x2x32xf32, #tpu.memory_space<vmem>>, vector<1x2x32xf32>,
    %c1_i32 = arith.constant 1 : i32
    %74 = arith.index_cast %c1_i32 : i32 to index
    %c0_37 = arith.constant 0 : index
    %c0_38 = arith.constant 0 : index
    %75 = vector.load %arg26[%74, %c0_37, %c0_38] : memref<16x2x256xf32, #tpu.memory_space<vmem>>, vector<1x2x256xf32>
    %76 = vector.shape_cast %75 : vector<1x2x256xf32> to vector<2x256xf32>
    %c15_i32_39 = arith.constant 15 : i32
    %77 = arith.subi %c15_i32_39, %c1_i32 : i32
    %78 = arith.index_cast %77 : i32 to index
    %c0_40 = arith.constant 0 : index
    %c0_41 = arith.constant 0 : index
    %79 = vector.load %arg27[%78, %c0_40, %c0_41] : memref<16x2x256xf32, #tpu.memory_space<vmem>>, vector<1x2x256xf32>
    %80 = vector.shape_cast %79 : vector<1x2x256xf32> to vector<2x256xf32>
    %81 = arith.addf %76, %80 : vector<2x256xf32>
    %cst_42 = arith.constant dense<0.000000e+00> : vector<2x256xf32>
    %82 = tpu.matmul %62, %26, %cst_42 {dimension_numbers = #tpu.dot_dimension_numbers<[1], [0], [0], [1], [0, 0, 1, 1], [], []>} : vector<2x64xf32>, vector<64x256xf32>, vector<2x256xf32> -> vector<2x256xf32>
    %83 = arith.addf %81, %82 : vector<2x256xf32>
    %84 = vector.extract_strided_slice %83 {offsets = [0, 0], sizes = [2, 64], strides = [1, 1]} : vector<2x256xf32> to vector<2x64xf32>
    %85 = arith.negf %84 : vector<2x64xf32>
    %86 = math.exp %85 : vector<2x64xf32>
    %cst_43 = arith.constant 1.000000e+00 : f32
    %87 = vector.broadcast %cst_43 : f32 to vector<2x64xf32>
    %88 = arith.addf %87, %86 : vector<2x64xf32>
    %89 = arith.divf %87, %88 : vector<2x64xf32>
    %90 = vector.extract_strided_slice %83 {offsets = [0, 64], sizes = [2, 64], strides = [1, 1]} : vector<2x256xf32> to vector<2x64xf32>
    %91 = arith.negf %90 : vector<2x64xf32>
    %92 = math.exp %91 : vector<2x64xf32>
    %cst_44 = arith.constant 1.000000e+00 : f32
    %93 = vector.broadcast %cst_44 : f32 to vector<2x64xf32>
    %94 = arith.addf %93, %92 : vector<2x64xf32>
    %95 = arith.divf %93, %94 : vector<2x64xf32>
    %96 = vector.extract_strided_slice %83 {offsets = [0, 128], sizes = [2, 64], strides = [1, 1]} : vector<2x256xf32> to vector<2x64xf32>
    %97 = math.tanh %96 : vector<2x64xf32>
    %98 = vector.extract_strided_slice %83 {offsets = [0, 192], sizes = [2, 64], strides = [1, 1]} : vector<2x256xf32> to vector<2x64xf32>
    %99 = arith.negf %98 : vector<2x64xf32>
    %100 = math.exp %99 : vector<2x64xf32>
    %cst_45 = arith.constant 1.000000e+00 : f32
    %101 = vector.broadcast %cst_45 : f32 to vector<2x64xf32>
    %102 = arith.addf %101, %100 : vector<2x64xf32>
    %103 = arith.divf %101, %102 : vector<2x64xf32>
    %104 = arith.mulf %95, %60 : vector<2x64xf32>
    %105 = arith.mulf %89, %97 : vector<2x64xf32>
    %106 = arith.addf %104, %105 : vector<2x64xf32>
    %107 = math.tanh %106 : vector<2x64xf32>
    %108 = arith.mulf %103, %107 : vector<2x64xf32>
    %109 = vector.extract_strided_slice %108 {offsets = [0, 0], sizes = [2, 32], strides = [1, 1]} : vector<2x64xf32> to vector<2x32xf32>
    %110 = arith.index_cast %c1_i32 : i32 to index
    %c0_46 = arith.constant 0 : index
    %c0_47 = arith.constant 0 : index
    %111 = vector.load %arg28[%110, %c0_46, %c0_47] : memref<16x2x32xf32, #tpu.memory_space<vmem>>, vector<1x2x32xf32>
    %112 = vector.shape_cast %111 : vector<1x2x32xf32> to vector<2x32xf32>
    %113 = vector.shape_cast %109 : vector<2x32xf32> to vector<1x2x32xf32>
    tpu.vector_store %arg28[%110, %c0_46, %c0_47], %113 {strides = array<i32>} : memref<16x2x32xf32, #tpu.memory_space<vmem>>, vector<1x2x32xf32>,
    %114 = vector.extract_strided_slice %108 {offsets = [0, 32], sizes = [2, 32], strides = [1, 1]} : vector<2x64xf32> to vector<2x32xf32>
    %c15_i32_48 = arith.constant 15 : i32
    %115 = arith.subi %c15_i32_48, %c1_i32 : i32
    %116 = arith.index_cast %115 : i32 to index
    %c0_49 = arith.constant 0 : index
    %c0_50 = arith.constant 0 : index
    %117 = vector.load %arg29[%116, %c0_49, %c0_50] : memref<16x2x32xf32, #tpu.memory_space<vmem>>, vector<1x2x32xf32>
    %118 = vector.shape_cast %117 : vector<1x2x32xf32> to vector<2x32xf32>
    %119 = vector.shape_cast %114 : vector<2x32xf32> to vector<1x2x32xf32>
    tpu.vector_store %arg29[%116, %c0_49, %c0_50], %119 {strides = array<i32>} : memref<16x2x32xf32, #tpu.memory_space<vmem>>, vector<1x2x32xf32>,
    %c2_i32 = arith.constant 2 : i32
    %120 = arith.index_cast %c2_i32 : i32 to index
    %c0_51 = arith.constant 0 : index
    %c0_52 = arith.constant 0 : index
    %121 = vector.load %arg26[%120, %c0_51, %c0_52] : memref<16x2x256xf32, #tpu.memory_space<vmem>>, vector<1x2x256xf32>
    %122 = vector.shape_cast %121 : vector<1x2x256xf32> to vector<2x256xf32>
    %c15_i32_53 = arith.constant 15 : i32
    %123 = arith.subi %c15_i32_53, %c2_i32 : i32
    %124 = arith.index_cast %123 : i32 to index
    %c0_54 = arith.constant 0 : index
    %c0_55 = arith.constant 0 : index
    %125 = vector.load %arg27[%124, %c0_54, %c0_55] : memref<16x2x256xf32, #tpu.memory_space<vmem>>, vector<1x2x256xf32>
    %126 = vector.shape_cast %125 : vector<1x2x256xf32> to vector<2x256xf32>
    %127 = arith.addf %122, %126 : vector<2x256xf32>
    %cst_56 = arith.constant dense<0.000000e+00> : vector<2x256xf32>
    %128 = tpu.matmul %108, %26, %cst_56 {dimension_numbers = #tpu.dot_dimension_numbers<[1], [0], [0], [1], [0, 0, 1, 1], [], []>} : vector<2x64xf32>, vector<64x256xf32>, vector<2x256xf32> -> vector<2x256xf32>
    %129 = arith.addf %127, %128 : vector<2x256xf32>
    %130 = vector.extract_strided_slice %129 {offsets = [0, 0], sizes = [2, 64], strides = [1, 1]} : vector<2x256xf32> to vector<2x64xf32>
    %131 = arith.negf %130 : vector<2x64xf32>
    %132 = math.exp %131 : vector<2x64xf32>
    %cst_57 = arith.constant 1.000000e+00 : f32
    %133 = vector.broadcast %cst_57 : f32 to vector<2x64xf32>
    %134 = arith.addf %133, %132 : vector<2x64xf32>
    %135 = arith.divf %133, %134 : vector<2x64xf32>
    %136 = vector.extract_strided_slice %129 {offsets = [0, 64], sizes = [2, 64], strides = [1, 1]} : vector<2x256xf32> to vector<2x64xf32>
    %137 = arith.negf %136 : vector<2x64xf32>
    %138 = math.exp %137 : vector<2x64xf32>
    %cst_58 = arith.constant 1.000000e+00 : f32
    %139 = vector.broadcast %cst_58 : f32 to vector<2x64xf32>
    %140 = arith.addf %139, %138 : vector<2x64xf32>
    %141 = arith.divf %139, %140 : vector<2x64xf32>
    %142 = vector.extract_strided_slice %129 {offsets = [0, 128], sizes = [2, 64], strides = [1, 1]} : vector<2x256xf32> to vector<2x64xf32>
    %143 = math.tanh %142 : vector<2x64xf32>
    %144 = vector.extract_strided_slice %129 {offsets = [0, 192], sizes = [2, 64], strides = [1, 1]} : vector<2x256xf32> to vector<2x64xf32>
    %145 = arith.negf %144 : vector<2x64xf32>
    %146 = math.exp %145 : vector<2x64xf32>
    %cst_59 = arith.constant 1.000000e+00 : f32
    %147 = vector.broadcast %cst_59 : f32 to vector<2x64xf32>
    %148 = arith.addf %147, %146 : vector<2x64xf32>
    %149 = arith.divf %147, %148 : vector<2x64xf32>
    %150 = arith.mulf %141, %106 : vector<2x64xf32>
    %151 = arith.mulf %135, %143 : vector<2x64xf32>
    %152 = arith.addf %150, %151 : vector<2x64xf32>
    %153 = math.tanh %152 : vector<2x64xf32>
    %154 = arith.mulf %149, %153 : vector<2x64xf32>
    %155 = vector.extract_strided_slice %154 {offsets = [0, 0], sizes = [2, 32], strides = [1, 1]} : vector<2x64xf32> to vector<2x32xf32>
    %156 = arith.index_cast %c2_i32 : i32 to index
    %c0_60 = arith.constant 0 : index
    %c0_61 = arith.constant 0 : index
    %157 = vector.load %arg28[%156, %c0_60, %c0_61] : memref<16x2x32xf32, #tpu.memory_space<vmem>>, vector<1x2x32xf32>
    %158 = vector.shape_cast %157 : vector<1x2x32xf32> to vector<2x32xf32>
    %159 = vector.shape_cast %155 : vector<2x32xf32> to vector<1x2x32xf32>
    tpu.vector_store %arg28[%156, %c0_60, %c0_61], %159 {strides = array<i32>} : memref<16x2x32xf32, #tpu.memory_space<vmem>>, vector<1x2x32xf32>,
    %160 = vector.extract_strided_slice %154 {offsets = [0, 32], sizes = [2, 32], strides = [1, 1]} : vector<2x64xf32> to vector<2x32xf32>
    %c15_i32_62 = arith.constant 15 : i32
    %161 = arith.subi %c15_i32_62, %c2_i32 : i32
    %162 = arith.index_cast %161 : i32 to index
    %c0_63 = arith.constant 0 : index
    %c0_64 = arith.constant 0 : index
    %163 = vector.load %arg29[%162, %c0_63, %c0_64] : memref<16x2x32xf32, #tpu.memory_space<vmem>>, vector<1x2x32xf32>
    %164 = vector.shape_cast %163 : vector<1x2x32xf32> to vector<2x32xf32>
    %165 = vector.shape_cast %160 : vector<2x32xf32> to vector<1x2x32xf32>
    tpu.vector_store %arg29[%162, %c0_63, %c0_64], %165 {strides = array<i32>} : memref<16x2x32xf32, #tpu.memory_space<vmem>>, vector<1x2x32xf32>,
    %c3_i32 = arith.constant 3 : i32
    %166 = arith.index_cast %c3_i32 : i32 to index
    %c0_65 = arith.constant 0 : index
    %c0_66 = arith.constant 0 : index
    %167 = vector.load %arg26[%166, %c0_65, %c0_66] : memref<16x2x256xf32, #tpu.memory_space<vmem>>, vector<1x2x256xf32>
    %168 = vector.shape_cast %167 : vector<1x2x256xf32> to vector<2x256xf32>
    %c15_i32_67 = arith.constant 15 : i32
    %169 = arith.subi %c15_i32_67, %c3_i32 : i32
    %170 = arith.index_cast %169 : i32 to index
    %c0_68 = arith.constant 0 : index
    %c0_69 = arith.constant 0 : index
    %171 = vector.load %arg27[%170, %c0_68, %c0_69] : memref<16x2x256xf32, #tpu.memory_space<vmem>>, vector<1x2x256xf32>
    %172 = vector.shape_cast %171 : vector<1x2x256xf32> to vector<2x256xf32>
    %173 = arith.addf %168, %172 : vector<2x256xf32>
    %cst_70 = arith.constant dense<0.000000e+00> : vector<2x256xf32>
    %174 = tpu.matmul %154, %26, %cst_70 {dimension_numbers = #tpu.dot_dimension_numbers<[1], [0], [0], [1], [0, 0, 1, 1], [], []>} : vector<2x64xf32>, vector<64x256xf32>, vector<2x256xf32> -> vector<2x256xf32>
    %175 = arith.addf %173, %174 : vector<2x256xf32>
    %176 = vector.extract_strided_slice %175 {offsets = [0, 0], sizes = [2, 64], strides = [1, 1]} : vector<2x256xf32> to vector<2x64xf32>
    %177 = arith.negf %176 : vector<2x64xf32>
    %178 = math.exp %177 : vector<2x64xf32>
    %cst_71 = arith.constant 1.000000e+00 : f32
    %179 = vector.broadcast %cst_71 : f32 to vector<2x64xf32>
    %180 = arith.addf %179, %178 : vector<2x64xf32>
    %181 = arith.divf %179, %180 : vector<2x64xf32>
    %182 = vector.extract_strided_slice %175 {offsets = [0, 64], sizes = [2, 64], strides = [1, 1]} : vector<2x256xf32> to vector<2x64xf32>
    %183 = arith.negf %182 : vector<2x64xf32>
    %184 = math.exp %183 : vector<2x64xf32>
    %cst_72 = arith.constant 1.000000e+00 : f32
    %185 = vector.broadcast %cst_72 : f32 to vector<2x64xf32>
    %186 = arith.addf %185, %184 : vector<2x64xf32>
    %187 = arith.divf %185, %186 : vector<2x64xf32>
    %188 = vector.extract_strided_slice %175 {offsets = [0, 128], sizes = [2, 64], strides = [1, 1]} : vector<2x256xf32> to vector<2x64xf32>
    %189 = math.tanh %188 : vector<2x64xf32>
    %190 = vector.extract_strided_slice %175 {offsets = [0, 192], sizes = [2, 64], strides = [1, 1]} : vector<2x256xf32> to vector<2x64xf32>
    %191 = arith.negf %190 : vector<2x64xf32>
    %192 = math.exp %191 : vector<2x64xf32>
    %cst_73 = arith.constant 1.000000e+00 : f32
    %193 = vector.broadcast %cst_73 : f32 to vector<2x64xf32>
    %194 = arith.addf %193, %192 : vector<2x64xf32>
    %195 = arith.divf %193, %194 : vector<2x64xf32>
    %196 = arith.mulf %187, %152 : vector<2x64xf32>
    %197 = arith.mulf %181, %189 : vector<2x64xf32>
    %198 = arith.addf %196, %197 : vector<2x64xf32>
    %199 = math.tanh %198 : vector<2x64xf32>
    %200 = arith.mulf %195, %199 : vector<2x64xf32>
    %201 = vector.extract_strided_slice %200 {offsets = [0, 0], sizes = [2, 32], strides = [1, 1]} : vector<2x64xf32> to vector<2x32xf32>
    %202 = arith.index_cast %c3_i32 : i32 to index
    %c0_74 = arith.constant 0 : index
    %c0_75 = arith.constant 0 : index
    %203 = vector.load %arg28[%202, %c0_74, %c0_75] : memref<16x2x32xf32, #tpu.memory_space<vmem>>, vector<1x2x32xf32>
    %204 = vector.shape_cast %203 : vector<1x2x32xf32> to vector<2x32xf32>
    %205 = vector.shape_cast %201 : vector<2x32xf32> to vector<1x2x32xf32>
    tpu.vector_store %arg28[%202, %c0_74, %c0_75], %205 {strides = array<i32>} : memref<16x2x32xf32, #tpu.memory_space<vmem>>, vector<1x2x32xf32>,
    %206 = vector.extract_strided_slice %200 {offsets = [0, 32], sizes = [2, 32], strides = [1, 1]} : vector<2x64xf32> to vector<2x32xf32>
    %c15_i32_76 = arith.constant 15 : i32
    %207 = arith.subi %c15_i32_76, %c3_i32 : i32
    %208 = arith.index_cast %207 : i32 to index
    %c0_77 = arith.constant 0 : index
    %c0_78 = arith.constant 0 : index
    %209 = vector.load %arg29[%208, %c0_77, %c0_78] : memref<16x2x32xf32, #tpu.memory_space<vmem>>, vector<1x2x32xf32>
    %210 = vector.shape_cast %209 : vector<1x2x32xf32> to vector<2x32xf32>
    %211 = vector.shape_cast %206 : vector<2x32xf32> to vector<1x2x32xf32>
    tpu.vector_store %arg29[%208, %c0_77, %c0_78], %211 {strides = array<i32>} : memref<16x2x32xf32, #tpu.memory_space<vmem>>, vector<1x2x32xf32>,
    %c4_i32 = arith.constant 4 : i32
    %212 = arith.index_cast %c4_i32 : i32 to index
    %c0_79 = arith.constant 0 : index
    %c0_80 = arith.constant 0 : index
    %213 = vector.load %arg26[%212, %c0_79, %c0_80] : memref<16x2x256xf32, #tpu.memory_space<vmem>>, vector<1x2x256xf32>
    %214 = vector.shape_cast %213 : vector<1x2x256xf32> to vector<2x256xf32>
    %c15_i32_81 = arith.constant 15 : i32
    %215 = arith.subi %c15_i32_81, %c4_i32 : i32
    %216 = arith.index_cast %215 : i32 to index
    %c0_82 = arith.constant 0 : index
    %c0_83 = arith.constant 0 : index
    %217 = vector.load %arg27[%216, %c0_82, %c0_83] : memref<16x2x256xf32, #tpu.memory_space<vmem>>, vector<1x2x256xf32>
    %218 = vector.shape_cast %217 : vector<1x2x256xf32> to vector<2x256xf32>
    %219 = arith.addf %214, %218 : vector<2x256xf32>
    %cst_84 = arith.constant dense<0.000000e+00> : vector<2x256xf32>
    %220 = tpu.matmul %200, %26, %cst_84 {dimension_numbers = #tpu.dot_dimension_numbers<[1], [0], [0], [1], [0, 0, 1, 1], [], []>} : vector<2x64xf32>, vector<64x256xf32>, vector<2x256xf32> -> vector<2x256xf32>
    %221 = arith.addf %219, %220 : vector<2x256xf32>
    %222 = vector.extract_strided_slice %221 {offsets = [0, 0], sizes = [2, 64], strides = [1, 1]} : vector<2x256xf32> to vector<2x64xf32>
    %223 = arith.negf %222 : vector<2x64xf32>
    %224 = math.exp %223 : vector<2x64xf32>
    %cst_85 = arith.constant 1.000000e+00 : f32
    %225 = vector.broadcast %cst_85 : f32 to vector<2x64xf32>
    %226 = arith.addf %225, %224 : vector<2x64xf32>
    %227 = arith.divf %225, %226 : vector<2x64xf32>
    %228 = vector.extract_strided_slice %221 {offsets = [0, 64], sizes = [2, 64], strides = [1, 1]} : vector<2x256xf32> to vector<2x64xf32>
    %229 = arith.negf %228 : vector<2x64xf32>
    %230 = math.exp %229 : vector<2x64xf32>
    %cst_86 = arith.constant 1.000000e+00 : f32
    %231 = vector.broadcast %cst_86 : f32 to vector<2x64xf32>
    %232 = arith.addf %231, %230 : vector<2x64xf32>
    %233 = arith.divf %231, %232 : vector<2x64xf32>
    %234 = vector.extract_strided_slice %221 {offsets = [0, 128], sizes = [2, 64], strides = [1, 1]} : vector<2x256xf32> to vector<2x64xf32>
    %235 = math.tanh %234 : vector<2x64xf32>
    %236 = vector.extract_strided_slice %221 {offsets = [0, 192], sizes = [2, 64], strides = [1, 1]} : vector<2x256xf32> to vector<2x64xf32>
    %237 = arith.negf %236 : vector<2x64xf32>
    %238 = math.exp %237 : vector<2x64xf32>
    %cst_87 = arith.constant 1.000000e+00 : f32
    %239 = vector.broadcast %cst_87 : f32 to vector<2x64xf32>
    %240 = arith.addf %239, %238 : vector<2x64xf32>
    %241 = arith.divf %239, %240 : vector<2x64xf32>
    %242 = arith.mulf %233, %198 : vector<2x64xf32>
    %243 = arith.mulf %227, %235 : vector<2x64xf32>
    %244 = arith.addf %242, %243 : vector<2x64xf32>
    %245 = math.tanh %244 : vector<2x64xf32>
    %246 = arith.mulf %241, %245 : vector<2x64xf32>
    %247 = vector.extract_strided_slice %246 {offsets = [0, 0], sizes = [2, 32], strides = [1, 1]} : vector<2x64xf32> to vector<2x32xf32>
    %248 = arith.index_cast %c4_i32 : i32 to index
    %c0_88 = arith.constant 0 : index
    %c0_89 = arith.constant 0 : index
    %249 = vector.load %arg28[%248, %c0_88, %c0_89] : memref<16x2x32xf32, #tpu.memory_space<vmem>>, vector<1x2x32xf32>
    %250 = vector.shape_cast %249 : vector<1x2x32xf32> to vector<2x32xf32>
    %251 = vector.shape_cast %247 : vector<2x32xf32> to vector<1x2x32xf32>
    tpu.vector_store %arg28[%248, %c0_88, %c0_89], %251 {strides = array<i32>} : memref<16x2x32xf32, #tpu.memory_space<vmem>>, vector<1x2x32xf32>,
    %252 = vector.extract_strided_slice %246 {offsets = [0, 32], sizes = [2, 32], strides = [1, 1]} : vector<2x64xf32> to vector<2x32xf32>
    %c15_i32_90 = arith.constant 15 : i32
    %253 = arith.subi %c15_i32_90, %c4_i32 : i32
    %254 = arith.index_cast %253 : i32 to index
    %c0_91 = arith.constant 0 : index
    %c0_92 = arith.constant 0 : index
    %255 = vector.load %arg29[%254, %c0_91, %c0_92] : memref<16x2x32xf32, #tpu.memory_space<vmem>>, vector<1x2x32xf32>
    %256 = vector.shape_cast %255 : vector<1x2x32xf32> to vector<2x32xf32>
    %257 = vector.shape_cast %252 : vector<2x32xf32> to vector<1x2x32xf32>
    tpu.vector_store %arg29[%254, %c0_91, %c0_92], %257 {strides = array<i32>} : memref<16x2x32xf32, #tpu.memory_space<vmem>>, vector<1x2x32xf32>,
    %c5_i32 = arith.constant 5 : i32
    %258 = arith.index_cast %c5_i32 : i32 to index
    %c0_93 = arith.constant 0 : index
    %c0_94 = arith.constant 0 : index
    %259 = vector.load %arg26[%258, %c0_93, %c0_94] : memref<16x2x256xf32, #tpu.memory_space<vmem>>, vector<1x2x256xf32>
    %260 = vector.shape_cast %259 : vector<1x2x256xf32> to vector<2x256xf32>
    %c15_i32_95 = arith.constant 15 : i32
    %261 = arith.subi %c15_i32_95, %c5_i32 : i32
    %262 = arith.index_cast %261 : i32 to index
    %c0_96 = arith.constant 0 : index
    %c0_97 = arith.constant 0 : index
    %263 = vector.load %arg27[%262, %c0_96, %c0_97] : memref<16x2x256xf32, #tpu.memory_space<vmem>>, vector<1x2x256xf32>
    %264 = vector.shape_cast %263 : vector<1x2x256xf32> to vector<2x256xf32>
    %265 = arith.addf %260, %264 : vector<2x256xf32>
    %cst_98 = arith.constant dense<0.000000e+00> : vector<2x256xf32>
    %266 = tpu.matmul %246, %26, %cst_98 {dimension_numbers = #tpu.dot_dimension_numbers<[1], [0], [0], [1], [0, 0, 1, 1], [], []>} : vector<2x64xf32>, vector<64x256xf32>, vector<2x256xf32> -> vector<2x256xf32>
    %267 = arith.addf %265, %266 : vector<2x256xf32>
    %268 = vector.extract_strided_slice %267 {offsets = [0, 0], sizes = [2, 64], strides = [1, 1]} : vector<2x256xf32> to vector<2x64xf32>
    %269 = arith.negf %268 : vector<2x64xf32>
    %270 = math.exp %269 : vector<2x64xf32>
    %cst_99 = arith.constant 1.000000e+00 : f32
    %271 = vector.broadcast %cst_99 : f32 to vector<2x64xf32>
    %272 = arith.addf %271, %270 : vector<2x64xf32>
    %273 = arith.divf %271, %272 : vector<2x64xf32>
    %274 = vector.extract_strided_slice %267 {offsets = [0, 64], sizes = [2, 64], strides = [1, 1]} : vector<2x256xf32> to vector<2x64xf32>
    %275 = arith.negf %274 : vector<2x64xf32>
    %276 = math.exp %275 : vector<2x64xf32>
    %cst_100 = arith.constant 1.000000e+00 : f32
    %277 = vector.broadcast %cst_100 : f32 to vector<2x64xf32>
    %278 = arith.addf %277, %276 : vector<2x64xf32>
    %279 = arith.divf %277, %278 : vector<2x64xf32>
    %280 = vector.extract_strided_slice %267 {offsets = [0, 128], sizes = [2, 64], strides = [1, 1]} : vector<2x256xf32> to vector<2x64xf32>
    %281 = math.tanh %280 : vector<2x64xf32>
    %282 = vector.extract_strided_slice %267 {offsets = [0, 192], sizes = [2, 64], strides = [1, 1]} : vector<2x256xf32> to vector<2x64xf32>
    %283 = arith.negf %282 : vector<2x64xf32>
    %284 = math.exp %283 : vector<2x64xf32>
    %cst_101 = arith.constant 1.000000e+00 : f32
    %285 = vector.broadcast %cst_101 : f32 to vector<2x64xf32>
    %286 = arith.addf %285, %284 : vector<2x64xf32>
    %287 = arith.divf %285, %286 : vector<2x64xf32>
    %288 = arith.mulf %279, %244 : vector<2x64xf32>
    %289 = arith.mulf %273, %281 : vector<2x64xf32>
    %290 = arith.addf %288, %289 : vector<2x64xf32>
    %291 = math.tanh %290 : vector<2x64xf32>
    %292 = arith.mulf %287, %291 : vector<2x64xf32>
    %293 = vector.extract_strided_slice %292 {offsets = [0, 0], sizes = [2, 32], strides = [1, 1]} : vector<2x64xf32> to vector<2x32xf32>
    %294 = arith.index_cast %c5_i32 : i32 to index
    %c0_102 = arith.constant 0 : index
    %c0_103 = arith.constant 0 : index
    %295 = vector.load %arg28[%294, %c0_102, %c0_103] : memref<16x2x32xf32, #tpu.memory_space<vmem>>, vector<1x2x32xf32>
    %296 = vector.shape_cast %295 : vector<1x2x32xf32> to vector<2x32xf32>
    %297 = vector.shape_cast %293 : vector<2x32xf32> to vector<1x2x32xf32>
    tpu.vector_store %arg28[%294, %c0_102, %c0_103], %297 {strides = array<i32>} : memref<16x2x32xf32, #tpu.memory_space<vmem>>, vector<1x2x32xf32>,
    %298 = vector.extract_strided_slice %292 {offsets = [0, 32], sizes = [2, 32], strides = [1, 1]} : vector<2x64xf32> to vector<2x32xf32>
    %c15_i32_104 = arith.constant 15 : i32
    %299 = arith.subi %c15_i32_104, %c5_i32 : i32
    %300 = arith.index_cast %299 : i32 to index
    %c0_105 = arith.constant 0 : index
    %c0_106 = arith.constant 0 : index
    %301 = vector.load %arg29[%300, %c0_105, %c0_106] : memref<16x2x32xf32, #tpu.memory_space<vmem>>, vector<1x2x32xf32>
    %302 = vector.shape_cast %301 : vector<1x2x32xf32> to vector<2x32xf32>
    %303 = vector.shape_cast %298 : vector<2x32xf32> to vector<1x2x32xf32>
    tpu.vector_store %arg29[%300, %c0_105, %c0_106], %303 {strides = array<i32>} : memref<16x2x32xf32, #tpu.memory_space<vmem>>, vector<1x2x32xf32>,
    %c6_i32 = arith.constant 6 : i32
    %304 = arith.index_cast %c6_i32 : i32 to index
    %c0_107 = arith.constant 0 : index
    %c0_108 = arith.constant 0 : index
    %305 = vector.load %arg26[%304, %c0_107, %c0_108] : memref<16x2x256xf32, #tpu.memory_space<vmem>>, vector<1x2x256xf32>
    %306 = vector.shape_cast %305 : vector<1x2x256xf32> to vector<2x256xf32>
    %c15_i32_109 = arith.constant 15 : i32
    %307 = arith.subi %c15_i32_109, %c6_i32 : i32
    %308 = arith.index_cast %307 : i32 to index
    %c0_110 = arith.constant 0 : index
    %c0_111 = arith.constant 0 : index
    %309 = vector.load %arg27[%308, %c0_110, %c0_111] : memref<16x2x256xf32, #tpu.memory_space<vmem>>, vector<1x2x256xf32>
    %310 = vector.shape_cast %309 : vector<1x2x256xf32> to vector<2x256xf32>
    %311 = arith.addf %306, %310 : vector<2x256xf32>
    %cst_112 = arith.constant dense<0.000000e+00> : vector<2x256xf32>
    %312 = tpu.matmul %292, %26, %cst_112 {dimension_numbers = #tpu.dot_dimension_numbers<[1], [0], [0], [1], [0, 0, 1, 1], [], []>} : vector<2x64xf32>, vector<64x256xf32>, vector<2x256xf32> -> vector<2x256xf32>
    %313 = arith.addf %311, %312 : vector<2x256xf32>
    %314 = vector.extract_strided_slice %313 {offsets = [0, 0], sizes = [2, 64], strides = [1, 1]} : vector<2x256xf32> to vector<2x64xf32>
    %315 = arith.negf %314 : vector<2x64xf32>
    %316 = math.exp %315 : vector<2x64xf32>
    %cst_113 = arith.constant 1.000000e+00 : f32
    %317 = vector.broadcast %cst_113 : f32 to vector<2x64xf32>
    %318 = arith.addf %317, %316 : vector<2x64xf32>
    %319 = arith.divf %317, %318 : vector<2x64xf32>
    %320 = vector.extract_strided_slice %313 {offsets = [0, 64], sizes = [2, 64], strides = [1, 1]} : vector<2x256xf32> to vector<2x64xf32>
    %321 = arith.negf %320 : vector<2x64xf32>
    %322 = math.exp %321 : vector<2x64xf32>
    %cst_114 = arith.constant 1.000000e+00 : f32
    %323 = vector.broadcast %cst_114 : f32 to vector<2x64xf32>
    %324 = arith.addf %323, %322 : vector<2x64xf32>
    %325 = arith.divf %323, %324 : vector<2x64xf32>
    %326 = vector.extract_strided_slice %313 {offsets = [0, 128], sizes = [2, 64], strides = [1, 1]} : vector<2x256xf32> to vector<2x64xf32>
    %327 = math.tanh %326 : vector<2x64xf32>
    %328 = vector.extract_strided_slice %313 {offsets = [0, 192], sizes = [2, 64], strides = [1, 1]} : vector<2x256xf32> to vector<2x64xf32>
    %329 = arith.negf %328 : vector<2x64xf32>
    %330 = math.exp %329 : vector<2x64xf32>
    %cst_115 = arith.constant 1.000000e+00 : f32
    %331 = vector.broadcast %cst_115 : f32 to vector<2x64xf32>
    %332 = arith.addf %331, %330 : vector<2x64xf32>
    %333 = arith.divf %331, %332 : vector<2x64xf32>
    %334 = arith.mulf %325, %290 : vector<2x64xf32>
    %335 = arith.mulf %319, %327 : vector<2x64xf32>
    %336 = arith.addf %334, %335 : vector<2x64xf32>
    %337 = math.tanh %336 : vector<2x64xf32>
    %338 = arith.mulf %333, %337 : vector<2x64xf32>
    %339 = vector.extract_strided_slice %338 {offsets = [0, 0], sizes = [2, 32], strides = [1, 1]} : vector<2x64xf32> to vector<2x32xf32>
    %340 = arith.index_cast %c6_i32 : i32 to index
    %c0_116 = arith.constant 0 : index
    %c0_117 = arith.constant 0 : index
    %341 = vector.load %arg28[%340, %c0_116, %c0_117] : memref<16x2x32xf32, #tpu.memory_space<vmem>>, vector<1x2x32xf32>
    %342 = vector.shape_cast %341 : vector<1x2x32xf32> to vector<2x32xf32>
    %343 = vector.shape_cast %339 : vector<2x32xf32> to vector<1x2x32xf32>
    tpu.vector_store %arg28[%340, %c0_116, %c0_117], %343 {strides = array<i32>} : memref<16x2x32xf32, #tpu.memory_space<vmem>>, vector<1x2x32xf32>,
    %344 = vector.extract_strided_slice %338 {offsets = [0, 32], sizes = [2, 32], strides = [1, 1]} : vector<2x64xf32> to vector<2x32xf32>
    %c15_i32_118 = arith.constant 15 : i32
    %345 = arith.subi %c15_i32_118, %c6_i32 : i32
    %346 = arith.index_cast %345 : i32 to index
    %c0_119 = arith.constant 0 : index
    %c0_120 = arith.constant 0 : index
    %347 = vector.load %arg29[%346, %c0_119, %c0_120] : memref<16x2x32xf32, #tpu.memory_space<vmem>>, vector<1x2x32xf32>
    %348 = vector.shape_cast %347 : vector<1x2x32xf32> to vector<2x32xf32>
    %349 = vector.shape_cast %344 : vector<2x32xf32> to vector<1x2x32xf32>
    tpu.vector_store %arg29[%346, %c0_119, %c0_120], %349 {strides = array<i32>} : memref<16x2x32xf32, #tpu.memory_space<vmem>>, vector<1x2x32xf32>,
    %c7_i32 = arith.constant 7 : i32
    %350 = arith.index_cast %c7_i32 : i32 to index
    %c0_121 = arith.constant 0 : index
    %c0_122 = arith.constant 0 : index
    %351 = vector.load %arg26[%350, %c0_121, %c0_122] : memref<16x2x256xf32, #tpu.memory_space<vmem>>, vector<1x2x256xf32>
    %352 = vector.shape_cast %351 : vector<1x2x256xf32> to vector<2x256xf32>
    %c15_i32_123 = arith.constant 15 : i32
    %353 = arith.subi %c15_i32_123, %c7_i32 : i32
    %354 = arith.index_cast %353 : i32 to index
    %c0_124 = arith.constant 0 : index
    %c0_125 = arith.constant 0 : index
    %355 = vector.load %arg27[%354, %c0_124, %c0_125] : memref<16x2x256xf32, #tpu.memory_space<vmem>>, vector<1x2x256xf32>
    %356 = vector.shape_cast %355 : vector<1x2x256xf32> to vector<2x256xf32>
    %357 = arith.addf %352, %356 : vector<2x256xf32>
    %cst_126 = arith.constant dense<0.000000e+00> : vector<2x256xf32>
    %358 = tpu.matmul %338, %26, %cst_126 {dimension_numbers = #tpu.dot_dimension_numbers<[1], [0], [0], [1], [0, 0, 1, 1], [], []>} : vector<2x64xf32>, vector<64x256xf32>, vector<2x256xf32> -> vector<2x256xf32>
    %359 = arith.addf %357, %358 : vector<2x256xf32>
    %360 = vector.extract_strided_slice %359 {offsets = [0, 0], sizes = [2, 64], strides = [1, 1]} : vector<2x256xf32> to vector<2x64xf32>
    %361 = arith.negf %360 : vector<2x64xf32>
    %362 = math.exp %361 : vector<2x64xf32>
    %cst_127 = arith.constant 1.000000e+00 : f32
    %363 = vector.broadcast %cst_127 : f32 to vector<2x64xf32>
    %364 = arith.addf %363, %362 : vector<2x64xf32>
    %365 = arith.divf %363, %364 : vector<2x64xf32>
    %366 = vector.extract_strided_slice %359 {offsets = [0, 64], sizes = [2, 64], strides = [1, 1]} : vector<2x256xf32> to vector<2x64xf32>
    %367 = arith.negf %366 : vector<2x64xf32>
    %368 = math.exp %367 : vector<2x64xf32>
    %cst_128 = arith.constant 1.000000e+00 : f32
    %369 = vector.broadcast %cst_128 : f32 to vector<2x64xf32>
    %370 = arith.addf %369, %368 : vector<2x64xf32>
    %371 = arith.divf %369, %370 : vector<2x64xf32>
    %372 = vector.extract_strided_slice %359 {offsets = [0, 128], sizes = [2, 64], strides = [1, 1]} : vector<2x256xf32> to vector<2x64xf32>
    %373 = math.tanh %372 : vector<2x64xf32>
    %374 = vector.extract_strided_slice %359 {offsets = [0, 192], sizes = [2, 64], strides = [1, 1]} : vector<2x256xf32> to vector<2x64xf32>
    %375 = arith.negf %374 : vector<2x64xf32>
    %376 = math.exp %375 : vector<2x64xf32>
    %cst_129 = arith.constant 1.000000e+00 : f32
    %377 = vector.broadcast %cst_129 : f32 to vector<2x64xf32>
    %378 = arith.addf %377, %376 : vector<2x64xf32>
    %379 = arith.divf %377, %378 : vector<2x64xf32>
    %380 = arith.mulf %371, %336 : vector<2x64xf32>
    %381 = arith.mulf %365, %373 : vector<2x64xf32>
    %382 = arith.addf %380, %381 : vector<2x64xf32>
    %383 = math.tanh %382 : vector<2x64xf32>
    %384 = arith.mulf %379, %383 : vector<2x64xf32>
    %385 = vector.extract_strided_slice %384 {offsets = [0, 0], sizes = [2, 32], strides = [1, 1]} : vector<2x64xf32> to vector<2x32xf32>
    %386 = arith.index_cast %c7_i32 : i32 to index
    %c0_130 = arith.constant 0 : index
    %c0_131 = arith.constant 0 : index
    %387 = vector.load %arg28[%386, %c0_130, %c0_131] : memref<16x2x32xf32, #tpu.memory_space<vmem>>, vector<1x2x32xf32>
    %388 = vector.shape_cast %387 : vector<1x2x32xf32> to vector<2x32xf32>
    %389 = vector.shape_cast %385 : vector<2x32xf32> to vector<1x2x32xf32>
    tpu.vector_store %arg28[%386, %c0_130, %c0_131], %389 {strides = array<i32>} : memref<16x2x32xf32, #tpu.memory_space<vmem>>, vector<1x2x32xf32>,
    %390 = vector.extract_strided_slice %384 {offsets = [0, 32], sizes = [2, 32], strides = [1, 1]} : vector<2x64xf32> to vector<2x32xf32>
    %c15_i32_132 = arith.constant 15 : i32
    %391 = arith.subi %c15_i32_132, %c7_i32 : i32
    %392 = arith.index_cast %391 : i32 to index
    %c0_133 = arith.constant 0 : index
    %c0_134 = arith.constant 0 : index
    %393 = vector.load %arg29[%392, %c0_133, %c0_134] : memref<16x2x32xf32, #tpu.memory_space<vmem>>, vector<1x2x32xf32>
    %394 = vector.shape_cast %393 : vector<1x2x32xf32> to vector<2x32xf32>
    %395 = vector.shape_cast %390 : vector<2x32xf32> to vector<1x2x32xf32>
    tpu.vector_store %arg29[%392, %c0_133, %c0_134], %395 {strides = array<i32>} : memref<16x2x32xf32, #tpu.memory_space<vmem>>, vector<1x2x32xf32>,
    %c8_i32 = arith.constant 8 : i32
    %396 = arith.index_cast %c8_i32 : i32 to index
    %c0_135 = arith.constant 0 : index
    %c0_136 = arith.constant 0 : index
    %397 = vector.load %arg26[%396, %c0_135, %c0_136] : memref<16x2x256xf32, #tpu.memory_space<vmem>>, vector<1x2x256xf32>
    %398 = vector.shape_cast %397 : vector<1x2x256xf32> to vector<2x256xf32>
    %c15_i32_137 = arith.constant 15 : i32
    %399 = arith.subi %c15_i32_137, %c8_i32 : i32
    %400 = arith.index_cast %399 : i32 to index
    %c0_138 = arith.constant 0 : index
    %c0_139 = arith.constant 0 : index
    %401 = vector.load %arg27[%400, %c0_138, %c0_139] : memref<16x2x256xf32, #tpu.memory_space<vmem>>, vector<1x2x256xf32>
    %402 = vector.shape_cast %401 : vector<1x2x256xf32> to vector<2x256xf32>
    %403 = arith.addf %398, %402 : vector<2x256xf32>
    %cst_140 = arith.constant dense<0.000000e+00> : vector<2x256xf32>
    %404 = tpu.matmul %384, %26, %cst_140 {dimension_numbers = #tpu.dot_dimension_numbers<[1], [0], [0], [1], [0, 0, 1, 1], [], []>} : vector<2x64xf32>, vector<64x256xf32>, vector<2x256xf32> -> vector<2x256xf32>
    %405 = arith.addf %403, %404 : vector<2x256xf32>
    %406 = vector.extract_strided_slice %405 {offsets = [0, 0], sizes = [2, 64], strides = [1, 1]} : vector<2x256xf32> to vector<2x64xf32>
    %407 = arith.negf %406 : vector<2x64xf32>
    %408 = math.exp %407 : vector<2x64xf32>
    %cst_141 = arith.constant 1.000000e+00 : f32
    %409 = vector.broadcast %cst_141 : f32 to vector<2x64xf32>
    %410 = arith.addf %409, %408 : vector<2x64xf32>
    %411 = arith.divf %409, %410 : vector<2x64xf32>
    %412 = vector.extract_strided_slice %405 {offsets = [0, 64], sizes = [2, 64], strides = [1, 1]} : vector<2x256xf32> to vector<2x64xf32>
    %413 = arith.negf %412 : vector<2x64xf32>
    %414 = math.exp %413 : vector<2x64xf32>
    %cst_142 = arith.constant 1.000000e+00 : f32
    %415 = vector.broadcast %cst_142 : f32 to vector<2x64xf32>
    %416 = arith.addf %415, %414 : vector<2x64xf32>
    %417 = arith.divf %415, %416 : vector<2x64xf32>
    %418 = vector.extract_strided_slice %405 {offsets = [0, 128], sizes = [2, 64], strides = [1, 1]} : vector<2x256xf32> to vector<2x64xf32>
    %419 = math.tanh %418 : vector<2x64xf32>
    %420 = vector.extract_strided_slice %405 {offsets = [0, 192], sizes = [2, 64], strides = [1, 1]} : vector<2x256xf32> to vector<2x64xf32>
    %421 = arith.negf %420 : vector<2x64xf32>
    %422 = math.exp %421 : vector<2x64xf32>
    %cst_143 = arith.constant 1.000000e+00 : f32
    %423 = vector.broadcast %cst_143 : f32 to vector<2x64xf32>
    %424 = arith.addf %423, %422 : vector<2x64xf32>
    %425 = arith.divf %423, %424 : vector<2x64xf32>
    %426 = arith.mulf %417, %382 : vector<2x64xf32>
    %427 = arith.mulf %411, %419 : vector<2x64xf32>
    %428 = arith.addf %426, %427 : vector<2x64xf32>
    %429 = math.tanh %428 : vector<2x64xf32>
    %430 = arith.mulf %425, %429 : vector<2x64xf32>
    %431 = vector.extract_strided_slice %430 {offsets = [0, 0], sizes = [2, 32], strides = [1, 1]} : vector<2x64xf32> to vector<2x32xf32>
    %432 = arith.index_cast %c8_i32 : i32 to index
    %c0_144 = arith.constant 0 : index
    %c0_145 = arith.constant 0 : index
    %433 = vector.load %arg28[%432, %c0_144, %c0_145] : memref<16x2x32xf32, #tpu.memory_space<vmem>>, vector<1x2x32xf32>
    %434 = vector.shape_cast %433 : vector<1x2x32xf32> to vector<2x32xf32>
    %435 = vector.shape_cast %431 : vector<2x32xf32> to vector<1x2x32xf32>
    tpu.vector_store %arg28[%432, %c0_144, %c0_145], %435 {strides = array<i32>} : memref<16x2x32xf32, #tpu.memory_space<vmem>>, vector<1x2x32xf32>,
    %436 = vector.extract_strided_slice %430 {offsets = [0, 32], sizes = [2, 32], strides = [1, 1]} : vector<2x64xf32> to vector<2x32xf32>
    %c15_i32_146 = arith.constant 15 : i32
    %437 = arith.subi %c15_i32_146, %c8_i32 : i32
    %438 = arith.index_cast %437 : i32 to index
    %c0_147 = arith.constant 0 : index
    %c0_148 = arith.constant 0 : index
    %439 = vector.load %arg29[%438, %c0_147, %c0_148] : memref<16x2x32xf32, #tpu.memory_space<vmem>>, vector<1x2x32xf32>
    %440 = vector.shape_cast %439 : vector<1x2x32xf32> to vector<2x32xf32>
    %441 = vector.shape_cast %436 : vector<2x32xf32> to vector<1x2x32xf32>
    tpu.vector_store %arg29[%438, %c0_147, %c0_148], %441 {strides = array<i32>} : memref<16x2x32xf32, #tpu.memory_space<vmem>>, vector<1x2x32xf32>,
    %c9_i32 = arith.constant 9 : i32
    %442 = arith.index_cast %c9_i32 : i32 to index
    %c0_149 = arith.constant 0 : index
    %c0_150 = arith.constant 0 : index
    %443 = vector.load %arg26[%442, %c0_149, %c0_150] : memref<16x2x256xf32, #tpu.memory_space<vmem>>, vector<1x2x256xf32>
    %444 = vector.shape_cast %443 : vector<1x2x256xf32> to vector<2x256xf32>
    %c15_i32_151 = arith.constant 15 : i32
    %445 = arith.subi %c15_i32_151, %c9_i32 : i32
    %446 = arith.index_cast %445 : i32 to index
    %c0_152 = arith.constant 0 : index
    %c0_153 = arith.constant 0 : index
    %447 = vector.load %arg27[%446, %c0_152, %c0_153] : memref<16x2x256xf32, #tpu.memory_space<vmem>>, vector<1x2x256xf32>
    %448 = vector.shape_cast %447 : vector<1x2x256xf32> to vector<2x256xf32>
    %449 = arith.addf %444, %448 : vector<2x256xf32>
    %cst_154 = arith.constant dense<0.000000e+00> : vector<2x256xf32>
    %450 = tpu.matmul %430, %26, %cst_154 {dimension_numbers = #tpu.dot_dimension_numbers<[1], [0], [0], [1], [0, 0, 1, 1], [], []>} : vector<2x64xf32>, vector<64x256xf32>, vector<2x256xf32> -> vector<2x256xf32>
    %451 = arith.addf %449, %450 : vector<2x256xf32>
    %452 = vector.extract_strided_slice %451 {offsets = [0, 0], sizes = [2, 64], strides = [1, 1]} : vector<2x256xf32> to vector<2x64xf32>
    %453 = arith.negf %452 : vector<2x64xf32>
    %454 = math.exp %453 : vector<2x64xf32>
    %cst_155 = arith.constant 1.000000e+00 : f32
    %455 = vector.broadcast %cst_155 : f32 to vector<2x64xf32>
    %456 = arith.addf %455, %454 : vector<2x64xf32>
    %457 = arith.divf %455, %456 : vector<2x64xf32>
    %458 = vector.extract_strided_slice %451 {offsets = [0, 64], sizes = [2, 64], strides = [1, 1]} : vector<2x256xf32> to vector<2x64xf32>
    %459 = arith.negf %458 : vector<2x64xf32>
    %460 = math.exp %459 : vector<2x64xf32>
    %cst_156 = arith.constant 1.000000e+00 : f32
    %461 = vector.broadcast %cst_156 : f32 to vector<2x64xf32>
    %462 = arith.addf %461, %460 : vector<2x64xf32>
    %463 = arith.divf %461, %462 : vector<2x64xf32>
    %464 = vector.extract_strided_slice %451 {offsets = [0, 128], sizes = [2, 64], strides = [1, 1]} : vector<2x256xf32> to vector<2x64xf32>
    %465 = math.tanh %464 : vector<2x64xf32>
    %466 = vector.extract_strided_slice %451 {offsets = [0, 192], sizes = [2, 64], strides = [1, 1]} : vector<2x256xf32> to vector<2x64xf32>
    %467 = arith.negf %466 : vector<2x64xf32>
    %468 = math.exp %467 : vector<2x64xf32>
    %cst_157 = arith.constant 1.000000e+00 : f32
    %469 = vector.broadcast %cst_157 : f32 to vector<2x64xf32>
    %470 = arith.addf %469, %468 : vector<2x64xf32>
    %471 = arith.divf %469, %470 : vector<2x64xf32>
    %472 = arith.mulf %463, %428 : vector<2x64xf32>
    %473 = arith.mulf %457, %465 : vector<2x64xf32>
    %474 = arith.addf %472, %473 : vector<2x64xf32>
    %475 = math.tanh %474 : vector<2x64xf32>
    %476 = arith.mulf %471, %475 : vector<2x64xf32>
    %477 = vector.extract_strided_slice %476 {offsets = [0, 0], sizes = [2, 32], strides = [1, 1]} : vector<2x64xf32> to vector<2x32xf32>
    %478 = arith.index_cast %c9_i32 : i32 to index
    %c0_158 = arith.constant 0 : index
    %c0_159 = arith.constant 0 : index
    %479 = vector.load %arg28[%478, %c0_158, %c0_159] : memref<16x2x32xf32, #tpu.memory_space<vmem>>, vector<1x2x32xf32>
    %480 = vector.shape_cast %479 : vector<1x2x32xf32> to vector<2x32xf32>
    %481 = vector.shape_cast %477 : vector<2x32xf32> to vector<1x2x32xf32>
    tpu.vector_store %arg28[%478, %c0_158, %c0_159], %481 {strides = array<i32>} : memref<16x2x32xf32, #tpu.memory_space<vmem>>, vector<1x2x32xf32>,
    %482 = vector.extract_strided_slice %476 {offsets = [0, 32], sizes = [2, 32], strides = [1, 1]} : vector<2x64xf32> to vector<2x32xf32>
    %c15_i32_160 = arith.constant 15 : i32
    %483 = arith.subi %c15_i32_160, %c9_i32 : i32
    %484 = arith.index_cast %483 : i32 to index
    %c0_161 = arith.constant 0 : index
    %c0_162 = arith.constant 0 : index
    %485 = vector.load %arg29[%484, %c0_161, %c0_162] : memref<16x2x32xf32, #tpu.memory_space<vmem>>, vector<1x2x32xf32>
    %486 = vector.shape_cast %485 : vector<1x2x32xf32> to vector<2x32xf32>
    %487 = vector.shape_cast %482 : vector<2x32xf32> to vector<1x2x32xf32>
    tpu.vector_store %arg29[%484, %c0_161, %c0_162], %487 {strides = array<i32>} : memref<16x2x32xf32, #tpu.memory_space<vmem>>, vector<1x2x32xf32>,
    %c10_i32 = arith.constant 10 : i32
    %488 = arith.index_cast %c10_i32 : i32 to index
    %c0_163 = arith.constant 0 : index
    %c0_164 = arith.constant 0 : index
    %489 = vector.load %arg26[%488, %c0_163, %c0_164] : memref<16x2x256xf32, #tpu.memory_space<vmem>>, vector<1x2x256xf32>
    %490 = vector.shape_cast %489 : vector<1x2x256xf32> to vector<2x256xf32>
    %c15_i32_165 = arith.constant 15 : i32
    %491 = arith.subi %c15_i32_165, %c10_i32 : i32
    %492 = arith.index_cast %491 : i32 to index
    %c0_166 = arith.constant 0 : index
    %c0_167 = arith.constant 0 : index
    %493 = vector.load %arg27[%492, %c0_166, %c0_167] : memref<16x2x256xf32, #tpu.memory_space<vmem>>, vector<1x2x256xf32>
    %494 = vector.shape_cast %493 : vector<1x2x256xf32> to vector<2x256xf32>
    %495 = arith.addf %490, %494 : vector<2x256xf32>
    %cst_168 = arith.constant dense<0.000000e+00> : vector<2x256xf32>
    %496 = tpu.matmul %476, %26, %cst_168 {dimension_numbers = #tpu.dot_dimension_numbers<[1], [0], [0], [1], [0, 0, 1, 1], [], []>} : vector<2x64xf32>, vector<64x256xf32>, vector<2x256xf32> -> vector<2x256xf32>
    %497 = arith.addf %495, %496 : vector<2x256xf32>
    %498 = vector.extract_strided_slice %497 {offsets = [0, 0], sizes = [2, 64], strides = [1, 1]} : vector<2x256xf32> to vector<2x64xf32>
    %499 = arith.negf %498 : vector<2x64xf32>
    %500 = math.exp %499 : vector<2x64xf32>
    %cst_169 = arith.constant 1.000000e+00 : f32
    %501 = vector.broadcast %cst_169 : f32 to vector<2x64xf32>
    %502 = arith.addf %501, %500 : vector<2x64xf32>
    %503 = arith.divf %501, %502 : vector<2x64xf32>
    %504 = vector.extract_strided_slice %497 {offsets = [0, 64], sizes = [2, 64], strides = [1, 1]} : vector<2x256xf32> to vector<2x64xf32>
    %505 = arith.negf %504 : vector<2x64xf32>
    %506 = math.exp %505 : vector<2x64xf32>
    %cst_170 = arith.constant 1.000000e+00 : f32
    %507 = vector.broadcast %cst_170 : f32 to vector<2x64xf32>
    %508 = arith.addf %507, %506 : vector<2x64xf32>
    %509 = arith.divf %507, %508 : vector<2x64xf32>
    %510 = vector.extract_strided_slice %497 {offsets = [0, 128], sizes = [2, 64], strides = [1, 1]} : vector<2x256xf32> to vector<2x64xf32>
    %511 = math.tanh %510 : vector<2x64xf32>
    %512 = vector.extract_strided_slice %497 {offsets = [0, 192], sizes = [2, 64], strides = [1, 1]} : vector<2x256xf32> to vector<2x64xf32>
    %513 = arith.negf %512 : vector<2x64xf32>
    %514 = math.exp %513 : vector<2x64xf32>
    %cst_171 = arith.constant 1.000000e+00 : f32
    %515 = vector.broadcast %cst_171 : f32 to vector<2x64xf32>
    %516 = arith.addf %515, %514 : vector<2x64xf32>
    %517 = arith.divf %515, %516 : vector<2x64xf32>
    %518 = arith.mulf %509, %474 : vector<2x64xf32>
    %519 = arith.mulf %503, %511 : vector<2x64xf32>
    %520 = arith.addf %518, %519 : vector<2x64xf32>
    %521 = math.tanh %520 : vector<2x64xf32>
    %522 = arith.mulf %517, %521 : vector<2x64xf32>
    %523 = vector.extract_strided_slice %522 {offsets = [0, 0], sizes = [2, 32], strides = [1, 1]} : vector<2x64xf32> to vector<2x32xf32>
    %524 = arith.index_cast %c10_i32 : i32 to index
    %c0_172 = arith.constant 0 : index
    %c0_173 = arith.constant 0 : index
    %525 = vector.load %arg28[%524, %c0_172, %c0_173] : memref<16x2x32xf32, #tpu.memory_space<vmem>>, vector<1x2x32xf32>
    %526 = vector.shape_cast %525 : vector<1x2x32xf32> to vector<2x32xf32>
    %527 = vector.shape_cast %523 : vector<2x32xf32> to vector<1x2x32xf32>
    tpu.vector_store %arg28[%524, %c0_172, %c0_173], %527 {strides = array<i32>} : memref<16x2x32xf32, #tpu.memory_space<vmem>>, vector<1x2x32xf32>,
    %528 = vector.extract_strided_slice %522 {offsets = [0, 32], sizes = [2, 32], strides = [1, 1]} : vector<2x64xf32> to vector<2x32xf32>
    %c15_i32_174 = arith.constant 15 : i32
    %529 = arith.subi %c15_i32_174, %c10_i32 : i32
    %530 = arith.index_cast %529 : i32 to index
    %c0_175 = arith.constant 0 : index
    %c0_176 = arith.constant 0 : index
    %531 = vector.load %arg29[%530, %c0_175, %c0_176] : memref<16x2x32xf32, #tpu.memory_space<vmem>>, vector<1x2x32xf32>
    %532 = vector.shape_cast %531 : vector<1x2x32xf32> to vector<2x32xf32>
    %533 = vector.shape_cast %528 : vector<2x32xf32> to vector<1x2x32xf32>
    tpu.vector_store %arg29[%530, %c0_175, %c0_176], %533 {strides = array<i32>} : memref<16x2x32xf32, #tpu.memory_space<vmem>>, vector<1x2x32xf32>,
    %c11_i32 = arith.constant 11 : i32
    %534 = arith.index_cast %c11_i32 : i32 to index
    %c0_177 = arith.constant 0 : index
    %c0_178 = arith.constant 0 : index
    %535 = vector.load %arg26[%534, %c0_177, %c0_178] : memref<16x2x256xf32, #tpu.memory_space<vmem>>, vector<1x2x256xf32>
    %536 = vector.shape_cast %535 : vector<1x2x256xf32> to vector<2x256xf32>
    %c15_i32_179 = arith.constant 15 : i32
    %537 = arith.subi %c15_i32_179, %c11_i32 : i32
    %538 = arith.index_cast %537 : i32 to index
    %c0_180 = arith.constant 0 : index
    %c0_181 = arith.constant 0 : index
    %539 = vector.load %arg27[%538, %c0_180, %c0_181] : memref<16x2x256xf32, #tpu.memory_space<vmem>>, vector<1x2x256xf32>
    %540 = vector.shape_cast %539 : vector<1x2x256xf32> to vector<2x256xf32>
    %541 = arith.addf %536, %540 : vector<2x256xf32>
    %cst_182 = arith.constant dense<0.000000e+00> : vector<2x256xf32>
    %542 = tpu.matmul %522, %26, %cst_182 {dimension_numbers = #tpu.dot_dimension_numbers<[1], [0], [0], [1], [0, 0, 1, 1], [], []>} : vector<2x64xf32>, vector<64x256xf32>, vector<2x256xf32> -> vector<2x256xf32>
    %543 = arith.addf %541, %542 : vector<2x256xf32>
    %544 = vector.extract_strided_slice %543 {offsets = [0, 0], sizes = [2, 64], strides = [1, 1]} : vector<2x256xf32> to vector<2x64xf32>
    %545 = arith.negf %544 : vector<2x64xf32>
    %546 = math.exp %545 : vector<2x64xf32>
    %cst_183 = arith.constant 1.000000e+00 : f32
    %547 = vector.broadcast %cst_183 : f32 to vector<2x64xf32>
    %548 = arith.addf %547, %546 : vector<2x64xf32>
    %549 = arith.divf %547, %548 : vector<2x64xf32>
    %550 = vector.extract_strided_slice %543 {offsets = [0, 64], sizes = [2, 64], strides = [1, 1]} : vector<2x256xf32> to vector<2x64xf32>
    %551 = arith.negf %550 : vector<2x64xf32>
    %552 = math.exp %551 : vector<2x64xf32>
    %cst_184 = arith.constant 1.000000e+00 : f32
    %553 = vector.broadcast %cst_184 : f32 to vector<2x64xf32>
    %554 = arith.addf %553, %552 : vector<2x64xf32>
    %555 = arith.divf %553, %554 : vector<2x64xf32>
    %556 = vector.extract_strided_slice %543 {offsets = [0, 128], sizes = [2, 64], strides = [1, 1]} : vector<2x256xf32> to vector<2x64xf32>
    %557 = math.tanh %556 : vector<2x64xf32>
    %558 = vector.extract_strided_slice %543 {offsets = [0, 192], sizes = [2, 64], strides = [1, 1]} : vector<2x256xf32> to vector<2x64xf32>
    %559 = arith.negf %558 : vector<2x64xf32>
    %560 = math.exp %559 : vector<2x64xf32>
    %cst_185 = arith.constant 1.000000e+00 : f32
    %561 = vector.broadcast %cst_185 : f32 to vector<2x64xf32>
    %562 = arith.addf %561, %560 : vector<2x64xf32>
    %563 = arith.divf %561, %562 : vector<2x64xf32>
    %564 = arith.mulf %555, %520 : vector<2x64xf32>
    %565 = arith.mulf %549, %557 : vector<2x64xf32>
    %566 = arith.addf %564, %565 : vector<2x64xf32>
    %567 = math.tanh %566 : vector<2x64xf32>
    %568 = arith.mulf %563, %567 : vector<2x64xf32>
    %569 = vector.extract_strided_slice %568 {offsets = [0, 0], sizes = [2, 32], strides = [1, 1]} : vector<2x64xf32> to vector<2x32xf32>
    %570 = arith.index_cast %c11_i32 : i32 to index
    %c0_186 = arith.constant 0 : index
    %c0_187 = arith.constant 0 : index
    %571 = vector.load %arg28[%570, %c0_186, %c0_187] : memref<16x2x32xf32, #tpu.memory_space<vmem>>, vector<1x2x32xf32>
    %572 = vector.shape_cast %571 : vector<1x2x32xf32> to vector<2x32xf32>
    %573 = vector.shape_cast %569 : vector<2x32xf32> to vector<1x2x32xf32>
    tpu.vector_store %arg28[%570, %c0_186, %c0_187], %573 {strides = array<i32>} : memref<16x2x32xf32, #tpu.memory_space<vmem>>, vector<1x2x32xf32>,
    %574 = vector.extract_strided_slice %568 {offsets = [0, 32], sizes = [2, 32], strides = [1, 1]} : vector<2x64xf32> to vector<2x32xf32>
    %c15_i32_188 = arith.constant 15 : i32
    %575 = arith.subi %c15_i32_188, %c11_i32 : i32
    %576 = arith.index_cast %575 : i32 to index
    %c0_189 = arith.constant 0 : index
    %c0_190 = arith.constant 0 : index
    %577 = vector.load %arg29[%576, %c0_189, %c0_190] : memref<16x2x32xf32, #tpu.memory_space<vmem>>, vector<1x2x32xf32>
    %578 = vector.shape_cast %577 : vector<1x2x32xf32> to vector<2x32xf32>
    %579 = vector.shape_cast %574 : vector<2x32xf32> to vector<1x2x32xf32>
    tpu.vector_store %arg29[%576, %c0_189, %c0_190], %579 {strides = array<i32>} : memref<16x2x32xf32, #tpu.memory_space<vmem>>, vector<1x2x32xf32>,
    %c12_i32 = arith.constant 12 : i32
    %580 = arith.index_cast %c12_i32 : i32 to index
    %c0_191 = arith.constant 0 : index
    %c0_192 = arith.constant 0 : index
    %581 = vector.load %arg26[%580, %c0_191, %c0_192] : memref<16x2x256xf32, #tpu.memory_space<vmem>>, vector<1x2x256xf32>
    %582 = vector.shape_cast %581 : vector<1x2x256xf32> to vector<2x256xf32>
    %c15_i32_193 = arith.constant 15 : i32
    %583 = arith.subi %c15_i32_193, %c12_i32 : i32
    %584 = arith.index_cast %583 : i32 to index
    %c0_194 = arith.constant 0 : index
    %c0_195 = arith.constant 0 : index
    %585 = vector.load %arg27[%584, %c0_194, %c0_195] : memref<16x2x256xf32, #tpu.memory_space<vmem>>, vector<1x2x256xf32>
    %586 = vector.shape_cast %585 : vector<1x2x256xf32> to vector<2x256xf32>
    %587 = arith.addf %582, %586 : vector<2x256xf32>
    %cst_196 = arith.constant dense<0.000000e+00> : vector<2x256xf32>
    %588 = tpu.matmul %568, %26, %cst_196 {dimension_numbers = #tpu.dot_dimension_numbers<[1], [0], [0], [1], [0, 0, 1, 1], [], []>} : vector<2x64xf32>, vector<64x256xf32>, vector<2x256xf32> -> vector<2x256xf32>
    %589 = arith.addf %587, %588 : vector<2x256xf32>
    %590 = vector.extract_strided_slice %589 {offsets = [0, 0], sizes = [2, 64], strides = [1, 1]} : vector<2x256xf32> to vector<2x64xf32>
    %591 = arith.negf %590 : vector<2x64xf32>
    %592 = math.exp %591 : vector<2x64xf32>
    %cst_197 = arith.constant 1.000000e+00 : f32
    %593 = vector.broadcast %cst_197 : f32 to vector<2x64xf32>
    %594 = arith.addf %593, %592 : vector<2x64xf32>
    %595 = arith.divf %593, %594 : vector<2x64xf32>
    %596 = vector.extract_strided_slice %589 {offsets = [0, 64], sizes = [2, 64], strides = [1, 1]} : vector<2x256xf32> to vector<2x64xf32>
    %597 = arith.negf %596 : vector<2x64xf32>
    %598 = math.exp %597 : vector<2x64xf32>
    %cst_198 = arith.constant 1.000000e+00 : f32
    %599 = vector.broadcast %cst_198 : f32 to vector<2x64xf32>
    %600 = arith.addf %599, %598 : vector<2x64xf32>
    %601 = arith.divf %599, %600 : vector<2x64xf32>
    %602 = vector.extract_strided_slice %589 {offsets = [0, 128], sizes = [2, 64], strides = [1, 1]} : vector<2x256xf32> to vector<2x64xf32>
    %603 = math.tanh %602 : vector<2x64xf32>
    %604 = vector.extract_strided_slice %589 {offsets = [0, 192], sizes = [2, 64], strides = [1, 1]} : vector<2x256xf32> to vector<2x64xf32>
    %605 = arith.negf %604 : vector<2x64xf32>
    %606 = math.exp %605 : vector<2x64xf32>
    %cst_199 = arith.constant 1.000000e+00 : f32
    %607 = vector.broadcast %cst_199 : f32 to vector<2x64xf32>
    %608 = arith.addf %607, %606 : vector<2x64xf32>
    %609 = arith.divf %607, %608 : vector<2x64xf32>
    %610 = arith.mulf %601, %566 : vector<2x64xf32>
    %611 = arith.mulf %595, %603 : vector<2x64xf32>
    %612 = arith.addf %610, %611 : vector<2x64xf32>
    %613 = math.tanh %612 : vector<2x64xf32>
    %614 = arith.mulf %609, %613 : vector<2x64xf32>
    %615 = vector.extract_strided_slice %614 {offsets = [0, 0], sizes = [2, 32], strides = [1, 1]} : vector<2x64xf32> to vector<2x32xf32>
    %616 = arith.index_cast %c12_i32 : i32 to index
    %c0_200 = arith.constant 0 : index
    %c0_201 = arith.constant 0 : index
    %617 = vector.load %arg28[%616, %c0_200, %c0_201] : memref<16x2x32xf32, #tpu.memory_space<vmem>>, vector<1x2x32xf32>
    %618 = vector.shape_cast %617 : vector<1x2x32xf32> to vector<2x32xf32>
    %619 = vector.shape_cast %615 : vector<2x32xf32> to vector<1x2x32xf32>
    tpu.vector_store %arg28[%616, %c0_200, %c0_201], %619 {strides = array<i32>} : memref<16x2x32xf32, #tpu.memory_space<vmem>>, vector<1x2x32xf32>,
    %620 = vector.extract_strided_slice %614 {offsets = [0, 32], sizes = [2, 32], strides = [1, 1]} : vector<2x64xf32> to vector<2x32xf32>
    %c15_i32_202 = arith.constant 15 : i32
    %621 = arith.subi %c15_i32_202, %c12_i32 : i32
    %622 = arith.index_cast %621 : i32 to index
    %c0_203 = arith.constant 0 : index
    %c0_204 = arith.constant 0 : index
    %623 = vector.load %arg29[%622, %c0_203, %c0_204] : memref<16x2x32xf32, #tpu.memory_space<vmem>>, vector<1x2x32xf32>
    %624 = vector.shape_cast %623 : vector<1x2x32xf32> to vector<2x32xf32>
    %625 = vector.shape_cast %620 : vector<2x32xf32> to vector<1x2x32xf32>
    tpu.vector_store %arg29[%622, %c0_203, %c0_204], %625 {strides = array<i32>} : memref<16x2x32xf32, #tpu.memory_space<vmem>>, vector<1x2x32xf32>,
    %c13_i32 = arith.constant 13 : i32
    %626 = arith.index_cast %c13_i32 : i32 to index
    %c0_205 = arith.constant 0 : index
    %c0_206 = arith.constant 0 : index
    %627 = vector.load %arg26[%626, %c0_205, %c0_206] : memref<16x2x256xf32, #tpu.memory_space<vmem>>, vector<1x2x256xf32>
    %628 = vector.shape_cast %627 : vector<1x2x256xf32> to vector<2x256xf32>
    %c15_i32_207 = arith.constant 15 : i32
    %629 = arith.subi %c15_i32_207, %c13_i32 : i32
    %630 = arith.index_cast %629 : i32 to index
    %c0_208 = arith.constant 0 : index
    %c0_209 = arith.constant 0 : index
    %631 = vector.load %arg27[%630, %c0_208, %c0_209] : memref<16x2x256xf32, #tpu.memory_space<vmem>>, vector<1x2x256xf32>
    %632 = vector.shape_cast %631 : vector<1x2x256xf32> to vector<2x256xf32>
    %633 = arith.addf %628, %632 : vector<2x256xf32>
    %cst_210 = arith.constant dense<0.000000e+00> : vector<2x256xf32>
    %634 = tpu.matmul %614, %26, %cst_210 {dimension_numbers = #tpu.dot_dimension_numbers<[1], [0], [0], [1], [0, 0, 1, 1], [], []>} : vector<2x64xf32>, vector<64x256xf32>, vector<2x256xf32> -> vector<2x256xf32>
    %635 = arith.addf %633, %634 : vector<2x256xf32>
    %636 = vector.extract_strided_slice %635 {offsets = [0, 0], sizes = [2, 64], strides = [1, 1]} : vector<2x256xf32> to vector<2x64xf32>
    %637 = arith.negf %636 : vector<2x64xf32>
    %638 = math.exp %637 : vector<2x64xf32>
    %cst_211 = arith.constant 1.000000e+00 : f32
    %639 = vector.broadcast %cst_211 : f32 to vector<2x64xf32>
    %640 = arith.addf %639, %638 : vector<2x64xf32>
    %641 = arith.divf %639, %640 : vector<2x64xf32>
    %642 = vector.extract_strided_slice %635 {offsets = [0, 64], sizes = [2, 64], strides = [1, 1]} : vector<2x256xf32> to vector<2x64xf32>
    %643 = arith.negf %642 : vector<2x64xf32>
    %644 = math.exp %643 : vector<2x64xf32>
    %cst_212 = arith.constant 1.000000e+00 : f32
    %645 = vector.broadcast %cst_212 : f32 to vector<2x64xf32>
    %646 = arith.addf %645, %644 : vector<2x64xf32>
    %647 = arith.divf %645, %646 : vector<2x64xf32>
    %648 = vector.extract_strided_slice %635 {offsets = [0, 128], sizes = [2, 64], strides = [1, 1]} : vector<2x256xf32> to vector<2x64xf32>
    %649 = math.tanh %648 : vector<2x64xf32>
    %650 = vector.extract_strided_slice %635 {offsets = [0, 192], sizes = [2, 64], strides = [1, 1]} : vector<2x256xf32> to vector<2x64xf32>
    %651 = arith.negf %650 : vector<2x64xf32>
    %652 = math.exp %651 : vector<2x64xf32>
    %cst_213 = arith.constant 1.000000e+00 : f32
    %653 = vector.broadcast %cst_213 : f32 to vector<2x64xf32>
    %654 = arith.addf %653, %652 : vector<2x64xf32>
    %655 = arith.divf %653, %654 : vector<2x64xf32>
    %656 = arith.mulf %647, %612 : vector<2x64xf32>
    %657 = arith.mulf %641, %649 : vector<2x64xf32>
    %658 = arith.addf %656, %657 : vector<2x64xf32>
    %659 = math.tanh %658 : vector<2x64xf32>
    %660 = arith.mulf %655, %659 : vector<2x64xf32>
    %661 = vector.extract_strided_slice %660 {offsets = [0, 0], sizes = [2, 32], strides = [1, 1]} : vector<2x64xf32> to vector<2x32xf32>
    %662 = arith.index_cast %c13_i32 : i32 to index
    %c0_214 = arith.constant 0 : index
    %c0_215 = arith.constant 0 : index
    %663 = vector.load %arg28[%662, %c0_214, %c0_215] : memref<16x2x32xf32, #tpu.memory_space<vmem>>, vector<1x2x32xf32>
    %664 = vector.shape_cast %663 : vector<1x2x32xf32> to vector<2x32xf32>
    %665 = vector.shape_cast %661 : vector<2x32xf32> to vector<1x2x32xf32>
    tpu.vector_store %arg28[%662, %c0_214, %c0_215], %665 {strides = array<i32>} : memref<16x2x32xf32, #tpu.memory_space<vmem>>, vector<1x2x32xf32>,
    %666 = vector.extract_strided_slice %660 {offsets = [0, 32], sizes = [2, 32], strides = [1, 1]} : vector<2x64xf32> to vector<2x32xf32>
    %c15_i32_216 = arith.constant 15 : i32
    %667 = arith.subi %c15_i32_216, %c13_i32 : i32
    %668 = arith.index_cast %667 : i32 to index
    %c0_217 = arith.constant 0 : index
    %c0_218 = arith.constant 0 : index
    %669 = vector.load %arg29[%668, %c0_217, %c0_218] : memref<16x2x32xf32, #tpu.memory_space<vmem>>, vector<1x2x32xf32>
    %670 = vector.shape_cast %669 : vector<1x2x32xf32> to vector<2x32xf32>
    %671 = vector.shape_cast %666 : vector<2x32xf32> to vector<1x2x32xf32>
    tpu.vector_store %arg29[%668, %c0_217, %c0_218], %671 {strides = array<i32>} : memref<16x2x32xf32, #tpu.memory_space<vmem>>, vector<1x2x32xf32>,
    %c14_i32 = arith.constant 14 : i32
    %672 = arith.index_cast %c14_i32 : i32 to index
    %c0_219 = arith.constant 0 : index
    %c0_220 = arith.constant 0 : index
    %673 = vector.load %arg26[%672, %c0_219, %c0_220] : memref<16x2x256xf32, #tpu.memory_space<vmem>>, vector<1x2x256xf32>
    %674 = vector.shape_cast %673 : vector<1x2x256xf32> to vector<2x256xf32>
    %c15_i32_221 = arith.constant 15 : i32
    %675 = arith.subi %c15_i32_221, %c14_i32 : i32
    %676 = arith.index_cast %675 : i32 to index
    %c0_222 = arith.constant 0 : index
    %c0_223 = arith.constant 0 : index
    %677 = vector.load %arg27[%676, %c0_222, %c0_223] : memref<16x2x256xf32, #tpu.memory_space<vmem>>, vector<1x2x256xf32>
    %678 = vector.shape_cast %677 : vector<1x2x256xf32> to vector<2x256xf32>
    %679 = arith.addf %674, %678 : vector<2x256xf32>
    %cst_224 = arith.constant dense<0.000000e+00> : vector<2x256xf32>
    %680 = tpu.matmul %660, %26, %cst_224 {dimension_numbers = #tpu.dot_dimension_numbers<[1], [0], [0], [1], [0, 0, 1, 1], [], []>} : vector<2x64xf32>, vector<64x256xf32>, vector<2x256xf32> -> vector<2x256xf32>
    %681 = arith.addf %679, %680 : vector<2x256xf32>
    %682 = vector.extract_strided_slice %681 {offsets = [0, 0], sizes = [2, 64], strides = [1, 1]} : vector<2x256xf32> to vector<2x64xf32>
    %683 = arith.negf %682 : vector<2x64xf32>
    %684 = math.exp %683 : vector<2x64xf32>
    %cst_225 = arith.constant 1.000000e+00 : f32
    %685 = vector.broadcast %cst_225 : f32 to vector<2x64xf32>
    %686 = arith.addf %685, %684 : vector<2x64xf32>
    %687 = arith.divf %685, %686 : vector<2x64xf32>
    %688 = vector.extract_strided_slice %681 {offsets = [0, 64], sizes = [2, 64], strides = [1, 1]} : vector<2x256xf32> to vector<2x64xf32>
    %689 = arith.negf %688 : vector<2x64xf32>
    %690 = math.exp %689 : vector<2x64xf32>
    %cst_226 = arith.constant 1.000000e+00 : f32
    %691 = vector.broadcast %cst_226 : f32 to vector<2x64xf32>
    %692 = arith.addf %691, %690 : vector<2x64xf32>
    %693 = arith.divf %691, %692 : vector<2x64xf32>
    %694 = vector.extract_strided_slice %681 {offsets = [0, 128], sizes = [2, 64], strides = [1, 1]} : vector<2x256xf32> to vector<2x64xf32>
    %695 = math.tanh %694 : vector<2x64xf32>
    %696 = vector.extract_strided_slice %681 {offsets = [0, 192], sizes = [2, 64], strides = [1, 1]} : vector<2x256xf32> to vector<2x64xf32>
    %697 = arith.negf %696 : vector<2x64xf32>
    %698 = math.exp %697 : vector<2x64xf32>
    %cst_227 = arith.constant 1.000000e+00 : f32
    %699 = vector.broadcast %cst_227 : f32 to vector<2x64xf32>
    %700 = arith.addf %699, %698 : vector<2x64xf32>
    %701 = arith.divf %699, %700 : vector<2x64xf32>
    %702 = arith.mulf %693, %658 : vector<2x64xf32>
    %703 = arith.mulf %687, %695 : vector<2x64xf32>
    %704 = arith.addf %702, %703 : vector<2x64xf32>
    %705 = math.tanh %704 : vector<2x64xf32>
    %706 = arith.mulf %701, %705 : vector<2x64xf32>
    %707 = vector.extract_strided_slice %706 {offsets = [0, 0], sizes = [2, 32], strides = [1, 1]} : vector<2x64xf32> to vector<2x32xf32>
    %708 = arith.index_cast %c14_i32 : i32 to index
    %c0_228 = arith.constant 0 : index
    %c0_229 = arith.constant 0 : index
    %709 = vector.load %arg28[%708, %c0_228, %c0_229] : memref<16x2x32xf32, #tpu.memory_space<vmem>>, vector<1x2x32xf32>
    %710 = vector.shape_cast %709 : vector<1x2x32xf32> to vector<2x32xf32>
    %711 = vector.shape_cast %707 : vector<2x32xf32> to vector<1x2x32xf32>
    tpu.vector_store %arg28[%708, %c0_228, %c0_229], %711 {strides = array<i32>} : memref<16x2x32xf32, #tpu.memory_space<vmem>>, vector<1x2x32xf32>,
    %712 = vector.extract_strided_slice %706 {offsets = [0, 32], sizes = [2, 32], strides = [1, 1]} : vector<2x64xf32> to vector<2x32xf32>
    %c15_i32_230 = arith.constant 15 : i32
    %713 = arith.subi %c15_i32_230, %c14_i32 : i32
    %714 = arith.index_cast %713 : i32 to index
    %c0_231 = arith.constant 0 : index
    %c0_232 = arith.constant 0 : index
    %715 = vector.load %arg29[%714, %c0_231, %c0_232] : memref<16x2x32xf32, #tpu.memory_space<vmem>>, vector<1x2x32xf32>
    %716 = vector.shape_cast %715 : vector<1x2x32xf32> to vector<2x32xf32>
    %717 = vector.shape_cast %712 : vector<2x32xf32> to vector<1x2x32xf32>
    tpu.vector_store %arg29[%714, %c0_231, %c0_232], %717 {strides = array<i32>} : memref<16x2x32xf32, #tpu.memory_space<vmem>>, vector<1x2x32xf32>,
    %c15_i32_233 = arith.constant 15 : i32
    %718 = arith.index_cast %c15_i32_233 : i32 to index
    %c0_234 = arith.constant 0 : index
    %c0_235 = arith.constant 0 : index
    %719 = vector.load %arg26[%718, %c0_234, %c0_235] : memref<16x2x256xf32, #tpu.memory_space<vmem>>, vector<1x2x256xf32>
    %720 = vector.shape_cast %719 : vector<1x2x256xf32> to vector<2x256xf32>
    %c15_i32_236 = arith.constant 15 : i32
    %721 = arith.subi %c15_i32_236, %c15_i32_233 : i32
    %722 = arith.index_cast %721 : i32 to index
    %c0_237 = arith.constant 0 : index
    %c0_238 = arith.constant 0 : index
    %723 = vector.load %arg27[%722, %c0_237, %c0_238] : memref<16x2x256xf32, #tpu.memory_space<vmem>>, vector<1x2x256xf32>
    %724 = vector.shape_cast %723 : vector<1x2x256xf32> to vector<2x256xf32>
    %725 = arith.addf %720, %724 : vector<2x256xf32>
    %cst_239 = arith.constant dense<0.000000e+00> : vector<2x256xf32>
    %726 = tpu.matmul %706, %26, %cst_239 {dimension_numbers = #tpu.dot_dimension_numbers<[1], [0], [0], [1], [0, 0, 1, 1], [], []>} : vector<2x64xf32>, vector<64x256xf32>, vector<2x256xf32> -> vector<2x256xf32>
    %727 = arith.addf %725, %726 : vector<2x256xf32>
    %728 = vector.extract_strided_slice %727 {offsets = [0, 0], sizes = [2, 64], strides = [1, 1]} : vector<2x256xf32> to vector<2x64xf32>
    %729 = arith.negf %728 : vector<2x64xf32>
    %730 = math.exp %729 : vector<2x64xf32>
    %cst_240 = arith.constant 1.000000e+00 : f32
    %731 = vector.broadcast %cst_240 : f32 to vector<2x64xf32>
    %732 = arith.addf %731, %730 : vector<2x64xf32>
    %733 = arith.divf %731, %732 : vector<2x64xf32>
    %734 = vector.extract_strided_slice %727 {offsets = [0, 64], sizes = [2, 64], strides = [1, 1]} : vector<2x256xf32> to vector<2x64xf32>
    %735 = arith.negf %734 : vector<2x64xf32>
    %736 = math.exp %735 : vector<2x64xf32>
    %cst_241 = arith.constant 1.000000e+00 : f32
    %737 = vector.broadcast %cst_241 : f32 to vector<2x64xf32>
    %738 = arith.addf %737, %736 : vector<2x64xf32>
    %739 = arith.divf %737, %738 : vector<2x64xf32>
    %740 = vector.extract_strided_slice %727 {offsets = [0, 128], sizes = [2, 64], strides = [1, 1]} : vector<2x256xf32> to vector<2x64xf32>
    %741 = math.tanh %740 : vector<2x64xf32>
    %742 = vector.extract_strided_slice %727 {offsets = [0, 192], sizes = [2, 64], strides = [1, 1]} : vector<2x256xf32> to vector<2x64xf32>
    %743 = arith.negf %742 : vector<2x64xf32>
    %744 = math.exp %743 : vector<2x64xf32>
    %cst_242 = arith.constant 1.000000e+00 : f32
    %745 = vector.broadcast %cst_242 : f32 to vector<2x64xf32>
    %746 = arith.addf %745, %744 : vector<2x64xf32>
    %747 = arith.divf %745, %746 : vector<2x64xf32>
    %748 = arith.mulf %739, %704 : vector<2x64xf32>
    %749 = arith.mulf %733, %741 : vector<2x64xf32>
    %750 = arith.addf %748, %749 : vector<2x64xf32>
    %751 = math.tanh %750 : vector<2x64xf32>
    %752 = arith.mulf %747, %751 : vector<2x64xf32>
    %753 = vector.extract_strided_slice %752 {offsets = [0, 0], sizes = [2, 32], strides = [1, 1]} : vector<2x64xf32> to vector<2x32xf32>
    %754 = arith.index_cast %c15_i32_233 : i32 to index
    %c0_243 = arith.constant 0 : index
    %c0_244 = arith.constant 0 : index
    %755 = vector.load %arg28[%754, %c0_243, %c0_244] : memref<16x2x32xf32, #tpu.memory_space<vmem>>, vector<1x2x32xf32>
    %756 = vector.shape_cast %755 : vector<1x2x32xf32> to vector<2x32xf32>
    %757 = vector.shape_cast %753 : vector<2x32xf32> to vector<1x2x32xf32>
    tpu.vector_store %arg28[%754, %c0_243, %c0_244], %757 {strides = array<i32>} : memref<16x2x32xf32, #tpu.memory_space<vmem>>, vector<1x2x32xf32>,
    %758 = vector.extract_strided_slice %752 {offsets = [0, 32], sizes = [2, 32], strides = [1, 1]} : vector<2x64xf32> to vector<2x32xf32>
    %c15_i32_245 = arith.constant 15 : i32
    %759 = arith.subi %c15_i32_245, %c15_i32_233 : i32
    %760 = arith.index_cast %759 : i32 to index
    %c0_246 = arith.constant 0 : index
    %c0_247 = arith.constant 0 : index
    %761 = vector.load %arg29[%760, %c0_246, %c0_247] : memref<16x2x32xf32, #tpu.memory_space<vmem>>, vector<1x2x32xf32>
    %762 = vector.shape_cast %761 : vector<1x2x32xf32> to vector<2x32xf32>
    %763 = vector.shape_cast %758 : vector<2x32xf32> to vector<1x2x32xf32>
    tpu.vector_store %arg29[%760, %c0_246, %c0_247], %763 {strides = array<i32>} : memref<16x2x32xf32, #tpu.memory_space<vmem>>, vector<1x2x32xf32>,
    %c16_i32 = arith.constant 16 : i32
    %c0_248 = arith.constant 0 : index
    %c0_249 = arith.constant 0 : index
    %c0_250 = arith.constant 0 : index
    %764 = vector.load %arg28[%c0_248, %c0_249, %c0_250] : memref<16x2x32xf32, #tpu.memory_space<vmem>>, vector<16x2x32xf32>
    %c0_251 = arith.constant 0 : index
    %c0_252 = arith.constant 0 : index
    %c0_253 = arith.constant 0 : index
    %765 = vector.load %arg29[%c0_251, %c0_252, %c0_253] : memref<16x2x32xf32, #tpu.memory_space<vmem>>, vector<16x2x32xf32>
    %766 = tpu.concatenate %764, %765 in 2 : vector<16x2x32xf32>, vector<16x2x32xf32> -> vector<16x2x64xf32>
    %cst_254 = arith.constant dense<0.000000e+00> : vector<2x64xf32>
    %767 = vector.multi_reduction <add>, %766, %cst_254 [0] : vector<16x2x64xf32> to vector<2x64xf32>
    %cst_255 = arith.constant 1.600000e+01 : f32
    %768 = vector.broadcast %cst_255 : f32 to vector<2x64xf32>
    %769 = arith.divf %767, %768 : vector<2x64xf32>
    %c0_256 = arith.constant 0 : index
    %c0_257 = arith.constant 0 : index
    %770 = vector.load %arg7[%c0_256, %c0_257] : memref<64x4xf32, #tpu.memory_space<vmem>>, vector<64x4xf32>
    %cst_258 = arith.constant dense<0.000000e+00> : vector<2x4xf32>
    %771 = tpu.matmul %769, %770, %cst_258 {dimension_numbers = #tpu.dot_dimension_numbers<[1], [0], [0], [1], [0, 0, 1, 1], [], []>} : vector<2x64xf32>, vector<64x4xf32>, vector<2x4xf32> -> vector<2x4xf32>
    %c0_259 = arith.constant 0 : index
    %c0_260 = arith.constant 0 : index
    %772 = vector.load %arg8[%c0_259, %c0_260] : memref<1x4xf32, #tpu.memory_space<vmem>>, vector<1x4xf32>
    %773 = vector.broadcast %772 : vector<1x4xf32> to vector<2x4xf32>
    %774 = arith.addf %771, %773 : vector<2x4xf32>
    %cst_261 = arith.constant 0.000000e+00 : f32
    %775 = vector.broadcast %cst_261 : f32 to vector<2x4xf32>
    %776 = arith.maximumf %774, %775 : vector<2x4xf32>
    %c0_262 = arith.constant 0 : index
    %c0_263 = arith.constant 0 : index
    %777 = vector.load %arg9[%c0_262, %c0_263] : memref<4x64xf32, #tpu.memory_space<vmem>>, vector<4x64xf32>
    %cst_264 = arith.constant dense<0.000000e+00> : vector<2x64xf32>
    %778 = tpu.matmul %776, %777, %cst_264 {dimension_numbers = #tpu.dot_dimension_numbers<[1], [0], [0], [1], [0, 0, 1, 1], [], []>} : vector<2x4xf32>, vector<4x64xf32>, vector<2x64xf32> -> vector<2x64xf32>
    %c0_265 = arith.constant 0 : index
    %c0_266 = arith.constant 0 : index
    %779 = vector.load %arg10[%c0_265, %c0_266] : memref<1x64xf32, #tpu.memory_space<vmem>>, vector<1x64xf32>
    %780 = vector.broadcast %779 : vector<1x64xf32> to vector<2x64xf32>
    %781 = arith.addf %778, %780 : vector<2x64xf32>
    %782 = arith.negf %781 : vector<2x64xf32>
    %783 = math.exp %782 : vector<2x64xf32>
    %cst_267 = arith.constant 1.000000e+00 : f32
    %784 = vector.broadcast %cst_267 : f32 to vector<2x64xf32>
    %785 = arith.addf %784, %783 : vector<2x64xf32>
    %786 = arith.divf %784, %785 : vector<2x64xf32>
    %787 = vector.shape_cast %786 : vector<2x64xf32> to vector<1x2x64xf32>
    %788 = vector.broadcast %787 : vector<1x2x64xf32> to vector<16x2x64xf32>
    %789 = arith.mulf %766, %788 : vector<16x2x64xf32>
    %790 = vector.shape_cast %789 : vector<16x2x64xf32> to vector<32x64xf32>
    %c0_268 = arith.constant 0 : index
    %c0_269 = arith.constant 0 : index
    %791 = vector.load %arg11[%c0_268, %c0_269] : memref<64x256xf32, #tpu.memory_space<vmem>>, vector<64x256xf32>
    %cst_270 = arith.constant dense<0.000000e+00> : vector<32x256xf32>
    %792 = tpu.matmul %790, %791, %cst_270 {dimension_numbers = #tpu.dot_dimension_numbers<[1], [0], [0], [1], [0, 0, 1, 1], [], []>} : vector<32x64xf32>, vector<64x256xf32>, vector<32x256xf32> -> vector<32x256xf32>
    %c0_271 = arith.constant 0 : index
    %c0_272 = arith.constant 0 : index
    %793 = vector.load %arg14[%c0_271, %c0_272] : memref<1x256xf32, #tpu.memory_space<vmem>>, vector<1x256xf32>
    %794 = vector.broadcast %793 : vector<1x256xf32> to vector<32x256xf32>
    %795 = arith.addf %792, %794 : vector<32x256xf32>
    %796 = vector.shape_cast %795 : vector<32x256xf32> to vector<16x2x256xf32>
    %c0_273 = arith.constant 0 : index
    %c0_274 = arith.constant 0 : index
    %c0_275 = arith.constant 0 : index
    %797 = vector.load %arg26[%c0_273, %c0_274, %c0_275] : memref<16x2x256xf32, #tpu.memory_space<vmem>>, vector<16x2x256xf32>
    tpu.vector_store %arg26[%c0_273, %c0_274, %c0_275], %796 {strides = array<i32>} : memref<16x2x256xf32, #tpu.memory_space<vmem>>, vector<16x2x256xf32>,
    %c0_276 = arith.constant 0 : index
    %c0_277 = arith.constant 0 : index
    %798 = vector.load %arg12[%c0_276, %c0_277] : memref<64x256xf32, #tpu.memory_space<vmem>>, vector<64x256xf32>
    %cst_278 = arith.constant dense<0.000000e+00> : vector<32x256xf32>
    %799 = tpu.matmul %790, %798, %cst_278 {dimension_numbers = #tpu.dot_dimension_numbers<[1], [0], [0], [1], [0, 0, 1, 1], [], []>} : vector<32x64xf32>, vector<64x256xf32>, vector<32x256xf32> -> vector<32x256xf32>
    %800 = vector.shape_cast %799 : vector<32x256xf32> to vector<16x2x256xf32>
    %c0_279 = arith.constant 0 : index
    %c0_280 = arith.constant 0 : index
    %c0_281 = arith.constant 0 : index
    %801 = vector.load %arg27[%c0_279, %c0_280, %c0_281] : memref<16x2x256xf32, #tpu.memory_space<vmem>>, vector<16x2x256xf32>
    tpu.vector_store %arg27[%c0_279, %c0_280, %c0_281], %800 {strides = array<i32>} : memref<16x2x256xf32, #tpu.memory_space<vmem>>, vector<16x2x256xf32>,
    %c0_282 = arith.constant 0 : index
    %c0_283 = arith.constant 0 : index
    %802 = vector.load %arg13[%c0_282, %c0_283] : memref<64x256xf32, #tpu.memory_space<vmem>>, vector<64x256xf32>
    %cst_284 = arith.constant 0.000000e+00 : f32
    %803 = vector.broadcast %cst_284 : f32 to vector<2x64xf32>
    %c0_i32_285 = arith.constant 0 : i32
    %804 = arith.index_cast %c0_i32_285 : i32 to index
    %c0_286 = arith.constant 0 : index
    %c0_287 = arith.constant 0 : index
    %805 = vector.load %arg26[%804, %c0_286, %c0_287] : memref<16x2x256xf32, #tpu.memory_space<vmem>>, vector<1x2x256xf32>
    %806 = vector.shape_cast %805 : vector<1x2x256xf32> to vector<2x256xf32>
    %c15_i32_288 = arith.constant 15 : i32
    %807 = arith.subi %c15_i32_288, %c0_i32_285 : i32
    %808 = arith.index_cast %807 : i32 to index
    %c0_289 = arith.constant 0 : index
    %c0_290 = arith.constant 0 : index
    %809 = vector.load %arg27[%808, %c0_289, %c0_290] : memref<16x2x256xf32, #tpu.memory_space<vmem>>, vector<1x2x256xf32>
    %810 = vector.shape_cast %809 : vector<1x2x256xf32> to vector<2x256xf32>
    %811 = arith.addf %806, %810 : vector<2x256xf32>
    %cst_291 = arith.constant dense<0.000000e+00> : vector<2x256xf32>
    %812 = tpu.matmul %803, %802, %cst_291 {dimension_numbers = #tpu.dot_dimension_numbers<[1], [0], [0], [1], [0, 0, 1, 1], [], []>} : vector<2x64xf32>, vector<64x256xf32>, vector<2x256xf32> -> vector<2x256xf32>
    %813 = arith.addf %811, %812 : vector<2x256xf32>
    %814 = vector.extract_strided_slice %813 {offsets = [0, 0], sizes = [2, 64], strides = [1, 1]} : vector<2x256xf32> to vector<2x64xf32>
    %815 = arith.negf %814 : vector<2x64xf32>
    %816 = math.exp %815 : vector<2x64xf32>
    %cst_292 = arith.constant 1.000000e+00 : f32
    %817 = vector.broadcast %cst_292 : f32 to vector<2x64xf32>
    %818 = arith.addf %817, %816 : vector<2x64xf32>
    %819 = arith.divf %817, %818 : vector<2x64xf32>
    %820 = vector.extract_strided_slice %813 {offsets = [0, 64], sizes = [2, 64], strides = [1, 1]} : vector<2x256xf32> to vector<2x64xf32>
    %821 = arith.negf %820 : vector<2x64xf32>
    %822 = math.exp %821 : vector<2x64xf32>
    %cst_293 = arith.constant 1.000000e+00 : f32
    %823 = vector.broadcast %cst_293 : f32 to vector<2x64xf32>
    %824 = arith.addf %823, %822 : vector<2x64xf32>
    %825 = arith.divf %823, %824 : vector<2x64xf32>
    %826 = vector.extract_strided_slice %813 {offsets = [0, 128], sizes = [2, 64], strides = [1, 1]} : vector<2x256xf32> to vector<2x64xf32>
    %827 = math.tanh %826 : vector<2x64xf32>
    %828 = vector.extract_strided_slice %813 {offsets = [0, 192], sizes = [2, 64], strides = [1, 1]} : vector<2x256xf32> to vector<2x64xf32>
    %829 = arith.negf %828 : vector<2x64xf32>
    %830 = math.exp %829 : vector<2x64xf32>
    %cst_294 = arith.constant 1.000000e+00 : f32
    %831 = vector.broadcast %cst_294 : f32 to vector<2x64xf32>
    %832 = arith.addf %831, %830 : vector<2x64xf32>
    %833 = arith.divf %831, %832 : vector<2x64xf32>
    %834 = arith.mulf %825, %803 : vector<2x64xf32>
    %835 = arith.mulf %819, %827 : vector<2x64xf32>
    %836 = arith.addf %834, %835 : vector<2x64xf32>
    %837 = math.tanh %836 : vector<2x64xf32>
    %838 = arith.mulf %833, %837 : vector<2x64xf32>
    %839 = vector.extract_strided_slice %838 {offsets = [0, 0], sizes = [2, 32], strides = [1, 1]} : vector<2x64xf32> to vector<2x32xf32>
    %840 = arith.index_cast %c0_i32_285 : i32 to index
    %c0_295 = arith.constant 0 : index
    %c0_296 = arith.constant 0 : index
    %841 = vector.load %arg28[%840, %c0_295, %c0_296] : memref<16x2x32xf32, #tpu.memory_space<vmem>>, vector<1x2x32xf32>
    %842 = vector.shape_cast %841 : vector<1x2x32xf32> to vector<2x32xf32>
    %843 = vector.shape_cast %839 : vector<2x32xf32> to vector<1x2x32xf32>
    tpu.vector_store %arg28[%840, %c0_295, %c0_296], %843 {strides = array<i32>} : memref<16x2x32xf32, #tpu.memory_space<vmem>>, vector<1x2x32xf32>,
    %844 = vector.extract_strided_slice %838 {offsets = [0, 32], sizes = [2, 32], strides = [1, 1]} : vector<2x64xf32> to vector<2x32xf32>
    %c15_i32_297 = arith.constant 15 : i32
    %845 = arith.subi %c15_i32_297, %c0_i32_285 : i32
    %846 = arith.index_cast %845 : i32 to index
    %c0_298 = arith.constant 0 : index
    %c0_299 = arith.constant 0 : index
    %847 = vector.load %arg29[%846, %c0_298, %c0_299] : memref<16x2x32xf32, #tpu.memory_space<vmem>>, vector<1x2x32xf32>
    %848 = vector.shape_cast %847 : vector<1x2x32xf32> to vector<2x32xf32>
    %849 = vector.shape_cast %844 : vector<2x32xf32> to vector<1x2x32xf32>
    tpu.vector_store %arg29[%846, %c0_298, %c0_299], %849 {strides = array<i32>} : memref<16x2x32xf32, #tpu.memory_space<vmem>>, vector<1x2x32xf32>,
    %c1_i32_300 = arith.constant 1 : i32
    %850 = arith.index_cast %c1_i32_300 : i32 to index
    %c0_301 = arith.constant 0 : index
    %c0_302 = arith.constant 0 : index
    %851 = vector.load %arg26[%850, %c0_301, %c0_302] : memref<16x2x256xf32, #tpu.memory_space<vmem>>, vector<1x2x256xf32>
    %852 = vector.shape_cast %851 : vector<1x2x256xf32> to vector<2x256xf32>
    %c15_i32_303 = arith.constant 15 : i32
    %853 = arith.subi %c15_i32_303, %c1_i32_300 : i32
    %854 = arith.index_cast %853 : i32 to index
    %c0_304 = arith.constant 0 : index
    %c0_305 = arith.constant 0 : index
    %855 = vector.load %arg27[%854, %c0_304, %c0_305] : memref<16x2x256xf32, #tpu.memory_space<vmem>>, vector<1x2x256xf32>
    %856 = vector.shape_cast %855 : vector<1x2x256xf32> to vector<2x256xf32>
    %857 = arith.addf %852, %856 : vector<2x256xf32>
    %cst_306 = arith.constant dense<0.000000e+00> : vector<2x256xf32>
    %858 = tpu.matmul %838, %802, %cst_306 {dimension_numbers = #tpu.dot_dimension_numbers<[1], [0], [0], [1], [0, 0, 1, 1], [], []>} : vector<2x64xf32>, vector<64x256xf32>, vector<2x256xf32> -> vector<2x256xf32>
    %859 = arith.addf %857, %858 : vector<2x256xf32>
    %860 = vector.extract_strided_slice %859 {offsets = [0, 0], sizes = [2, 64], strides = [1, 1]} : vector<2x256xf32> to vector<2x64xf32>
    %861 = arith.negf %860 : vector<2x64xf32>
    %862 = math.exp %861 : vector<2x64xf32>
    %cst_307 = arith.constant 1.000000e+00 : f32
    %863 = vector.broadcast %cst_307 : f32 to vector<2x64xf32>
    %864 = arith.addf %863, %862 : vector<2x64xf32>
    %865 = arith.divf %863, %864 : vector<2x64xf32>
    %866 = vector.extract_strided_slice %859 {offsets = [0, 64], sizes = [2, 64], strides = [1, 1]} : vector<2x256xf32> to vector<2x64xf32>
    %867 = arith.negf %866 : vector<2x64xf32>
    %868 = math.exp %867 : vector<2x64xf32>
    %cst_308 = arith.constant 1.000000e+00 : f32
    %869 = vector.broadcast %cst_308 : f32 to vector<2x64xf32>
    %870 = arith.addf %869, %868 : vector<2x64xf32>
    %871 = arith.divf %869, %870 : vector<2x64xf32>
    %872 = vector.extract_strided_slice %859 {offsets = [0, 128], sizes = [2, 64], strides = [1, 1]} : vector<2x256xf32> to vector<2x64xf32>
    %873 = math.tanh %872 : vector<2x64xf32>
    %874 = vector.extract_strided_slice %859 {offsets = [0, 192], sizes = [2, 64], strides = [1, 1]} : vector<2x256xf32> to vector<2x64xf32>
    %875 = arith.negf %874 : vector<2x64xf32>
    %876 = math.exp %875 : vector<2x64xf32>
    %cst_309 = arith.constant 1.000000e+00 : f32
    %877 = vector.broadcast %cst_309 : f32 to vector<2x64xf32>
    %878 = arith.addf %877, %876 : vector<2x64xf32>
    %879 = arith.divf %877, %878 : vector<2x64xf32>
    %880 = arith.mulf %871, %836 : vector<2x64xf32>
    %881 = arith.mulf %865, %873 : vector<2x64xf32>
    %882 = arith.addf %880, %881 : vector<2x64xf32>
    %883 = math.tanh %882 : vector<2x64xf32>
    %884 = arith.mulf %879, %883 : vector<2x64xf32>
    %885 = vector.extract_strided_slice %884 {offsets = [0, 0], sizes = [2, 32], strides = [1, 1]} : vector<2x64xf32> to vector<2x32xf32>
    %886 = arith.index_cast %c1_i32_300 : i32 to index
    %c0_310 = arith.constant 0 : index
    %c0_311 = arith.constant 0 : index
    %887 = vector.load %arg28[%886, %c0_310, %c0_311] : memref<16x2x32xf32, #tpu.memory_space<vmem>>, vector<1x2x32xf32>
    %888 = vector.shape_cast %887 : vector<1x2x32xf32> to vector<2x32xf32>
    %889 = vector.shape_cast %885 : vector<2x32xf32> to vector<1x2x32xf32>
    tpu.vector_store %arg28[%886, %c0_310, %c0_311], %889 {strides = array<i32>} : memref<16x2x32xf32, #tpu.memory_space<vmem>>, vector<1x2x32xf32>,
    %890 = vector.extract_strided_slice %884 {offsets = [0, 32], sizes = [2, 32], strides = [1, 1]} : vector<2x64xf32> to vector<2x32xf32>
    %c15_i32_312 = arith.constant 15 : i32
    %891 = arith.subi %c15_i32_312, %c1_i32_300 : i32
    %892 = arith.index_cast %891 : i32 to index
    %c0_313 = arith.constant 0 : index
    %c0_314 = arith.constant 0 : index
    %893 = vector.load %arg29[%892, %c0_313, %c0_314] : memref<16x2x32xf32, #tpu.memory_space<vmem>>, vector<1x2x32xf32>
    %894 = vector.shape_cast %893 : vector<1x2x32xf32> to vector<2x32xf32>
    %895 = vector.shape_cast %890 : vector<2x32xf32> to vector<1x2x32xf32>
    tpu.vector_store %arg29[%892, %c0_313, %c0_314], %895 {strides = array<i32>} : memref<16x2x32xf32, #tpu.memory_space<vmem>>, vector<1x2x32xf32>,
    %c2_i32_315 = arith.constant 2 : i32
    %896 = arith.index_cast %c2_i32_315 : i32 to index
    %c0_316 = arith.constant 0 : index
    %c0_317 = arith.constant 0 : index
    %897 = vector.load %arg26[%896, %c0_316, %c0_317] : memref<16x2x256xf32, #tpu.memory_space<vmem>>, vector<1x2x256xf32>
    %898 = vector.shape_cast %897 : vector<1x2x256xf32> to vector<2x256xf32>
    %c15_i32_318 = arith.constant 15 : i32
    %899 = arith.subi %c15_i32_318, %c2_i32_315 : i32
    %900 = arith.index_cast %899 : i32 to index
    %c0_319 = arith.constant 0 : index
    %c0_320 = arith.constant 0 : index
    %901 = vector.load %arg27[%900, %c0_319, %c0_320] : memref<16x2x256xf32, #tpu.memory_space<vmem>>, vector<1x2x256xf32>
    %902 = vector.shape_cast %901 : vector<1x2x256xf32> to vector<2x256xf32>
    %903 = arith.addf %898, %902 : vector<2x256xf32>
    %cst_321 = arith.constant dense<0.000000e+00> : vector<2x256xf32>
    %904 = tpu.matmul %884, %802, %cst_321 {dimension_numbers = #tpu.dot_dimension_numbers<[1], [0], [0], [1], [0, 0, 1, 1], [], []>} : vector<2x64xf32>, vector<64x256xf32>, vector<2x256xf32> -> vector<2x256xf32>
    %905 = arith.addf %903, %904 : vector<2x256xf32>
    %906 = vector.extract_strided_slice %905 {offsets = [0, 0], sizes = [2, 64], strides = [1, 1]} : vector<2x256xf32> to vector<2x64xf32>
    %907 = arith.negf %906 : vector<2x64xf32>
    %908 = math.exp %907 : vector<2x64xf32>
    %cst_322 = arith.constant 1.000000e+00 : f32
    %909 = vector.broadcast %cst_322 : f32 to vector<2x64xf32>
    %910 = arith.addf %909, %908 : vector<2x64xf32>
    %911 = arith.divf %909, %910 : vector<2x64xf32>
    %912 = vector.extract_strided_slice %905 {offsets = [0, 64], sizes = [2, 64], strides = [1, 1]} : vector<2x256xf32> to vector<2x64xf32>
    %913 = arith.negf %912 : vector<2x64xf32>
    %914 = math.exp %913 : vector<2x64xf32>
    %cst_323 = arith.constant 1.000000e+00 : f32
    %915 = vector.broadcast %cst_323 : f32 to vector<2x64xf32>
    %916 = arith.addf %915, %914 : vector<2x64xf32>
    %917 = arith.divf %915, %916 : vector<2x64xf32>
    %918 = vector.extract_strided_slice %905 {offsets = [0, 128], sizes = [2, 64], strides = [1, 1]} : vector<2x256xf32> to vector<2x64xf32>
    %919 = math.tanh %918 : vector<2x64xf32>
    %920 = vector.extract_strided_slice %905 {offsets = [0, 192], sizes = [2, 64], strides = [1, 1]} : vector<2x256xf32> to vector<2x64xf32>
    %921 = arith.negf %920 : vector<2x64xf32>
    %922 = math.exp %921 : vector<2x64xf32>
    %cst_324 = arith.constant 1.000000e+00 : f32
    %923 = vector.broadcast %cst_324 : f32 to vector<2x64xf32>
    %924 = arith.addf %923, %922 : vector<2x64xf32>
    %925 = arith.divf %923, %924 : vector<2x64xf32>
    %926 = arith.mulf %917, %882 : vector<2x64xf32>
    %927 = arith.mulf %911, %919 : vector<2x64xf32>
    %928 = arith.addf %926, %927 : vector<2x64xf32>
    %929 = math.tanh %928 : vector<2x64xf32>
    %930 = arith.mulf %925, %929 : vector<2x64xf32>
    %931 = vector.extract_strided_slice %930 {offsets = [0, 0], sizes = [2, 32], strides = [1, 1]} : vector<2x64xf32> to vector<2x32xf32>
    %932 = arith.index_cast %c2_i32_315 : i32 to index
    %c0_325 = arith.constant 0 : index
    %c0_326 = arith.constant 0 : index
    %933 = vector.load %arg28[%932, %c0_325, %c0_326] : memref<16x2x32xf32, #tpu.memory_space<vmem>>, vector<1x2x32xf32>
    %934 = vector.shape_cast %933 : vector<1x2x32xf32> to vector<2x32xf32>
    %935 = vector.shape_cast %931 : vector<2x32xf32> to vector<1x2x32xf32>
    tpu.vector_store %arg28[%932, %c0_325, %c0_326], %935 {strides = array<i32>} : memref<16x2x32xf32, #tpu.memory_space<vmem>>, vector<1x2x32xf32>,
    %936 = vector.extract_strided_slice %930 {offsets = [0, 32], sizes = [2, 32], strides = [1, 1]} : vector<2x64xf32> to vector<2x32xf32>
    %c15_i32_327 = arith.constant 15 : i32
    %937 = arith.subi %c15_i32_327, %c2_i32_315 : i32
    %938 = arith.index_cast %937 : i32 to index
    %c0_328 = arith.constant 0 : index
    %c0_329 = arith.constant 0 : index
    %939 = vector.load %arg29[%938, %c0_328, %c0_329] : memref<16x2x32xf32, #tpu.memory_space<vmem>>, vector<1x2x32xf32>
    %940 = vector.shape_cast %939 : vector<1x2x32xf32> to vector<2x32xf32>
    %941 = vector.shape_cast %936 : vector<2x32xf32> to vector<1x2x32xf32>
    tpu.vector_store %arg29[%938, %c0_328, %c0_329], %941 {strides = array<i32>} : memref<16x2x32xf32, #tpu.memory_space<vmem>>, vector<1x2x32xf32>,
    %c3_i32_330 = arith.constant 3 : i32
    %942 = arith.index_cast %c3_i32_330 : i32 to index
    %c0_331 = arith.constant 0 : index
    %c0_332 = arith.constant 0 : index
    %943 = vector.load %arg26[%942, %c0_331, %c0_332] : memref<16x2x256xf32, #tpu.memory_space<vmem>>, vector<1x2x256xf32>
    %944 = vector.shape_cast %943 : vector<1x2x256xf32> to vector<2x256xf32>
    %c15_i32_333 = arith.constant 15 : i32
    %945 = arith.subi %c15_i32_333, %c3_i32_330 : i32
    %946 = arith.index_cast %945 : i32 to index
    %c0_334 = arith.constant 0 : index
    %c0_335 = arith.constant 0 : index
    %947 = vector.load %arg27[%946, %c0_334, %c0_335] : memref<16x2x256xf32, #tpu.memory_space<vmem>>, vector<1x2x256xf32>
    %948 = vector.shape_cast %947 : vector<1x2x256xf32> to vector<2x256xf32>
    %949 = arith.addf %944, %948 : vector<2x256xf32>
    %cst_336 = arith.constant dense<0.000000e+00> : vector<2x256xf32>
    %950 = tpu.matmul %930, %802, %cst_336 {dimension_numbers = #tpu.dot_dimension_numbers<[1], [0], [0], [1], [0, 0, 1, 1], [], []>} : vector<2x64xf32>, vector<64x256xf32>, vector<2x256xf32> -> vector<2x256xf32>
    %951 = arith.addf %949, %950 : vector<2x256xf32>
    %952 = vector.extract_strided_slice %951 {offsets = [0, 0], sizes = [2, 64], strides = [1, 1]} : vector<2x256xf32> to vector<2x64xf32>
    %953 = arith.negf %952 : vector<2x64xf32>
    %954 = math.exp %953 : vector<2x64xf32>
    %cst_337 = arith.constant 1.000000e+00 : f32
    %955 = vector.broadcast %cst_337 : f32 to vector<2x64xf32>
    %956 = arith.addf %955, %954 : vector<2x64xf32>
    %957 = arith.divf %955, %956 : vector<2x64xf32>
    %958 = vector.extract_strided_slice %951 {offsets = [0, 64], sizes = [2, 64], strides = [1, 1]} : vector<2x256xf32> to vector<2x64xf32>
    %959 = arith.negf %958 : vector<2x64xf32>
    %960 = math.exp %959 : vector<2x64xf32>
    %cst_338 = arith.constant 1.000000e+00 : f32
    %961 = vector.broadcast %cst_338 : f32 to vector<2x64xf32>
    %962 = arith.addf %961, %960 : vector<2x64xf32>
    %963 = arith.divf %961, %962 : vector<2x64xf32>
    %964 = vector.extract_strided_slice %951 {offsets = [0, 128], sizes = [2, 64], strides = [1, 1]} : vector<2x256xf32> to vector<2x64xf32>
    %965 = math.tanh %964 : vector<2x64xf32>
    %966 = vector.extract_strided_slice %951 {offsets = [0, 192], sizes = [2, 64], strides = [1, 1]} : vector<2x256xf32> to vector<2x64xf32>
    %967 = arith.negf %966 : vector<2x64xf32>
    %968 = math.exp %967 : vector<2x64xf32>
    %cst_339 = arith.constant 1.000000e+00 : f32
    %969 = vector.broadcast %cst_339 : f32 to vector<2x64xf32>
    %970 = arith.addf %969, %968 : vector<2x64xf32>
    %971 = arith.divf %969, %970 : vector<2x64xf32>
    %972 = arith.mulf %963, %928 : vector<2x64xf32>
    %973 = arith.mulf %957, %965 : vector<2x64xf32>
    %974 = arith.addf %972, %973 : vector<2x64xf32>
    %975 = math.tanh %974 : vector<2x64xf32>
    %976 = arith.mulf %971, %975 : vector<2x64xf32>
    %977 = vector.extract_strided_slice %976 {offsets = [0, 0], sizes = [2, 32], strides = [1, 1]} : vector<2x64xf32> to vector<2x32xf32>
    %978 = arith.index_cast %c3_i32_330 : i32 to index
    %c0_340 = arith.constant 0 : index
    %c0_341 = arith.constant 0 : index
    %979 = vector.load %arg28[%978, %c0_340, %c0_341] : memref<16x2x32xf32, #tpu.memory_space<vmem>>, vector<1x2x32xf32>
    %980 = vector.shape_cast %979 : vector<1x2x32xf32> to vector<2x32xf32>
    %981 = vector.shape_cast %977 : vector<2x32xf32> to vector<1x2x32xf32>
    tpu.vector_store %arg28[%978, %c0_340, %c0_341], %981 {strides = array<i32>} : memref<16x2x32xf32, #tpu.memory_space<vmem>>, vector<1x2x32xf32>,
    %982 = vector.extract_strided_slice %976 {offsets = [0, 32], sizes = [2, 32], strides = [1, 1]} : vector<2x64xf32> to vector<2x32xf32>
    %c15_i32_342 = arith.constant 15 : i32
    %983 = arith.subi %c15_i32_342, %c3_i32_330 : i32
    %984 = arith.index_cast %983 : i32 to index
    %c0_343 = arith.constant 0 : index
    %c0_344 = arith.constant 0 : index
    %985 = vector.load %arg29[%984, %c0_343, %c0_344] : memref<16x2x32xf32, #tpu.memory_space<vmem>>, vector<1x2x32xf32>
    %986 = vector.shape_cast %985 : vector<1x2x32xf32> to vector<2x32xf32>
    %987 = vector.shape_cast %982 : vector<2x32xf32> to vector<1x2x32xf32>
    tpu.vector_store %arg29[%984, %c0_343, %c0_344], %987 {strides = array<i32>} : memref<16x2x32xf32, #tpu.memory_space<vmem>>, vector<1x2x32xf32>,
    %c4_i32_345 = arith.constant 4 : i32
    %988 = arith.index_cast %c4_i32_345 : i32 to index
    %c0_346 = arith.constant 0 : index
    %c0_347 = arith.constant 0 : index
    %989 = vector.load %arg26[%988, %c0_346, %c0_347] : memref<16x2x256xf32, #tpu.memory_space<vmem>>, vector<1x2x256xf32>
    %990 = vector.shape_cast %989 : vector<1x2x256xf32> to vector<2x256xf32>
    %c15_i32_348 = arith.constant 15 : i32
    %991 = arith.subi %c15_i32_348, %c4_i32_345 : i32
    %992 = arith.index_cast %991 : i32 to index
    %c0_349 = arith.constant 0 : index
    %c0_350 = arith.constant 0 : index
    %993 = vector.load %arg27[%992, %c0_349, %c0_350] : memref<16x2x256xf32, #tpu.memory_space<vmem>>, vector<1x2x256xf32>
    %994 = vector.shape_cast %993 : vector<1x2x256xf32> to vector<2x256xf32>
    %995 = arith.addf %990, %994 : vector<2x256xf32>
    %cst_351 = arith.constant dense<0.000000e+00> : vector<2x256xf32>
    %996 = tpu.matmul %976, %802, %cst_351 {dimension_numbers = #tpu.dot_dimension_numbers<[1], [0], [0], [1], [0, 0, 1, 1], [], []>} : vector<2x64xf32>, vector<64x256xf32>, vector<2x256xf32> -> vector<2x256xf32>
    %997 = arith.addf %995, %996 : vector<2x256xf32>
    %998 = vector.extract_strided_slice %997 {offsets = [0, 0], sizes = [2, 64], strides = [1, 1]} : vector<2x256xf32> to vector<2x64xf32>
    %999 = arith.negf %998 : vector<2x64xf32>
    %1000 = math.exp %999 : vector<2x64xf32>
    %cst_352 = arith.constant 1.000000e+00 : f32
    %1001 = vector.broadcast %cst_352 : f32 to vector<2x64xf32>
    %1002 = arith.addf %1001, %1000 : vector<2x64xf32>
    %1003 = arith.divf %1001, %1002 : vector<2x64xf32>
    %1004 = vector.extract_strided_slice %997 {offsets = [0, 64], sizes = [2, 64], strides = [1, 1]} : vector<2x256xf32> to vector<2x64xf32>
    %1005 = arith.negf %1004 : vector<2x64xf32>
    %1006 = math.exp %1005 : vector<2x64xf32>
    %cst_353 = arith.constant 1.000000e+00 : f32
    %1007 = vector.broadcast %cst_353 : f32 to vector<2x64xf32>
    %1008 = arith.addf %1007, %1006 : vector<2x64xf32>
    %1009 = arith.divf %1007, %1008 : vector<2x64xf32>
    %1010 = vector.extract_strided_slice %997 {offsets = [0, 128], sizes = [2, 64], strides = [1, 1]} : vector<2x256xf32> to vector<2x64xf32>
    %1011 = math.tanh %1010 : vector<2x64xf32>
    %1012 = vector.extract_strided_slice %997 {offsets = [0, 192], sizes = [2, 64], strides = [1, 1]} : vector<2x256xf32> to vector<2x64xf32>
    %1013 = arith.negf %1012 : vector<2x64xf32>
    %1014 = math.exp %1013 : vector<2x64xf32>
    %cst_354 = arith.constant 1.000000e+00 : f32
    %1015 = vector.broadcast %cst_354 : f32 to vector<2x64xf32>
    %1016 = arith.addf %1015, %1014 : vector<2x64xf32>
    %1017 = arith.divf %1015, %1016 : vector<2x64xf32>
    %1018 = arith.mulf %1009, %974 : vector<2x64xf32>
    %1019 = arith.mulf %1003, %1011 : vector<2x64xf32>
    %1020 = arith.addf %1018, %1019 : vector<2x64xf32>
    %1021 = math.tanh %1020 : vector<2x64xf32>
    %1022 = arith.mulf %1017, %1021 : vector<2x64xf32>
    %1023 = vector.extract_strided_slice %1022 {offsets = [0, 0], sizes = [2, 32], strides = [1, 1]} : vector<2x64xf32> to vector<2x32xf32>
    %1024 = arith.index_cast %c4_i32_345 : i32 to index
    %c0_355 = arith.constant 0 : index
    %c0_356 = arith.constant 0 : index
    %1025 = vector.load %arg28[%1024, %c0_355, %c0_356] : memref<16x2x32xf32, #tpu.memory_space<vmem>>, vector<1x2x32xf32>
    %1026 = vector.shape_cast %1025 : vector<1x2x32xf32> to vector<2x32xf32>
    %1027 = vector.shape_cast %1023 : vector<2x32xf32> to vector<1x2x32xf32>
    tpu.vector_store %arg28[%1024, %c0_355, %c0_356], %1027 {strides = array<i32>} : memref<16x2x32xf32, #tpu.memory_space<vmem>>, vector<1x2x32xf32>,
    %1028 = vector.extract_strided_slice %1022 {offsets = [0, 32], sizes = [2, 32], strides = [1, 1]} : vector<2x64xf32> to vector<2x32xf32>
    %c15_i32_357 = arith.constant 15 : i32
    %1029 = arith.subi %c15_i32_357, %c4_i32_345 : i32
    %1030 = arith.index_cast %1029 : i32 to index
    %c0_358 = arith.constant 0 : index
    %c0_359 = arith.constant 0 : index
    %1031 = vector.load %arg29[%1030, %c0_358, %c0_359] : memref<16x2x32xf32, #tpu.memory_space<vmem>>, vector<1x2x32xf32>
    %1032 = vector.shape_cast %1031 : vector<1x2x32xf32> to vector<2x32xf32>
    %1033 = vector.shape_cast %1028 : vector<2x32xf32> to vector<1x2x32xf32>
    tpu.vector_store %arg29[%1030, %c0_358, %c0_359], %1033 {strides = array<i32>} : memref<16x2x32xf32, #tpu.memory_space<vmem>>, vector<1x2x32xf32>,
    %c5_i32_360 = arith.constant 5 : i32
    %1034 = arith.index_cast %c5_i32_360 : i32 to index
    %c0_361 = arith.constant 0 : index
    %c0_362 = arith.constant 0 : index
    %1035 = vector.load %arg26[%1034, %c0_361, %c0_362] : memref<16x2x256xf32, #tpu.memory_space<vmem>>, vector<1x2x256xf32>
    %1036 = vector.shape_cast %1035 : vector<1x2x256xf32> to vector<2x256xf32>
    %c15_i32_363 = arith.constant 15 : i32
    %1037 = arith.subi %c15_i32_363, %c5_i32_360 : i32
    %1038 = arith.index_cast %1037 : i32 to index
    %c0_364 = arith.constant 0 : index
    %c0_365 = arith.constant 0 : index
    %1039 = vector.load %arg27[%1038, %c0_364, %c0_365] : memref<16x2x256xf32, #tpu.memory_space<vmem>>, vector<1x2x256xf32>
    %1040 = vector.shape_cast %1039 : vector<1x2x256xf32> to vector<2x256xf32>
    %1041 = arith.addf %1036, %1040 : vector<2x256xf32>
    %cst_366 = arith.constant dense<0.000000e+00> : vector<2x256xf32>
    %1042 = tpu.matmul %1022, %802, %cst_366 {dimension_numbers = #tpu.dot_dimension_numbers<[1], [0], [0], [1], [0, 0, 1, 1], [], []>} : vector<2x64xf32>, vector<64x256xf32>, vector<2x256xf32> -> vector<2x256xf32>
    %1043 = arith.addf %1041, %1042 : vector<2x256xf32>
    %1044 = vector.extract_strided_slice %1043 {offsets = [0, 0], sizes = [2, 64], strides = [1, 1]} : vector<2x256xf32> to vector<2x64xf32>
    %1045 = arith.negf %1044 : vector<2x64xf32>
    %1046 = math.exp %1045 : vector<2x64xf32>
    %cst_367 = arith.constant 1.000000e+00 : f32
    %1047 = vector.broadcast %cst_367 : f32 to vector<2x64xf32>
    %1048 = arith.addf %1047, %1046 : vector<2x64xf32>
    %1049 = arith.divf %1047, %1048 : vector<2x64xf32>
    %1050 = vector.extract_strided_slice %1043 {offsets = [0, 64], sizes = [2, 64], strides = [1, 1]} : vector<2x256xf32> to vector<2x64xf32>
    %1051 = arith.negf %1050 : vector<2x64xf32>
    %1052 = math.exp %1051 : vector<2x64xf32>
    %cst_368 = arith.constant 1.000000e+00 : f32
    %1053 = vector.broadcast %cst_368 : f32 to vector<2x64xf32>
    %1054 = arith.addf %1053, %1052 : vector<2x64xf32>
    %1055 = arith.divf %1053, %1054 : vector<2x64xf32>
    %1056 = vector.extract_strided_slice %1043 {offsets = [0, 128], sizes = [2, 64], strides = [1, 1]} : vector<2x256xf32> to vector<2x64xf32>
    %1057 = math.tanh %1056 : vector<2x64xf32>
    %1058 = vector.extract_strided_slice %1043 {offsets = [0, 192], sizes = [2, 64], strides = [1, 1]} : vector<2x256xf32> to vector<2x64xf32>
    %1059 = arith.negf %1058 : vector<2x64xf32>
    %1060 = math.exp %1059 : vector<2x64xf32>
    %cst_369 = arith.constant 1.000000e+00 : f32
    %1061 = vector.broadcast %cst_369 : f32 to vector<2x64xf32>
    %1062 = arith.addf %1061, %1060 : vector<2x64xf32>
    %1063 = arith.divf %1061, %1062 : vector<2x64xf32>
    %1064 = arith.mulf %1055, %1020 : vector<2x64xf32>
    %1065 = arith.mulf %1049, %1057 : vector<2x64xf32>
    %1066 = arith.addf %1064, %1065 : vector<2x64xf32>
    %1067 = math.tanh %1066 : vector<2x64xf32>
    %1068 = arith.mulf %1063, %1067 : vector<2x64xf32>
    %1069 = vector.extract_strided_slice %1068 {offsets = [0, 0], sizes = [2, 32], strides = [1, 1]} : vector<2x64xf32> to vector<2x32xf32>
    %1070 = arith.index_cast %c5_i32_360 : i32 to index
    %c0_370 = arith.constant 0 : index
    %c0_371 = arith.constant 0 : index
    %1071 = vector.load %arg28[%1070, %c0_370, %c0_371] : memref<16x2x32xf32, #tpu.memory_space<vmem>>, vector<1x2x32xf32>
    %1072 = vector.shape_cast %1071 : vector<1x2x32xf32> to vector<2x32xf32>
    %1073 = vector.shape_cast %1069 : vector<2x32xf32> to vector<1x2x32xf32>
    tpu.vector_store %arg28[%1070, %c0_370, %c0_371], %1073 {strides = array<i32>} : memref<16x2x32xf32, #tpu.memory_space<vmem>>, vector<1x2x32xf32>,
    %1074 = vector.extract_strided_slice %1068 {offsets = [0, 32], sizes = [2, 32], strides = [1, 1]} : vector<2x64xf32> to vector<2x32xf32>
    %c15_i32_372 = arith.constant 15 : i32
    %1075 = arith.subi %c15_i32_372, %c5_i32_360 : i32
    %1076 = arith.index_cast %1075 : i32 to index
    %c0_373 = arith.constant 0 : index
    %c0_374 = arith.constant 0 : index
    %1077 = vector.load %arg29[%1076, %c0_373, %c0_374] : memref<16x2x32xf32, #tpu.memory_space<vmem>>, vector<1x2x32xf32>
    %1078 = vector.shape_cast %1077 : vector<1x2x32xf32> to vector<2x32xf32>
    %1079 = vector.shape_cast %1074 : vector<2x32xf32> to vector<1x2x32xf32>
    tpu.vector_store %arg29[%1076, %c0_373, %c0_374], %1079 {strides = array<i32>} : memref<16x2x32xf32, #tpu.memory_space<vmem>>, vector<1x2x32xf32>,
    %c6_i32_375 = arith.constant 6 : i32
    %1080 = arith.index_cast %c6_i32_375 : i32 to index
    %c0_376 = arith.constant 0 : index
    %c0_377 = arith.constant 0 : index
    %1081 = vector.load %arg26[%1080, %c0_376, %c0_377] : memref<16x2x256xf32, #tpu.memory_space<vmem>>, vector<1x2x256xf32>
    %1082 = vector.shape_cast %1081 : vector<1x2x256xf32> to vector<2x256xf32>
    %c15_i32_378 = arith.constant 15 : i32
    %1083 = arith.subi %c15_i32_378, %c6_i32_375 : i32
    %1084 = arith.index_cast %1083 : i32 to index
    %c0_379 = arith.constant 0 : index
    %c0_380 = arith.constant 0 : index
    %1085 = vector.load %arg27[%1084, %c0_379, %c0_380] : memref<16x2x256xf32, #tpu.memory_space<vmem>>, vector<1x2x256xf32>
    %1086 = vector.shape_cast %1085 : vector<1x2x256xf32> to vector<2x256xf32>
    %1087 = arith.addf %1082, %1086 : vector<2x256xf32>
    %cst_381 = arith.constant dense<0.000000e+00> : vector<2x256xf32>
    %1088 = tpu.matmul %1068, %802, %cst_381 {dimension_numbers = #tpu.dot_dimension_numbers<[1], [0], [0], [1], [0, 0, 1, 1], [], []>} : vector<2x64xf32>, vector<64x256xf32>, vector<2x256xf32> -> vector<2x256xf32>
    %1089 = arith.addf %1087, %1088 : vector<2x256xf32>
    %1090 = vector.extract_strided_slice %1089 {offsets = [0, 0], sizes = [2, 64], strides = [1, 1]} : vector<2x256xf32> to vector<2x64xf32>
    %1091 = arith.negf %1090 : vector<2x64xf32>
    %1092 = math.exp %1091 : vector<2x64xf32>
    %cst_382 = arith.constant 1.000000e+00 : f32
    %1093 = vector.broadcast %cst_382 : f32 to vector<2x64xf32>
    %1094 = arith.addf %1093, %1092 : vector<2x64xf32>
    %1095 = arith.divf %1093, %1094 : vector<2x64xf32>
    %1096 = vector.extract_strided_slice %1089 {offsets = [0, 64], sizes = [2, 64], strides = [1, 1]} : vector<2x256xf32> to vector<2x64xf32>
    %1097 = arith.negf %1096 : vector<2x64xf32>
    %1098 = math.exp %1097 : vector<2x64xf32>
    %cst_383 = arith.constant 1.000000e+00 : f32
    %1099 = vector.broadcast %cst_383 : f32 to vector<2x64xf32>
    %1100 = arith.addf %1099, %1098 : vector<2x64xf32>
    %1101 = arith.divf %1099, %1100 : vector<2x64xf32>
    %1102 = vector.extract_strided_slice %1089 {offsets = [0, 128], sizes = [2, 64], strides = [1, 1]} : vector<2x256xf32> to vector<2x64xf32>
    %1103 = math.tanh %1102 : vector<2x64xf32>
    %1104 = vector.extract_strided_slice %1089 {offsets = [0, 192], sizes = [2, 64], strides = [1, 1]} : vector<2x256xf32> to vector<2x64xf32>
    %1105 = arith.negf %1104 : vector<2x64xf32>
    %1106 = math.exp %1105 : vector<2x64xf32>
    %cst_384 = arith.constant 1.000000e+00 : f32
    %1107 = vector.broadcast %cst_384 : f32 to vector<2x64xf32>
    %1108 = arith.addf %1107, %1106 : vector<2x64xf32>
    %1109 = arith.divf %1107, %1108 : vector<2x64xf32>
    %1110 = arith.mulf %1101, %1066 : vector<2x64xf32>
    %1111 = arith.mulf %1095, %1103 : vector<2x64xf32>
    %1112 = arith.addf %1110, %1111 : vector<2x64xf32>
    %1113 = math.tanh %1112 : vector<2x64xf32>
    %1114 = arith.mulf %1109, %1113 : vector<2x64xf32>
    %1115 = vector.extract_strided_slice %1114 {offsets = [0, 0], sizes = [2, 32], strides = [1, 1]} : vector<2x64xf32> to vector<2x32xf32>
    %1116 = arith.index_cast %c6_i32_375 : i32 to index
    %c0_385 = arith.constant 0 : index
    %c0_386 = arith.constant 0 : index
    %1117 = vector.load %arg28[%1116, %c0_385, %c0_386] : memref<16x2x32xf32, #tpu.memory_space<vmem>>, vector<1x2x32xf32>
    %1118 = vector.shape_cast %1117 : vector<1x2x32xf32> to vector<2x32xf32>
    %1119 = vector.shape_cast %1115 : vector<2x32xf32> to vector<1x2x32xf32>
    tpu.vector_store %arg28[%1116, %c0_385, %c0_386], %1119 {strides = array<i32>} : memref<16x2x32xf32, #tpu.memory_space<vmem>>, vector<1x2x32xf32>,
    %1120 = vector.extract_strided_slice %1114 {offsets = [0, 32], sizes = [2, 32], strides = [1, 1]} : vector<2x64xf32> to vector<2x32xf32>
    %c15_i32_387 = arith.constant 15 : i32
    %1121 = arith.subi %c15_i32_387, %c6_i32_375 : i32
    %1122 = arith.index_cast %1121 : i32 to index
    %c0_388 = arith.constant 0 : index
    %c0_389 = arith.constant 0 : index
    %1123 = vector.load %arg29[%1122, %c0_388, %c0_389] : memref<16x2x32xf32, #tpu.memory_space<vmem>>, vector<1x2x32xf32>
    %1124 = vector.shape_cast %1123 : vector<1x2x32xf32> to vector<2x32xf32>
    %1125 = vector.shape_cast %1120 : vector<2x32xf32> to vector<1x2x32xf32>
    tpu.vector_store %arg29[%1122, %c0_388, %c0_389], %1125 {strides = array<i32>} : memref<16x2x32xf32, #tpu.memory_space<vmem>>, vector<1x2x32xf32>,
    %c7_i32_390 = arith.constant 7 : i32
    %1126 = arith.index_cast %c7_i32_390 : i32 to index
    %c0_391 = arith.constant 0 : index
    %c0_392 = arith.constant 0 : index
    %1127 = vector.load %arg26[%1126, %c0_391, %c0_392] : memref<16x2x256xf32, #tpu.memory_space<vmem>>, vector<1x2x256xf32>
    %1128 = vector.shape_cast %1127 : vector<1x2x256xf32> to vector<2x256xf32>
    %c15_i32_393 = arith.constant 15 : i32
    %1129 = arith.subi %c15_i32_393, %c7_i32_390 : i32
    %1130 = arith.index_cast %1129 : i32 to index
    %c0_394 = arith.constant 0 : index
    %c0_395 = arith.constant 0 : index
    %1131 = vector.load %arg27[%1130, %c0_394, %c0_395] : memref<16x2x256xf32, #tpu.memory_space<vmem>>, vector<1x2x256xf32>
    %1132 = vector.shape_cast %1131 : vector<1x2x256xf32> to vector<2x256xf32>
    %1133 = arith.addf %1128, %1132 : vector<2x256xf32>
    %cst_396 = arith.constant dense<0.000000e+00> : vector<2x256xf32>
    %1134 = tpu.matmul %1114, %802, %cst_396 {dimension_numbers = #tpu.dot_dimension_numbers<[1], [0], [0], [1], [0, 0, 1, 1], [], []>} : vector<2x64xf32>, vector<64x256xf32>, vector<2x256xf32> -> vector<2x256xf32>
    %1135 = arith.addf %1133, %1134 : vector<2x256xf32>
    %1136 = vector.extract_strided_slice %1135 {offsets = [0, 0], sizes = [2, 64], strides = [1, 1]} : vector<2x256xf32> to vector<2x64xf32>
    %1137 = arith.negf %1136 : vector<2x64xf32>
    %1138 = math.exp %1137 : vector<2x64xf32>
    %cst_397 = arith.constant 1.000000e+00 : f32
    %1139 = vector.broadcast %cst_397 : f32 to vector<2x64xf32>
    %1140 = arith.addf %1139, %1138 : vector<2x64xf32>
    %1141 = arith.divf %1139, %1140 : vector<2x64xf32>
    %1142 = vector.extract_strided_slice %1135 {offsets = [0, 64], sizes = [2, 64], strides = [1, 1]} : vector<2x256xf32> to vector<2x64xf32>
    %1143 = arith.negf %1142 : vector<2x64xf32>
    %1144 = math.exp %1143 : vector<2x64xf32>
    %cst_398 = arith.constant 1.000000e+00 : f32
    %1145 = vector.broadcast %cst_398 : f32 to vector<2x64xf32>
    %1146 = arith.addf %1145, %1144 : vector<2x64xf32>
    %1147 = arith.divf %1145, %1146 : vector<2x64xf32>
    %1148 = vector.extract_strided_slice %1135 {offsets = [0, 128], sizes = [2, 64], strides = [1, 1]} : vector<2x256xf32> to vector<2x64xf32>
    %1149 = math.tanh %1148 : vector<2x64xf32>
    %1150 = vector.extract_strided_slice %1135 {offsets = [0, 192], sizes = [2, 64], strides = [1, 1]} : vector<2x256xf32> to vector<2x64xf32>
    %1151 = arith.negf %1150 : vector<2x64xf32>
    %1152 = math.exp %1151 : vector<2x64xf32>
    %cst_399 = arith.constant 1.000000e+00 : f32
    %1153 = vector.broadcast %cst_399 : f32 to vector<2x64xf32>
    %1154 = arith.addf %1153, %1152 : vector<2x64xf32>
    %1155 = arith.divf %1153, %1154 : vector<2x64xf32>
    %1156 = arith.mulf %1147, %1112 : vector<2x64xf32>
    %1157 = arith.mulf %1141, %1149 : vector<2x64xf32>
    %1158 = arith.addf %1156, %1157 : vector<2x64xf32>
    %1159 = math.tanh %1158 : vector<2x64xf32>
    %1160 = arith.mulf %1155, %1159 : vector<2x64xf32>
    %1161 = vector.extract_strided_slice %1160 {offsets = [0, 0], sizes = [2, 32], strides = [1, 1]} : vector<2x64xf32> to vector<2x32xf32>
    %1162 = arith.index_cast %c7_i32_390 : i32 to index
    %c0_400 = arith.constant 0 : index
    %c0_401 = arith.constant 0 : index
    %1163 = vector.load %arg28[%1162, %c0_400, %c0_401] : memref<16x2x32xf32, #tpu.memory_space<vmem>>, vector<1x2x32xf32>
    %1164 = vector.shape_cast %1163 : vector<1x2x32xf32> to vector<2x32xf32>
    %1165 = vector.shape_cast %1161 : vector<2x32xf32> to vector<1x2x32xf32>
    tpu.vector_store %arg28[%1162, %c0_400, %c0_401], %1165 {strides = array<i32>} : memref<16x2x32xf32, #tpu.memory_space<vmem>>, vector<1x2x32xf32>,
    %1166 = vector.extract_strided_slice %1160 {offsets = [0, 32], sizes = [2, 32], strides = [1, 1]} : vector<2x64xf32> to vector<2x32xf32>
    %c15_i32_402 = arith.constant 15 : i32
    %1167 = arith.subi %c15_i32_402, %c7_i32_390 : i32
    %1168 = arith.index_cast %1167 : i32 to index
    %c0_403 = arith.constant 0 : index
    %c0_404 = arith.constant 0 : index
    %1169 = vector.load %arg29[%1168, %c0_403, %c0_404] : memref<16x2x32xf32, #tpu.memory_space<vmem>>, vector<1x2x32xf32>
    %1170 = vector.shape_cast %1169 : vector<1x2x32xf32> to vector<2x32xf32>
    %1171 = vector.shape_cast %1166 : vector<2x32xf32> to vector<1x2x32xf32>
    tpu.vector_store %arg29[%1168, %c0_403, %c0_404], %1171 {strides = array<i32>} : memref<16x2x32xf32, #tpu.memory_space<vmem>>, vector<1x2x32xf32>,
    %c8_i32_405 = arith.constant 8 : i32
    %1172 = arith.index_cast %c8_i32_405 : i32 to index
    %c0_406 = arith.constant 0 : index
    %c0_407 = arith.constant 0 : index
    %1173 = vector.load %arg26[%1172, %c0_406, %c0_407] : memref<16x2x256xf32, #tpu.memory_space<vmem>>, vector<1x2x256xf32>
    %1174 = vector.shape_cast %1173 : vector<1x2x256xf32> to vector<2x256xf32>
    %c15_i32_408 = arith.constant 15 : i32
    %1175 = arith.subi %c15_i32_408, %c8_i32_405 : i32
    %1176 = arith.index_cast %1175 : i32 to index
    %c0_409 = arith.constant 0 : index
    %c0_410 = arith.constant 0 : index
    %1177 = vector.load %arg27[%1176, %c0_409, %c0_410] : memref<16x2x256xf32, #tpu.memory_space<vmem>>, vector<1x2x256xf32>
    %1178 = vector.shape_cast %1177 : vector<1x2x256xf32> to vector<2x256xf32>
    %1179 = arith.addf %1174, %1178 : vector<2x256xf32>
    %cst_411 = arith.constant dense<0.000000e+00> : vector<2x256xf32>
    %1180 = tpu.matmul %1160, %802, %cst_411 {dimension_numbers = #tpu.dot_dimension_numbers<[1], [0], [0], [1], [0, 0, 1, 1], [], []>} : vector<2x64xf32>, vector<64x256xf32>, vector<2x256xf32> -> vector<2x256xf32>
    %1181 = arith.addf %1179, %1180 : vector<2x256xf32>
    %1182 = vector.extract_strided_slice %1181 {offsets = [0, 0], sizes = [2, 64], strides = [1, 1]} : vector<2x256xf32> to vector<2x64xf32>
    %1183 = arith.negf %1182 : vector<2x64xf32>
    %1184 = math.exp %1183 : vector<2x64xf32>
    %cst_412 = arith.constant 1.000000e+00 : f32
    %1185 = vector.broadcast %cst_412 : f32 to vector<2x64xf32>
    %1186 = arith.addf %1185, %1184 : vector<2x64xf32>
    %1187 = arith.divf %1185, %1186 : vector<2x64xf32>
    %1188 = vector.extract_strided_slice %1181 {offsets = [0, 64], sizes = [2, 64], strides = [1, 1]} : vector<2x256xf32> to vector<2x64xf32>
    %1189 = arith.negf %1188 : vector<2x64xf32>
    %1190 = math.exp %1189 : vector<2x64xf32>
    %cst_413 = arith.constant 1.000000e+00 : f32
    %1191 = vector.broadcast %cst_413 : f32 to vector<2x64xf32>
    %1192 = arith.addf %1191, %1190 : vector<2x64xf32>
    %1193 = arith.divf %1191, %1192 : vector<2x64xf32>
    %1194 = vector.extract_strided_slice %1181 {offsets = [0, 128], sizes = [2, 64], strides = [1, 1]} : vector<2x256xf32> to vector<2x64xf32>
    %1195 = math.tanh %1194 : vector<2x64xf32>
    %1196 = vector.extract_strided_slice %1181 {offsets = [0, 192], sizes = [2, 64], strides = [1, 1]} : vector<2x256xf32> to vector<2x64xf32>
    %1197 = arith.negf %1196 : vector<2x64xf32>
    %1198 = math.exp %1197 : vector<2x64xf32>
    %cst_414 = arith.constant 1.000000e+00 : f32
    %1199 = vector.broadcast %cst_414 : f32 to vector<2x64xf32>
    %1200 = arith.addf %1199, %1198 : vector<2x64xf32>
    %1201 = arith.divf %1199, %1200 : vector<2x64xf32>
    %1202 = arith.mulf %1193, %1158 : vector<2x64xf32>
    %1203 = arith.mulf %1187, %1195 : vector<2x64xf32>
    %1204 = arith.addf %1202, %1203 : vector<2x64xf32>
    %1205 = math.tanh %1204 : vector<2x64xf32>
    %1206 = arith.mulf %1201, %1205 : vector<2x64xf32>
    %1207 = vector.extract_strided_slice %1206 {offsets = [0, 0], sizes = [2, 32], strides = [1, 1]} : vector<2x64xf32> to vector<2x32xf32>
    %1208 = arith.index_cast %c8_i32_405 : i32 to index
    %c0_415 = arith.constant 0 : index
    %c0_416 = arith.constant 0 : index
    %1209 = vector.load %arg28[%1208, %c0_415, %c0_416] : memref<16x2x32xf32, #tpu.memory_space<vmem>>, vector<1x2x32xf32>
    %1210 = vector.shape_cast %1209 : vector<1x2x32xf32> to vector<2x32xf32>
    %1211 = vector.shape_cast %1207 : vector<2x32xf32> to vector<1x2x32xf32>
    tpu.vector_store %arg28[%1208, %c0_415, %c0_416], %1211 {strides = array<i32>} : memref<16x2x32xf32, #tpu.memory_space<vmem>>, vector<1x2x32xf32>,
    %1212 = vector.extract_strided_slice %1206 {offsets = [0, 32], sizes = [2, 32], strides = [1, 1]} : vector<2x64xf32> to vector<2x32xf32>
    %c15_i32_417 = arith.constant 15 : i32
    %1213 = arith.subi %c15_i32_417, %c8_i32_405 : i32
    %1214 = arith.index_cast %1213 : i32 to index
    %c0_418 = arith.constant 0 : index
    %c0_419 = arith.constant 0 : index
    %1215 = vector.load %arg29[%1214, %c0_418, %c0_419] : memref<16x2x32xf32, #tpu.memory_space<vmem>>, vector<1x2x32xf32>
    %1216 = vector.shape_cast %1215 : vector<1x2x32xf32> to vector<2x32xf32>
    %1217 = vector.shape_cast %1212 : vector<2x32xf32> to vector<1x2x32xf32>
    tpu.vector_store %arg29[%1214, %c0_418, %c0_419], %1217 {strides = array<i32>} : memref<16x2x32xf32, #tpu.memory_space<vmem>>, vector<1x2x32xf32>,
    %c9_i32_420 = arith.constant 9 : i32
    %1218 = arith.index_cast %c9_i32_420 : i32 to index
    %c0_421 = arith.constant 0 : index
    %c0_422 = arith.constant 0 : index
    %1219 = vector.load %arg26[%1218, %c0_421, %c0_422] : memref<16x2x256xf32, #tpu.memory_space<vmem>>, vector<1x2x256xf32>
    %1220 = vector.shape_cast %1219 : vector<1x2x256xf32> to vector<2x256xf32>
    %c15_i32_423 = arith.constant 15 : i32
    %1221 = arith.subi %c15_i32_423, %c9_i32_420 : i32
    %1222 = arith.index_cast %1221 : i32 to index
    %c0_424 = arith.constant 0 : index
    %c0_425 = arith.constant 0 : index
    %1223 = vector.load %arg27[%1222, %c0_424, %c0_425] : memref<16x2x256xf32, #tpu.memory_space<vmem>>, vector<1x2x256xf32>
    %1224 = vector.shape_cast %1223 : vector<1x2x256xf32> to vector<2x256xf32>
    %1225 = arith.addf %1220, %1224 : vector<2x256xf32>
    %cst_426 = arith.constant dense<0.000000e+00> : vector<2x256xf32>
    %1226 = tpu.matmul %1206, %802, %cst_426 {dimension_numbers = #tpu.dot_dimension_numbers<[1], [0], [0], [1], [0, 0, 1, 1], [], []>} : vector<2x64xf32>, vector<64x256xf32>, vector<2x256xf32> -> vector<2x256xf32>
    %1227 = arith.addf %1225, %1226 : vector<2x256xf32>
    %1228 = vector.extract_strided_slice %1227 {offsets = [0, 0], sizes = [2, 64], strides = [1, 1]} : vector<2x256xf32> to vector<2x64xf32>
    %1229 = arith.negf %1228 : vector<2x64xf32>
    %1230 = math.exp %1229 : vector<2x64xf32>
    %cst_427 = arith.constant 1.000000e+00 : f32
    %1231 = vector.broadcast %cst_427 : f32 to vector<2x64xf32>
    %1232 = arith.addf %1231, %1230 : vector<2x64xf32>
    %1233 = arith.divf %1231, %1232 : vector<2x64xf32>
    %1234 = vector.extract_strided_slice %1227 {offsets = [0, 64], sizes = [2, 64], strides = [1, 1]} : vector<2x256xf32> to vector<2x64xf32>
    %1235 = arith.negf %1234 : vector<2x64xf32>
    %1236 = math.exp %1235 : vector<2x64xf32>
    %cst_428 = arith.constant 1.000000e+00 : f32
    %1237 = vector.broadcast %cst_428 : f32 to vector<2x64xf32>
    %1238 = arith.addf %1237, %1236 : vector<2x64xf32>
    %1239 = arith.divf %1237, %1238 : vector<2x64xf32>
    %1240 = vector.extract_strided_slice %1227 {offsets = [0, 128], sizes = [2, 64], strides = [1, 1]} : vector<2x256xf32> to vector<2x64xf32>
    %1241 = math.tanh %1240 : vector<2x64xf32>
    %1242 = vector.extract_strided_slice %1227 {offsets = [0, 192], sizes = [2, 64], strides = [1, 1]} : vector<2x256xf32> to vector<2x64xf32>
    %1243 = arith.negf %1242 : vector<2x64xf32>
    %1244 = math.exp %1243 : vector<2x64xf32>
    %cst_429 = arith.constant 1.000000e+00 : f32
    %1245 = vector.broadcast %cst_429 : f32 to vector<2x64xf32>
    %1246 = arith.addf %1245, %1244 : vector<2x64xf32>
    %1247 = arith.divf %1245, %1246 : vector<2x64xf32>
    %1248 = arith.mulf %1239, %1204 : vector<2x64xf32>
    %1249 = arith.mulf %1233, %1241 : vector<2x64xf32>
    %1250 = arith.addf %1248, %1249 : vector<2x64xf32>
    %1251 = math.tanh %1250 : vector<2x64xf32>
    %1252 = arith.mulf %1247, %1251 : vector<2x64xf32>
    %1253 = vector.extract_strided_slice %1252 {offsets = [0, 0], sizes = [2, 32], strides = [1, 1]} : vector<2x64xf32> to vector<2x32xf32>
    %1254 = arith.index_cast %c9_i32_420 : i32 to index
    %c0_430 = arith.constant 0 : index
    %c0_431 = arith.constant 0 : index
    %1255 = vector.load %arg28[%1254, %c0_430, %c0_431] : memref<16x2x32xf32, #tpu.memory_space<vmem>>, vector<1x2x32xf32>
    %1256 = vector.shape_cast %1255 : vector<1x2x32xf32> to vector<2x32xf32>
    %1257 = vector.shape_cast %1253 : vector<2x32xf32> to vector<1x2x32xf32>
    tpu.vector_store %arg28[%1254, %c0_430, %c0_431], %1257 {strides = array<i32>} : memref<16x2x32xf32, #tpu.memory_space<vmem>>, vector<1x2x32xf32>,
    %1258 = vector.extract_strided_slice %1252 {offsets = [0, 32], sizes = [2, 32], strides = [1, 1]} : vector<2x64xf32> to vector<2x32xf32>
    %c15_i32_432 = arith.constant 15 : i32
    %1259 = arith.subi %c15_i32_432, %c9_i32_420 : i32
    %1260 = arith.index_cast %1259 : i32 to index
    %c0_433 = arith.constant 0 : index
    %c0_434 = arith.constant 0 : index
    %1261 = vector.load %arg29[%1260, %c0_433, %c0_434] : memref<16x2x32xf32, #tpu.memory_space<vmem>>, vector<1x2x32xf32>
    %1262 = vector.shape_cast %1261 : vector<1x2x32xf32> to vector<2x32xf32>
    %1263 = vector.shape_cast %1258 : vector<2x32xf32> to vector<1x2x32xf32>
    tpu.vector_store %arg29[%1260, %c0_433, %c0_434], %1263 {strides = array<i32>} : memref<16x2x32xf32, #tpu.memory_space<vmem>>, vector<1x2x32xf32>,
    %c10_i32_435 = arith.constant 10 : i32
    %1264 = arith.index_cast %c10_i32_435 : i32 to index
    %c0_436 = arith.constant 0 : index
    %c0_437 = arith.constant 0 : index
    %1265 = vector.load %arg26[%1264, %c0_436, %c0_437] : memref<16x2x256xf32, #tpu.memory_space<vmem>>, vector<1x2x256xf32>
    %1266 = vector.shape_cast %1265 : vector<1x2x256xf32> to vector<2x256xf32>
    %c15_i32_438 = arith.constant 15 : i32
    %1267 = arith.subi %c15_i32_438, %c10_i32_435 : i32
    %1268 = arith.index_cast %1267 : i32 to index
    %c0_439 = arith.constant 0 : index
    %c0_440 = arith.constant 0 : index
    %1269 = vector.load %arg27[%1268, %c0_439, %c0_440] : memref<16x2x256xf32, #tpu.memory_space<vmem>>, vector<1x2x256xf32>
    %1270 = vector.shape_cast %1269 : vector<1x2x256xf32> to vector<2x256xf32>
    %1271 = arith.addf %1266, %1270 : vector<2x256xf32>
    %cst_441 = arith.constant dense<0.000000e+00> : vector<2x256xf32>
    %1272 = tpu.matmul %1252, %802, %cst_441 {dimension_numbers = #tpu.dot_dimension_numbers<[1], [0], [0], [1], [0, 0, 1, 1], [], []>} : vector<2x64xf32>, vector<64x256xf32>, vector<2x256xf32> -> vector<2x256xf32>
    %1273 = arith.addf %1271, %1272 : vector<2x256xf32>
    %1274 = vector.extract_strided_slice %1273 {offsets = [0, 0], sizes = [2, 64], strides = [1, 1]} : vector<2x256xf32> to vector<2x64xf32>
    %1275 = arith.negf %1274 : vector<2x64xf32>
    %1276 = math.exp %1275 : vector<2x64xf32>
    %cst_442 = arith.constant 1.000000e+00 : f32
    %1277 = vector.broadcast %cst_442 : f32 to vector<2x64xf32>
    %1278 = arith.addf %1277, %1276 : vector<2x64xf32>
    %1279 = arith.divf %1277, %1278 : vector<2x64xf32>
    %1280 = vector.extract_strided_slice %1273 {offsets = [0, 64], sizes = [2, 64], strides = [1, 1]} : vector<2x256xf32> to vector<2x64xf32>
    %1281 = arith.negf %1280 : vector<2x64xf32>
    %1282 = math.exp %1281 : vector<2x64xf32>
    %cst_443 = arith.constant 1.000000e+00 : f32
    %1283 = vector.broadcast %cst_443 : f32 to vector<2x64xf32>
    %1284 = arith.addf %1283, %1282 : vector<2x64xf32>
    %1285 = arith.divf %1283, %1284 : vector<2x64xf32>
    %1286 = vector.extract_strided_slice %1273 {offsets = [0, 128], sizes = [2, 64], strides = [1, 1]} : vector<2x256xf32> to vector<2x64xf32>
    %1287 = math.tanh %1286 : vector<2x64xf32>
    %1288 = vector.extract_strided_slice %1273 {offsets = [0, 192], sizes = [2, 64], strides = [1, 1]} : vector<2x256xf32> to vector<2x64xf32>
    %1289 = arith.negf %1288 : vector<2x64xf32>
    %1290 = math.exp %1289 : vector<2x64xf32>
    %cst_444 = arith.constant 1.000000e+00 : f32
    %1291 = vector.broadcast %cst_444 : f32 to vector<2x64xf32>
    %1292 = arith.addf %1291, %1290 : vector<2x64xf32>
    %1293 = arith.divf %1291, %1292 : vector<2x64xf32>
    %1294 = arith.mulf %1285, %1250 : vector<2x64xf32>
    %1295 = arith.mulf %1279, %1287 : vector<2x64xf32>
    %1296 = arith.addf %1294, %1295 : vector<2x64xf32>
    %1297 = math.tanh %1296 : vector<2x64xf32>
    %1298 = arith.mulf %1293, %1297 : vector<2x64xf32>
    %1299 = vector.extract_strided_slice %1298 {offsets = [0, 0], sizes = [2, 32], strides = [1, 1]} : vector<2x64xf32> to vector<2x32xf32>
    %1300 = arith.index_cast %c10_i32_435 : i32 to index
    %c0_445 = arith.constant 0 : index
    %c0_446 = arith.constant 0 : index
    %1301 = vector.load %arg28[%1300, %c0_445, %c0_446] : memref<16x2x32xf32, #tpu.memory_space<vmem>>, vector<1x2x32xf32>
    %1302 = vector.shape_cast %1301 : vector<1x2x32xf32> to vector<2x32xf32>
    %1303 = vector.shape_cast %1299 : vector<2x32xf32> to vector<1x2x32xf32>
    tpu.vector_store %arg28[%1300, %c0_445, %c0_446], %1303 {strides = array<i32>} : memref<16x2x32xf32, #tpu.memory_space<vmem>>, vector<1x2x32xf32>,
    %1304 = vector.extract_strided_slice %1298 {offsets = [0, 32], sizes = [2, 32], strides = [1, 1]} : vector<2x64xf32> to vector<2x32xf32>
    %c15_i32_447 = arith.constant 15 : i32
    %1305 = arith.subi %c15_i32_447, %c10_i32_435 : i32
    %1306 = arith.index_cast %1305 : i32 to index
    %c0_448 = arith.constant 0 : index
    %c0_449 = arith.constant 0 : index
    %1307 = vector.load %arg29[%1306, %c0_448, %c0_449] : memref<16x2x32xf32, #tpu.memory_space<vmem>>, vector<1x2x32xf32>
    %1308 = vector.shape_cast %1307 : vector<1x2x32xf32> to vector<2x32xf32>
    %1309 = vector.shape_cast %1304 : vector<2x32xf32> to vector<1x2x32xf32>
    tpu.vector_store %arg29[%1306, %c0_448, %c0_449], %1309 {strides = array<i32>} : memref<16x2x32xf32, #tpu.memory_space<vmem>>, vector<1x2x32xf32>,
    %c11_i32_450 = arith.constant 11 : i32
    %1310 = arith.index_cast %c11_i32_450 : i32 to index
    %c0_451 = arith.constant 0 : index
    %c0_452 = arith.constant 0 : index
    %1311 = vector.load %arg26[%1310, %c0_451, %c0_452] : memref<16x2x256xf32, #tpu.memory_space<vmem>>, vector<1x2x256xf32>
    %1312 = vector.shape_cast %1311 : vector<1x2x256xf32> to vector<2x256xf32>
    %c15_i32_453 = arith.constant 15 : i32
    %1313 = arith.subi %c15_i32_453, %c11_i32_450 : i32
    %1314 = arith.index_cast %1313 : i32 to index
    %c0_454 = arith.constant 0 : index
    %c0_455 = arith.constant 0 : index
    %1315 = vector.load %arg27[%1314, %c0_454, %c0_455] : memref<16x2x256xf32, #tpu.memory_space<vmem>>, vector<1x2x256xf32>
    %1316 = vector.shape_cast %1315 : vector<1x2x256xf32> to vector<2x256xf32>
    %1317 = arith.addf %1312, %1316 : vector<2x256xf32>
    %cst_456 = arith.constant dense<0.000000e+00> : vector<2x256xf32>
    %1318 = tpu.matmul %1298, %802, %cst_456 {dimension_numbers = #tpu.dot_dimension_numbers<[1], [0], [0], [1], [0, 0, 1, 1], [], []>} : vector<2x64xf32>, vector<64x256xf32>, vector<2x256xf32> -> vector<2x256xf32>
    %1319 = arith.addf %1317, %1318 : vector<2x256xf32>
    %1320 = vector.extract_strided_slice %1319 {offsets = [0, 0], sizes = [2, 64], strides = [1, 1]} : vector<2x256xf32> to vector<2x64xf32>
    %1321 = arith.negf %1320 : vector<2x64xf32>
    %1322 = math.exp %1321 : vector<2x64xf32>
    %cst_457 = arith.constant 1.000000e+00 : f32
    %1323 = vector.broadcast %cst_457 : f32 to vector<2x64xf32>
    %1324 = arith.addf %1323, %1322 : vector<2x64xf32>
    %1325 = arith.divf %1323, %1324 : vector<2x64xf32>
    %1326 = vector.extract_strided_slice %1319 {offsets = [0, 64], sizes = [2, 64], strides = [1, 1]} : vector<2x256xf32> to vector<2x64xf32>
    %1327 = arith.negf %1326 : vector<2x64xf32>
    %1328 = math.exp %1327 : vector<2x64xf32>
    %cst_458 = arith.constant 1.000000e+00 : f32
    %1329 = vector.broadcast %cst_458 : f32 to vector<2x64xf32>
    %1330 = arith.addf %1329, %1328 : vector<2x64xf32>
    %1331 = arith.divf %1329, %1330 : vector<2x64xf32>
    %1332 = vector.extract_strided_slice %1319 {offsets = [0, 128], sizes = [2, 64], strides = [1, 1]} : vector<2x256xf32> to vector<2x64xf32>
    %1333 = math.tanh %1332 : vector<2x64xf32>
    %1334 = vector.extract_strided_slice %1319 {offsets = [0, 192], sizes = [2, 64], strides = [1, 1]} : vector<2x256xf32> to vector<2x64xf32>
    %1335 = arith.negf %1334 : vector<2x64xf32>
    %1336 = math.exp %1335 : vector<2x64xf32>
    %cst_459 = arith.constant 1.000000e+00 : f32
    %1337 = vector.broadcast %cst_459 : f32 to vector<2x64xf32>
    %1338 = arith.addf %1337, %1336 : vector<2x64xf32>
    %1339 = arith.divf %1337, %1338 : vector<2x64xf32>
    %1340 = arith.mulf %1331, %1296 : vector<2x64xf32>
    %1341 = arith.mulf %1325, %1333 : vector<2x64xf32>
    %1342 = arith.addf %1340, %1341 : vector<2x64xf32>
    %1343 = math.tanh %1342 : vector<2x64xf32>
    %1344 = arith.mulf %1339, %1343 : vector<2x64xf32>
    %1345 = vector.extract_strided_slice %1344 {offsets = [0, 0], sizes = [2, 32], strides = [1, 1]} : vector<2x64xf32> to vector<2x32xf32>
    %1346 = arith.index_cast %c11_i32_450 : i32 to index
    %c0_460 = arith.constant 0 : index
    %c0_461 = arith.constant 0 : index
    %1347 = vector.load %arg28[%1346, %c0_460, %c0_461] : memref<16x2x32xf32, #tpu.memory_space<vmem>>, vector<1x2x32xf32>
    %1348 = vector.shape_cast %1347 : vector<1x2x32xf32> to vector<2x32xf32>
    %1349 = vector.shape_cast %1345 : vector<2x32xf32> to vector<1x2x32xf32>
    tpu.vector_store %arg28[%1346, %c0_460, %c0_461], %1349 {strides = array<i32>} : memref<16x2x32xf32, #tpu.memory_space<vmem>>, vector<1x2x32xf32>,
    %1350 = vector.extract_strided_slice %1344 {offsets = [0, 32], sizes = [2, 32], strides = [1, 1]} : vector<2x64xf32> to vector<2x32xf32>
    %c15_i32_462 = arith.constant 15 : i32
    %1351 = arith.subi %c15_i32_462, %c11_i32_450 : i32
    %1352 = arith.index_cast %1351 : i32 to index
    %c0_463 = arith.constant 0 : index
    %c0_464 = arith.constant 0 : index
    %1353 = vector.load %arg29[%1352, %c0_463, %c0_464] : memref<16x2x32xf32, #tpu.memory_space<vmem>>, vector<1x2x32xf32>
    %1354 = vector.shape_cast %1353 : vector<1x2x32xf32> to vector<2x32xf32>
    %1355 = vector.shape_cast %1350 : vector<2x32xf32> to vector<1x2x32xf32>
    tpu.vector_store %arg29[%1352, %c0_463, %c0_464], %1355 {strides = array<i32>} : memref<16x2x32xf32, #tpu.memory_space<vmem>>, vector<1x2x32xf32>,
    %c12_i32_465 = arith.constant 12 : i32
    %1356 = arith.index_cast %c12_i32_465 : i32 to index
    %c0_466 = arith.constant 0 : index
    %c0_467 = arith.constant 0 : index
    %1357 = vector.load %arg26[%1356, %c0_466, %c0_467] : memref<16x2x256xf32, #tpu.memory_space<vmem>>, vector<1x2x256xf32>
    %1358 = vector.shape_cast %1357 : vector<1x2x256xf32> to vector<2x256xf32>
    %c15_i32_468 = arith.constant 15 : i32
    %1359 = arith.subi %c15_i32_468, %c12_i32_465 : i32
    %1360 = arith.index_cast %1359 : i32 to index
    %c0_469 = arith.constant 0 : index
    %c0_470 = arith.constant 0 : index
    %1361 = vector.load %arg27[%1360, %c0_469, %c0_470] : memref<16x2x256xf32, #tpu.memory_space<vmem>>, vector<1x2x256xf32>
    %1362 = vector.shape_cast %1361 : vector<1x2x256xf32> to vector<2x256xf32>
    %1363 = arith.addf %1358, %1362 : vector<2x256xf32>
    %cst_471 = arith.constant dense<0.000000e+00> : vector<2x256xf32>
    %1364 = tpu.matmul %1344, %802, %cst_471 {dimension_numbers = #tpu.dot_dimension_numbers<[1], [0], [0], [1], [0, 0, 1, 1], [], []>} : vector<2x64xf32>, vector<64x256xf32>, vector<2x256xf32> -> vector<2x256xf32>
    %1365 = arith.addf %1363, %1364 : vector<2x256xf32>
    %1366 = vector.extract_strided_slice %1365 {offsets = [0, 0], sizes = [2, 64], strides = [1, 1]} : vector<2x256xf32> to vector<2x64xf32>
    %1367 = arith.negf %1366 : vector<2x64xf32>
    %1368 = math.exp %1367 : vector<2x64xf32>
    %cst_472 = arith.constant 1.000000e+00 : f32
    %1369 = vector.broadcast %cst_472 : f32 to vector<2x64xf32>
    %1370 = arith.addf %1369, %1368 : vector<2x64xf32>
    %1371 = arith.divf %1369, %1370 : vector<2x64xf32>
    %1372 = vector.extract_strided_slice %1365 {offsets = [0, 64], sizes = [2, 64], strides = [1, 1]} : vector<2x256xf32> to vector<2x64xf32>
    %1373 = arith.negf %1372 : vector<2x64xf32>
    %1374 = math.exp %1373 : vector<2x64xf32>
    %cst_473 = arith.constant 1.000000e+00 : f32
    %1375 = vector.broadcast %cst_473 : f32 to vector<2x64xf32>
    %1376 = arith.addf %1375, %1374 : vector<2x64xf32>
    %1377 = arith.divf %1375, %1376 : vector<2x64xf32>
    %1378 = vector.extract_strided_slice %1365 {offsets = [0, 128], sizes = [2, 64], strides = [1, 1]} : vector<2x256xf32> to vector<2x64xf32>
    %1379 = math.tanh %1378 : vector<2x64xf32>
    %1380 = vector.extract_strided_slice %1365 {offsets = [0, 192], sizes = [2, 64], strides = [1, 1]} : vector<2x256xf32> to vector<2x64xf32>
    %1381 = arith.negf %1380 : vector<2x64xf32>
    %1382 = math.exp %1381 : vector<2x64xf32>
    %cst_474 = arith.constant 1.000000e+00 : f32
    %1383 = vector.broadcast %cst_474 : f32 to vector<2x64xf32>
    %1384 = arith.addf %1383, %1382 : vector<2x64xf32>
    %1385 = arith.divf %1383, %1384 : vector<2x64xf32>
    %1386 = arith.mulf %1377, %1342 : vector<2x64xf32>
    %1387 = arith.mulf %1371, %1379 : vector<2x64xf32>
    %1388 = arith.addf %1386, %1387 : vector<2x64xf32>
    %1389 = math.tanh %1388 : vector<2x64xf32>
    %1390 = arith.mulf %1385, %1389 : vector<2x64xf32>
    %1391 = vector.extract_strided_slice %1390 {offsets = [0, 0], sizes = [2, 32], strides = [1, 1]} : vector<2x64xf32> to vector<2x32xf32>
    %1392 = arith.index_cast %c12_i32_465 : i32 to index
    %c0_475 = arith.constant 0 : index
    %c0_476 = arith.constant 0 : index
    %1393 = vector.load %arg28[%1392, %c0_475, %c0_476] : memref<16x2x32xf32, #tpu.memory_space<vmem>>, vector<1x2x32xf32>
    %1394 = vector.shape_cast %1393 : vector<1x2x32xf32> to vector<2x32xf32>
    %1395 = vector.shape_cast %1391 : vector<2x32xf32> to vector<1x2x32xf32>
    tpu.vector_store %arg28[%1392, %c0_475, %c0_476], %1395 {strides = array<i32>} : memref<16x2x32xf32, #tpu.memory_space<vmem>>, vector<1x2x32xf32>,
    %1396 = vector.extract_strided_slice %1390 {offsets = [0, 32], sizes = [2, 32], strides = [1, 1]} : vector<2x64xf32> to vector<2x32xf32>
    %c15_i32_477 = arith.constant 15 : i32
    %1397 = arith.subi %c15_i32_477, %c12_i32_465 : i32
    %1398 = arith.index_cast %1397 : i32 to index
    %c0_478 = arith.constant 0 : index
    %c0_479 = arith.constant 0 : index
    %1399 = vector.load %arg29[%1398, %c0_478, %c0_479] : memref<16x2x32xf32, #tpu.memory_space<vmem>>, vector<1x2x32xf32>
    %1400 = vector.shape_cast %1399 : vector<1x2x32xf32> to vector<2x32xf32>
    %1401 = vector.shape_cast %1396 : vector<2x32xf32> to vector<1x2x32xf32>
    tpu.vector_store %arg29[%1398, %c0_478, %c0_479], %1401 {strides = array<i32>} : memref<16x2x32xf32, #tpu.memory_space<vmem>>, vector<1x2x32xf32>,
    %c13_i32_480 = arith.constant 13 : i32
    %1402 = arith.index_cast %c13_i32_480 : i32 to index
    %c0_481 = arith.constant 0 : index
    %c0_482 = arith.constant 0 : index
    %1403 = vector.load %arg26[%1402, %c0_481, %c0_482] : memref<16x2x256xf32, #tpu.memory_space<vmem>>, vector<1x2x256xf32>
    %1404 = vector.shape_cast %1403 : vector<1x2x256xf32> to vector<2x256xf32>
    %c15_i32_483 = arith.constant 15 : i32
    %1405 = arith.subi %c15_i32_483, %c13_i32_480 : i32
    %1406 = arith.index_cast %1405 : i32 to index
    %c0_484 = arith.constant 0 : index
    %c0_485 = arith.constant 0 : index
    %1407 = vector.load %arg27[%1406, %c0_484, %c0_485] : memref<16x2x256xf32, #tpu.memory_space<vmem>>, vector<1x2x256xf32>
    %1408 = vector.shape_cast %1407 : vector<1x2x256xf32> to vector<2x256xf32>
    %1409 = arith.addf %1404, %1408 : vector<2x256xf32>
    %cst_486 = arith.constant dense<0.000000e+00> : vector<2x256xf32>
    %1410 = tpu.matmul %1390, %802, %cst_486 {dimension_numbers = #tpu.dot_dimension_numbers<[1], [0], [0], [1], [0, 0, 1, 1], [], []>} : vector<2x64xf32>, vector<64x256xf32>, vector<2x256xf32> -> vector<2x256xf32>
    %1411 = arith.addf %1409, %1410 : vector<2x256xf32>
    %1412 = vector.extract_strided_slice %1411 {offsets = [0, 0], sizes = [2, 64], strides = [1, 1]} : vector<2x256xf32> to vector<2x64xf32>
    %1413 = arith.negf %1412 : vector<2x64xf32>
    %1414 = math.exp %1413 : vector<2x64xf32>
    %cst_487 = arith.constant 1.000000e+00 : f32
    %1415 = vector.broadcast %cst_487 : f32 to vector<2x64xf32>
    %1416 = arith.addf %1415, %1414 : vector<2x64xf32>
    %1417 = arith.divf %1415, %1416 : vector<2x64xf32>
    %1418 = vector.extract_strided_slice %1411 {offsets = [0, 64], sizes = [2, 64], strides = [1, 1]} : vector<2x256xf32> to vector<2x64xf32>
    %1419 = arith.negf %1418 : vector<2x64xf32>
    %1420 = math.exp %1419 : vector<2x64xf32>
    %cst_488 = arith.constant 1.000000e+00 : f32
    %1421 = vector.broadcast %cst_488 : f32 to vector<2x64xf32>
    %1422 = arith.addf %1421, %1420 : vector<2x64xf32>
    %1423 = arith.divf %1421, %1422 : vector<2x64xf32>
    %1424 = vector.extract_strided_slice %1411 {offsets = [0, 128], sizes = [2, 64], strides = [1, 1]} : vector<2x256xf32> to vector<2x64xf32>
    %1425 = math.tanh %1424 : vector<2x64xf32>
    %1426 = vector.extract_strided_slice %1411 {offsets = [0, 192], sizes = [2, 64], strides = [1, 1]} : vector<2x256xf32> to vector<2x64xf32>
    %1427 = arith.negf %1426 : vector<2x64xf32>
    %1428 = math.exp %1427 : vector<2x64xf32>
    %cst_489 = arith.constant 1.000000e+00 : f32
    %1429 = vector.broadcast %cst_489 : f32 to vector<2x64xf32>
    %1430 = arith.addf %1429, %1428 : vector<2x64xf32>
    %1431 = arith.divf %1429, %1430 : vector<2x64xf32>
    %1432 = arith.mulf %1423, %1388 : vector<2x64xf32>
    %1433 = arith.mulf %1417, %1425 : vector<2x64xf32>
    %1434 = arith.addf %1432, %1433 : vector<2x64xf32>
    %1435 = math.tanh %1434 : vector<2x64xf32>
    %1436 = arith.mulf %1431, %1435 : vector<2x64xf32>
    %1437 = vector.extract_strided_slice %1436 {offsets = [0, 0], sizes = [2, 32], strides = [1, 1]} : vector<2x64xf32> to vector<2x32xf32>
    %1438 = arith.index_cast %c13_i32_480 : i32 to index
    %c0_490 = arith.constant 0 : index
    %c0_491 = arith.constant 0 : index
    %1439 = vector.load %arg28[%1438, %c0_490, %c0_491] : memref<16x2x32xf32, #tpu.memory_space<vmem>>, vector<1x2x32xf32>
    %1440 = vector.shape_cast %1439 : vector<1x2x32xf32> to vector<2x32xf32>
    %1441 = vector.shape_cast %1437 : vector<2x32xf32> to vector<1x2x32xf32>
    tpu.vector_store %arg28[%1438, %c0_490, %c0_491], %1441 {strides = array<i32>} : memref<16x2x32xf32, #tpu.memory_space<vmem>>, vector<1x2x32xf32>,
    %1442 = vector.extract_strided_slice %1436 {offsets = [0, 32], sizes = [2, 32], strides = [1, 1]} : vector<2x64xf32> to vector<2x32xf32>
    %c15_i32_492 = arith.constant 15 : i32
    %1443 = arith.subi %c15_i32_492, %c13_i32_480 : i32
    %1444 = arith.index_cast %1443 : i32 to index
    %c0_493 = arith.constant 0 : index
    %c0_494 = arith.constant 0 : index
    %1445 = vector.load %arg29[%1444, %c0_493, %c0_494] : memref<16x2x32xf32, #tpu.memory_space<vmem>>, vector<1x2x32xf32>
    %1446 = vector.shape_cast %1445 : vector<1x2x32xf32> to vector<2x32xf32>
    %1447 = vector.shape_cast %1442 : vector<2x32xf32> to vector<1x2x32xf32>
    tpu.vector_store %arg29[%1444, %c0_493, %c0_494], %1447 {strides = array<i32>} : memref<16x2x32xf32, #tpu.memory_space<vmem>>, vector<1x2x32xf32>,
    %c14_i32_495 = arith.constant 14 : i32
    %1448 = arith.index_cast %c14_i32_495 : i32 to index
    %c0_496 = arith.constant 0 : index
    %c0_497 = arith.constant 0 : index
    %1449 = vector.load %arg26[%1448, %c0_496, %c0_497] : memref<16x2x256xf32, #tpu.memory_space<vmem>>, vector<1x2x256xf32>
    %1450 = vector.shape_cast %1449 : vector<1x2x256xf32> to vector<2x256xf32>
    %c15_i32_498 = arith.constant 15 : i32
    %1451 = arith.subi %c15_i32_498, %c14_i32_495 : i32
    %1452 = arith.index_cast %1451 : i32 to index
    %c0_499 = arith.constant 0 : index
    %c0_500 = arith.constant 0 : index
    %1453 = vector.load %arg27[%1452, %c0_499, %c0_500] : memref<16x2x256xf32, #tpu.memory_space<vmem>>, vector<1x2x256xf32>
    %1454 = vector.shape_cast %1453 : vector<1x2x256xf32> to vector<2x256xf32>
    %1455 = arith.addf %1450, %1454 : vector<2x256xf32>
    %cst_501 = arith.constant dense<0.000000e+00> : vector<2x256xf32>
    %1456 = tpu.matmul %1436, %802, %cst_501 {dimension_numbers = #tpu.dot_dimension_numbers<[1], [0], [0], [1], [0, 0, 1, 1], [], []>} : vector<2x64xf32>, vector<64x256xf32>, vector<2x256xf32> -> vector<2x256xf32>
    %1457 = arith.addf %1455, %1456 : vector<2x256xf32>
    %1458 = vector.extract_strided_slice %1457 {offsets = [0, 0], sizes = [2, 64], strides = [1, 1]} : vector<2x256xf32> to vector<2x64xf32>
    %1459 = arith.negf %1458 : vector<2x64xf32>
    %1460 = math.exp %1459 : vector<2x64xf32>
    %cst_502 = arith.constant 1.000000e+00 : f32
    %1461 = vector.broadcast %cst_502 : f32 to vector<2x64xf32>
    %1462 = arith.addf %1461, %1460 : vector<2x64xf32>
    %1463 = arith.divf %1461, %1462 : vector<2x64xf32>
    %1464 = vector.extract_strided_slice %1457 {offsets = [0, 64], sizes = [2, 64], strides = [1, 1]} : vector<2x256xf32> to vector<2x64xf32>
    %1465 = arith.negf %1464 : vector<2x64xf32>
    %1466 = math.exp %1465 : vector<2x64xf32>
    %cst_503 = arith.constant 1.000000e+00 : f32
    %1467 = vector.broadcast %cst_503 : f32 to vector<2x64xf32>
    %1468 = arith.addf %1467, %1466 : vector<2x64xf32>
    %1469 = arith.divf %1467, %1468 : vector<2x64xf32>
    %1470 = vector.extract_strided_slice %1457 {offsets = [0, 128], sizes = [2, 64], strides = [1, 1]} : vector<2x256xf32> to vector<2x64xf32>
    %1471 = math.tanh %1470 : vector<2x64xf32>
    %1472 = vector.extract_strided_slice %1457 {offsets = [0, 192], sizes = [2, 64], strides = [1, 1]} : vector<2x256xf32> to vector<2x64xf32>
    %1473 = arith.negf %1472 : vector<2x64xf32>
    %1474 = math.exp %1473 : vector<2x64xf32>
    %cst_504 = arith.constant 1.000000e+00 : f32
    %1475 = vector.broadcast %cst_504 : f32 to vector<2x64xf32>
    %1476 = arith.addf %1475, %1474 : vector<2x64xf32>
    %1477 = arith.divf %1475, %1476 : vector<2x64xf32>
    %1478 = arith.mulf %1469, %1434 : vector<2x64xf32>
    %1479 = arith.mulf %1463, %1471 : vector<2x64xf32>
    %1480 = arith.addf %1478, %1479 : vector<2x64xf32>
    %1481 = math.tanh %1480 : vector<2x64xf32>
    %1482 = arith.mulf %1477, %1481 : vector<2x64xf32>
    %1483 = vector.extract_strided_slice %1482 {offsets = [0, 0], sizes = [2, 32], strides = [1, 1]} : vector<2x64xf32> to vector<2x32xf32>
    %1484 = arith.index_cast %c14_i32_495 : i32 to index
    %c0_505 = arith.constant 0 : index
    %c0_506 = arith.constant 0 : index
    %1485 = vector.load %arg28[%1484, %c0_505, %c0_506] : memref<16x2x32xf32, #tpu.memory_space<vmem>>, vector<1x2x32xf32>
    %1486 = vector.shape_cast %1485 : vector<1x2x32xf32> to vector<2x32xf32>
    %1487 = vector.shape_cast %1483 : vector<2x32xf32> to vector<1x2x32xf32>
    tpu.vector_store %arg28[%1484, %c0_505, %c0_506], %1487 {strides = array<i32>} : memref<16x2x32xf32, #tpu.memory_space<vmem>>, vector<1x2x32xf32>,
    %1488 = vector.extract_strided_slice %1482 {offsets = [0, 32], sizes = [2, 32], strides = [1, 1]} : vector<2x64xf32> to vector<2x32xf32>
    %c15_i32_507 = arith.constant 15 : i32
    %1489 = arith.subi %c15_i32_507, %c14_i32_495 : i32
    %1490 = arith.index_cast %1489 : i32 to index
    %c0_508 = arith.constant 0 : index
    %c0_509 = arith.constant 0 : index
    %1491 = vector.load %arg29[%1490, %c0_508, %c0_509] : memref<16x2x32xf32, #tpu.memory_space<vmem>>, vector<1x2x32xf32>
    %1492 = vector.shape_cast %1491 : vector<1x2x32xf32> to vector<2x32xf32>
    %1493 = vector.shape_cast %1488 : vector<2x32xf32> to vector<1x2x32xf32>
    tpu.vector_store %arg29[%1490, %c0_508, %c0_509], %1493 {strides = array<i32>} : memref<16x2x32xf32, #tpu.memory_space<vmem>>, vector<1x2x32xf32>,
    %c15_i32_510 = arith.constant 15 : i32
    %1494 = arith.index_cast %c15_i32_510 : i32 to index
    %c0_511 = arith.constant 0 : index
    %c0_512 = arith.constant 0 : index
    %1495 = vector.load %arg26[%1494, %c0_511, %c0_512] : memref<16x2x256xf32, #tpu.memory_space<vmem>>, vector<1x2x256xf32>
    %1496 = vector.shape_cast %1495 : vector<1x2x256xf32> to vector<2x256xf32>
    %c15_i32_513 = arith.constant 15 : i32
    %1497 = arith.subi %c15_i32_513, %c15_i32_510 : i32
    %1498 = arith.index_cast %1497 : i32 to index
    %c0_514 = arith.constant 0 : index
    %c0_515 = arith.constant 0 : index
    %1499 = vector.load %arg27[%1498, %c0_514, %c0_515] : memref<16x2x256xf32, #tpu.memory_space<vmem>>, vector<1x2x256xf32>
    %1500 = vector.shape_cast %1499 : vector<1x2x256xf32> to vector<2x256xf32>
    %1501 = arith.addf %1496, %1500 : vector<2x256xf32>
    %cst_516 = arith.constant dense<0.000000e+00> : vector<2x256xf32>
    %1502 = tpu.matmul %1482, %802, %cst_516 {dimension_numbers = #tpu.dot_dimension_numbers<[1], [0], [0], [1], [0, 0, 1, 1], [], []>} : vector<2x64xf32>, vector<64x256xf32>, vector<2x256xf32> -> vector<2x256xf32>
    %1503 = arith.addf %1501, %1502 : vector<2x256xf32>
    %1504 = vector.extract_strided_slice %1503 {offsets = [0, 0], sizes = [2, 64], strides = [1, 1]} : vector<2x256xf32> to vector<2x64xf32>
    %1505 = arith.negf %1504 : vector<2x64xf32>
    %1506 = math.exp %1505 : vector<2x64xf32>
    %cst_517 = arith.constant 1.000000e+00 : f32
    %1507 = vector.broadcast %cst_517 : f32 to vector<2x64xf32>
    %1508 = arith.addf %1507, %1506 : vector<2x64xf32>
    %1509 = arith.divf %1507, %1508 : vector<2x64xf32>
    %1510 = vector.extract_strided_slice %1503 {offsets = [0, 64], sizes = [2, 64], strides = [1, 1]} : vector<2x256xf32> to vector<2x64xf32>
    %1511 = arith.negf %1510 : vector<2x64xf32>
    %1512 = math.exp %1511 : vector<2x64xf32>
    %cst_518 = arith.constant 1.000000e+00 : f32
    %1513 = vector.broadcast %cst_518 : f32 to vector<2x64xf32>
    %1514 = arith.addf %1513, %1512 : vector<2x64xf32>
    %1515 = arith.divf %1513, %1514 : vector<2x64xf32>
    %1516 = vector.extract_strided_slice %1503 {offsets = [0, 128], sizes = [2, 64], strides = [1, 1]} : vector<2x256xf32> to vector<2x64xf32>
    %1517 = math.tanh %1516 : vector<2x64xf32>
    %1518 = vector.extract_strided_slice %1503 {offsets = [0, 192], sizes = [2, 64], strides = [1, 1]} : vector<2x256xf32> to vector<2x64xf32>
    %1519 = arith.negf %1518 : vector<2x64xf32>
    %1520 = math.exp %1519 : vector<2x64xf32>
    %cst_519 = arith.constant 1.000000e+00 : f32
    %1521 = vector.broadcast %cst_519 : f32 to vector<2x64xf32>
    %1522 = arith.addf %1521, %1520 : vector<2x64xf32>
    %1523 = arith.divf %1521, %1522 : vector<2x64xf32>
    %1524 = arith.mulf %1515, %1480 : vector<2x64xf32>
    %1525 = arith.mulf %1509, %1517 : vector<2x64xf32>
    %1526 = arith.addf %1524, %1525 : vector<2x64xf32>
    %1527 = math.tanh %1526 : vector<2x64xf32>
    %1528 = arith.mulf %1523, %1527 : vector<2x64xf32>
    %1529 = vector.extract_strided_slice %1528 {offsets = [0, 0], sizes = [2, 32], strides = [1, 1]} : vector<2x64xf32> to vector<2x32xf32>
    %1530 = arith.index_cast %c15_i32_510 : i32 to index
    %c0_520 = arith.constant 0 : index
    %c0_521 = arith.constant 0 : index
    %1531 = vector.load %arg28[%1530, %c0_520, %c0_521] : memref<16x2x32xf32, #tpu.memory_space<vmem>>, vector<1x2x32xf32>
    %1532 = vector.shape_cast %1531 : vector<1x2x32xf32> to vector<2x32xf32>
    %1533 = vector.shape_cast %1529 : vector<2x32xf32> to vector<1x2x32xf32>
    tpu.vector_store %arg28[%1530, %c0_520, %c0_521], %1533 {strides = array<i32>} : memref<16x2x32xf32, #tpu.memory_space<vmem>>, vector<1x2x32xf32>,
    %1534 = vector.extract_strided_slice %1528 {offsets = [0, 32], sizes = [2, 32], strides = [1, 1]} : vector<2x64xf32> to vector<2x32xf32>
    %c15_i32_522 = arith.constant 15 : i32
    %1535 = arith.subi %c15_i32_522, %c15_i32_510 : i32
    %1536 = arith.index_cast %1535 : i32 to index
    %c0_523 = arith.constant 0 : index
    %c0_524 = arith.constant 0 : index
    %1537 = vector.load %arg29[%1536, %c0_523, %c0_524] : memref<16x2x32xf32, #tpu.memory_space<vmem>>, vector<1x2x32xf32>
    %1538 = vector.shape_cast %1537 : vector<1x2x32xf32> to vector<2x32xf32>
    %1539 = vector.shape_cast %1534 : vector<2x32xf32> to vector<1x2x32xf32>
    tpu.vector_store %arg29[%1536, %c0_523, %c0_524], %1539 {strides = array<i32>} : memref<16x2x32xf32, #tpu.memory_space<vmem>>, vector<1x2x32xf32>,
    %c16_i32_525 = arith.constant 16 : i32
    %c0_526 = arith.constant 0 : index
    %c0_527 = arith.constant 0 : index
    %c0_528 = arith.constant 0 : index
    %1540 = vector.load %arg28[%c0_526, %c0_527, %c0_528] : memref<16x2x32xf32, #tpu.memory_space<vmem>>, vector<16x2x32xf32>
    %c0_529 = arith.constant 0 : index
    %c0_530 = arith.constant 0 : index
    %c0_531 = arith.constant 0 : index
    %1541 = vector.load %arg29[%c0_529, %c0_530, %c0_531] : memref<16x2x32xf32, #tpu.memory_space<vmem>>, vector<16x2x32xf32>
    %1542 = tpu.concatenate %1540, %1541 in 2 : vector<16x2x32xf32>, vector<16x2x32xf32> -> vector<16x2x64xf32>
    %cst_532 = arith.constant dense<0.000000e+00> : vector<2x64xf32>
    %1543 = vector.multi_reduction <add>, %1542, %cst_532 [0] : vector<16x2x64xf32> to vector<2x64xf32>
    %cst_533 = arith.constant 1.600000e+01 : f32
    %1544 = vector.broadcast %cst_533 : f32 to vector<2x64xf32>
    %1545 = arith.divf %1543, %1544 : vector<2x64xf32>
    %c0_534 = arith.constant 0 : index
    %c0_535 = arith.constant 0 : index
    %1546 = vector.load %arg15[%c0_534, %c0_535] : memref<64x4xf32, #tpu.memory_space<vmem>>, vector<64x4xf32>
    %cst_536 = arith.constant dense<0.000000e+00> : vector<2x4xf32>
    %1547 = tpu.matmul %1545, %1546, %cst_536 {dimension_numbers = #tpu.dot_dimension_numbers<[1], [0], [0], [1], [0, 0, 1, 1], [], []>} : vector<2x64xf32>, vector<64x4xf32>, vector<2x4xf32> -> vector<2x4xf32>
    %c0_537 = arith.constant 0 : index
    %c0_538 = arith.constant 0 : index
    %1548 = vector.load %arg16[%c0_537, %c0_538] : memref<1x4xf32, #tpu.memory_space<vmem>>, vector<1x4xf32>
    %1549 = vector.broadcast %1548 : vector<1x4xf32> to vector<2x4xf32>
    %1550 = arith.addf %1547, %1549 : vector<2x4xf32>
    %cst_539 = arith.constant 0.000000e+00 : f32
    %1551 = vector.broadcast %cst_539 : f32 to vector<2x4xf32>
    %1552 = arith.maximumf %1550, %1551 : vector<2x4xf32>
    %c0_540 = arith.constant 0 : index
    %c0_541 = arith.constant 0 : index
    %1553 = vector.load %arg17[%c0_540, %c0_541] : memref<4x64xf32, #tpu.memory_space<vmem>>, vector<4x64xf32>
    %cst_542 = arith.constant dense<0.000000e+00> : vector<2x64xf32>
    %1554 = tpu.matmul %1552, %1553, %cst_542 {dimension_numbers = #tpu.dot_dimension_numbers<[1], [0], [0], [1], [0, 0, 1, 1], [], []>} : vector<2x4xf32>, vector<4x64xf32>, vector<2x64xf32> -> vector<2x64xf32>
    %c0_543 = arith.constant 0 : index
    %c0_544 = arith.constant 0 : index
    %1555 = vector.load %arg18[%c0_543, %c0_544] : memref<1x64xf32, #tpu.memory_space<vmem>>, vector<1x64xf32>
    %1556 = vector.broadcast %1555 : vector<1x64xf32> to vector<2x64xf32>
    %1557 = arith.addf %1554, %1556 : vector<2x64xf32>
    %1558 = arith.negf %1557 : vector<2x64xf32>
    %1559 = math.exp %1558 : vector<2x64xf32>
    %cst_545 = arith.constant 1.000000e+00 : f32
    %1560 = vector.broadcast %cst_545 : f32 to vector<2x64xf32>
    %1561 = arith.addf %1560, %1559 : vector<2x64xf32>
    %1562 = arith.divf %1560, %1561 : vector<2x64xf32>
    %1563 = vector.shape_cast %1562 : vector<2x64xf32> to vector<1x2x64xf32>
    %1564 = vector.broadcast %1563 : vector<1x2x64xf32> to vector<16x2x64xf32>
    %1565 = arith.mulf %1542, %1564 : vector<16x2x64xf32>
    %cst_546 = arith.constant 0.000000e+00 : f32
    %1566 = vector.broadcast %cst_546 : f32 to vector<1x2x64xf32>
    %1567 = vector.extract_strided_slice %1565 {offsets = [0, 0, 0], sizes = [15, 2, 64], strides = [1, 1, 1]} : vector<16x2x64xf32> to vector<15x2x64xf32>
    %1568 = tpu.concatenate %1566, %1567 in 0 : vector<1x2x64xf32>, vector<15x2x64xf32> -> vector<16x2x64xf32>
    %1569 = vector.extract_strided_slice %1565 {offsets = [1, 0, 0], sizes = [15, 2, 64], strides = [1, 1, 1]} : vector<16x2x64xf32> to vector<15x2x64xf32>
    %1570 = tpu.concatenate %1569, %1566 in 0 : vector<15x2x64xf32>, vector<1x2x64xf32> -> vector<16x2x64xf32>
    %1571 = tpu.concatenate %1568, %1565, %1570 in 2 : vector<16x2x64xf32>, vector<16x2x64xf32>, vector<16x2x64xf32> -> vector<16x2x192xf32>
    %1572 = vector.shape_cast %1571 : vector<16x2x192xf32> to vector<32x192xf32>
    %c0_547 = arith.constant 0 : index
    %c0_548 = arith.constant 0 : index
    %1573 = vector.load %arg19[%c0_547, %c0_548] : memref<192x64xf32, #tpu.memory_space<vmem>>, vector<192x64xf32>
    %cst_549 = arith.constant dense<0.000000e+00> : vector<32x64xf32>
    %1574 = tpu.matmul %1572, %1573, %cst_549 {dimension_numbers = #tpu.dot_dimension_numbers<[1], [0], [0], [1], [0, 0, 1, 1], [], []>} : vector<32x192xf32>, vector<192x64xf32>, vector<32x64xf32> -> vector<32x64xf32>
    %c0_550 = arith.constant 0 : index
    %c0_551 = arith.constant 0 : index
    %1575 = vector.load %arg20[%c0_550, %c0_551] : memref<1x64xf32, #tpu.memory_space<vmem>>, vector<1x64xf32>
    %1576 = vector.broadcast %1575 : vector<1x64xf32> to vector<32x64xf32>
    %1577 = arith.addf %1574, %1576 : vector<32x64xf32>
    %1578 = vector.shape_cast %1577 : vector<32x64xf32> to vector<16x2x64xf32>
    %cst_552 = arith.constant dense<0.000000e+00> : vector<16x2xf32>
    %1579 = vector.multi_reduction <add>, %1578, %cst_552 [2] : vector<16x2x64xf32> to vector<16x2xf32>
    %1580 = vector.shape_cast %1579 : vector<16x2xf32> to vector<16x2x1xf32>
    %cst_553 = arith.constant 6.400000e+01 : f32
    %1581 = vector.broadcast %cst_553 : f32 to vector<16x2x1xf32>
    %1582 = arith.divf %1580, %1581 : vector<16x2x1xf32>
    %1583 = vector.broadcast %1582 : vector<16x2x1xf32> to vector<16x2x64xf32>
    %1584 = arith.subf %1578, %1583 : vector<16x2x64xf32>
    %1585 = arith.mulf %1584, %1584 : vector<16x2x64xf32>
    %cst_554 = arith.constant dense<0.000000e+00> : vector<16x2xf32>
    %1586 = vector.multi_reduction <add>, %1585, %cst_554 [2] : vector<16x2x64xf32> to vector<16x2xf32>
    %1587 = vector.shape_cast %1586 : vector<16x2xf32> to vector<16x2x1xf32>
    %cst_555 = arith.constant 6.400000e+01 : f32
    %1588 = vector.broadcast %cst_555 : f32 to vector<16x2x1xf32>
    %1589 = arith.divf %1587, %1588 : vector<16x2x1xf32>
    %1590 = vector.broadcast %1582 : vector<16x2x1xf32> to vector<16x2x64xf32>
    %1591 = arith.subf %1578, %1590 : vector<16x2x64xf32>
    %cst_556 = arith.constant 9.99999974E-6 : f32
    %1592 = vector.broadcast %cst_556 : f32 to vector<16x2x1xf32>
    %1593 = arith.addf %1589, %1592 : vector<16x2x1xf32>
    %1594 = math.rsqrt %1593 : vector<16x2x1xf32>
    %1595 = vector.broadcast %1594 : vector<16x2x1xf32> to vector<16x2x64xf32>
    %1596 = arith.mulf %1591, %1595 : vector<16x2x64xf32>
    %c0_557 = arith.constant 0 : index
    %c0_558 = arith.constant 0 : index
    %1597 = vector.load %arg21[%c0_557, %c0_558] : memref<1x64xf32, #tpu.memory_space<vmem>>, vector<1x64xf32>
    %1598 = vector.shape_cast %1597 : vector<1x64xf32> to vector<1x1x64xf32>
    %1599 = vector.broadcast %1598 : vector<1x1x64xf32> to vector<16x2x64xf32>
    %1600 = arith.mulf %1596, %1599 : vector<16x2x64xf32>
    %c0_559 = arith.constant 0 : index
    %c0_560 = arith.constant 0 : index
    %1601 = vector.load %arg22[%c0_559, %c0_560] : memref<1x64xf32, #tpu.memory_space<vmem>>, vector<1x64xf32>
    %1602 = vector.shape_cast %1601 : vector<1x64xf32> to vector<1x1x64xf32>
    %1603 = vector.broadcast %1602 : vector<1x1x64xf32> to vector<16x2x64xf32>
    %1604 = arith.addf %1600, %1603 : vector<16x2x64xf32>
    %cst_561 = arith.constant dense<0.000000e+00> : vector<2x64xf32>
    %1605 = vector.multi_reduction <add>, %1604, %cst_561 [0] : vector<16x2x64xf32> to vector<2x64xf32>
    %cst_562 = arith.constant 1.600000e+01 : f32
    %1606 = vector.broadcast %cst_562 : f32 to vector<2x64xf32>
    %1607 = arith.divf %1605, %1606 : vector<2x64xf32>
    %c0_563 = arith.constant 0 : index
    %c0_564 = arith.constant 0 : index
    %1608 = vector.load %arg23[%c0_563, %c0_564] : memref<64x2xf32, #tpu.memory_space<vmem>>, vector<64x2xf32>
    %cst_565 = arith.constant dense<0.000000e+00> : vector<2x2xf32>
    %1609 = tpu.matmul %1607, %1608, %cst_565 {dimension_numbers = #tpu.dot_dimension_numbers<[1], [0], [0], [1], [0, 0, 1, 1], [], []>} : vector<2x64xf32>, vector<64x2xf32>, vector<2x2xf32> -> vector<2x2xf32>
    %c0_566 = arith.constant 0 : index
    %c0_567 = arith.constant 0 : index
    %1610 = vector.load %arg24[%c0_566, %c0_567] : memref<1x2xf32, #tpu.memory_space<vmem>>, vector<1x2xf32>
    %1611 = vector.broadcast %1610 : vector<1x2xf32> to vector<2x2xf32>
    %1612 = arith.addf %1609, %1611 : vector<2x2xf32>
    %c0_568 = arith.constant 0 : index
    %c0_569 = arith.constant 0 : index
    %1613 = vector.load %arg25[%c0_568, %c0_569] : memref<2x2xf32, #tpu.memory_space<vmem>>, vector<2x2xf32>
    tpu.vector_store %arg25[%c0_568, %c0_569], %1612 {strides = array<i32>} : memref<2x2xf32, #tpu.memory_space<vmem>>, vector<2x2xf32>,
    return
  }
}

</mosaic_0001>

<llo_original>
// kernel: lstm_separator_forward.1
$region0: #{lstm_separator_forward.1}
  #allocation0 [shape = 'u32[]', space=smem, size = 0x4, offset = 0x4, fixed_abs, tag = 'smem constant byte address 0x4 - core index']
  #allocation1 [shape = 'u32[144,128]{1,0:T(1,128)}', space=vmem, size = 0x12000, scoped, tag = 'internal scratch']
  #allocation2 [shape = 'f32[16,2,256]{2,1,0:T(2,128)}', space=vmem, size = 0x8000, scoped, tag = 'scratch operand']
  #allocation3 [shape = 'f32[16,2,256]{2,1,0:T(2,128)}', space=vmem, size = 0x8000, scoped, tag = 'scratch operand']
  #allocation4 [shape = 'f32[16,2,32]{2,1,0:T(2,128)}', space=vmem, size = 0x4000, scoped, tag = 'scratch operand']
  #allocation5 [shape = 'f32[16,2,32]{2,1,0:T(2,128)}', space=vmem, size = 0x4000, scoped, tag = 'scratch operand']
  %s0 = inlined_call_operand.vmem [shape: f32[16,2,2], index: 0, kind: input, shape index: {}]
  %s1 = inlined_call_operand.hbm [shape: f32[6,32], index: 1, kind: input, shape index: {}]
  %s2 = inlined_call_operand.hbm [shape: f32[1,32], index: 2, kind: input, shape index: {}]
  %s3 = inlined_call_operand.hbm [shape: f32[32,256], index: 3, kind: input, shape index: {}]
  %s4 = inlined_call_operand.vmem [shape: f32[32,256], index: 4, kind: input, shape index: {}]
  %s5 = inlined_call_operand.vmem [shape: f32[64,256], index: 5, kind: input, shape index: {}]
  %s6 = inlined_call_operand.hbm [shape: f32[1,256], index: 6, kind: input, shape index: {}]
  %s7 = inlined_call_operand.vmem [shape: f32[64,4], index: 7, kind: input, shape index: {}]
  %s8 = inlined_call_operand.hbm [shape: f32[1,4], index: 8, kind: input, shape index: {}]
  %s9 = inlined_call_operand.vmem [shape: f32[4,64], index: 9, kind: input, shape index: {}]
  %s10 = inlined_call_operand.vmem [shape: f32[1,64], index: 10, kind: input, shape index: {}]
  %s11 = inlined_call_operand.vmem [shape: f32[64,256], index: 11, kind: input, shape index: {}]
  %s12 = inlined_call_operand.vmem [shape: f32[64,256], index: 12, kind: input, shape index: {}]
  %s13 = inlined_call_operand.vmem [shape: f32[64,256], index: 13, kind: input, shape index: {}]
  %s14 = inlined_call_operand.vmem [shape: f32[1,256], index: 14, kind: input, shape index: {}]
  %s15 = inlined_call_operand.vmem [shape: f32[64,4], index: 15, kind: input, shape index: {}]
  %s16 = inlined_call_operand.vmem [shape: f32[1,4], index: 16, kind: input, shape index: {}]
  %s17 = inlined_call_operand.vmem [shape: f32[4,64], index: 17, kind: input, shape index: {}]
  %s18 = inlined_call_operand.vmem [shape: f32[1,64], index: 18, kind: input, shape index: {}]
  %s19 = inlined_call_operand.vmem [shape: f32[192,64], index: 19, kind: input, shape index: {}]
  %s20 = inlined_call_operand.vmem [shape: f32[1,64], index: 20, kind: input, shape index: {}]
  %s21 = inlined_call_operand.vmem [shape: f32[1,64], index: 21, kind: input, shape index: {}]
  %s22 = inlined_call_operand.vmem [shape: f32[1,64], index: 22, kind: input, shape index: {}]
  %s23 = inlined_call_operand.vmem [shape: f32[64,2], index: 23, kind: input, shape index: {}]
  %s24 = inlined_call_operand.vmem [shape: f32[1,2], index: 24, kind: input, shape index: {}]
  %s25 = inlined_call_operand.hbm [shape: f32[2,2], index: 25, kind: output, shape index: {}]
  %s26 = sld [smem:[#allocation0]]
  $region130: #{lstm_separator_forward.1} parent=0
    _
  %s28 = ssub.s32 1, %s26
  %s29 = scalar_select 0, %s28, %s26
  $region1: #{lstm_separator_forward.1} parent=0
    #allocation6 [shape = 'u8[4096]{0}', space=vmem, size = 0x1000, scoped, tag = 'input window, operand 1, single buffered']
    #allocation7 [shape = 's32[1]{0}', space=sflag, size = 0x4, scoped, tag = 'scoped memory for lstm_separator_forward.1']
    #allocation8 [shape = 's32[1]{0}', space=sflag, size = 0x4, scoped, tag = 'scoped memory for lstm_separator_forward.1']
    #allocation9 [shape = 'u8[512]{0}', space=vmem, size = 0x400, scoped, tag = 'input window, operand 2, single buffered']
    #allocation10 [shape = 's32[1]{0}', space=sflag, size = 0x4, scoped, tag = 'scoped memory for lstm_separator_forward.1']
    #allocation11 [shape = 'u8[32768]{0}', space=vmem, size = 0x8000, scoped, tag = 'input window, operand 3, single buffered']
    #allocation12 [shape = 'u8[1024]{0}', space=vmem, size = 0x400, scoped, tag = 'input window, operand 6, single buffered']
    #allocation13 [shape = 's32[1]{0}', space=sflag, size = 0x4, scoped, tag = 'scoped memory for lstm_separator_forward.1']
    #allocation14 [shape = 'u8[512]{0}', space=vmem, size = 0x400, scoped, tag = 'input window, operand 8, single buffered']
    #allocation15 [shape = 'u8[1024]{0}', space=vmem, size = 0x400, scoped, tag = 'output window, operand 0, single buffered']
    %30 = vsyncpa [#allocation7], 0
    %31 = vsyncpa [#allocation10], 0
    %32 = vsyncpa [#allocation13], 0
    %33 = vsyncpa [#allocation8], 0
    // Predicated region
    $region2: #{lstm_separator_forward.1} parent=1 // pred_check
      _
    $region3: #{lstm_separator_forward.1} parent=1 // pred_check_branch
      %35 = sbr.rel (0) target = $region5
    $region4: #{lstm_separator_forward.1} parent=1 // pred_region
      _
    $region5: #{lstm_separator_forward.1} parent=1 // pred_fallthru
      _
    // Predicated region
    $region6: #{lstm_separator_forward.1} parent=1 // pred_check
      _
    $region7: #{lstm_separator_forward.1} parent=1 // pred_check_branch
      %37 = sbr.rel (0) target = $region9
    $region8: #{lstm_separator_forward.1} parent=1 // pred_region
      %s39 = ssub.s32 128, 128
      %40 = vsyncadd [#allocation7], %s39
      %s42 = sshll.u32 [#allocation6], 4
      %s43 = int_to_ptr.vmem [resolvable:$true] %s42
      %45 = dma.hbm_to_vmem [thread:$0]  %s1, 128, %s43, [#allocation7]
    $region9: #{lstm_separator_forward.1} parent=1 // pred_fallthru
      _
    // Predicated region
    $region10: #{lstm_separator_forward.1} parent=1 // pred_check
      _
    $region11: #{lstm_separator_forward.1} parent=1 // pred_check_branch
      %47 = sbr.rel (0) target = $region13
    $region12: #{lstm_separator_forward.1} parent=1 // pred_region
      %s49 = ssub.s32 16, 16
      %50 = vsyncadd [#allocation10], %s49
      %s52 = sshll.u32 [#allocation9], 4
      %s53 = int_to_ptr.vmem [resolvable:$true] %s52
      %55 = dma.hbm_to_vmem [thread:$0]  %s2, 16, %s53, [#allocation10]
    $region13: #{lstm_separator_forward.1} parent=1 // pred_fallthru
      _
    // Predicated region
    $region14: #{lstm_separator_forward.1} parent=1 // pred_check
      _
    $region15: #{lstm_separator_forward.1} parent=1 // pred_check_branch
      %57 = sbr.rel (0) target = $region17
    $region16: #{lstm_separator_forward.1} parent=1 // pred_region
      %s59 = ssub.s32 1024, 1024
      %60 = vsyncadd [#allocation10], %s59
      %s61 = sshll.u32 [#allocation11], 4
      %s62 = int_to_ptr.vmem [resolvable:$true] %s61
      %67 = dma.hbm_to_vmem [thread:$0]  %s3, 1024, %s62, [#allocation10], 256, 256, 16
    $region17: #{lstm_separator_forward.1} parent=1 // pred_fallthru
      _
    // Predicated region
    $region18: #{lstm_separator_forward.1} parent=1 // pred_check
      _
    $region19: #{lstm_separator_forward.1} parent=1 // pred_check_branch
      %69 = sbr.rel (0) target = $region21
    $region20: #{lstm_separator_forward.1} parent=1 // pred_region
      _
    $region21: #{lstm_separator_forward.1} parent=1 // pred_fallthru
      _
    // Predicated region
    $region22: #{lstm_separator_forward.1} parent=1 // pred_check
      _
    $region23: #{lstm_separator_forward.1} parent=1 // pred_check_branch
      %71 = sbr.rel (0) target = $region25
    $region24: #{lstm_separator_forward.1} parent=1 // pred_region
      _
    $region25: #{lstm_separator_forward.1} parent=1 // pred_fallthru
      _
    // Predicated region
    $region26: #{lstm_separator_forward.1} parent=1 // pred_check
      _
    $region27: #{lstm_separator_forward.1} parent=1 // pred_check_branch
      %73 = sbr.rel (0) target = $region29
    $region28: #{lstm_separator_forward.1} parent=1 // pred_region
      %s75 = ssub.s32 32, 32
      %76 = vsyncadd [#allocation13], %s75
      %s78 = sshll.u32 [#allocation12], 4
      %s79 = int_to_ptr.vmem [resolvable:$true] %s78
      %81 = dma.hbm_to_vmem [thread:$0]  %s6, 32, %s79, [#allocation13]
    $region29: #{lstm_separator_forward.1} parent=1 // pred_fallthru
      _
    // Predicated region
    $region30: #{lstm_separator_forward.1} parent=1 // pred_check
      _
    $region31: #{lstm_separator_forward.1} parent=1 // pred_check_branch
      %83 = sbr.rel (0) target = $region33
    $region32: #{lstm_separator_forward.1} parent=1 // pred_region
      _
    $region33: #{lstm_separator_forward.1} parent=1 // pred_fallthru
      _
    // Predicated region
    $region34: #{lstm_separator_forward.1} parent=1 // pred_check
      _
    $region35: #{lstm_separator_forward.1} parent=1 // pred_check_branch
      %85 = sbr.rel (0) target = $region37
    $region36: #{lstm_separator_forward.1} parent=1 // pred_region
      %s87 = ssub.s32 16, 16
      %88 = vsyncadd [#allocation13], %s87
      %s90 = sshll.u32 [#allocation14], 4
      %s91 = int_to_ptr.vmem [resolvable:$true] %s90
      %93 = dma.hbm_to_vmem [thread:$0]  %s8, 16, %s91, [#allocation13]
    $region37: #{lstm_separator_forward.1} parent=1 // pred_fallthru
      _
    // Predicated region
    $region38: #{lstm_separator_forward.1} parent=1 // pred_check
      _
    $region39: #{lstm_separator_forward.1} parent=1 // pred_check_branch
      %95 = sbr.rel (0) target = $region41
    $region40: #{lstm_separator_forward.1} parent=1 // pred_region
      _
    $region41: #{lstm_separator_forward.1} parent=1 // pred_fallthru
      _
    // Predicated region
    $region42: #{lstm_separator_forward.1} parent=1 // pred_check
      _
    $region43: #{lstm_separator_forward.1} parent=1 // pred_check_branch
      %97 = sbr.rel (0) target = $region45
    $region44: #{lstm_separator_forward.1} parent=1 // pred_region
      _
    $region45: #{lstm_separator_forward.1} parent=1 // pred_fallthru
      _
    // Predicated region
    $region46: #{lstm_separator_forward.1} parent=1 // pred_check
      _
    $region47: #{lstm_separator_forward.1} parent=1 // pred_check_branch
      %99 = sbr.rel (0) target = $region49
    $region48: #{lstm_separator_forward.1} parent=1 // pred_region
      _
    $region49: #{lstm_separator_forward.1} parent=1 // pred_fallthru
      _
    // Predicated region
    $region50: #{lstm_separator_forward.1} parent=1 // pred_check
      _
    $region51: #{lstm_separator_forward.1} parent=1 // pred_check_branch
      %101 = sbr.rel (0) target = $region53
    $region52: #{lstm_separator_forward.1} parent=1 // pred_region
      _
    $region53: #{lstm_separator_forward.1} parent=1 // pred_fallthru
      _
    // Predicated region
    $region54: #{lstm_separator_forward.1} parent=1 // pred_check
      _
    $region55: #{lstm_separator_forward.1} parent=1 // pred_check_branch
      %103 = sbr.rel (0) target = $region57
    $region56: #{lstm_separator_forward.1} parent=1 // pred_region
      _
    $region57: #{lstm_separator_forward.1} parent=1 // pred_fallthru
      _
    // Predicated region
    $region58: #{lstm_separator_forward.1} parent=1 // pred_check
      _
    $region59: #{lstm_separator_forward.1} parent=1 // pred_check_branch
      %105 = sbr.rel (0) target = $region61
    $region60: #{lstm_separator_forward.1} parent=1 // pred_region
      _
    $region61: #{lstm_separator_forward.1} parent=1 // pred_fallthru
      _
    // Predicated region
    $region62: #{lstm_separator_forward.1} parent=1 // pred_check
      _
    $region63: #{lstm_separator_forward.1} parent=1 // pred_check_branch
      %107 = sbr.rel (0) target = $region65
    $region64: #{lstm_separator_forward.1} parent=1 // pred_region
      _
    $region65: #{lstm_separator_forward.1} parent=1 // pred_fallthru
      _
    // Predicated region
    $region66: #{lstm_separator_forward.1} parent=1 // pred_check
      _
    $region67: #{lstm_separator_forward.1} parent=1 // pred_check_branch
      %109 = sbr.rel (0) target = $region69
    $region68: #{lstm_separator_forward.1} parent=1 // pred_region
      _
    $region69: #{lstm_separator_forward.1} parent=1 // pred_fallthru
      _
    // Predicated region
    $region70: #{lstm_separator_forward.1} parent=1 // pred_check
      _
    $region71: #{lstm_separator_forward.1} parent=1 // pred_check_branch
      %111 = sbr.rel (0) target = $region73
    $region72: #{lstm_separator_forward.1} parent=1 // pred_region
      _
    $region73: #{lstm_separator_forward.1} parent=1 // pred_fallthru
      _
    // Predicated region
    $region74: #{lstm_separator_forward.1} parent=1 // pred_check
      _
    $region75: #{lstm_separator_forward.1} parent=1 // pred_check_branch
      %113 = sbr.rel (0) target = $region77
    $region76: #{lstm_separator_forward.1} parent=1 // pred_region
      _
    $region77: #{lstm_separator_forward.1} parent=1 // pred_fallthru
      _
    // Predicated region
    $region78: #{lstm_separator_forward.1} parent=1 // pred_check
      _
    $region79: #{lstm_separator_forward.1} parent=1 // pred_check_branch
      %115 = sbr.rel (0) target = $region81
    $region80: #{lstm_separator_forward.1} parent=1 // pred_region
      _
    $region81: #{lstm_separator_forward.1} parent=1 // pred_fallthru
      _
    // Predicated region
    $region82: #{lstm_separator_forward.1} parent=1 // pred_check
      _
    $region83: #{lstm_separator_forward.1} parent=1 // pred_check_branch
      %117 = sbr.rel (0) target = $region85
    $region84: #{lstm_separator_forward.1} parent=1 // pred_region
      _
    $region85: #{lstm_separator_forward.1} parent=1 // pred_fallthru
      _
    // Predicated region
    $region86: #{lstm_separator_forward.1} parent=1 // pred_check
      _
    $region87: #{lstm_separator_forward.1} parent=1 // pred_check_branch
      %119 = sbr.rel (0) target = $region89
    $region88: #{lstm_separator_forward.1} parent=1 // pred_region
      _
    $region89: #{lstm_separator_forward.1} parent=1 // pred_fallthru
      _
    // Predicated region
    $region90: #{lstm_separator_forward.1} parent=1 // pred_check
      _
    $region91: #{lstm_separator_forward.1} parent=1 // pred_check_branch
      %121 = sbr.rel (0) target = $region93
    $region92: #{lstm_separator_forward.1} parent=1 // pred_region
      _
    $region93: #{lstm_separator_forward.1} parent=1 // pred_fallthru
      _
    // Predicated region
    $region94: #{lstm_separator_forward.1} parent=1 // pred_check
      _
    $region95: #{lstm_separator_forward.1} parent=1 // pred_check_branch
      %123 = sbr.rel (0) target = $region97
    $region96: #{lstm_separator_forward.1} parent=1 // pred_region
      _
    $region97: #{lstm_separator_forward.1} parent=1 // pred_fallthru
      _
    // Predicated region
    $region98: #{lstm_separator_forward.1} parent=1 // pred_check
      _
    $region99: #{lstm_separator_forward.1} parent=1 // pred_check_branch
      %125 = sbr.rel (0) target = $region101
    $region100: #{lstm_separator_forward.1} parent=1 // pred_region
      _
    $region101: #{lstm_separator_forward.1} parent=1 // pred_fallthru
      _
    // Predicated region
    $region102: #{lstm_separator_forward.1} parent=1 // pred_check
      _
    $region103: #{lstm_separator_forward.1} parent=1 // pred_check_branch
      %127 = sbr.rel (0) target = $region105
    $region104: #{lstm_separator_forward.1} parent=1 // pred_region
      %128 = dma.done [#allocation7], 128
    $region105: #{lstm_separator_forward.1} parent=1 // pred_fallthru
      _
    // Predicated region
    $region106: #{lstm_separator_forward.1} parent=1 // pred_check
      _
    $region107: #{lstm_separator_forward.1} parent=1 // pred_check_branch
      %130 = sbr.rel (0) target = $region109
    $region108: #{lstm_separator_forward.1} parent=1 // pred_region
      %131 = dma.done [#allocation10], 16
    $region109: #{lstm_separator_forward.1} parent=1 // pred_fallthru
      _
    // Predicated region
    $region110: #{lstm_separator_forward.1} parent=1 // pred_check
      _
    $region111: #{lstm_separator_forward.1} parent=1 // pred_check_branch
      %133 = sbr.rel (0) target = $region113
    $region112: #{lstm_separator_forward.1} parent=1 // pred_region
      %134 = dma.done [#allocation10], 1024
    $region113: #{lstm_separator_forward.1} parent=1 // pred_fallthru
      _
    // Predicated region
    $region114: #{lstm_separator_forward.1} parent=1 // pred_check
      _
    $region115: #{lstm_separator_forward.1} parent=1 // pred_check_branch
      %136 = sbr.rel (0) target = $region117
    $region116: #{lstm_separator_forward.1} parent=1 // pred_region
      %137 = dma.done [#allocation13], 32
    $region117: #{lstm_separator_forward.1} parent=1 // pred_fallthru
      _
    // Predicated region
    $region118: #{lstm_separator_forward.1} parent=1 // pred_check
      _
    $region119: #{lstm_separator_forward.1} parent=1 // pred_check_branch
      %139 = sbr.rel (0) target = $region121
    $region120: #{lstm_separator_forward.1} parent=1 // pred_region
      %140 = dma.done [#allocation13], 16
    $region121: #{lstm_separator_forward.1} parent=1 // pred_fallthru
      _
    %v141 = vld [vmem:[%s0] sm:$0x3]
    %v142 = vld [vmem:[%s0 + $0x2] sm:$0x3]
    %v143 = vld [vmem:[%s0 + $0x4] sm:$0x3]
    %v144 = vld [vmem:[%s0 + $0x6] sm:$0x3]
    %v145 = vld [vmem:[%s0 + $0x8] sm:$0x3]
    %v146 = vld [vmem:[%s0 + $0xa] sm:$0x3]
    %v147 = vld [vmem:[%s0 + $0xc] sm:$0x3]
    %v148 = vld [vmem:[%s0 + $0xe] sm:$0x3]
    %v149 = vld [vmem:[%s0 + $0x10] sm:$0x3]
    %v150 = vld [vmem:[%s0 + $0x12] sm:$0x3]
    %v151 = vld [vmem:[%s0 + $0x14] sm:$0x3]
    %v152 = vld [vmem:[%s0 + $0x16] sm:$0x3]
    %v153 = vld [vmem:[%s0 + $0x18] sm:$0x3]
    %v154 = vld [vmem:[%s0 + $0x1a] sm:$0x3]
    %v155 = vld [vmem:[%s0 + $0x1c] sm:$0x3]
    %v156 = vld [vmem:[%s0 + $0x1e] sm:$0x3]
    %173 = vrot.lane.b32.xlu0 %v141, 2
    %v174 = vpop.permute.xlu0 %173
    %175 = vrot.lane.b32.xlu0 %v142, 2
    %v176 = vpop.permute.xlu0 %175
    %177 = vrot.lane.b32.xlu0 %v143, 2
    %v178 = vpop.permute.xlu0 %177
    %179 = vrot.lane.b32.xlu0 %v144, 2
    %v180 = vpop.permute.xlu0 %179
    %181 = vrot.lane.b32.xlu0 %v145, 2
    %v182 = vpop.permute.xlu0 %181
    %183 = vrot.lane.b32.xlu0 %v146, 2
    %v184 = vpop.permute.xlu0 %183
    %185 = vrot.lane.b32.xlu0 %v147, 2
    %v186 = vpop.permute.xlu0 %185
    %187 = vrot.lane.b32.xlu0 %v148, 2
    %v188 = vpop.permute.xlu0 %187
    %189 = vrot.lane.b32.xlu0 %v149, 2
    %v190 = vpop.permute.xlu0 %189
    %191 = vrot.lane.b32.xlu0 %v150, 2
    %v192 = vpop.permute.xlu0 %191
    %193 = vrot.lane.b32.xlu0 %v151, 2
    %v194 = vpop.permute.xlu0 %193
    %195 = vrot.lane.b32.xlu0 %v152, 2
    %v196 = vpop.permute.xlu0 %195
    %197 = vrot.lane.b32.xlu0 %v153, 2
    %v198 = vpop.permute.xlu0 %197
    %199 = vrot.lane.b32.xlu0 %v154, 2
    %v200 = vpop.permute.xlu0 %199
    %201 = vrot.lane.b32.xlu0 %v155, 2
    %v202 = vpop.permute.xlu0 %201
    %203 = vrot.lane.b32.xlu0 %v156, 2
    %v204 = vpop.permute.xlu0 %203
    %222 = vrot.lane.b32.xlu0 %v142, 4
    %v223 = vpop.permute.xlu0 %222
    %224 = vrot.lane.b32.xlu0 %v143, 4
    %v225 = vpop.permute.xlu0 %224
    %226 = vrot.lane.b32.xlu0 %v144, 4
    %v227 = vpop.permute.xlu0 %226
    %228 = vrot.lane.b32.xlu0 %v145, 4
    %v229 = vpop.permute.xlu0 %228
    %230 = vrot.lane.b32.xlu0 %v146, 4
    %v231 = vpop.permute.xlu0 %230
    %232 = vrot.lane.b32.xlu0 %v147, 4
    %v233 = vpop.permute.xlu0 %232
    %234 = vrot.lane.b32.xlu0 %v148, 4
    %v235 = vpop.permute.xlu0 %234
    %236 = vrot.lane.b32.xlu0 %v149, 4
    %v237 = vpop.permute.xlu0 %236
    %238 = vrot.lane.b32.xlu0 %v150, 4
    %v239 = vpop.permute.xlu0 %238
    %240 = vrot.lane.b32.xlu0 %v151, 4
    %v241 = vpop.permute.xlu0 %240
    %242 = vrot.lane.b32.xlu0 %v152, 4
    %v243 = vpop.permute.xlu0 %242
    %244 = vrot.lane.b32.xlu0 %v153, 4
    %v245 = vpop.permute.xlu0 %244
    %246 = vrot.lane.b32.xlu0 %v154, 4
    %v247 = vpop.permute.xlu0 %246
    %248 = vrot.lane.b32.xlu0 %v155, 4
    %v249 = vpop.permute.xlu0 %248
    %250 = vrot.lane.b32.xlu0 %v156, 4
    %v251 = vpop.permute.xlu0 %250
    %252 = vrot.lane.b32.xlu0 0.0, 4
    %v253 = vpop.permute.xlu0 %252
    %vm270 = vcmask 15360
    %v271 = vsel %vm270, 0.0, %v174
    %v272 = vsel %vm270, %v141, %v176
    %v273 = vsel %vm270, %v142, %v178
    %v274 = vsel %vm270, %v143, %v180
    %v275 = vsel %vm270, %v144, %v182
    %v276 = vsel %vm270, %v145, %v184
    %v277 = vsel %vm270, %v146, %v186
    %v278 = vsel %vm270, %v147, %v188
    %v279 = vsel %vm270, %v148, %v190
    %v280 = vsel %vm270, %v149, %v192
    %v281 = vsel %vm270, %v150, %v194
    %v282 = vsel %vm270, %v151, %v196
    %v283 = vsel %vm270, %v152, %v198
    %v284 = vsel %vm270, %v153, %v200
    %v285 = vsel %vm270, %v154, %v202
    %v286 = vsel %vm270, %v155, %v204
    %vm287 = vcmask 31744
    %v288 = vsel %vm287, %v271, %v223
    %v289 = vsel %vm287, %v272, %v225
    %v290 = vsel %vm287, %v273, %v227
    %v291 = vsel %vm287, %v274, %v229
    %v292 = vsel %vm287, %v275, %v231
    %v293 = vsel %vm287, %v276, %v233
    %v294 = vsel %vm287, %v277, %v235
    %v295 = vsel %vm287, %v278, %v237
    %v296 = vsel %vm287, %v279, %v239
    %v297 = vsel %vm287, %v280, %v241
    %v298 = vsel %vm287, %v281, %v243
    %v299 = vsel %vm287, %v282, %v245
    %v300 = vsel %vm287, %v283, %v247
    %v301 = vsel %vm287, %v284, %v249
    %v302 = vsel %vm287, %v285, %v251
    %v303 = vsel %vm287, %v286, %v253
    %v304 = vld [vmem:[#allocation6] sm:$0x3f]
    %v305 = vld [vmem:[#allocation9] sm:$0x1]
    %v307 = vlaneseq
    %v308 = vshrl.u32 %v307, 7
    %v309 = vsub.s32 0, %v308
    %v310 = vrot.slane %v305, %v309
    %v328 = vcombine.low %v288, %v289
    %v329 = vcombine.low %v290, %v291
    %v331 = vunpack.c.l.s4 1983009808
    %v332 = vunpack.c.0.s8 %v331
    %v333 = vlaneseq
    %v334 = vshrl.u32 %v333, 7
    %v335 = vsub.s32 %v332, %v334
    %v336 = vrot.slane %v328, %v335
    %v338 = vunpack.c.l.s4 1983009808
    %v339 = vunpack.c.0.s8 %v338
    %v340 = vlaneseq
    %v341 = vshrl.u32 %v340, 7
    %v342 = vsub.s32 %v339, %v341
    %v343 = vrot.slane %v329, %v342
    %v344 = vcombine.low %v336, %v343
    %v345 = vcombine.low %v292, %v293
    %v346 = vcombine.low %v294, %v295
    %v348 = vunpack.c.l.s4 1983009808
    %v349 = vunpack.c.0.s8 %v348
    %v350 = vlaneseq
    %v351 = vshrl.u32 %v350, 7
    %v352 = vsub.s32 %v349, %v351
    %v353 = vrot.slane %v345, %v352
    %v355 = vunpack.c.l.s4 1983009808
    %v356 = vunpack.c.0.s8 %v355
    %v357 = vlaneseq
    %v358 = vshrl.u32 %v357, 7
    %v359 = vsub.s32 %v356, %v358
    %v360 = vrot.slane %v346, %v359
    %v361 = vcombine.low %v353, %v360
    %v362 = vcombine.low %v296, %v297
    %v363 = vcombine.low %v298, %v299
    %v365 = vunpack.c.l.s4 1983009808
    %v366 = vunpack.c.0.s8 %v365
    %v367 = vlaneseq
    %v368 = vshrl.u32 %v367, 7
    %v369 = vsub.s32 %v366, %v368
    %v370 = vrot.slane %v362, %v369
    %v372 = vunpack.c.l.s4 1983009808
    %v373 = vunpack.c.0.s8 %v372
    %v374 = vlaneseq
    %v375 = vshrl.u32 %v374, 7
    %v376 = vsub.s32 %v373, %v375
    %v377 = vrot.slane %v363, %v376
    %v378 = vcombine.low %v370, %v377
    %v379 = vcombine.low %v300, %v301
    %v380 = vcombine.low %v302, %v303
    %v382 = vunpack.c.l.s4 1983009808
    %v383 = vunpack.c.0.s8 %v382
    %v384 = vlaneseq
    %v385 = vshrl.u32 %v384, 7
    %v386 = vsub.s32 %v383, %v385
    %v387 = vrot.slane %v379, %v386
    %v389 = vunpack.c.l.s4 1983009808
    %v390 = vunpack.c.0.s8 %v389
    %v391 = vlaneseq
    %v392 = vshrl.u32 %v391, 7
    %v393 = vsub.s32 %v390, %v392
    %v394 = vrot.slane %v380, %v393
    %v395 = vcombine.low %v387, %v394
    %vm396 = vcmask 48128
    %v397 = vsel %vm396, %v344, 0
    %v399 = vsel %vm396, %v361, 0
    %v401 = vsel %vm396, %v378, 0
    %v403 = vsel %vm396, %v395, 0
    %vm405 = vcmask 1045504
    %v407 = vsel %vm405, %v304, 0
    %409 = vmatprep.subr.mxu0 0.0
    %410 = vmatpush1.msra.mxu0 %v407
    %411 = vmatprep.subr.mxu0 0.0
    %412 = vmatpush1.msra.mxu0 0.0
    %413 = vmatprep.subr.mxu0 0.0
    %414 = vmatpush1.msra.mxu0 0.0
    %415 = vmatprep.subr.mxu0 0.0
    %416 = vmatpush1.msra.mxu0 0.0
    %417 = vmatprep.subr.mxu0 0.0
    %418 = vmatpush1.msra.mxu0 0.0
    %419 = vmatprep.subr.mxu0 0.0
    %420 = vmatpush1.msra.mxu0 0.0
    %421 = vmatprep.subr.mxu0 0.0
    %422 = vmatpush1.msra.mxu0 0.0
    %423 = vmatprep.subr.mxu0 0.0
    %424 = vmatpush1.msra.mxu0 0.0
    %425 = vmatprep.subr.mxu0 0.0
    %426 = vmatpush1.msra.mxu0 0.0
    %427 = vmatprep.subr.mxu0 0.0
    %428 = vmatpush1.msra.mxu0 0.0
    %429 = vmatprep.subr.mxu0 0.0
    %430 = vmatpush1.msra.mxu0 0.0
    %431 = vmatprep.subr.mxu0 0.0
    %432 = vmatpush1.msra.mxu0 0.0
    %433 = vmatprep.subr.mxu0 0.0
    %434 = vmatpush1.msra.mxu0 0.0
    %435 = vmatprep.subr.mxu0 0.0
    %436 = vmatpush1.msra.mxu0 0.0
    %437 = vmatprep.subr.mxu0 0.0
    %438 = vmatpush1.msra.mxu0 0.0
    %439 = vmatprep.subr.mxu0 0.0
    %440 = vmatpush1.msra.mxu0 0.0
    %441 = vmatprep.subr.mxu0 0.0
    %442 = vmatpush1.msra.mxu0 0.0
    %443 = vmatprep.subr.mxu0 0.0
    %444 = vmatpush1.msra.mxu0 0.0
    %445 = vmatprep.subr.mxu0 0.0
    %446 = vmatpush1.msra.mxu0 0.0
    %447 = vmatprep.subr.mxu0 0.0
    %448 = vmatpush1.msra.mxu0 0.0
    %449 = vmatprep.subr.mxu0 0.0
    %450 = vmatpush1.msra.mxu0 0.0
    %451 = vmatprep.subr.mxu0 0.0
    %452 = vmatpush1.msra.mxu0 0.0
    %453 = vmatprep.subr.mxu0 0.0
    %454 = vmatpush1.msra.mxu0 0.0
    %455 = vmatprep.subr.mxu0 0.0
    %456 = vmatpush1.msra.mxu0 0.0
    %457 = vmatprep.subr.mxu0 0.0
    %458 = vmatpush1.msra.mxu0 0.0
    %459 = vmatprep.subr.mxu0 0.0
    %460 = vmatpush1.msra.mxu0 0.0
    %461 = vmatprep.subr.mxu0 0.0
    %462 = vmatpush1.msra.mxu0 0.0
    %463 = vmatprep.subr.mxu0 0.0
    %464 = vmatpush1.msra.mxu0 0.0
    %465 = vmatprep.subr.mxu0 0.0
    %466 = vmatpush1.msra.mxu0 0.0
    %467 = vmatprep.subr.mxu0 0.0
    %468 = vmatpush1.msra.mxu0 0.0
    %469 = vmatprep.subr.mxu0 0.0
    %470 = vmatpush1.msra.mxu0 0.0
    %471 = vmatprep.subr.mxu0 0.0
    %472 = vmatpush1.msra.mxu0 0.0
    %473 = vmatprep.mubr.f32.mxu0 0.0
    %474 = vmatmul.mubr.f32.gmra.mrb[0].mxu0 %v397
    %v475 = vpop.f32.mrb[0].mxu0
    %v476 = vadd.f32 %v310, %v475
    %v477 = vpop.f32.mrb[0].mxu0
    %478 = vmatprep.mubr.f32.mxu0 0.0
    %479 = vmatmul.mubr.f32.gmra.mrb[0].mxu0 %v399
    %v480 = vpop.f32.mrb[0].mxu0
    %v481 = vadd.f32 %v310, %v480
    %v482 = vpop.f32.mrb[0].mxu0
    %483 = vmatprep.mubr.f32.mxu0 0.0
    %484 = vmatmul.mubr.f32.gmra.mrb[0].mxu0 %v401
    %v485 = vpop.f32.mrb[0].mxu0
    %v486 = vadd.f32 %v310, %v485
    %v487 = vpop.f32.mrb[0].mxu0
    %488 = vmatprep.mubr.f32.mxu0 0.0
    %489 = vmatmul.mubr.f32.gmra.mrb[0].mxu0 %v403
    %v490 = vpop.f32.mrb[0].mxu0
    %v491 = vadd.f32 %v310, %v490
    %v492 = vpop.f32.mrb[0].mxu0
    %493 = vdwg.mxu0
    %v494 = vld [vmem:[#allocation11] sm:$0xff]
    %v495 = vld [vmem:[#allocation11 + $0x8] sm:$0xff]
    %v496 = vld [vmem:[#allocation11 + $0x10] sm:$0xff]
    %v497 = vld [vmem:[#allocation11 + $0x18] sm:$0xff]
    %v498 = vld [vmem:[#allocation11 + $0x20] sm:$0xff]
    %v499 = vld [vmem:[#allocation11 + $0x28] sm:$0xff]
    %v500 = vld [vmem:[#allocation11 + $0x30] sm:$0xff]
    %v501 = vld [vmem:[#allocation11 + $0x38] sm:$0xff]
    %v502 = vld [vmem:[#allocation12] sm:$0x3]
    %v504 = vlaneseq
    %v505 = vshrl.u32 %v504, 7
    %v506 = vsub.s32 0, %v505
    %v507 = vrot.slane %v502, %v506
    %v508 = vlaneseq
    %v509 = vshrl.u32 %v508, 7
    %v510 = vsub.s32 1, %v509
    %v511 = vrot.slane %v502, %v510
    %vm514 = vcmask 261120
    %v516 = vsel %vm514, %v476, 0
    %v519 = vsel %vm514, %v481, 0
    %v522 = vsel %vm514, %v486, 0
    %v525 = vsel %vm514, %v491, 0
    %527 = vmatprep.subr.mxu0 %v495
    %528 = vmatpush1.msra.mxu0 %v494
    %529 = vmatprep.subr.mxu0 %v497
    %530 = vmatpush1.msra.mxu0 %v496
    %531 = vmatprep.subr.mxu0 %v499
    %532 = vmatpush1.msra.mxu0 %v498
    %533 = vmatprep.subr.mxu0 %v501
    %534 = vmatpush1.msra.mxu0 %v500
    %535 = vmatprep.subr.mxu0 0.0
    %536 = vmatpush1.msra.mxu0 0.0
    %537 = vmatprep.subr.mxu0 0.0
    %538 = vmatpush1.msra.mxu0 0.0
    %539 = vmatprep.subr.mxu0 0.0
    %540 = vmatpush1.msra.mxu0 0.0
    %541 = vmatprep.subr.mxu0 0.0
    %542 = vmatpush1.msra.mxu0 0.0
    %543 = vmatprep.subr.mxu0 0.0
    %544 = vmatpush1.msra.mxu0 0.0
    %545 = vmatprep.subr.mxu0 0.0
    %546 = vmatpush1.msra.mxu0 0.0
    %547 = vmatprep.subr.mxu0 0.0
    %548 = vmatpush1.msra.mxu0 0.0
    %549 = vmatprep.subr.mxu0 0.0
    %550 = vmatpush1.msra.mxu0 0.0
    %551 = vmatprep.subr.mxu0 0.0
    %552 = vmatpush1.msra.mxu0 0.0
    %553 = vmatprep.subr.mxu0 0.0
    %554 = vmatpush1.msra.mxu0 0.0
    %555 = vmatprep.subr.mxu0 0.0
    %556 = vmatpush1.msra.mxu0 0.0
    %557 = vmatprep.subr.mxu0 0.0
    %558 = vmatpush1.msra.mxu0 0.0
    %559 = vmatprep.subr.mxu0 0.0
    %560 = vmatpush1.msra.mxu0 0.0
    %561 = vmatprep.subr.mxu0 0.0
    %562 = vmatpush1.msra.mxu0 0.0
    %563 = vmatprep.subr.mxu0 0.0
    %564 = vmatpush1.msra.mxu0 0.0
    %565 = vmatprep.subr.mxu0 0.0
    %566 = vmatpush1.msra.mxu0 0.0
    %567 = vmatprep.subr.mxu0 0.0
    %568 = vmatpush1.msra.mxu0 0.0
    %569 = vmatprep.subr.mxu0 0.0
    %570 = vmatpush1.msra.mxu0 0.0
    %571 = vmatprep.subr.mxu0 0.0
    %572 = vmatpush1.msra.mxu0 0.0
    %573 = vmatprep.subr.mxu0 0.0
    %574 = vmatpush1.msra.mxu0 0.0
    %575 = vmatprep.subr.mxu0 0.0
    %576 = vmatpush1.msra.mxu0 0.0
    %577 = vmatprep.subr.mxu0 0.0
    %578 = vmatpush1.msra.mxu0 0.0
    %579 = vmatprep.subr.mxu0 0.0
    %580 = vmatpush1.msra.mxu0 0.0
    %581 = vmatprep.subr.mxu0 0.0
    %582 = vmatpush1.msra.mxu0 0.0
    %583 = vmatprep.subr.mxu0 0.0
    %584 = vmatpush1.msra.mxu0 0.0
    %585 = vmatprep.subr.mxu0 0.0
    %586 = vmatpush1.msra.mxu0 0.0
    %587 = vmatprep.subr.mxu0 0.0
    %588 = vmatpush1.msra.mxu0 0.0
    %589 = vmatprep.subr.mxu0 0.0
    %590 = vmatpush1.msra.mxu0 0.0
    %591 = vmatprep.mubr.f32.mxu0 0.0
    %592 = vmatmul.mubr.f32.gmra.mrb[0].mxu0 %v516
    %v593 = vpop.f32.mrb[0].mxu0
    %v594 = vadd.f32 %v507, %v593
    %v595 = vpop.f32.mrb[0].mxu0
    %v596 = vadd.f32 %v511, %v595
    %597 = vmatprep.mubr.f32.mxu0 0.0
    %598 = vmatmul.mubr.f32.gmra.mrb[0].mxu0 %v519
    %v599 = vpop.f32.mrb[0].mxu0
    %v600 = vadd.f32 %v507, %v599
    %v601 = vpop.f32.mrb[0].mxu0
    %v602 = vadd.f32 %v511, %v601
    %603 = vmatprep.mubr.f32.mxu0 0.0
    %604 = vmatmul.mubr.f32.gmra.mrb[0].mxu0 %v522
    %v605 = vpop.f32.mrb[0].mxu0
    %v606 = vadd.f32 %v507, %v605
    %v607 = vpop.f32.mrb[0].mxu0
    %v608 = vadd.f32 %v511, %v607
    %609 = vmatprep.mubr.f32.mxu0 0.0
    %610 = vmatmul.mubr.f32.gmra.mrb[0].mxu0 %v525
    %v611 = vpop.f32.mrb[0].mxu0
    %v612 = vadd.f32 %v507, %v611
    %v613 = vpop.f32.mrb[0].mxu0
    %v614 = vadd.f32 %v511, %v613
    %615 = vdwg.mxu0
    %v624 = vcombine.low %v594, %v596
    %v625 = vcombine.high %v594, %v596
    %v627 = vunpack.c.l.s4 1983009808
    %v628 = vunpack.c.0.s8 %v627
    %v629 = vlaneseq
    %v630 = vshrl.u32 %v629, 7
    %v631 = vsub.s32 %v628, %v630
    %v632 = vrot.slane %v624, %v631
    %v634 = vunpack.c.l.s4 1983009808
    %v635 = vunpack.c.0.s8 %v634
    %v636 = vlaneseq
    %v637 = vshrl.u32 %v636, 7
    %v638 = vsub.s32 %v635, %v637
    %v639 = vrot.slane %v625, %v638
    %v640 = vcombine.high %v632, %v632
    %v641 = vcombine.high %v639, %v639
    %v642 = vcombine.low %v600, %v602
    %v643 = vcombine.high %v600, %v602
    %v645 = vunpack.c.l.s4 1983009808
    %v646 = vunpack.c.0.s8 %v645
    %v647 = vlaneseq
    %v648 = vshrl.u32 %v647, 7
    %v649 = vsub.s32 %v646, %v648
    %v650 = vrot.slane %v642, %v649
    %v652 = vunpack.c.l.s4 1983009808
    %v653 = vunpack.c.0.s8 %v652
    %v654 = vlaneseq
    %v655 = vshrl.u32 %v654, 7
    %v656 = vsub.s32 %v653, %v655
    %v657 = vrot.slane %v643, %v656
    %v658 = vcombine.high %v650, %v650
    %v659 = vcombine.high %v657, %v657
    %v660 = vcombine.low %v606, %v608
    %v661 = vcombine.high %v606, %v608
    %v663 = vunpack.c.l.s4 1983009808
    %v664 = vunpack.c.0.s8 %v663
    %v665 = vlaneseq
    %v666 = vshrl.u32 %v665, 7
    %v667 = vsub.s32 %v664, %v666
    %v668 = vrot.slane %v660, %v667
    %v670 = vunpack.c.l.s4 1983009808
    %v671 = vunpack.c.0.s8 %v670
    %v672 = vlaneseq
    %v673 = vshrl.u32 %v672, 7
    %v674 = vsub.s32 %v671, %v673
    %v675 = vrot.slane %v661, %v674
    %v676 = vcombine.high %v668, %v668
    %v677 = vcombine.high %v675, %v675
    %v678 = vcombine.low %v612, %v614
    %v679 = vcombine.high %v612, %v614
    %v681 = vunpack.c.l.s4 1983009808
    %v682 = vunpack.c.0.s8 %v681
    %v683 = vlaneseq
    %v684 = vshrl.u32 %v683, 7
    %v685 = vsub.s32 %v682, %v684
    %v686 = vrot.slane %v678, %v685
    %v688 = vunpack.c.l.s4 1983009808
    %v689 = vunpack.c.0.s8 %v688
    %v690 = vlaneseq
    %v691 = vshrl.u32 %v690, 7
    %v692 = vsub.s32 %v689, %v691
    %v693 = vrot.slane %v679, %v692
    %v694 = vcombine.high %v686, %v686
    %v695 = vcombine.high %v693, %v693
    %712 = vst [vmem:[#allocation2] sm:$0xf] %v632
    %713 = vst [vmem:[#allocation2 + $0x4] sm:$0xf] %v640
    %714 = vst [vmem:[#allocation2 + $0x8] sm:$0xf] %v639
    %715 = vst [vmem:[#allocation2 + $0xc] sm:$0xf] %v641
    %716 = vst [vmem:[#allocation2 + $0x10] sm:$0xf] %v650
    %717 = vst [vmem:[#allocation2 + $0x14] sm:$0xf] %v658
    %718 = vst [vmem:[#allocation2 + $0x18] sm:$0xf] %v657
    %719 = vst [vmem:[#allocation2 + $0x1c] sm:$0xf] %v659
    %720 = vst [vmem:[#allocation2 + $0x20] sm:$0xf] %v668
    %721 = vst [vmem:[#allocation2 + $0x24] sm:$0xf] %v676
    %722 = vst [vmem:[#allocation2 + $0x28] sm:$0xf] %v675
    %723 = vst [vmem:[#allocation2 + $0x2c] sm:$0xf] %v677
    %724 = vst [vmem:[#allocation2 + $0x30] sm:$0xf] %v686
    %725 = vst [vmem:[#allocation2 + $0x34] sm:$0xf] %v694
    %726 = vst [vmem:[#allocation2 + $0x38] sm:$0xf] %v693
    %727 = vst [vmem:[#allocation2 + $0x3c] sm:$0xf] %v695
    %v728 = vld [vmem:[%s4] sm:$0xff]
    %v729 = vld [vmem:[%s4 + $0x8] sm:$0xff]
    %v730 = vld [vmem:[%s4 + $0x10] sm:$0xff]
    %v731 = vld [vmem:[%s4 + $0x18] sm:$0xff]
    %v732 = vld [vmem:[%s4 + $0x20] sm:$0xff]
    %v733 = vld [vmem:[%s4 + $0x28] sm:$0xff]
    %v734 = vld [vmem:[%s4 + $0x30] sm:$0xff]
    %v735 = vld [vmem:[%s4 + $0x38] sm:$0xff]
    %736 = vmatprep.subr.mxu0 %v729
    %737 = vmatpush1.msra.mxu0 %v728
    %738 = vmatprep.subr.mxu0 %v731
    %739 = vmatpush1.msra.mxu0 %v730
    %740 = vmatprep.subr.mxu0 %v733
    %741 = vmatpush1.msra.mxu0 %v732
    %742 = vmatprep.subr.mxu0 %v735
    %743 = vmatpush1.msra.mxu0 %v734
    %744 = vmatprep.subr.mxu0 0.0
    %745 = vmatpush1.msra.mxu0 0.0
    %746 = vmatprep.subr.mxu0 0.0
    %747 = vmatpush1.msra.mxu0 0.0
    %748 = vmatprep.subr.mxu0 0.0
    %749 = vmatpush1.msra.mxu0 0.0
    %750 = vmatprep.subr.mxu0 0.0
    %751 = vmatpush1.msra.mxu0 0.0
    %752 = vmatprep.subr.mxu0 0.0
    %753 = vmatpush1.msra.mxu0 0.0
    %754 = vmatprep.subr.mxu0 0.0
    %755 = vmatpush1.msra.mxu0 0.0
    %756 = vmatprep.subr.mxu0 0.0
    %757 = vmatpush1.msra.mxu0 0.0
    %758 = vmatprep.subr.mxu0 0.0
    %759 = vmatpush1.msra.mxu0 0.0
    %760 = vmatprep.subr.mxu0 0.0
    %761 = vmatpush1.msra.mxu0 0.0
    %762 = vmatprep.subr.mxu0 0.0
    %763 = vmatpush1.msra.mxu0 0.0
    %764 = vmatprep.subr.mxu0 0.0
    %765 = vmatpush1.msra.mxu0 0.0
    %766 = vmatprep.subr.mxu0 0.0
    %767 = vmatpush1.msra.mxu0 0.0
    %768 = vmatprep.subr.mxu0 0.0
    %769 = vmatpush1.msra.mxu0 0.0
    %770 = vmatprep.subr.mxu0 0.0
    %771 = vmatpush1.msra.mxu0 0.0
    %772 = vmatprep.subr.mxu0 0.0
    %773 = vmatpush1.msra.mxu0 0.0
    %774 = vmatprep.subr.mxu0 0.0
    %775 = vmatpush1.msra.mxu0 0.0
    %776 = vmatprep.subr.mxu0 0.0
    %777 = vmatpush1.msra.mxu0 0.0
    %778 = vmatprep.subr.mxu0 0.0
    %779 = vmatpush1.msra.mxu0 0.0
    %780 = vmatprep.subr.mxu0 0.0
    %781 = vmatpush1.msra.mxu0 0.0
    %782 = vmatprep.subr.mxu0 0.0
    %783 = vmatpush1.msra.mxu0 0.0
    %784 = vmatprep.subr.mxu0 0.0
    %785 = vmatpush1.msra.mxu0 0.0
    %786 = vmatprep.subr.mxu0 0.0
    %787 = vmatpush1.msra.mxu0 0.0
    %788 = vmatprep.subr.mxu0 0.0
    %789 = vmatpush1.msra.mxu0 0.0
    %790 = vmatprep.subr.mxu0 0.0
    %791 = vmatpush1.msra.mxu0 0.0
    %792 = vmatprep.subr.mxu0 0.0
    %793 = vmatpush1.msra.mxu0 0.0
    %794 = vmatprep.subr.mxu0 0.0
    %795 = vmatpush1.msra.mxu0 0.0
    %796 = vmatprep.subr.mxu0 0.0
    %797 = vmatpush1.msra.mxu0 0.0
    %798 = vmatprep.subr.mxu0 0.0
    %799 = vmatpush1.msra.mxu0 0.0
    %800 = vmatprep.mubr.f32.mxu0 0.0
    %801 = vmatmul.mubr.f32.gmra.mrb[0].mxu0 %v516
    %v802 = vpop.f32.mrb[0].mxu0
    %v803 = vadd.f32 0.0, %v802
    %v804 = vpop.f32.mrb[0].mxu0
    %v805 = vadd.f32 0.0, %v804
    %806 = vmatprep.mubr.f32.mxu0 0.0
    %807 = vmatmul.mubr.f32.gmra.mrb[0].mxu0 %v519
    %v808 = vpop.f32.mrb[0].mxu0
    %v809 = vadd.f32 0.0, %v808
    %v810 = vpop.f32.mrb[0].mxu0
    %v811 = vadd.f32 0.0, %v810
    %812 = vmatprep.mubr.f32.mxu0 0.0
    %813 = vmatmul.mubr.f32.gmra.mrb[0].mxu0 %v522
    %v814 = vpop.f32.mrb[0].mxu0
    %v815 = vadd.f32 0.0, %v814
    %v816 = vpop.f32.mrb[0].mxu0
    %v817 = vadd.f32 0.0, %v816
    %818 = vmatprep.mubr.f32.mxu0 0.0
    %819 = vmatmul.mubr.f32.gmra.mrb[0].mxu0 %v525
    %v820 = vpop.f32.mrb[0].mxu0
    %v821 = vadd.f32 0.0, %v820
    %v822 = vpop.f32.mrb[0].mxu0
    %v823 = vadd.f32 0.0, %v822
    %824 = vdwg.mxu0
    %v833 = vcombine.low %v803, %v805
    %v834 = vcombine.high %v803, %v805
    %v836 = vunpack.c.l.s4 1983009808
    %v837 = vunpack.c.0.s8 %v836
    %v838 = vlaneseq
    %v839 = vshrl.u32 %v838, 7
    %v840 = vsub.s32 %v837, %v839
    %v841 = vrot.slane %v833, %v840
    %v843 = vunpack.c.l.s4 1983009808
    %v844 = vunpack.c.0.s8 %v843
    %v845 = vlaneseq
    %v846 = vshrl.u32 %v845, 7
    %v847 = vsub.s32 %v844, %v846
    %v848 = vrot.slane %v834, %v847
    %v849 = vcombine.high %v841, %v841
    %v850 = vcombine.high %v848, %v848
    %v851 = vcombine.low %v809, %v811
    %v852 = vcombine.high %v809, %v811
    %v854 = vunpack.c.l.s4 1983009808
    %v855 = vunpack.c.0.s8 %v854
    %v856 = vlaneseq
    %v857 = vshrl.u32 %v856, 7
    %v858 = vsub.s32 %v855, %v857
    %v859 = vrot.slane %v851, %v858
    %v861 = vunpack.c.l.s4 1983009808
    %v862 = vunpack.c.0.s8 %v861
    %v863 = vlaneseq
    %v864 = vshrl.u32 %v863, 7
    %v865 = vsub.s32 %v862, %v864
    %v866 = vrot.slane %v852, %v865
    %v867 = vcombine.high %v859, %v859
    %v868 = vcombine.high %v866, %v866
    %v869 = vcombine.low %v815, %v817
    %v870 = vcombine.high %v815, %v817
    %v872 = vunpack.c.l.s4 1983009808
    %v873 = vunpack.c.0.s8 %v872
    %v874 = vlaneseq
    %v875 = vshrl.u32 %v874, 7
    %v876 = vsub.s32 %v873, %v875
    %v877 = vrot.slane %v869, %v876
    %v879 = vunpack.c.l.s4 1983009808
    %v880 = vunpack.c.0.s8 %v879
    %v881 = vlaneseq
    %v882 = vshrl.u32 %v881, 7
    %v883 = vsub.s32 %v880, %v882
    %v884 = vrot.slane %v870, %v883
    %v885 = vcombine.high %v877, %v877
    %v886 = vcombine.high %v884, %v884
    %v887 = vcombine.low %v821, %v823
    %v888 = vcombine.high %v821, %v823
    %v890 = vunpack.c.l.s4 1983009808
    %v891 = vunpack.c.0.s8 %v890
    %v892 = vlaneseq
    %v893 = vshrl.u32 %v892, 7
    %v894 = vsub.s32 %v891, %v893
    %v895 = vrot.slane %v887, %v894
    %v897 = vunpack.c.l.s4 1983009808
    %v898 = vunpack.c.0.s8 %v897
    %v899 = vlaneseq
    %v900 = vshrl.u32 %v899, 7
    %v901 = vsub.s32 %v898, %v900
    %v902 = vrot.slane %v888, %v901
    %v903 = vcombine.high %v895, %v895
    %v904 = vcombine.high %v902, %v902
    %921 = vst [vmem:[#allocation3] sm:$0xf] %v841
    %922 = vst [vmem:[#allocation3 + $0x4] sm:$0xf] %v849
    %923 = vst [vmem:[#allocation3 + $0x8] sm:$0xf] %v848
    %924 = vst [vmem:[#allocation3 + $0xc] sm:$0xf] %v850
    %925 = vst [vmem:[#allocation3 + $0x10] sm:$0xf] %v859
    %926 = vst [vmem:[#allocation3 + $0x14] sm:$0xf] %v867
    %927 = vst [vmem:[#allocation3 + $0x18] sm:$0xf] %v866
    %928 = vst [vmem:[#allocation3 + $0x1c] sm:$0xf] %v868
    %929 = vst [vmem:[#allocation3 + $0x20] sm:$0xf] %v877
    %930 = vst [vmem:[#allocation3 + $0x24] sm:$0xf] %v885
    %931 = vst [vmem:[#allocation3 + $0x28] sm:$0xf] %v884
    %932 = vst [vmem:[#allocation3 + $0x2c] sm:$0xf] %v886
    %933 = vst [vmem:[#allocation3 + $0x30] sm:$0xf] %v895
    %934 = vst [vmem:[#allocation3 + $0x34] sm:$0xf] %v903
    %935 = vst [vmem:[#allocation3 + $0x38] sm:$0xf] %v902
    %936 = vst [vmem:[#allocation3 + $0x3c] sm:$0xf] %v904
    %v937 = vld [vmem:[%s5] sm:$0xff]
    %v938 = vld [vmem:[%s5 + $0x8] sm:$0xff]
    %v939 = vld [vmem:[%s5 + $0x10] sm:$0xff]
    %v940 = vld [vmem:[%s5 + $0x18] sm:$0xff]
    %v941 = vld [vmem:[%s5 + $0x20] sm:$0xff]
    %v942 = vld [vmem:[%s5 + $0x28] sm:$0xff]
    %v943 = vld [vmem:[%s5 + $0x30] sm:$0xff]
    %v944 = vld [vmem:[%s5 + $0x38] sm:$0xff]
    %v945 = vld [vmem:[%s5 + $0x40] sm:$0xff]
    %v946 = vld [vmem:[%s5 + $0x48] sm:$0xff]
    %v947 = vld [vmem:[%s5 + $0x50] sm:$0xff]
    %v948 = vld [vmem:[%s5 + $0x58] sm:$0xff]
    %v949 = vld [vmem:[%s5 + $0x60] sm:$0xff]
    %v950 = vld [vmem:[%s5 + $0x68] sm:$0xff]
    %v951 = vld [vmem:[%s5 + $0x70] sm:$0xff]
    %v952 = vld [vmem:[%s5 + $0x78] sm:$0xff]
    %v953 = vld [vmem:[#allocation2] sm:$0xf]
    %s954 = scalar_lea.vmem [#allocation3], 60
    %v955 = vld [vmem:[%s954] sm:$0xf]
    %v956 = vadd.f32 %v953, %v955
    %vm957 = vcmask 523264
    %v958 = vsel %vm957, 0.0, 0
    %960 = vmatprep.subr.mxu0 %v938
    %961 = vmatpush1.msra.mxu0 %v937
    %962 = vmatprep.subr.mxu0 %v940
    %963 = vmatpush1.msra.mxu0 %v939
    %964 = vmatprep.subr.mxu0 %v942
    %965 = vmatpush1.msra.mxu0 %v941
    %966 = vmatprep.subr.mxu0 %v944
    %967 = vmatpush1.msra.mxu0 %v943
    %968 = vmatprep.subr.mxu0 %v946
    %969 = vmatpush1.msra.mxu0 %v945
    %970 = vmatprep.subr.mxu0 %v948
    %971 = vmatpush1.msra.mxu0 %v947
    %972 = vmatprep.subr.mxu0 %v950
    %973 = vmatpush1.msra.mxu0 %v949
    %974 = vmatprep.subr.mxu0 %v952
    %975 = vmatpush1.msra.mxu0 %v951
    %976 = vmatprep.subr.mxu0 0.0
    %977 = vmatpush1.msra.mxu0 0.0
    %978 = vmatprep.subr.mxu0 0.0
    %979 = vmatpush1.msra.mxu0 0.0
    %980 = vmatprep.subr.mxu0 0.0
    %981 = vmatpush1.msra.mxu0 0.0
    %982 = vmatprep.subr.mxu0 0.0
    %983 = vmatpush1.msra.mxu0 0.0
    %984 = vmatprep.subr.mxu0 0.0
    %985 = vmatpush1.msra.mxu0 0.0
    %986 = vmatprep.subr.mxu0 0.0
    %987 = vmatpush1.msra.mxu0 0.0
    %988 = vmatprep.subr.mxu0 0.0
    %989 = vmatpush1.msra.mxu0 0.0
    %990 = vmatprep.subr.mxu0 0.0
    %991 = vmatpush1.msra.mxu0 0.0
    %992 = vmatprep.subr.mxu0 0.0
    %993 = vmatpush1.msra.mxu0 0.0
    %994 = vmatprep.subr.mxu0 0.0
    %995 = vmatpush1.msra.mxu0 0.0
    %996 = vmatprep.subr.mxu0 0.0
    %997 = vmatpush1.msra.mxu0 0.0
    %998 = vmatprep.subr.mxu0 0.0
    %999 = vmatpush1.msra.mxu0 0.0
    %1000 = vmatprep.subr.mxu0 0.0
    %1001 = vmatpush1.msra.mxu0 0.0
    %1002 = vmatprep.subr.mxu0 0.0
    %1003 = vmatpush1.msra.mxu0 0.0
    %1004 = vmatprep.subr.mxu0 0.0
    %1005 = vmatpush1.msra.mxu0 0.0
    %1006 = vmatprep.subr.mxu0 0.0
    %1007 = vmatpush1.msra.mxu0 0.0
    %1008 = vmatprep.subr.mxu0 0.0
    %1009 = vmatpush1.msra.mxu0 0.0
    %1010 = vmatprep.subr.mxu0 0.0
    %1011 = vmatpush1.msra.mxu0 0.0
    %1012 = vmatprep.subr.mxu0 0.0
    %1013 = vmatpush1.msra.mxu0 0.0
    %1014 = vmatprep.subr.mxu0 0.0
    %1015 = vmatpush1.msra.mxu0 0.0
    %1016 = vmatprep.subr.mxu0 0.0
    %1017 = vmatpush1.msra.mxu0 0.0
    %1018 = vmatprep.subr.mxu0 0.0
    %1019 = vmatpush1.msra.mxu0 0.0
    %1020 = vmatprep.subr.mxu0 0.0
    %1021 = vmatpush1.msra.mxu0 0.0
    %1022 = vmatprep.subr.mxu0 0.0
    %1023 = vmatpush1.msra.mxu0 0.0
    %1024 = vmatprep.mubr.f32.mxu0 0.0
    %1025 = vmatmul.mubr.f32.gmra.mrb[0].mxu0 %v958
    %v1026 = vpop.f32.mrb[0].mxu0
    %v1027 = vadd.f32 0.0, %v1026
    %v1028 = vpop.f32.mrb[0].mxu0
    %v1029 = vadd.f32 0.0, %v1028
    %1030 = vdwg.mxu0
    %v1033 = vcombine.low %v1027, %v1029
    %v1035 = vunpack.c.l.s4 1983009808
    %v1036 = vunpack.c.0.s8 %v1035
    %v1037 = vlaneseq
    %v1038 = vshrl.u32 %v1037, 7
    %v1039 = vsub.s32 %v1036, %v1038
    %v1040 = vrot.slane %v1033, %v1039
    %v1042 = vadd.f32 %v956, %v1040
    %v1043 = vxor.u32 %v1042, 2147483648
    %v1044 = vmul.f32 %v1043, 1.442695
    %v1045 = vpow.pop %v1044
    %v1046 = vadd.f32 %v1045, 1.0
    %v1047 = vrcp.pop %v1046
    %v1048 = vmul.f32 1.0, %v1047
    %v1050 = vrot.slane %v1042, 2
    %v1052 = vtanh.pop %v1050
    %1053 = vrot.lane.b32.xlu0 %v1042, 64
    %v1054 = vpop.permute.xlu0 %1053
    %v1055 = vrot.slane %v1054, 2
    %v1057 = vxor.u32 %v1055, 2147483648
    %v1058 = vmul.f32 %v1057, 1.442695
    %v1059 = vpow.pop %v1058
    %v1060 = vadd.f32 %v1059, 1.0
    %v1061 = vrcp.pop %v1060
    %v1062 = vmul.f32 1.0, %v1061
    %v1063 = vmul.f32 %v1048, 0.0
    %v1064 = vmul.f32 %v1048, %v1052
    %1066 = vrot.lane.b32.xlu0 %v1064, 64
    %v1067 = vpop.permute.xlu0 %1066
    %v1069 = vadd.f32 %v1063, %v1067
    %v1070 = vtanh.pop %v1069
    %1072 = vrot.lane.b32.xlu0 %v1070, 64
    %v1073 = vpop.permute.xlu0 %1072
    %v1075 = vmul.f32 %v1062, %v1073
    %vm1076 = vcmask 254976
    %1077 = vst.msk [vmem:[#allocation4] sm:$0x3] %vm1076, %v1075
    %v1080 = vunpack.c.l.s4 1983009808
    %v1081 = vunpack.c.0.s8 %v1080
    %v1082 = vlaneseq
    %v1083 = vshrl.u32 %v1082, 7
    %v1084 = vsub.s32 %v1081, %v1083
    %v1085 = vrot.slane %v1075, %v1084
    %1086 = vrot.lane.b32.xlu0 %v1085, 96
    %v1087 = vpop.permute.xlu0 %1086
    %s1089 = scalar_lea.vmem [#allocation5], 30
    %1090 = vst.msk [vmem:[%s1089] sm:$0x3] %vm1076, %v1087
    %s1091 = scalar_lea.vmem [#allocation2], 4
    %v1092 = vld [vmem:[%s1091] sm:$0xf]
    %s1093 = scalar_lea.vmem [#allocation3], 56
    %v1094 = vld [vmem:[%s1093] sm:$0xf]
    %v1095 = vadd.f32 %v1092, %v1094
    %v1096 = vsel %vm957, %v1075, 0
    %1098 = vmatprep.subr.mxu0 %v938
    %1099 = vmatpush1.msra.mxu0 %v937
    %1100 = vmatprep.subr.mxu0 %v940
    %1101 = vmatpush1.msra.mxu0 %v939
    %1102 = vmatprep.subr.mxu0 %v942
    %1103 = vmatpush1.msra.mxu0 %v941
    %1104 = vmatprep.subr.mxu0 %v944
    %1105 = vmatpush1.msra.mxu0 %v943
    %1106 = vmatprep.subr.mxu0 %v946
    %1107 = vmatpush1.msra.mxu0 %v945
    %1108 = vmatprep.subr.mxu0 %v948
    %1109 = vmatpush1.msra.mxu0 %v947
    %1110 = vmatprep.subr.mxu0 %v950
    %1111 = vmatpush1.msra.mxu0 %v949
    %1112 = vmatprep.subr.mxu0 %v952
    %1113 = vmatpush1.msra.mxu0 %v951
    %1114 = vmatprep.subr.mxu0 0.0
    %1115 = vmatpush1.msra.mxu0 0.0
    %1116 = vmatprep.subr.mxu0 0.0
    %1117 = vmatpush1.msra.mxu0 0.0
    %1118 = vmatprep.subr.mxu0 0.0
    %1119 = vmatpush1.msra.mxu0 0.0
    %1120 = vmatprep.subr.mxu0 0.0
    %1121 = vmatpush1.msra.mxu0 0.0
    %1122 = vmatprep.subr.mxu0 0.0
    %1123 = vmatpush1.msra.mxu0 0.0
    %1124 = vmatprep.subr.mxu0 0.0
    %1125 = vmatpush1.msra.mxu0 0.0
    %1126 = vmatprep.subr.mxu0 0.0
    %1127 = vmatpush1.msra.mxu0 0.0
    %1128 = vmatprep.subr.mxu0 0.0
    %1129 = vmatpush1.msra.mxu0 0.0
    %1130 = vmatprep.subr.mxu0 0.0
    %1131 = vmatpush1.msra.mxu0 0.0
    %1132 = vmatprep.subr.mxu0 0.0
    %1133 = vmatpush1.msra.mxu0 0.0
    %1134 = vmatprep.subr.mxu0 0.0
    %1135 = vmatpush1.msra.mxu0 0.0
    %1136 = vmatprep.subr.mxu0 0.0
    %1137 = vmatpush1.msra.mxu0 0.0
    %1138 = vmatprep.subr.mxu0 0.0
    %1139 = vmatpush1.msra.mxu0 0.0
    %1140 = vmatprep.subr.mxu0 0.0
    %1141 = vmatpush1.msra.mxu0 0.0
    %1142 = vmatprep.subr.mxu0 0.0
    %1143 = vmatpush1.msra.mxu0 0.0
    %1144 = vmatprep.subr.mxu0 0.0
    %1145 = vmatpush1.msra.mxu0 0.0
    %1146 = vmatprep.subr.mxu0 0.0
    %1147 = vmatpush1.msra.mxu0 0.0
    %1148 = vmatprep.subr.mxu0 0.0
    %1149 = vmatpush1.msra.mxu0 0.0
    %1150 = vmatprep.subr.mxu0 0.0
    %1151 = vmatpush1.msra.mxu0 0.0
    %1152 = vmatprep.subr.mxu0 0.0
    %1153 = vmatpush1.msra.mxu0 0.0
    %1154 = vmatprep.subr.mxu0 0.0
    %1155 = vmatpush1.msra.mxu0 0.0
    %1156 = vmatprep.subr.mxu0 0.0
    %1157 = vmatpush1.msra.mxu0 0.0
    %1158 = vmatprep.subr.mxu0 0.0
    %1159 = vmatpush1.msra.mxu0 0.0
    %1160 = vmatprep.subr.mxu0 0.0
    %1161 = vmatpush1.msra.mxu0 0.0
    %1162 = vmatprep.mubr.f32.mxu0 0.0
    %1163 = vmatmul.mubr.f32.gmra.mrb[0].mxu0 %v1096
    %v1164 = vpop.f32.mrb[0].mxu0
    %v1165 = vadd.f32 0.0, %v1164
    %v1166 = vpop.f32.mrb[0].mxu0
    %v1167 = vadd.f32 0.0, %v1166
    %1168 = vdwg.mxu0
    %v1171 = vcombine.low %v1165, %v1167
    %v1173 = vunpack.c.l.s4 1983009808
    %v1174 = vunpack.c.0.s8 %v1173
    %v1175 = vlaneseq
    %v1176 = vshrl.u32 %v1175, 7
    %v1177 = vsub.s32 %v1174, %v1176
    %v1178 = vrot.slane %v1171, %v1177
    %v1180 = vadd.f32 %v1095, %v1178
    %v1181 = vxor.u32 %v1180, 2147483648
    %v1182 = vmul.f32 %v1181, 1.442695
    %v1183 = vpow.pop %v1182
    %v1184 = vadd.f32 %v1183, 1.0
    %v1185 = vrcp.pop %v1184
    %v1186 = vmul.f32 1.0, %v1185
    %v1188 = vrot.slane %v1180, 2
    %v1190 = vtanh.pop %v1188
    %1191 = vrot.lane.b32.xlu0 %v1180, 64
    %v1192 = vpop.permute.xlu0 %1191
    %v1193 = vrot.slane %v1192, 2
    %v1195 = vxor.u32 %v1193, 2147483648
    %v1196 = vmul.f32 %v1195, 1.442695
    %v1197 = vpow.pop %v1196
    %v1198 = vadd.f32 %v1197, 1.0
    %v1199 = vrcp.pop %v1198
    %v1200 = vmul.f32 1.0, %v1199
    %v1201 = vmul.f32 %v1186, %v1069
    %v1202 = vmul.f32 %v1186, %v1190
    %1204 = vrot.lane.b32.xlu0 %v1202, 64
    %v1205 = vpop.permute.xlu0 %1204
    %v1207 = vadd.f32 %v1201, %v1205
    %v1208 = vtanh.pop %v1207
    %1210 = vrot.lane.b32.xlu0 %v1208, 64
    %v1211 = vpop.permute.xlu0 %1210
    %v1213 = vmul.f32 %v1200, %v1211
    %s1214 = scalar_lea.vmem [#allocation4], 2
    %1215 = vst.msk [vmem:[%s1214] sm:$0x3] %vm1076, %v1213
    %v1218 = vunpack.c.l.s4 1983009808
    %v1219 = vunpack.c.0.s8 %v1218
    %v1220 = vlaneseq
    %v1221 = vshrl.u32 %v1220, 7
    %v1222 = vsub.s32 %v1219, %v1221
    %v1223 = vrot.slane %v1213, %v1222
    %1224 = vrot.lane.b32.xlu0 %v1223, 96
    %v1225 = vpop.permute.xlu0 %1224
    %s1227 = scalar_lea.vmem [#allocation5], 28
    %1228 = vst.msk [vmem:[%s1227] sm:$0x3] %vm1076, %v1225
    %s1229 = scalar_lea.vmem [#allocation2], 8
    %v1230 = vld [vmem:[%s1229] sm:$0xf]
    %s1231 = scalar_lea.vmem [#allocation3], 52
    %v1232 = vld [vmem:[%s1231] sm:$0xf]
    %v1233 = vadd.f32 %v1230, %v1232
    %v1234 = vsel %vm957, %v1213, 0
    %1236 = vmatprep.subr.mxu0 %v938
    %1237 = vmatpush1.msra.mxu0 %v937
    %1238 = vmatprep.subr.mxu0 %v940
    %1239 = vmatpush1.msra.mxu0 %v939
    %1240 = vmatprep.subr.mxu0 %v942
    %1241 = vmatpush1.msra.mxu0 %v941
    %1242 = vmatprep.subr.mxu0 %v944
    %1243 = vmatpush1.msra.mxu0 %v943
    %1244 = vmatprep.subr.mxu0 %v946
    %1245 = vmatpush1.msra.mxu0 %v945
    %1246 = vmatprep.subr.mxu0 %v948
    %1247 = vmatpush1.msra.mxu0 %v947
    %1248 = vmatprep.subr.mxu0 %v950
    %1249 = vmatpush1.msra.mxu0 %v949
    %1250 = vmatprep.subr.mxu0 %v952
    %1251 = vmatpush1.msra.mxu0 %v951
    %1252 = vmatprep.subr.mxu0 0.0
    %1253 = vmatpush1.msra.mxu0 0.0
    %1254 = vmatprep.subr.mxu0 0.0
    %1255 = vmatpush1.msra.mxu0 0.0
    %1256 = vmatprep.subr.mxu0 0.0
    %1257 = vmatpush1.msra.mxu0 0.0
    %1258 = vmatprep.subr.mxu0 0.0
    %1259 = vmatpush1.msra.mxu0 0.0
    %1260 = vmatprep.subr.mxu0 0.0
    %1261 = vmatpush1.msra.mxu0 0.0
    %1262 = vmatprep.subr.mxu0 0.0
    %1263 = vmatpush1.msra.mxu0 0.0
    %1264 = vmatprep.subr.mxu0 0.0
    %1265 = vmatpush1.msra.mxu0 0.0
    %1266 = vmatprep.subr.mxu0 0.0
    %1267 = vmatpush1.msra.mxu0 0.0
    %1268 = vmatprep.subr.mxu0 0.0
    %1269 = vmatpush1.msra.mxu0 0.0
    %1270 = vmatprep.subr.mxu0 0.0
    %1271 = vmatpush1.msra.mxu0 0.0
    %1272 = vmatprep.subr.mxu0 0.0
    %1273 = vmatpush1.msra.mxu0 0.0
    %1274 = vmatprep.subr.mxu0 0.0
    %1275 = vmatpush1.msra.mxu0 0.0
    %1276 = vmatprep.subr.mxu0 0.0
    %1277 = vmatpush1.msra.mxu0 0.0
    %1278 = vmatprep.subr.mxu0 0.0
    %1279 = vmatpush1.msra.mxu0 0.0
    %1280 = vmatprep.subr.mxu0 0.0
    %1281 = vmatpush1.msra.mxu0 0.0
    %1282 = vmatprep.subr.mxu0 0.0
    %1283 = vmatpush1.msra.mxu0 0.0
    %1284 = vmatprep.subr.mxu0 0.0
    %1285 = vmatpush1.msra.mxu0 0.0
    %1286 = vmatprep.subr.mxu0 0.0
    %1287 = vmatpush1.msra.mxu0 0.0
    %1288 = vmatprep.subr.mxu0 0.0
    %1289 = vmatpush1.msra.mxu0 0.0
    %1290 = vmatprep.subr.mxu0 0.0
    %1291 = vmatpush1.msra.mxu0 0.0
    %1292 = vmatprep.subr.mxu0 0.0
    %1293 = vmatpush1.msra.mxu0 0.0
    %1294 = vmatprep.subr.mxu0 0.0
    %1295 = vmatpush1.msra.mxu0 0.0
    %1296 = vmatprep.subr.mxu0 0.0
    %1297 = vmatpush1.msra.mxu0 0.0
    %1298 = vmatprep.subr.mxu0 0.0
    %1299 = vmatpush1.msra.mxu0 0.0
    %1300 = vmatprep.mubr.f32.mxu0 0.0
    %1301 = vmatmul.mubr.f32.gmra.mrb[0].mxu0 %v1234
    %v1302 = vpop.f32.mrb[0].mxu0
    %v1303 = vadd.f32 0.0, %v1302
    %v1304 = vpop.f32.mrb[0].mxu0
    %v1305 = vadd.f32 0.0, %v1304
    %1306 = vdwg.mxu0
    %v1309 = vcombine.low %v1303, %v1305
    %v1311 = vunpack.c.l.s4 1983009808
    %v1312 = vunpack.c.0.s8 %v1311
    %v1313 = vlaneseq
    %v1314 = vshrl.u32 %v1313, 7
    %v1315 = vsub.s32 %v1312, %v1314
    %v1316 = vrot.slane %v1309, %v1315
    %v1318 = vadd.f32 %v1233, %v1316
    %v1319 = vxor.u32 %v1318, 2147483648
    %v1320 = vmul.f32 %v1319, 1.442695
    %v1321 = vpow.pop %v1320
    %v1322 = vadd.f32 %v1321, 1.0
    %v1323 = vrcp.pop %v1322
    %v1324 = vmul.f32 1.0, %v1323
    %v1326 = vrot.slane %v1318, 2
    %v1328 = vtanh.pop %v1326
    %1329 = vrot.lane.b32.xlu0 %v1318, 64
    %v1330 = vpop.permute.xlu0 %1329
    %v1331 = vrot.slane %v1330, 2
    %v1333 = vxor.u32 %v1331, 2147483648
    %v1334 = vmul.f32 %v1333, 1.442695
    %v1335 = vpow.pop %v1334
    %v1336 = vadd.f32 %v1335, 1.0
    %v1337 = vrcp.pop %v1336
    %v1338 = vmul.f32 1.0, %v1337
    %v1339 = vmul.f32 %v1324, %v1207
    %v1340 = vmul.f32 %v1324, %v1328
    %1342 = vrot.lane.b32.xlu0 %v1340, 64
    %v1343 = vpop.permute.xlu0 %1342
    %v1345 = vadd.f32 %v1339, %v1343
    %v1346 = vtanh.pop %v1345
    %1348 = vrot.lane.b32.xlu0 %v1346, 64
    %v1349 = vpop.permute.xlu0 %1348
    %v1351 = vmul.f32 %v1338, %v1349
    %s1352 = scalar_lea.vmem [#allocation4], 4
    %1353 = vst.msk [vmem:[%s1352] sm:$0x3] %vm1076, %v1351
    %v1356 = vunpack.c.l.s4 1983009808
    %v1357 = vunpack.c.0.s8 %v1356
    %v1358 = vlaneseq
    %v1359 = vshrl.u32 %v1358, 7
    %v1360 = vsub.s32 %v1357, %v1359
    %v1361 = vrot.slane %v1351, %v1360
    %1362 = vrot.lane.b32.xlu0 %v1361, 96
    %v1363 = vpop.permute.xlu0 %1362
    %s1365 = scalar_lea.vmem [#allocation5], 26
    %1366 = vst.msk [vmem:[%s1365] sm:$0x3] %vm1076, %v1363
    %s1367 = scalar_lea.vmem [#allocation2], 12
    %v1368 = vld [vmem:[%s1367] sm:$0xf]
    %s1369 = scalar_lea.vmem [#allocation3], 48
    %v1370 = vld [vmem:[%s1369] sm:$0xf]
    %v1371 = vadd.f32 %v1368, %v1370
    %v1372 = vsel %vm957, %v1351, 0
    %1374 = vmatprep.subr.mxu0 %v938
    %1375 = vmatpush1.msra.mxu0 %v937
    %1376 = vmatprep.subr.mxu0 %v940
    %1377 = vmatpush1.msra.mxu0 %v939
    %1378 = vmatprep.subr.mxu0 %v942
    %1379 = vmatpush1.msra.mxu0 %v941
    %1380 = vmatprep.subr.mxu0 %v944
    %1381 = vmatpush1.msra.mxu0 %v943
    %1382 = vmatprep.subr.mxu0 %v946
    %1383 = vmatpush1.msra.mxu0 %v945
    %1384 = vmatprep.subr.mxu0 %v948
    %1385 = vmatpush1.msra.mxu0 %v947
    %1386 = vmatprep.subr.mxu0 %v950
    %1387 = vmatpush1.msra.mxu0 %v949
    %1388 = vmatprep.subr.mxu0 %v952
    %1389 = vmatpush1.msra.mxu0 %v951
    %1390 = vmatprep.subr.mxu0 0.0
    %1391 = vmatpush1.msra.mxu0 0.0
    %1392 = vmatprep.subr.mxu0 0.0
    %1393 = vmatpush1.msra.mxu0 0.0
    %1394 = vmatprep.subr.mxu0 0.0
    %1395 = vmatpush1.msra.mxu0 0.0
    %1396 = vmatprep.subr.mxu0 0.0
    %1397 = vmatpush1.msra.mxu0 0.0
    %1398 = vmatprep.subr.mxu0 0.0
    %1399 = vmatpush1.msra.mxu0 0.0
    %1400 = vmatprep.subr.mxu0 0.0
    %1401 = vmatpush1.msra.mxu0 0.0
    %1402 = vmatprep.subr.mxu0 0.0
    %1403 = vmatpush1.msra.mxu0 0.0
    %1404 = vmatprep.subr.mxu0 0.0
    %1405 = vmatpush1.msra.mxu0 0.0
    %1406 = vmatprep.subr.mxu0 0.0
    %1407 = vmatpush1.msra.mxu0 0.0
    %1408 = vmatprep.subr.mxu0 0.0
    %1409 = vmatpush1.msra.mxu0 0.0
    %1410 = vmatprep.subr.mxu0 0.0
    %1411 = vmatpush1.msra.mxu0 0.0
    %1412 = vmatprep.subr.mxu0 0.0
    %1413 = vmatpush1.msra.mxu0 0.0
    %1414 = vmatprep.subr.mxu0 0.0
    %1415 = vmatpush1.msra.mxu0 0.0
    %1416 = vmatprep.subr.mxu0 0.0
    %1417 = vmatpush1.msra.mxu0 0.0
    %1418 = vmatprep.subr.mxu0 0.0
    %1419 = vmatpush1.msra.mxu0 0.0
    %1420 = vmatprep.subr.mxu0 0.0
    %1421 = vmatpush1.msra.mxu0 0.0
    %1422 = vmatprep.subr.mxu0 0.0
    %1423 = vmatpush1.msra.mxu0 0.0
    %1424 = vmatprep.subr.mxu0 0.0
    %1425 = vmatpush1.msra.mxu0 0.0
    %1426 = vmatprep.subr.mxu0 0.0
    %1427 = vmatpush1.msra.mxu0 0.0
    %1428 = vmatprep.subr.mxu0 0.0
    %1429 = vmatpush1.msra.mxu0 0.0
    %1430 = vmatprep.subr.mxu0 0.0
    %1431 = vmatpush1.msra.mxu0 0.0
    %1432 = vmatprep.subr.mxu0 0.0
    %1433 = vmatpush1.msra.mxu0 0.0
    %1434 = vmatprep.subr.mxu0 0.0
    %1435 = vmatpush1.msra.mxu0 0.0
    %1436 = vmatprep.subr.mxu0 0.0
    %1437 = vmatpush1.msra.mxu0 0.0
    %1438 = vmatprep.mubr.f32.mxu0 0.0
    %1439 = vmatmul.mubr.f32.gmra.mrb[0].mxu0 %v1372
    %v1440 = vpop.f32.mrb[0].mxu0
    %v1441 = vadd.f32 0.0, %v1440
    %v1442 = vpop.f32.mrb[0].mxu0
    %v1443 = vadd.f32 0.0, %v1442
    %1444 = vdwg.mxu0
    %v1447 = vcombine.low %v1441, %v1443
    %v1449 = vunpack.c.l.s4 1983009808
    %v1450 = vunpack.c.0.s8 %v1449
    %v1451 = vlaneseq
    %v1452 = vshrl.u32 %v1451, 7
    %v1453 = vsub.s32 %v1450, %v1452
    %v1454 = vrot.slane %v1447, %v1453
    %v1456 = vadd.f32 %v1371, %v1454
    %v1457 = vxor.u32 %v1456, 2147483648
    %v1458 = vmul.f32 %v1457, 1.442695
    %v1459 = vpow.pop %v1458
    %v1460 = vadd.f32 %v1459, 1.0
    %v1461 = vrcp.pop %v1460
    %v1462 = vmul.f32 1.0, %v1461
    %v1464 = vrot.slane %v1456, 2
    %v1466 = vtanh.pop %v1464
    %1467 = vrot.lane.b32.xlu0 %v1456, 64
    %v1468 = vpop.permute.xlu0 %1467
    %v1469 = vrot.slane %v1468, 2
    %v1471 = vxor.u32 %v1469, 2147483648
    %v1472 = vmul.f32 %v1471, 1.442695
    %v1473 = vpow.pop %v1472
    %v1474 = vadd.f32 %v1473, 1.0
    %v1475 = vrcp.pop %v1474
    %v1476 = vmul.f32 1.0, %v1475
    %v1477 = vmul.f32 %v1462, %v1345
    %v1478 = vmul.f32 %v1462, %v1466
    %1480 = vrot.lane.b32.xlu0 %v1478, 64
    %v1481 = vpop.permute.xlu0 %1480
    %v1483 = vadd.f32 %v1477, %v1481
    %v1484 = vtanh.pop %v1483
    %1486 = vrot.lane.b32.xlu0 %v1484, 64
    %v1487 = vpop.permute.xlu0 %1486
    %v1489 = vmul.f32 %v1476, %v1487
    %s1490 = scalar_lea.vmem [#allocation4], 6
    %1491 = vst.msk [vmem:[%s1490] sm:$0x3] %vm1076, %v1489
    %v1494 = vunpack.c.l.s4 1983009808
    %v1495 = vunpack.c.0.s8 %v1494
    %v1496 = vlaneseq
    %v1497 = vshrl.u32 %v1496, 7
    %v1498 = vsub.s32 %v1495, %v1497
    %v1499 = vrot.slane %v1489, %v1498
    %1500 = vrot.lane.b32.xlu0 %v1499, 96
    %v1501 = vpop.permute.xlu0 %1500
    %s1503 = scalar_lea.vmem [#allocation5], 24
    %1504 = vst.msk [vmem:[%s1503] sm:$0x3] %vm1076, %v1501
    %s1505 = scalar_lea.vmem [#allocation2], 16
    %v1506 = vld [vmem:[%s1505] sm:$0xf]
    %s1507 = scalar_lea.vmem [#allocation3], 44
    %v1508 = vld [vmem:[%s1507] sm:$0xf]
    %v1509 = vadd.f32 %v1506, %v1508
    %v1510 = vsel %vm957, %v1489, 0
    %1512 = vmatprep.subr.mxu0 %v938
    %1513 = vmatpush1.msra.mxu0 %v937
    %1514 = vmatprep.subr.mxu0 %v940
    %1515 = vmatpush1.msra.mxu0 %v939
    %1516 = vmatprep.subr.mxu0 %v942
    %1517 = vmatpush1.msra.mxu0 %v941
    %1518 = vmatprep.subr.mxu0 %v944
    %1519 = vmatpush1.msra.mxu0 %v943
    %1520 = vmatprep.subr.mxu0 %v946
    %1521 = vmatpush1.msra.mxu0 %v945
    %1522 = vmatprep.subr.mxu0 %v948
    %1523 = vmatpush1.msra.mxu0 %v947
    %1524 = vmatprep.subr.mxu0 %v950
    %1525 = vmatpush1.msra.mxu0 %v949
    %1526 = vmatprep.subr.mxu0 %v952
    %1527 = vmatpush1.msra.mxu0 %v951
    %1528 = vmatprep.subr.mxu0 0.0
    %1529 = vmatpush1.msra.mxu0 0.0
    %1530 = vmatprep.subr.mxu0 0.0
    %1531 = vmatpush1.msra.mxu0 0.0
    %1532 = vmatprep.subr.mxu0 0.0
    %1533 = vmatpush1.msra.mxu0 0.0
    %1534 = vmatprep.subr.mxu0 0.0
    %1535 = vmatpush1.msra.mxu0 0.0
    %1536 = vmatprep.subr.mxu0 0.0
    %1537 = vmatpush1.msra.mxu0 0.0
    %1538 = vmatprep.subr.mxu0 0.0
    %1539 = vmatpush1.msra.mxu0 0.0
    %1540 = vmatprep.subr.mxu0 0.0
    %1541 = vmatpush1.msra.mxu0 0.0
    %1542 = vmatprep.subr.mxu0 0.0
    %1543 = vmatpush1.msra.mxu0 0.0
    %1544 = vmatprep.subr.mxu0 0.0
    %1545 = vmatpush1.msra.mxu0 0.0
    %1546 = vmatprep.subr.mxu0 0.0
    %1547 = vmatpush1.msra.mxu0 0.0
    %1548 = vmatprep.subr.mxu0 0.0
    %1549 = vmatpush1.msra.mxu0 0.0
    %1550 = vmatprep.subr.mxu0 0.0
    %1551 = vmatpush1.msra.mxu0 0.0
    %1552 = vmatprep.subr.mxu0 0.0
    %1553 = vmatpush1.msra.mxu0 0.0
    %1554 = vmatprep.subr.mxu0 0.0
    %1555 = vmatpush1.msra.mxu0 0.0
    %1556 = vmatprep.subr.mxu0 0.0
    %1557 = vmatpush1.msra.mxu0 0.0
    %1558 = vmatprep.subr.mxu0 0.0
    %1559 = vmatpush1.msra.mxu0 0.0
    %1560 = vmatprep.subr.mxu0 0.0
    %1561 = vmatpush1.msra.mxu0 0.0
    %1562 = vmatprep.subr.mxu0 0.0
    %1563 = vmatpush1.msra.mxu0 0.0
    %1564 = vmatprep.subr.mxu0 0.0
    %1565 = vmatpush1.msra.mxu0 0.0
    %1566 = vmatprep.subr.mxu0 0.0
    %1567 = vmatpush1.msra.mxu0 0.0
    %1568 = vmatprep.subr.mxu0 0.0
    %1569 = vmatpush1.msra.mxu0 0.0
    %1570 = vmatprep.subr.mxu0 0.0
    %1571 = vmatpush1.msra.mxu0 0.0
    %1572 = vmatprep.subr.mxu0 0.0
    %1573 = vmatpush1.msra.mxu0 0.0
    %1574 = vmatprep.subr.mxu0 0.0
    %1575 = vmatpush1.msra.mxu0 0.0
    %1576 = vmatprep.mubr.f32.mxu0 0.0
    %1577 = vmatmul.mubr.f32.gmra.mrb[0].mxu0 %v1510
    %v1578 = vpop.f32.mrb[0].mxu0
    %v1579 = vadd.f32 0.0, %v1578
    %v1580 = vpop.f32.mrb[0].mxu0
    %v1581 = vadd.f32 0.0, %v1580
    %1582 = vdwg.mxu0
    %v1585 = vcombine.low %v1579, %v1581
    %v1587 = vunpack.c.l.s4 1983009808
    %v1588 = vunpack.c.0.s8 %v1587
    %v1589 = vlaneseq
    %v1590 = vshrl.u32 %v1589, 7
    %v1591 = vsub.s32 %v1588, %v1590
    %v1592 = vrot.slane %v1585, %v1591
    %v1594 = vadd.f32 %v1509, %v1592
    %v1595 = vxor.u32 %v1594, 2147483648
    %v1596 = vmul.f32 %v1595, 1.442695
    %v1597 = vpow.pop %v1596
    %v1598 = vadd.f32 %v1597, 1.0
    %v1599 = vrcp.pop %v1598
    %v1600 = vmul.f32 1.0, %v1599
    %v1602 = vrot.slane %v1594, 2
    %v1604 = vtanh.pop %v1602
    %1605 = vrot.lane.b32.xlu0 %v1594, 64
    %v1606 = vpop.permute.xlu0 %1605
    %v1607 = vrot.slane %v1606, 2
    %v1609 = vxor.u32 %v1607, 2147483648
    %v1610 = vmul.f32 %v1609, 1.442695
    %v1611 = vpow.pop %v1610
    %v1612 = vadd.f32 %v1611, 1.0
    %v1613 = vrcp.pop %v1612
    %v1614 = vmul.f32 1.0, %v1613
    %v1615 = vmul.f32 %v1600, %v1483
    %v1616 = vmul.f32 %v1600, %v1604
    %1618 = vrot.lane.b32.xlu0 %v1616, 64
    %v1619 = vpop.permute.xlu0 %1618
    %v1621 = vadd.f32 %v1615, %v1619
    %v1622 = vtanh.pop %v1621
    %1624 = vrot.lane.b32.xlu0 %v1622, 64
    %v1625 = vpop.permute.xlu0 %1624
    %v1627 = vmul.f32 %v1614, %v1625
    %s1628 = scalar_lea.vmem [#allocation4], 8
    %1629 = vst.msk [vmem:[%s1628] sm:$0x3] %vm1076, %v1627
    %v1632 = vunpack.c.l.s4 1983009808
    %v1633 = vunpack.c.0.s8 %v1632
    %v1634 = vlaneseq
    %v1635 = vshrl.u32 %v1634, 7
    %v1636 = vsub.s32 %v1633, %v1635
    %v1637 = vrot.slane %v1627, %v1636
    %1638 = vrot.lane.b32.xlu0 %v1637, 96
    %v1639 = vpop.permute.xlu0 %1638
    %s1641 = scalar_lea.vmem [#allocation5], 22
    %1642 = vst.msk [vmem:[%s1641] sm:$0x3] %vm1076, %v1639
    %s1643 = scalar_lea.vmem [#allocation2], 20
    %v1644 = vld [vmem:[%s1643] sm:$0xf]
    %s1645 = scalar_lea.vmem [#allocation3], 40
    %v1646 = vld [vmem:[%s1645] sm:$0xf]
    %v1647 = vadd.f32 %v1644, %v1646
    %v1648 = vsel %vm957, %v1627, 0
    %1650 = vmatprep.subr.mxu0 %v938
    %1651 = vmatpush1.msra.mxu0 %v937
    %1652 = vmatprep.subr.mxu0 %v940
    %1653 = vmatpush1.msra.mxu0 %v939
    %1654 = vmatprep.subr.mxu0 %v942
    %1655 = vmatpush1.msra.mxu0 %v941
    %1656 = vmatprep.subr.mxu0 %v944
    %1657 = vmatpush1.msra.mxu0 %v943
    %1658 = vmatprep.subr.mxu0 %v946
    %1659 = vmatpush1.msra.mxu0 %v945
    %1660 = vmatprep.subr.mxu0 %v948
    %1661 = vmatpush1.msra.mxu0 %v947
    %1662 = vmatprep.subr.mxu0 %v950
    %1663 = vmatpush1.msra.mxu0 %v949
    %1664 = vmatprep.subr.mxu0 %v952
    %1665 = vmatpush1.msra.mxu0 %v951
    %1666 = vmatprep.subr.mxu0 0.0
    %1667 = vmatpush1.msra.mxu0 0.0
    %1668 = vmatprep.subr.mxu0 0.0
    %1669 = vmatpush1.msra.mxu0 0.0
    %1670 = vmatprep.subr.mxu0 0.0
    %1671 = vmatpush1.msra.mxu0 0.0
    %1672 = vmatprep.subr.mxu0 0.0
    %1673 = vmatpush1.msra.mxu0 0.0
    %1674 = vmatprep.subr.mxu0 0.0
    %1675 = vmatpush1.msra.mxu0 0.0
    %1676 = vmatprep.subr.mxu0 0.0
    %1677 = vmatpush1.msra.mxu0 0.0
    %1678 = vmatprep.subr.mxu0 0.0
    %1679 = vmatpush1.msra.mxu0 0.0
    %1680 = vmatprep.subr.mxu0 0.0
    %1681 = vmatpush1.msra.mxu0 0.0
    %1682 = vmatprep.subr.mxu0 0.0
    %1683 = vmatpush1.msra.mxu0 0.0
    %1684 = vmatprep.subr.mxu0 0.0
    %1685 = vmatpush1.msra.mxu0 0.0
    %1686 = vmatprep.subr.mxu0 0.0
    %1687 = vmatpush1.msra.mxu0 0.0
    %1688 = vmatprep.subr.mxu0 0.0
    %1689 = vmatpush1.msra.mxu0 0.0
    %1690 = vmatprep.subr.mxu0 0.0
    %1691 = vmatpush1.msra.mxu0 0.0
    %1692 = vmatprep.subr.mxu0 0.0
    %1693 = vmatpush1.msra.mxu0 0.0
    %1694 = vmatprep.subr.mxu0 0.0
    %1695 = vmatpush1.msra.mxu0 0.0
    %1696 = vmatprep.subr.mxu0 0.0
    %1697 = vmatpush1.msra.mxu0 0.0
    %1698 = vmatprep.subr.mxu0 0.0
    %1699 = vmatpush1.msra.mxu0 0.0
    %1700 = vmatprep.subr.mxu0 0.0
    %1701 = vmatpush1.msra.mxu0 0.0
    %1702 = vmatprep.subr.mxu0 0.0
    %1703 = vmatpush1.msra.mxu0 0.0
    %1704 = vmatprep.subr.mxu0 0.0
    %1705 = vmatpush1.msra.mxu0 0.0
    %1706 = vmatprep.subr.mxu0 0.0
    %1707 = vmatpush1.msra.mxu0 0.0
    %1708 = vmatprep.subr.mxu0 0.0
    %1709 = vmatpush1.msra.mxu0 0.0
    %1710 = vmatprep.subr.mxu0 0.0
    %1711 = vmatpush1.msra.mxu0 0.0
    %1712 = vmatprep.subr.mxu0 0.0
    %1713 = vmatpush1.msra.mxu0 0.0
    %1714 = vmatprep.mubr.f32.mxu0 0.0
    %1715 = vmatmul.mubr.f32.gmra.mrb[0].mxu0 %v1648
    %v1716 = vpop.f32.mrb[0].mxu0
    %v1717 = vadd.f32 0.0, %v1716
    %v1718 = vpop.f32.mrb[0].mxu0
    %v1719 = vadd.f32 0.0, %v1718
    %1720 = vdwg.mxu0
    %v1723 = vcombine.low %v1717, %v1719
    %v1725 = vunpack.c.l.s4 1983009808
    %v1726 = vunpack.c.0.s8 %v1725
    %v1727 = vlaneseq
    %v1728 = vshrl.u32 %v1727, 7
    %v1729 = vsub.s32 %v1726, %v1728
    %v1730 = vrot.slane %v1723, %v1729
    %v1732 = vadd.f32 %v1647, %v1730
    %v1733 = vxor.u32 %v1732, 2147483648
    %v1734 = vmul.f32 %v1733, 1.442695
    %v1735 = vpow.pop %v1734
    %v1736 = vadd.f32 %v1735, 1.0
    %v1737 = vrcp.pop %v1736
    %v1738 = vmul.f32 1.0, %v1737
    %v1740 = vrot.slane %v1732, 2
    %v1742 = vtanh.pop %v1740
    %1743 = vrot.lane.b32.xlu0 %v1732, 64
    %v1744 = vpop.permute.xlu0 %1743
    %v1745 = vrot.slane %v1744, 2
    %v1747 = vxor.u32 %v1745, 2147483648
    %v1748 = vmul.f32 %v1747, 1.442695
    %v1749 = vpow.pop %v1748
    %v1750 = vadd.f32 %v1749, 1.0
    %v1751 = vrcp.pop %v1750
    %v1752 = vmul.f32 1.0, %v1751
    %v1753 = vmul.f32 %v1738, %v1621
    %v1754 = vmul.f32 %v1738, %v1742
    %1756 = vrot.lane.b32.xlu0 %v1754, 64
    %v1757 = vpop.permute.xlu0 %1756
    %v1759 = vadd.f32 %v1753, %v1757
    %v1760 = vtanh.pop %v1759
    %1762 = vrot.lane.b32.xlu0 %v1760, 64
    %v1763 = vpop.permute.xlu0 %1762
    %v1765 = vmul.f32 %v1752, %v1763
    %s1766 = scalar_lea.vmem [#allocation4], 10
    %1767 = vst.msk [vmem:[%s1766] sm:$0x3] %vm1076, %v1765
    %v1770 = vunpack.c.l.s4 1983009808
    %v1771 = vunpack.c.0.s8 %v1770
    %v1772 = vlaneseq
    %v1773 = vshrl.u32 %v1772, 7
    %v1774 = vsub.s32 %v1771, %v1773
    %v1775 = vrot.slane %v1765, %v1774
    %1776 = vrot.lane.b32.xlu0 %v1775, 96
    %v1777 = vpop.permute.xlu0 %1776
    %s1779 = scalar_lea.vmem [#allocation5], 20
    %1780 = vst.msk [vmem:[%s1779] sm:$0x3] %vm1076, %v1777
    %s1781 = scalar_lea.vmem [#allocation2], 24
    %v1782 = vld [vmem:[%s1781] sm:$0xf]
    %s1783 = scalar_lea.vmem [#allocation3], 36
    %v1784 = vld [vmem:[%s1783] sm:$0xf]
    %v1785 = vadd.f32 %v1782, %v1784
    %v1786 = vsel %vm957, %v1765, 0
    %1788 = vmatprep.subr.mxu0 %v938
    %1789 = vmatpush1.msra.mxu0 %v937
    %1790 = vmatprep.subr.mxu0 %v940
    %1791 = vmatpush1.msra.mxu0 %v939
    %1792 = vmatprep.subr.mxu0 %v942
    %1793 = vmatpush1.msra.mxu0 %v941
    %1794 = vmatprep.subr.mxu0 %v944
    %1795 = vmatpush1.msra.mxu0 %v943
    %1796 = vmatprep.subr.mxu0 %v946
    %1797 = vmatpush1.msra.mxu0 %v945
    %1798 = vmatprep.subr.mxu0 %v948
    %1799 = vmatpush1.msra.mxu0 %v947
    %1800 = vmatprep.subr.mxu0 %v950
    %1801 = vmatpush1.msra.mxu0 %v949
    %1802 = vmatprep.subr.mxu0 %v952
    %1803 = vmatpush1.msra.mxu0 %v951
    %1804 = vmatprep.subr.mxu0 0.0
    %1805 = vmatpush1.msra.mxu0 0.0
    %1806 = vmatprep.subr.mxu0 0.0
    %1807 = vmatpush1.msra.mxu0 0.0
    %1808 = vmatprep.subr.mxu0 0.0
    %1809 = vmatpush1.msra.mxu0 0.0
    %1810 = vmatprep.subr.mxu0 0.0
    %1811 = vmatpush1.msra.mxu0 0.0
    %1812 = vmatprep.subr.mxu0 0.0
    %1813 = vmatpush1.msra.mxu0 0.0
    %1814 = vmatprep.subr.mxu0 0.0
    %1815 = vmatpush1.msra.mxu0 0.0
    %1816 = vmatprep.subr.mxu0 0.0
    %1817 = vmatpush1.msra.mxu0 0.0
    %1818 = vmatprep.subr.mxu0 0.0
    %1819 = vmatpush1.msra.mxu0 0.0
    %1820 = vmatprep.subr.mxu0 0.0
    %1821 = vmatpush1.msra.mxu0 0.0
    %1822 = vmatprep.subr.mxu0 0.0
    %1823 = vmatpush1.msra.mxu0 0.0
    %1824 = vmatprep.subr.mxu0 0.0
    %1825 = vmatpush1.msra.mxu0 0.0
    %1826 = vmatprep.subr.mxu0 0.0
    %1827 = vmatpush1.msra.mxu0 0.0
    %1828 = vmatprep.subr.mxu0 0.0
    %1829 = vmatpush1.msra.mxu0 0.0
    %1830 = vmatprep.subr.mxu0 0.0
    %1831 = vmatpush1.msra.mxu0 0.0
    %1832 = vmatprep.subr.mxu0 0.0
    %1833 = vmatpush1.msra.mxu0 0.0
    %1834 = vmatprep.subr.mxu0 0.0
    %1835 = vmatpush1.msra.mxu0 0.0
    %1836 = vmatprep.subr.mxu0 0.0
    %1837 = vmatpush1.msra.mxu0 0.0
    %1838 = vmatprep.subr.mxu0 0.0
    %1839 = vmatpush1.msra.mxu0 0.0
    %1840 = vmatprep.subr.mxu0 0.0
    %1841 = vmatpush1.msra.mxu0 0.0
    %1842 = vmatprep.subr.mxu0 0.0
    %1843 = vmatpush1.msra.mxu0 0.0
    %1844 = vmatprep.subr.mxu0 0.0
    %1845 = vmatpush1.msra.mxu0 0.0
    %1846 = vmatprep.subr.mxu0 0.0
    %1847 = vmatpush1.msra.mxu0 0.0
    %1848 = vmatprep.subr.mxu0 0.0
    %1849 = vmatpush1.msra.mxu0 0.0
    %1850 = vmatprep.subr.mxu0 0.0
    %1851 = vmatpush1.msra.mxu0 0.0
    %1852 = vmatprep.mubr.f32.mxu0 0.0
    %1853 = vmatmul.mubr.f32.gmra.mrb[0].mxu0 %v1786
    %v1854 = vpop.f32.mrb[0].mxu0
    %v1855 = vadd.f32 0.0, %v1854
    %v1856 = vpop.f32.mrb[0].mxu0
    %v1857 = vadd.f32 0.0, %v1856
    %1858 = vdwg.mxu0
    %v1861 = vcombine.low %v1855, %v1857
    %v1863 = vunpack.c.l.s4 1983009808
    %v1864 = vunpack.c.0.s8 %v1863
    %v1865 = vlaneseq
    %v1866 = vshrl.u32 %v1865, 7
    %v1867 = vsub.s32 %v1864, %v1866
    %v1868 = vrot.slane %v1861, %v1867
    %v1870 = vadd.f32 %v1785, %v1868
    %v1871 = vxor.u32 %v1870, 2147483648
    %v1872 = vmul.f32 %v1871, 1.442695
    %v1873 = vpow.pop %v1872
    %v1874 = vadd.f32 %v1873, 1.0
    %v1875 = vrcp.pop %v1874
    %v1876 = vmul.f32 1.0, %v1875
    %v1878 = vrot.slane %v1870, 2
    %v1880 = vtanh.pop %v1878
    %1881 = vrot.lane.b32.xlu0 %v1870, 64
    %v1882 = vpop.permute.xlu0 %1881
    %v1883 = vrot.slane %v1882, 2
    %v1885 = vxor.u32 %v1883, 2147483648
    %v1886 = vmul.f32 %v1885, 1.442695
    %v1887 = vpow.pop %v1886
    %v1888 = vadd.f32 %v1887, 1.0
    %v1889 = vrcp.pop %v1888
    %v1890 = vmul.f32 1.0, %v1889
    %v1891 = vmul.f32 %v1876, %v1759
    %v1892 = vmul.f32 %v1876, %v1880
    %1894 = vrot.lane.b32.xlu0 %v1892, 64
    %v1895 = vpop.permute.xlu0 %1894
    %v1897 = vadd.f32 %v1891, %v1895
    %v1898 = vtanh.pop %v1897
    %1900 = vrot.lane.b32.xlu0 %v1898, 64
    %v1901 = vpop.permute.xlu0 %1900
    %v1903 = vmul.f32 %v1890, %v1901
    %s1904 = scalar_lea.vmem [#allocation4], 12
    %1905 = vst.msk [vmem:[%s1904] sm:$0x3] %vm1076, %v1903
    %v1908 = vunpack.c.l.s4 1983009808
    %v1909 = vunpack.c.0.s8 %v1908
    %v1910 = vlaneseq
    %v1911 = vshrl.u32 %v1910, 7
    %v1912 = vsub.s32 %v1909, %v1911
    %v1913 = vrot.slane %v1903, %v1912
    %1914 = vrot.lane.b32.xlu0 %v1913, 96
    %v1915 = vpop.permute.xlu0 %1914
    %s1917 = scalar_lea.vmem [#allocation5], 18
    %1918 = vst.msk [vmem:[%s1917] sm:$0x3] %vm1076, %v1915
    %s1919 = scalar_lea.vmem [#allocation2], 28
    %v1920 = vld [vmem:[%s1919] sm:$0xf]
    %s1921 = scalar_lea.vmem [#allocation3], 32
    %v1922 = vld [vmem:[%s1921] sm:$0xf]
    %v1923 = vadd.f32 %v1920, %v1922
    %v1924 = vsel %vm957, %v1903, 0
    %1926 = vmatprep.subr.mxu0 %v938
    %1927 = vmatpush1.msra.mxu0 %v937
    %1928 = vmatprep.subr.mxu0 %v940
    %1929 = vmatpush1.msra.mxu0 %v939
    %1930 = vmatprep.subr.mxu0 %v942
    %1931 = vmatpush1.msra.mxu0 %v941
    %1932 = vmatprep.subr.mxu0 %v944
    %1933 = vmatpush1.msra.mxu0 %v943
    %1934 = vmatprep.subr.mxu0 %v946
    %1935 = vmatpush1.msra.mxu0 %v945
    %1936 = vmatprep.subr.mxu0 %v948
    %1937 = vmatpush1.msra.mxu0 %v947
    %1938 = vmatprep.subr.mxu0 %v950
    %1939 = vmatpush1.msra.mxu0 %v949
    %1940 = vmatprep.subr.mxu0 %v952
    %1941 = vmatpush1.msra.mxu0 %v951
    %1942 = vmatprep.subr.mxu0 0.0
    %1943 = vmatpush1.msra.mxu0 0.0
    %1944 = vmatprep.subr.mxu0 0.0
    %1945 = vmatpush1.msra.mxu0 0.0
    %1946 = vmatprep.subr.mxu0 0.0
    %1947 = vmatpush1.msra.mxu0 0.0
    %1948 = vmatprep.subr.mxu0 0.0
    %1949 = vmatpush1.msra.mxu0 0.0
    %1950 = vmatprep.subr.mxu0 0.0
    %1951 = vmatpush1.msra.mxu0 0.0
    %1952 = vmatprep.subr.mxu0 0.0
    %1953 = vmatpush1.msra.mxu0 0.0
    %1954 = vmatprep.subr.mxu0 0.0
    %1955 = vmatpush1.msra.mxu0 0.0
    %1956 = vmatprep.subr.mxu0 0.0
    %1957 = vmatpush1.msra.mxu0 0.0
    %1958 = vmatprep.subr.mxu0 0.0
    %1959 = vmatpush1.msra.mxu0 0.0
    %1960 = vmatprep.subr.mxu0 0.0
    %1961 = vmatpush1.msra.mxu0 0.0
    %1962 = vmatprep.subr.mxu0 0.0
    %1963 = vmatpush1.msra.mxu0 0.0
    %1964 = vmatprep.subr.mxu0 0.0
    %1965 = vmatpush1.msra.mxu0 0.0
    %1966 = vmatprep.subr.mxu0 0.0
    %1967 = vmatpush1.msra.mxu0 0.0
    %1968 = vmatprep.subr.mxu0 0.0
    %1969 = vmatpush1.msra.mxu0 0.0
    %1970 = vmatprep.subr.mxu0 0.0
    %1971 = vmatpush1.msra.mxu0 0.0
    %1972 = vmatprep.subr.mxu0 0.0
    %1973 = vmatpush1.msra.mxu0 0.0
    %1974 = vmatprep.subr.mxu0 0.0
    %1975 = vmatpush1.msra.mxu0 0.0
    %1976 = vmatprep.subr.mxu0 0.0
    %1977 = vmatpush1.msra.mxu0 0.0
    %1978 = vmatprep.subr.mxu0 0.0
    %1979 = vmatpush1.msra.mxu0 0.0
    %1980 = vmatprep.subr.mxu0 0.0
    %1981 = vmatpush1.msra.mxu0 0.0
    %1982 = vmatprep.subr.mxu0 0.0
    %1983 = vmatpush1.msra.mxu0 0.0
    %1984 = vmatprep.subr.mxu0 0.0
    %1985 = vmatpush1.msra.mxu0 0.0
    %1986 = vmatprep.subr.mxu0 0.0
    %1987 = vmatpush1.msra.mxu0 0.0
    %1988 = vmatprep.subr.mxu0 0.0
    %1989 = vmatpush1.msra.mxu0 0.0
    %1990 = vmatprep.mubr.f32.mxu0 0.0
    %1991 = vmatmul.mubr.f32.gmra.mrb[0].mxu0 %v1924
    %v1992 = vpop.f32.mrb[0].mxu0
    %v1993 = vadd.f32 0.0, %v1992
    %v1994 = vpop.f32.mrb[0].mxu0
    %v1995 = vadd.f32 0.0, %v1994
    %1996 = vdwg.mxu0
    %v1999 = vcombine.low %v1993, %v1995
    %v2001 = vunpack.c.l.s4 1983009808
    %v2002 = vunpack.c.0.s8 %v2001
    %v2003 = vlaneseq
    %v2004 = vshrl.u32 %v2003, 7
    %v2005 = vsub.s32 %v2002, %v2004
    %v2006 = vrot.slane %v1999, %v2005
    %v2008 = vadd.f32 %v1923, %v2006
    %v2009 = vxor.u32 %v2008, 2147483648
    %v2010 = vmul.f32 %v2009, 1.442695
    %v2011 = vpow.pop %v2010
    %v2012 = vadd.f32 %v2011, 1.0
    %v2013 = vrcp.pop %v2012
    %v2014 = vmul.f32 1.0, %v2013
    %v2016 = vrot.slane %v2008, 2
    %v2018 = vtanh.pop %v2016
    %2019 = vrot.lane.b32.xlu0 %v2008, 64
    %v2020 = vpop.permute.xlu0 %2019
    %v2021 = vrot.slane %v2020, 2
    %v2023 = vxor.u32 %v2021, 2147483648
    %v2024 = vmul.f32 %v2023, 1.442695
    %v2025 = vpow.pop %v2024
    %v2026 = vadd.f32 %v2025, 1.0
    %v2027 = vrcp.pop %v2026
    %v2028 = vmul.f32 1.0, %v2027
    %v2029 = vmul.f32 %v2014, %v1897
    %v2030 = vmul.f32 %v2014, %v2018
    %2032 = vrot.lane.b32.xlu0 %v2030, 64
    %v2033 = vpop.permute.xlu0 %2032
    %v2035 = vadd.f32 %v2029, %v2033
    %v2036 = vtanh.pop %v2035
    %2038 = vrot.lane.b32.xlu0 %v2036, 64
    %v2039 = vpop.permute.xlu0 %2038
    %v2041 = vmul.f32 %v2028, %v2039
    %s2042 = scalar_lea.vmem [#allocation4], 14
    %2043 = vst.msk [vmem:[%s2042] sm:$0x3] %vm1076, %v2041
    %v2046 = vunpack.c.l.s4 1983009808
    %v2047 = vunpack.c.0.s8 %v2046
    %v2048 = vlaneseq
    %v2049 = vshrl.u32 %v2048, 7
    %v2050 = vsub.s32 %v2047, %v2049
    %v2051 = vrot.slane %v2041, %v2050
    %2052 = vrot.lane.b32.xlu0 %v2051, 96
    %v2053 = vpop.permute.xlu0 %2052
    %s2055 = scalar_lea.vmem [#allocation5], 16
    %2056 = vst.msk [vmem:[%s2055] sm:$0x3] %vm1076, %v2053
    %s2057 = scalar_lea.vmem [#allocation2], 32
    %v2058 = vld [vmem:[%s2057] sm:$0xf]
    %s2059 = scalar_lea.vmem [#allocation3], 28
    %v2060 = vld [vmem:[%s2059] sm:$0xf]
    %v2061 = vadd.f32 %v2058, %v2060
    %v2062 = vsel %vm957, %v2041, 0
    %2064 = vmatprep.subr.mxu0 %v938
    %2065 = vmatpush1.msra.mxu0 %v937
    %2066 = vmatprep.subr.mxu0 %v940
    %2067 = vmatpush1.msra.mxu0 %v939
    %2068 = vmatprep.subr.mxu0 %v942
    %2069 = vmatpush1.msra.mxu0 %v941
    %2070 = vmatprep.subr.mxu0 %v944
    %2071 = vmatpush1.msra.mxu0 %v943
    %2072 = vmatprep.subr.mxu0 %v946
    %2073 = vmatpush1.msra.mxu0 %v945
    %2074 = vmatprep.subr.mxu0 %v948
    %2075 = vmatpush1.msra.mxu0 %v947
    %2076 = vmatprep.subr.mxu0 %v950
    %2077 = vmatpush1.msra.mxu0 %v949
    %2078 = vmatprep.subr.mxu0 %v952
    %2079 = vmatpush1.msra.mxu0 %v951
    %2080 = vmatprep.subr.mxu0 0.0
    %2081 = vmatpush1.msra.mxu0 0.0
    %2082 = vmatprep.subr.mxu0 0.0
    %2083 = vmatpush1.msra.mxu0 0.0
    %2084 = vmatprep.subr.mxu0 0.0
    %2085 = vmatpush1.msra.mxu0 0.0
    %2086 = vmatprep.subr.mxu0 0.0
    %2087 = vmatpush1.msra.mxu0 0.0
    %2088 = vmatprep.subr.mxu0 0.0
    %2089 = vmatpush1.msra.mxu0 0.0
    %2090 = vmatprep.subr.mxu0 0.0
    %2091 = vmatpush1.msra.mxu0 0.0
    %2092 = vmatprep.subr.mxu0 0.0
    %2093 = vmatpush1.msra.mxu0 0.0
    %2094 = vmatprep.subr.mxu0 0.0
    %2095 = vmatpush1.msra.mxu0 0.0
    %2096 = vmatprep.subr.mxu0 0.0
    %2097 = vmatpush1.msra.mxu0 0.0
    %2098 = vmatprep.subr.mxu0 0.0
    %2099 = vmatpush1.msra.mxu0 0.0
    %2100 = vmatprep.subr.mxu0 0.0
    %2101 = vmatpush1.msra.mxu0 0.0
    %2102 = vmatprep.subr.mxu0 0.0
    %2103 = vmatpush1.msra.mxu0 0.0
    %2104 = vmatprep.subr.mxu0 0.0
    %2105 = vmatpush1.msra.mxu0 0.0
    %2106 = vmatprep.subr.mxu0 0.0
    %2107 = vmatpush1.msra.mxu0 0.0
    %2108 = vmatprep.subr.mxu0 0.0
    %2109 = vmatpush1.msra.mxu0 0.0
    %2110 = vmatprep.subr.mxu0 0.0
    %2111 = vmatpush1.msra.mxu0 0.0
    %2112 = vmatprep.subr.mxu0 0.0
    %2113 = vmatpush1.msra.mxu0 0.0
    %2114 = vmatprep.subr.mxu0 0.0
    %2115 = vmatpush1.msra.mxu0 0.0
    %2116 = vmatprep.subr.mxu0 0.0
    %2117 = vmatpush1.msra.mxu0 0.0
    %2118 = vmatprep.subr.mxu0 0.0
    %2119 = vmatpush1.msra.mxu0 0.0
    %2120 = vmatprep.subr.mxu0 0.0
    %2121 = vmatpush1.msra.mxu0 0.0
    %2122 = vmatprep.subr.mxu0 0.0
    %2123 = vmatpush1.msra.mxu0 0.0
    %2124 = vmatprep.subr.mxu0 0.0
    %2125 = vmatpush1.msra.mxu0 0.0
    %2126 = vmatprep.subr.mxu0 0.0
    %2127 = vmatpush1.msra.mxu0 0.0
    %2128 = vmatprep.mubr.f32.mxu0 0.0
    %2129 = vmatmul.mubr.f32.gmra.mrb[0].mxu0 %v2062
    %v2130 = vpop.f32.mrb[0].mxu0
    %v2131 = vadd.f32 0.0, %v2130
    %v2132 = vpop.f32.mrb[0].mxu0
    %v2133 = vadd.f32 0.0, %v2132
    %2134 = vdwg.mxu0
    %v2137 = vcombine.low %v2131, %v2133
    %v2139 = vunpack.c.l.s4 1983009808
    %v2140 = vunpack.c.0.s8 %v2139
    %v2141 = vlaneseq
    %v2142 = vshrl.u32 %v2141, 7
    %v2143 = vsub.s32 %v2140, %v2142
    %v2144 = vrot.slane %v2137, %v2143
    %v2146 = vadd.f32 %v2061, %v2144
    %v2147 = vxor.u32 %v2146, 2147483648
    %v2148 = vmul.f32 %v2147, 1.442695
    %v2149 = vpow.pop %v2148
    %v2150 = vadd.f32 %v2149, 1.0
    %v2151 = vrcp.pop %v2150
    %v2152 = vmul.f32 1.0, %v2151
    %v2154 = vrot.slane %v2146, 2
    %v2156 = vtanh.pop %v2154
    %2157 = vrot.lane.b32.xlu0 %v2146, 64
    %v2158 = vpop.permute.xlu0 %2157
    %v2159 = vrot.slane %v2158, 2
    %v2161 = vxor.u32 %v2159, 2147483648
    %v2162 = vmul.f32 %v2161, 1.442695
    %v2163 = vpow.pop %v2162
    %v2164 = vadd.f32 %v2163, 1.0
    %v2165 = vrcp.pop %v2164
    %v2166 = vmul.f32 1.0, %v2165
    %v2167 = vmul.f32 %v2152, %v2035
    %v2168 = vmul.f32 %v2152, %v2156
    %2170 = vrot.lane.b32.xlu0 %v2168, 64
    %v2171 = vpop.permute.xlu0 %2170
    %v2173 = vadd.f32 %v2167, %v2171
    %v2174 = vtanh.pop %v2173
    %2176 = vrot.lane.b32.xlu0 %v2174, 64
    %v2177 = vpop.permute.xlu0 %2176
    %v2179 = vmul.f32 %v2166, %v2177
    %s2180 = scalar_lea.vmem [#allocation4], 16
    %2181 = vst.msk [vmem:[%s2180] sm:$0x3] %vm1076, %v2179
    %v2184 = vunpack.c.l.s4 1983009808
    %v2185 = vunpack.c.0.s8 %v2184
    %v2186 = vlaneseq
    %v2187 = vshrl.u32 %v2186, 7
    %v2188 = vsub.s32 %v2185, %v2187
    %v2189 = vrot.slane %v2179, %v2188
    %2190 = vrot.lane.b32.xlu0 %v2189, 96
    %v2191 = vpop.permute.xlu0 %2190
    %s2193 = scalar_lea.vmem [#allocation5], 14
    %2194 = vst.msk [vmem:[%s2193] sm:$0x3] %vm1076, %v2191
    %s2195 = scalar_lea.vmem [#allocation2], 36
    %v2196 = vld [vmem:[%s2195] sm:$0xf]
    %s2197 = scalar_lea.vmem [#allocation3], 24
    %v2198 = vld [vmem:[%s2197] sm:$0xf]
    %v2199 = vadd.f32 %v2196, %v2198
    %v2200 = vsel %vm957, %v2179, 0
    %2202 = vmatprep.subr.mxu0 %v938
    %2203 = vmatpush1.msra.mxu0 %v937
    %2204 = vmatprep.subr.mxu0 %v940
    %2205 = vmatpush1.msra.mxu0 %v939
    %2206 = vmatprep.subr.mxu0 %v942
    %2207 = vmatpush1.msra.mxu0 %v941
    %2208 = vmatprep.subr.mxu0 %v944
    %2209 = vmatpush1.msra.mxu0 %v943
    %2210 = vmatprep.subr.mxu0 %v946
    %2211 = vmatpush1.msra.mxu0 %v945
    %2212 = vmatprep.subr.mxu0 %v948
    %2213 = vmatpush1.msra.mxu0 %v947
    %2214 = vmatprep.subr.mxu0 %v950
    %2215 = vmatpush1.msra.mxu0 %v949
    %2216 = vmatprep.subr.mxu0 %v952
    %2217 = vmatpush1.msra.mxu0 %v951
    %2218 = vmatprep.subr.mxu0 0.0
    %2219 = vmatpush1.msra.mxu0 0.0
    %2220 = vmatprep.subr.mxu0 0.0
    %2221 = vmatpush1.msra.mxu0 0.0
    %2222 = vmatprep.subr.mxu0 0.0
    %2223 = vmatpush1.msra.mxu0 0.0
    %2224 = vmatprep.subr.mxu0 0.0
    %2225 = vmatpush1.msra.mxu0 0.0
    %2226 = vmatprep.subr.mxu0 0.0
    %2227 = vmatpush1.msra.mxu0 0.0
    %2228 = vmatprep.subr.mxu0 0.0
    %2229 = vmatpush1.msra.mxu0 0.0
    %2230 = vmatprep.subr.mxu0 0.0
    %2231 = vmatpush1.msra.mxu0 0.0
    %2232 = vmatprep.subr.mxu0 0.0
    %2233 = vmatpush1.msra.mxu0 0.0
    %2234 = vmatprep.subr.mxu0 0.0
    %2235 = vmatpush1.msra.mxu0 0.0
    %2236 = vmatprep.subr.mxu0 0.0
    %2237 = vmatpush1.msra.mxu0 0.0
    %2238 = vmatprep.subr.mxu0 0.0
    %2239 = vmatpush1.msra.mxu0 0.0
    %2240 = vmatprep.subr.mxu0 0.0
    %2241 = vmatpush1.msra.mxu0 0.0
    %2242 = vmatprep.subr.mxu0 0.0
    %2243 = vmatpush1.msra.mxu0 0.0
    %2244 = vmatprep.subr.mxu0 0.0
    %2245 = vmatpush1.msra.mxu0 0.0
    %2246 = vmatprep.subr.mxu0 0.0
    %2247 = vmatpush1.msra.mxu0 0.0
    %2248 = vmatprep.subr.mxu0 0.0
    %2249 = vmatpush1.msra.mxu0 0.0
    %2250 = vmatprep.subr.mxu0 0.0
    %2251 = vmatpush1.msra.mxu0 0.0
    %2252 = vmatprep.subr.mxu0 0.0
    %2253 = vmatpush1.msra.mxu0 0.0
    %2254 = vmatprep.subr.mxu0 0.0
    %2255 = vmatpush1.msra.mxu0 0.0
    %2256 = vmatprep.subr.mxu0 0.0
    %2257 = vmatpush1.msra.mxu0 0.0
    %2258 = vmatprep.subr.mxu0 0.0
    %2259 = vmatpush1.msra.mxu0 0.0
    %2260 = vmatprep.subr.mxu0 0.0
    %2261 = vmatpush1.msra.mxu0 0.0
    %2262 = vmatprep.subr.mxu0 0.0
    %2263 = vmatpush1.msra.mxu0 0.0
    %2264 = vmatprep.subr.mxu0 0.0
    %2265 = vmatpush1.msra.mxu0 0.0
    %2266 = vmatprep.mubr.f32.mxu0 0.0
    %2267 = vmatmul.mubr.f32.gmra.mrb[0].mxu0 %v2200
    %v2268 = vpop.f32.mrb[0].mxu0
    %v2269 = vadd.f32 0.0, %v2268
    %v2270 = vpop.f32.mrb[0].mxu0
    %v2271 = vadd.f32 0.0, %v2270
    %2272 = vdwg.mxu0
    %v2275 = vcombine.low %v2269, %v2271
    %v2277 = vunpack.c.l.s4 1983009808
    %v2278 = vunpack.c.0.s8 %v2277
    %v2279 = vlaneseq
    %v2280 = vshrl.u32 %v2279, 7
    %v2281 = vsub.s32 %v2278, %v2280
    %v2282 = vrot.slane %v2275, %v2281
    %v2284 = vadd.f32 %v2199, %v2282
    %v2285 = vxor.u32 %v2284, 2147483648
    %v2286 = vmul.f32 %v2285, 1.442695
    %v2287 = vpow.pop %v2286
    %v2288 = vadd.f32 %v2287, 1.0
    %v2289 = vrcp.pop %v2288
    %v2290 = vmul.f32 1.0, %v2289
    %v2292 = vrot.slane %v2284, 2
    %v2294 = vtanh.pop %v2292
    %2295 = vrot.lane.b32.xlu0 %v2284, 64
    %v2296 = vpop.permute.xlu0 %2295
    %v2297 = vrot.slane %v2296, 2
    %v2299 = vxor.u32 %v2297, 2147483648
    %v2300 = vmul.f32 %v2299, 1.442695
    %v2301 = vpow.pop %v2300
    %v2302 = vadd.f32 %v2301, 1.0
    %v2303 = vrcp.pop %v2302
    %v2304 = vmul.f32 1.0, %v2303
    %v2305 = vmul.f32 %v2290, %v2173
    %v2306 = vmul.f32 %v2290, %v2294
    %2308 = vrot.lane.b32.xlu0 %v2306, 64
    %v2309 = vpop.permute.xlu0 %2308
    %v2311 = vadd.f32 %v2305, %v2309
    %v2312 = vtanh.pop %v2311
    %2314 = vrot.lane.b32.xlu0 %v2312, 64
    %v2315 = vpop.permute.xlu0 %2314
    %v2317 = vmul.f32 %v2304, %v2315
    %s2318 = scalar_lea.vmem [#allocation4], 18
    %2319 = vst.msk [vmem:[%s2318] sm:$0x3] %vm1076, %v2317
    %v2322 = vunpack.c.l.s4 1983009808
    %v2323 = vunpack.c.0.s8 %v2322
    %v2324 = vlaneseq
    %v2325 = vshrl.u32 %v2324, 7
    %v2326 = vsub.s32 %v2323, %v2325
    %v2327 = vrot.slane %v2317, %v2326
    %2328 = vrot.lane.b32.xlu0 %v2327, 96
    %v2329 = vpop.permute.xlu0 %2328
    %s2331 = scalar_lea.vmem [#allocation5], 12
    %2332 = vst.msk [vmem:[%s2331] sm:$0x3] %vm1076, %v2329
    %s2333 = scalar_lea.vmem [#allocation2], 40
    %v2334 = vld [vmem:[%s2333] sm:$0xf]
    %s2335 = scalar_lea.vmem [#allocation3], 20
    %v2336 = vld [vmem:[%s2335] sm:$0xf]
    %v2337 = vadd.f32 %v2334, %v2336
    %v2338 = vsel %vm957, %v2317, 0
    %2340 = vmatprep.subr.mxu0 %v938
    %2341 = vmatpush1.msra.mxu0 %v937
    %2342 = vmatprep.subr.mxu0 %v940
    %2343 = vmatpush1.msra.mxu0 %v939
    %2344 = vmatprep.subr.mxu0 %v942
    %2345 = vmatpush1.msra.mxu0 %v941
    %2346 = vmatprep.subr.mxu0 %v944
    %2347 = vmatpush1.msra.mxu0 %v943
    %2348 = vmatprep.subr.mxu0 %v946
    %2349 = vmatpush1.msra.mxu0 %v945
    %2350 = vmatprep.subr.mxu0 %v948
    %2351 = vmatpush1.msra.mxu0 %v947
    %2352 = vmatprep.subr.mxu0 %v950
    %2353 = vmatpush1.msra.mxu0 %v949
    %2354 = vmatprep.subr.mxu0 %v952
    %2355 = vmatpush1.msra.mxu0 %v951
    %2356 = vmatprep.subr.mxu0 0.0
    %2357 = vmatpush1.msra.mxu0 0.0
    %2358 = vmatprep.subr.mxu0 0.0
    %2359 = vmatpush1.msra.mxu0 0.0
    %2360 = vmatprep.subr.mxu0 0.0
    %2361 = vmatpush1.msra.mxu0 0.0
    %2362 = vmatprep.subr.mxu0 0.0
    %2363 = vmatpush1.msra.mxu0 0.0
    %2364 = vmatprep.subr.mxu0 0.0
    %2365 = vmatpush1.msra.mxu0 0.0
    %2366 = vmatprep.subr.mxu0 0.0
    %2367 = vmatpush1.msra.mxu0 0.0
    %2368 = vmatprep.subr.mxu0 0.0
    %2369 = vmatpush1.msra.mxu0 0.0
    %2370 = vmatprep.subr.mxu0 0.0
    %2371 = vmatpush1.msra.mxu0 0.0
    %2372 = vmatprep.subr.mxu0 0.0
    %2373 = vmatpush1.msra.mxu0 0.0
    %2374 = vmatprep.subr.mxu0 0.0
    %2375 = vmatpush1.msra.mxu0 0.0
    %2376 = vmatprep.subr.mxu0 0.0
    %2377 = vmatpush1.msra.mxu0 0.0
    %2378 = vmatprep.subr.mxu0 0.0
    %2379 = vmatpush1.msra.mxu0 0.0
    %2380 = vmatprep.subr.mxu0 0.0
    %2381 = vmatpush1.msra.mxu0 0.0
    %2382 = vmatprep.subr.mxu0 0.0
    %2383 = vmatpush1.msra.mxu0 0.0
    %2384 = vmatprep.subr.mxu0 0.0
    %2385 = vmatpush1.msra.mxu0 0.0
    %2386 = vmatprep.subr.mxu0 0.0
    %2387 = vmatpush1.msra.mxu0 0.0
    %2388 = vmatprep.subr.mxu0 0.0
    %2389 = vmatpush1.msra.mxu0 0.0
    %2390 = vmatprep.subr.mxu0 0.0
    %2391 = vmatpush1.msra.mxu0 0.0
    %2392 = vmatprep.subr.mxu0 0.0
    %2393 = vmatpush1.msra.mxu0 0.0
    %2394 = vmatprep.subr.mxu0 0.0
    %2395 = vmatpush1.msra.mxu0 0.0
    %2396 = vmatprep.subr.mxu0 0.0
    %2397 = vmatpush1.msra.mxu0 0.0
    %2398 = vmatprep.subr.mxu0 0.0
    %2399 = vmatpush1.msra.mxu0 0.0
    %2400 = vmatprep.subr.mxu0 0.0
    %2401 = vmatpush1.msra.mxu0 0.0
    %2402 = vmatprep.subr.mxu0 0.0
    %2403 = vmatpush1.msra.mxu0 0.0
    %2404 = vmatprep.mubr.f32.mxu0 0.0
    %2405 = vmatmul.mubr.f32.gmra.mrb[0].mxu0 %v2338
    %v2406 = vpop.f32.mrb[0].mxu0
    %v2407 = vadd.f32 0.0, %v2406
    %v2408 = vpop.f32.mrb[0].mxu0
    %v2409 = vadd.f32 0.0, %v2408
    %2410 = vdwg.mxu0
    %v2413 = vcombine.low %v2407, %v2409
    %v2415 = vunpack.c.l.s4 1983009808
    %v2416 = vunpack.c.0.s8 %v2415
    %v2417 = vlaneseq
    %v2418 = vshrl.u32 %v2417, 7
    %v2419 = vsub.s32 %v2416, %v2418
    %v2420 = vrot.slane %v2413, %v2419
    %v2422 = vadd.f32 %v2337, %v2420
    %v2423 = vxor.u32 %v2422, 2147483648
    %v2424 = vmul.f32 %v2423, 1.442695
    %v2425 = vpow.pop %v2424
    %v2426 = vadd.f32 %v2425, 1.0
    %v2427 = vrcp.pop %v2426
    %v2428 = vmul.f32 1.0, %v2427
    %v2430 = vrot.slane %v2422, 2
    %v2432 = vtanh.pop %v2430
    %2433 = vrot.lane.b32.xlu0 %v2422, 64
    %v2434 = vpop.permute.xlu0 %2433
    %v2435 = vrot.slane %v2434, 2
    %v2437 = vxor.u32 %v2435, 2147483648
    %v2438 = vmul.f32 %v2437, 1.442695
    %v2439 = vpow.pop %v2438
    %v2440 = vadd.f32 %v2439, 1.0
    %v2441 = vrcp.pop %v2440
    %v2442 = vmul.f32 1.0, %v2441
    %v2443 = vmul.f32 %v2428, %v2311
    %v2444 = vmul.f32 %v2428, %v2432
    %2446 = vrot.lane.b32.xlu0 %v2444, 64
    %v2447 = vpop.permute.xlu0 %2446
    %v2449 = vadd.f32 %v2443, %v2447
    %v2450 = vtanh.pop %v2449
    %2452 = vrot.lane.b32.xlu0 %v2450, 64
    %v2453 = vpop.permute.xlu0 %2452
    %v2455 = vmul.f32 %v2442, %v2453
    %s2456 = scalar_lea.vmem [#allocation4], 20
    %2457 = vst.msk [vmem:[%s2456] sm:$0x3] %vm1076, %v2455
    %v2460 = vunpack.c.l.s4 1983009808
    %v2461 = vunpack.c.0.s8 %v2460
    %v2462 = vlaneseq
    %v2463 = vshrl.u32 %v2462, 7
    %v2464 = vsub.s32 %v2461, %v2463
    %v2465 = vrot.slane %v2455, %v2464
    %2466 = vrot.lane.b32.xlu0 %v2465, 96
    %v2467 = vpop.permute.xlu0 %2466
    %s2469 = scalar_lea.vmem [#allocation5], 10
    %2470 = vst.msk [vmem:[%s2469] sm:$0x3] %vm1076, %v2467
    %s2471 = scalar_lea.vmem [#allocation2], 44
    %v2472 = vld [vmem:[%s2471] sm:$0xf]
    %s2473 = scalar_lea.vmem [#allocation3], 16
    %v2474 = vld [vmem:[%s2473] sm:$0xf]
    %v2475 = vadd.f32 %v2472, %v2474
    %v2476 = vsel %vm957, %v2455, 0
    %2478 = vmatprep.subr.mxu0 %v938
    %2479 = vmatpush1.msra.mxu0 %v937
    %2480 = vmatprep.subr.mxu0 %v940
    %2481 = vmatpush1.msra.mxu0 %v939
    %2482 = vmatprep.subr.mxu0 %v942
    %2483 = vmatpush1.msra.mxu0 %v941
    %2484 = vmatprep.subr.mxu0 %v944
    %2485 = vmatpush1.msra.mxu0 %v943
    %2486 = vmatprep.subr.mxu0 %v946
    %2487 = vmatpush1.msra.mxu0 %v945
    %2488 = vmatprep.subr.mxu0 %v948
    %2489 = vmatpush1.msra.mxu0 %v947
    %2490 = vmatprep.subr.mxu0 %v950
    %2491 = vmatpush1.msra.mxu0 %v949
    %2492 = vmatprep.subr.mxu0 %v952
    %2493 = vmatpush1.msra.mxu0 %v951
    %2494 = vmatprep.subr.mxu0 0.0
    %2495 = vmatpush1.msra.mxu0 0.0
    %2496 = vmatprep.subr.mxu0 0.0
    %2497 = vmatpush1.msra.mxu0 0.0
    %2498 = vmatprep.subr.mxu0 0.0
    %2499 = vmatpush1.msra.mxu0 0.0
    %2500 = vmatprep.subr.mxu0 0.0
    %2501 = vmatpush1.msra.mxu0 0.0
    %2502 = vmatprep.subr.mxu0 0.0
    %2503 = vmatpush1.msra.mxu0 0.0
    %2504 = vmatprep.subr.mxu0 0.0
    %2505 = vmatpush1.msra.mxu0 0.0
    %2506 = vmatprep.subr.mxu0 0.0
    %2507 = vmatpush1.msra.mxu0 0.0
    %2508 = vmatprep.subr.mxu0 0.0
    %2509 = vmatpush1.msra.mxu0 0.0
    %2510 = vmatprep.subr.mxu0 0.0
    %2511 = vmatpush1.msra.mxu0 0.0
    %2512 = vmatprep.subr.mxu0 0.0
    %2513 = vmatpush1.msra.mxu0 0.0
    %2514 = vmatprep.subr.mxu0 0.0
    %2515 = vmatpush1.msra.mxu0 0.0
    %2516 = vmatprep.subr.mxu0 0.0
    %2517 = vmatpush1.msra.mxu0 0.0
    %2518 = vmatprep.subr.mxu0 0.0
    %2519 = vmatpush1.msra.mxu0 0.0
    %2520 = vmatprep.subr.mxu0 0.0
    %2521 = vmatpush1.msra.mxu0 0.0
    %2522 = vmatprep.subr.mxu0 0.0
    %2523 = vmatpush1.msra.mxu0 0.0
    %2524 = vmatprep.subr.mxu0 0.0
    %2525 = vmatpush1.msra.mxu0 0.0
    %2526 = vmatprep.subr.mxu0 0.0
    %2527 = vmatpush1.msra.mxu0 0.0
    %2528 = vmatprep.subr.mxu0 0.0
    %2529 = vmatpush1.msra.mxu0 0.0
    %2530 = vmatprep.subr.mxu0 0.0
    %2531 = vmatpush1.msra.mxu0 0.0
    %2532 = vmatprep.subr.mxu0 0.0
    %2533 = vmatpush1.msra.mxu0 0.0
    %2534 = vmatprep.subr.mxu0 0.0
    %2535 = vmatpush1.msra.mxu0 0.0
    %2536 = vmatprep.subr.mxu0 0.0
    %2537 = vmatpush1.msra.mxu0 0.0
    %2538 = vmatprep.subr.mxu0 0.0
    %2539 = vmatpush1.msra.mxu0 0.0
    %2540 = vmatprep.subr.mxu0 0.0
    %2541 = vmatpush1.msra.mxu0 0.0
    %2542 = vmatprep.mubr.f32.mxu0 0.0
    %2543 = vmatmul.mubr.f32.gmra.mrb[0].mxu0 %v2476
    %v2544 = vpop.f32.mrb[0].mxu0
    %v2545 = vadd.f32 0.0, %v2544
    %v2546 = vpop.f32.mrb[0].mxu0
    %v2547 = vadd.f32 0.0, %v2546
    %2548 = vdwg.mxu0
    %v2551 = vcombine.low %v2545, %v2547
    %v2553 = vunpack.c.l.s4 1983009808
    %v2554 = vunpack.c.0.s8 %v2553
    %v2555 = vlaneseq
    %v2556 = vshrl.u32 %v2555, 7
    %v2557 = vsub.s32 %v2554, %v2556
    %v2558 = vrot.slane %v2551, %v2557
    %v2560 = vadd.f32 %v2475, %v2558
    %v2561 = vxor.u32 %v2560, 2147483648
    %v2562 = vmul.f32 %v2561, 1.442695
    %v2563 = vpow.pop %v2562
    %v2564 = vadd.f32 %v2563, 1.0
    %v2565 = vrcp.pop %v2564
    %v2566 = vmul.f32 1.0, %v2565
    %v2568 = vrot.slane %v2560, 2
    %v2570 = vtanh.pop %v2568
    %2571 = vrot.lane.b32.xlu0 %v2560, 64
    %v2572 = vpop.permute.xlu0 %2571
    %v2573 = vrot.slane %v2572, 2
    %v2575 = vxor.u32 %v2573, 2147483648
    %v2576 = vmul.f32 %v2575, 1.442695
    %v2577 = vpow.pop %v2576
    %v2578 = vadd.f32 %v2577, 1.0
    %v2579 = vrcp.pop %v2578
    %v2580 = vmul.f32 1.0, %v2579
    %v2581 = vmul.f32 %v2566, %v2449
    %v2582 = vmul.f32 %v2566, %v2570
    %2584 = vrot.lane.b32.xlu0 %v2582, 64
    %v2585 = vpop.permute.xlu0 %2584
    %v2587 = vadd.f32 %v2581, %v2585
    %v2588 = vtanh.pop %v2587
    %2590 = vrot.lane.b32.xlu0 %v2588, 64
    %v2591 = vpop.permute.xlu0 %2590
    %v2593 = vmul.f32 %v2580, %v2591
    %s2594 = scalar_lea.vmem [#allocation4], 22
    %2595 = vst.msk [vmem:[%s2594] sm:$0x3] %vm1076, %v2593
    %v2598 = vunpack.c.l.s4 1983009808
    %v2599 = vunpack.c.0.s8 %v2598
    %v2600 = vlaneseq
    %v2601 = vshrl.u32 %v2600, 7
    %v2602 = vsub.s32 %v2599, %v2601
    %v2603 = vrot.slane %v2593, %v2602
    %2604 = vrot.lane.b32.xlu0 %v2603, 96
    %v2605 = vpop.permute.xlu0 %2604
    %s2607 = scalar_lea.vmem [#allocation5], 8
    %2608 = vst.msk [vmem:[%s2607] sm:$0x3] %vm1076, %v2605
    %s2609 = scalar_lea.vmem [#allocation2], 48
    %v2610 = vld [vmem:[%s2609] sm:$0xf]
    %s2611 = scalar_lea.vmem [#allocation3], 12
    %v2612 = vld [vmem:[%s2611] sm:$0xf]
    %v2613 = vadd.f32 %v2610, %v2612
    %v2614 = vsel %vm957, %v2593, 0
    %2616 = vmatprep.subr.mxu0 %v938
    %2617 = vmatpush1.msra.mxu0 %v937
    %2618 = vmatprep.subr.mxu0 %v940
    %2619 = vmatpush1.msra.mxu0 %v939
    %2620 = vmatprep.subr.mxu0 %v942
    %2621 = vmatpush1.msra.mxu0 %v941
    %2622 = vmatprep.subr.mxu0 %v944
    %2623 = vmatpush1.msra.mxu0 %v943
    %2624 = vmatprep.subr.mxu0 %v946
    %2625 = vmatpush1.msra.mxu0 %v945
    %2626 = vmatprep.subr.mxu0 %v948
    %2627 = vmatpush1.msra.mxu0 %v947
    %2628 = vmatprep.subr.mxu0 %v950
    %2629 = vmatpush1.msra.mxu0 %v949
    %2630 = vmatprep.subr.mxu0 %v952
    %2631 = vmatpush1.msra.mxu0 %v951
    %2632 = vmatprep.subr.mxu0 0.0
    %2633 = vmatpush1.msra.mxu0 0.0
    %2634 = vmatprep.subr.mxu0 0.0
    %2635 = vmatpush1.msra.mxu0 0.0
    %2636 = vmatprep.subr.mxu0 0.0
    %2637 = vmatpush1.msra.mxu0 0.0
    %2638 = vmatprep.subr.mxu0 0.0
    %2639 = vmatpush1.msra.mxu0 0.0
    %2640 = vmatprep.subr.mxu0 0.0
    %2641 = vmatpush1.msra.mxu0 0.0
    %2642 = vmatprep.subr.mxu0 0.0
    %2643 = vmatpush1.msra.mxu0 0.0
    %2644 = vmatprep.subr.mxu0 0.0
    %2645 = vmatpush1.msra.mxu0 0.0
    %2646 = vmatprep.subr.mxu0 0.0
    %2647 = vmatpush1.msra.mxu0 0.0
    %2648 = vmatprep.subr.mxu0 0.0
    %2649 = vmatpush1.msra.mxu0 0.0
    %2650 = vmatprep.subr.mxu0 0.0
    %2651 = vmatpush1.msra.mxu0 0.0
    %2652 = vmatprep.subr.mxu0 0.0
    %2653 = vmatpush1.msra.mxu0 0.0
    %2654 = vmatprep.subr.mxu0 0.0
    %2655 = vmatpush1.msra.mxu0 0.0
    %2656 = vmatprep.subr.mxu0 0.0
    %2657 = vmatpush1.msra.mxu0 0.0
    %2658 = vmatprep.subr.mxu0 0.0
    %2659 = vmatpush1.msra.mxu0 0.0
    %2660 = vmatprep.subr.mxu0 0.0
    %2661 = vmatpush1.msra.mxu0 0.0
    %2662 = vmatprep.subr.mxu0 0.0
    %2663 = vmatpush1.msra.mxu0 0.0
    %2664 = vmatprep.subr.mxu0 0.0
    %2665 = vmatpush1.msra.mxu0 0.0
    %2666 = vmatprep.subr.mxu0 0.0
    %2667 = vmatpush1.msra.mxu0 0.0
    %2668 = vmatprep.subr.mxu0 0.0
    %2669 = vmatpush1.msra.mxu0 0.0
    %2670 = vmatprep.subr.mxu0 0.0
    %2671 = vmatpush1.msra.mxu0 0.0
    %2672 = vmatprep.subr.mxu0 0.0
    %2673 = vmatpush1.msra.mxu0 0.0
    %2674 = vmatprep.subr.mxu0 0.0
    %2675 = vmatpush1.msra.mxu0 0.0
    %2676 = vmatprep.subr.mxu0 0.0
    %2677 = vmatpush1.msra.mxu0 0.0
    %2678 = vmatprep.subr.mxu0 0.0
    %2679 = vmatpush1.msra.mxu0 0.0
    %2680 = vmatprep.mubr.f32.mxu0 0.0
    %2681 = vmatmul.mubr.f32.gmra.mrb[0].mxu0 %v2614
    %v2682 = vpop.f32.mrb[0].mxu0
    %v2683 = vadd.f32 0.0, %v2682
    %v2684 = vpop.f32.mrb[0].mxu0
    %v2685 = vadd.f32 0.0, %v2684
    %2686 = vdwg.mxu0
    %v2689 = vcombine.low %v2683, %v2685
    %v2691 = vunpack.c.l.s4 1983009808
    %v2692 = vunpack.c.0.s8 %v2691
    %v2693 = vlaneseq
    %v2694 = vshrl.u32 %v2693, 7
    %v2695 = vsub.s32 %v2692, %v2694
    %v2696 = vrot.slane %v2689, %v2695
    %v2698 = vadd.f32 %v2613, %v2696
    %v2699 = vxor.u32 %v2698, 2147483648
    %v2700 = vmul.f32 %v2699, 1.442695
    %v2701 = vpow.pop %v2700
    %v2702 = vadd.f32 %v2701, 1.0
    %v2703 = vrcp.pop %v2702
    %v2704 = vmul.f32 1.0, %v2703
    %v2706 = vrot.slane %v2698, 2
    %v2708 = vtanh.pop %v2706
    %2709 = vrot.lane.b32.xlu0 %v2698, 64
    %v2710 = vpop.permute.xlu0 %2709
    %v2711 = vrot.slane %v2710, 2
    %v2713 = vxor.u32 %v2711, 2147483648
    %v2714 = vmul.f32 %v2713, 1.442695
    %v2715 = vpow.pop %v2714
    %v2716 = vadd.f32 %v2715, 1.0
    %v2717 = vrcp.pop %v2716
    %v2718 = vmul.f32 1.0, %v2717
    %v2719 = vmul.f32 %v2704, %v2587
    %v2720 = vmul.f32 %v2704, %v2708
    %2722 = vrot.lane.b32.xlu0 %v2720, 64
    %v2723 = vpop.permute.xlu0 %2722
    %v2725 = vadd.f32 %v2719, %v2723
    %v2726 = vtanh.pop %v2725
    %2728 = vrot.lane.b32.xlu0 %v2726, 64
    %v2729 = vpop.permute.xlu0 %2728
    %v2731 = vmul.f32 %v2718, %v2729
    %s2732 = scalar_lea.vmem [#allocation4], 24
    %2733 = vst.msk [vmem:[%s2732] sm:$0x3] %vm1076, %v2731
    %v2736 = vunpack.c.l.s4 1983009808
    %v2737 = vunpack.c.0.s8 %v2736
    %v2738 = vlaneseq
    %v2739 = vshrl.u32 %v2738, 7
    %v2740 = vsub.s32 %v2737, %v2739
    %v2741 = vrot.slane %v2731, %v2740
    %2742 = vrot.lane.b32.xlu0 %v2741, 96
    %v2743 = vpop.permute.xlu0 %2742
    %s2745 = scalar_lea.vmem [#allocation5], 6
    %2746 = vst.msk [vmem:[%s2745] sm:$0x3] %vm1076, %v2743
    %s2747 = scalar_lea.vmem [#allocation2], 52
    %v2748 = vld [vmem:[%s2747] sm:$0xf]
    %s2749 = scalar_lea.vmem [#allocation3], 8
    %v2750 = vld [vmem:[%s2749] sm:$0xf]
    %v2751 = vadd.f32 %v2748, %v2750
    %v2752 = vsel %vm957, %v2731, 0
    %2754 = vmatprep.subr.mxu0 %v938
    %2755 = vmatpush1.msra.mxu0 %v937
    %2756 = vmatprep.subr.mxu0 %v940
    %2757 = vmatpush1.msra.mxu0 %v939
    %2758 = vmatprep.subr.mxu0 %v942
    %2759 = vmatpush1.msra.mxu0 %v941
    %2760 = vmatprep.subr.mxu0 %v944
    %2761 = vmatpush1.msra.mxu0 %v943
    %2762 = vmatprep.subr.mxu0 %v946
    %2763 = vmatpush1.msra.mxu0 %v945
    %2764 = vmatprep.subr.mxu0 %v948
    %2765 = vmatpush1.msra.mxu0 %v947
    %2766 = vmatprep.subr.mxu0 %v950
    %2767 = vmatpush1.msra.mxu0 %v949
    %2768 = vmatprep.subr.mxu0 %v952
    %2769 = vmatpush1.msra.mxu0 %v951
    %2770 = vmatprep.subr.mxu0 0.0
    %2771 = vmatpush1.msra.mxu0 0.0
    %2772 = vmatprep.subr.mxu0 0.0
    %2773 = vmatpush1.msra.mxu0 0.0
    %2774 = vmatprep.subr.mxu0 0.0
    %2775 = vmatpush1.msra.mxu0 0.0
    %2776 = vmatprep.subr.mxu0 0.0
    %2777 = vmatpush1.msra.mxu0 0.0
    %2778 = vmatprep.subr.mxu0 0.0
    %2779 = vmatpush1.msra.mxu0 0.0
    %2780 = vmatprep.subr.mxu0 0.0
    %2781 = vmatpush1.msra.mxu0 0.0
    %2782 = vmatprep.subr.mxu0 0.0
    %2783 = vmatpush1.msra.mxu0 0.0
    %2784 = vmatprep.subr.mxu0 0.0
    %2785 = vmatpush1.msra.mxu0 0.0
    %2786 = vmatprep.subr.mxu0 0.0
    %2787 = vmatpush1.msra.mxu0 0.0
    %2788 = vmatprep.subr.mxu0 0.0
    %2789 = vmatpush1.msra.mxu0 0.0
    %2790 = vmatprep.subr.mxu0 0.0
    %2791 = vmatpush1.msra.mxu0 0.0
    %2792 = vmatprep.subr.mxu0 0.0
    %2793 = vmatpush1.msra.mxu0 0.0
    %2794 = vmatprep.subr.mxu0 0.0
    %2795 = vmatpush1.msra.mxu0 0.0
    %2796 = vmatprep.subr.mxu0 0.0
    %2797 = vmatpush1.msra.mxu0 0.0
    %2798 = vmatprep.subr.mxu0 0.0
    %2799 = vmatpush1.msra.mxu0 0.0
    %2800 = vmatprep.subr.mxu0 0.0
    %2801 = vmatpush1.msra.mxu0 0.0
    %2802 = vmatprep.subr.mxu0 0.0
    %2803 = vmatpush1.msra.mxu0 0.0
    %2804 = vmatprep.subr.mxu0 0.0
    %2805 = vmatpush1.msra.mxu0 0.0
    %2806 = vmatprep.subr.mxu0 0.0
    %2807 = vmatpush1.msra.mxu0 0.0
    %2808 = vmatprep.subr.mxu0 0.0
    %2809 = vmatpush1.msra.mxu0 0.0
    %2810 = vmatprep.subr.mxu0 0.0
    %2811 = vmatpush1.msra.mxu0 0.0
    %2812 = vmatprep.subr.mxu0 0.0
    %2813 = vmatpush1.msra.mxu0 0.0
    %2814 = vmatprep.subr.mxu0 0.0
    %2815 = vmatpush1.msra.mxu0 0.0
    %2816 = vmatprep.subr.mxu0 0.0
    %2817 = vmatpush1.msra.mxu0 0.0
    %2818 = vmatprep.mubr.f32.mxu0 0.0
    %2819 = vmatmul.mubr.f32.gmra.mrb[0].mxu0 %v2752
    %v2820 = vpop.f32.mrb[0].mxu0
    %v2821 = vadd.f32 0.0, %v2820
    %v2822 = vpop.f32.mrb[0].mxu0
    %v2823 = vadd.f32 0.0, %v2822
    %2824 = vdwg.mxu0
    %v2827 = vcombine.low %v2821, %v2823
    %v2829 = vunpack.c.l.s4 1983009808
    %v2830 = vunpack.c.0.s8 %v2829
    %v2831 = vlaneseq
    %v2832 = vshrl.u32 %v2831, 7
    %v2833 = vsub.s32 %v2830, %v2832
    %v2834 = vrot.slane %v2827, %v2833
    %v2836 = vadd.f32 %v2751, %v2834
    %v2837 = vxor.u32 %v2836, 2147483648
    %v2838 = vmul.f32 %v2837, 1.442695
    %v2839 = vpow.pop %v2838
    %v2840 = vadd.f32 %v2839, 1.0
    %v2841 = vrcp.pop %v2840
    %v2842 = vmul.f32 1.0, %v2841
    %v2844 = vrot.slane %v2836, 2
    %v2846 = vtanh.pop %v2844
    %2847 = vrot.lane.b32.xlu0 %v2836, 64
    %v2848 = vpop.permute.xlu0 %2847
    %v2849 = vrot.slane %v2848, 2
    %v2851 = vxor.u32 %v2849, 2147483648
    %v2852 = vmul.f32 %v2851, 1.442695
    %v2853 = vpow.pop %v2852
    %v2854 = vadd.f32 %v2853, 1.0
    %v2855 = vrcp.pop %v2854
    %v2856 = vmul.f32 1.0, %v2855
    %v2857 = vmul.f32 %v2842, %v2725
    %v2858 = vmul.f32 %v2842, %v2846
    %2860 = vrot.lane.b32.xlu0 %v2858, 64
    %v2861 = vpop.permute.xlu0 %2860
    %v2863 = vadd.f32 %v2857, %v2861
    %v2864 = vtanh.pop %v2863
    %2866 = vrot.lane.b32.xlu0 %v2864, 64
    %v2867 = vpop.permute.xlu0 %2866
    %v2869 = vmul.f32 %v2856, %v2867
    %s2870 = scalar_lea.vmem [#allocation4], 26
    %2871 = vst.msk [vmem:[%s2870] sm:$0x3] %vm1076, %v2869
    %v2874 = vunpack.c.l.s4 1983009808
    %v2875 = vunpack.c.0.s8 %v2874
    %v2876 = vlaneseq
    %v2877 = vshrl.u32 %v2876, 7
    %v2878 = vsub.s32 %v2875, %v2877
    %v2879 = vrot.slane %v2869, %v2878
    %2880 = vrot.lane.b32.xlu0 %v2879, 96
    %v2881 = vpop.permute.xlu0 %2880
    %s2883 = scalar_lea.vmem [#allocation5], 4
    %2884 = vst.msk [vmem:[%s2883] sm:$0x3] %vm1076, %v2881
    %s2885 = scalar_lea.vmem [#allocation2], 56
    %v2886 = vld [vmem:[%s2885] sm:$0xf]
    %s2887 = scalar_lea.vmem [#allocation3], 4
    %v2888 = vld [vmem:[%s2887] sm:$0xf]
    %v2889 = vadd.f32 %v2886, %v2888
    %v2890 = vsel %vm957, %v2869, 0
    %2892 = vmatprep.subr.mxu0 %v938
    %2893 = vmatpush1.msra.mxu0 %v937
    %2894 = vmatprep.subr.mxu0 %v940
    %2895 = vmatpush1.msra.mxu0 %v939
    %2896 = vmatprep.subr.mxu0 %v942
    %2897 = vmatpush1.msra.mxu0 %v941
    %2898 = vmatprep.subr.mxu0 %v944
    %2899 = vmatpush1.msra.mxu0 %v943
    %2900 = vmatprep.subr.mxu0 %v946
    %2901 = vmatpush1.msra.mxu0 %v945
    %2902 = vmatprep.subr.mxu0 %v948
    %2903 = vmatpush1.msra.mxu0 %v947
    %2904 = vmatprep.subr.mxu0 %v950
    %2905 = vmatpush1.msra.mxu0 %v949
    %2906 = vmatprep.subr.mxu0 %v952
    %2907 = vmatpush1.msra.mxu0 %v951
    %2908 = vmatprep.subr.mxu0 0.0
    %2909 = vmatpush1.msra.mxu0 0.0
    %2910 = vmatprep.subr.mxu0 0.0
    %2911 = vmatpush1.msra.mxu0 0.0
    %2912 = vmatprep.subr.mxu0 0.0
    %2913 = vmatpush1.msra.mxu0 0.0
    %2914 = vmatprep.subr.mxu0 0.0
    %2915 = vmatpush1.msra.mxu0 0.0
    %2916 = vmatprep.subr.mxu0 0.0
    %2917 = vmatpush1.msra.mxu0 0.0
    %2918 = vmatprep.subr.mxu0 0.0
    %2919 = vmatpush1.msra.mxu0 0.0
    %2920 = vmatprep.subr.mxu0 0.0
    %2921 = vmatpush1.msra.mxu0 0.0
    %2922 = vmatprep.subr.mxu0 0.0
    %2923 = vmatpush1.msra.mxu0 0.0
    %2924 = vmatprep.subr.mxu0 0.0
    %2925 = vmatpush1.msra.mxu0 0.0
    %2926 = vmatprep.subr.mxu0 0.0
    %2927 = vmatpush1.msra.mxu0 0.0
    %2928 = vmatprep.subr.mxu0 0.0
    %2929 = vmatpush1.msra.mxu0 0.0
    %2930 = vmatprep.subr.mxu0 0.0
    %2931 = vmatpush1.msra.mxu0 0.0
    %2932 = vmatprep.subr.mxu0 0.0
    %2933 = vmatpush1.msra.mxu0 0.0
    %2934 = vmatprep.subr.mxu0 0.0
    %2935 = vmatpush1.msra.mxu0 0.0
    %2936 = vmatprep.subr.mxu0 0.0
    %2937 = vmatpush1.msra.mxu0 0.0
    %2938 = vmatprep.subr.mxu0 0.0
    %2939 = vmatpush1.msra.mxu0 0.0
    %2940 = vmatprep.subr.mxu0 0.0
    %2941 = vmatpush1.msra.mxu0 0.0
    %2942 = vmatprep.subr.mxu0 0.0
    %2943 = vmatpush1.msra.mxu0 0.0
    %2944 = vmatprep.subr.mxu0 0.0
    %2945 = vmatpush1.msra.mxu0 0.0
    %2946 = vmatprep.subr.mxu0 0.0
    %2947 = vmatpush1.msra.mxu0 0.0
    %2948 = vmatprep.subr.mxu0 0.0
    %2949 = vmatpush1.msra.mxu0 0.0
    %2950 = vmatprep.subr.mxu0 0.0
    %2951 = vmatpush1.msra.mxu0 0.0
    %2952 = vmatprep.subr.mxu0 0.0
    %2953 = vmatpush1.msra.mxu0 0.0
    %2954 = vmatprep.subr.mxu0 0.0
    %2955 = vmatpush1.msra.mxu0 0.0
    %2956 = vmatprep.mubr.f32.mxu0 0.0
    %2957 = vmatmul.mubr.f32.gmra.mrb[0].mxu0 %v2890
    %v2958 = vpop.f32.mrb[0].mxu0
    %v2959 = vadd.f32 0.0, %v2958
    %v2960 = vpop.f32.mrb[0].mxu0
    %v2961 = vadd.f32 0.0, %v2960
    %2962 = vdwg.mxu0
    %v2965 = vcombine.low %v2959, %v2961
    %v2967 = vunpack.c.l.s4 1983009808
    %v2968 = vunpack.c.0.s8 %v2967
    %v2969 = vlaneseq
    %v2970 = vshrl.u32 %v2969, 7
    %v2971 = vsub.s32 %v2968, %v2970
    %v2972 = vrot.slane %v2965, %v2971
    %v2974 = vadd.f32 %v2889, %v2972
    %v2975 = vxor.u32 %v2974, 2147483648
    %v2976 = vmul.f32 %v2975, 1.442695
    %v2977 = vpow.pop %v2976
    %v2978 = vadd.f32 %v2977, 1.0
    %v2979 = vrcp.pop %v2978
    %v2980 = vmul.f32 1.0, %v2979
    %v2982 = vrot.slane %v2974, 2
    %v2984 = vtanh.pop %v2982
    %2985 = vrot.lane.b32.xlu0 %v2974, 64
    %v2986 = vpop.permute.xlu0 %2985
    %v2987 = vrot.slane %v2986, 2
    %v2989 = vxor.u32 %v2987, 2147483648
    %v2990 = vmul.f32 %v2989, 1.442695
    %v2991 = vpow.pop %v2990
    %v2992 = vadd.f32 %v2991, 1.0
    %v2993 = vrcp.pop %v2992
    %v2994 = vmul.f32 1.0, %v2993
    %v2995 = vmul.f32 %v2980, %v2863
    %v2996 = vmul.f32 %v2980, %v2984
    %2998 = vrot.lane.b32.xlu0 %v2996, 64
    %v2999 = vpop.permute.xlu0 %2998
    %v3001 = vadd.f32 %v2995, %v2999
    %v3002 = vtanh.pop %v3001
    %3004 = vrot.lane.b32.xlu0 %v3002, 64
    %v3005 = vpop.permute.xlu0 %3004
    %v3007 = vmul.f32 %v2994, %v3005
    %s3008 = scalar_lea.vmem [#allocation4], 28
    %3009 = vst.msk [vmem:[%s3008] sm:$0x3] %vm1076, %v3007
    %v3012 = vunpack.c.l.s4 1983009808
    %v3013 = vunpack.c.0.s8 %v3012
    %v3014 = vlaneseq
    %v3015 = vshrl.u32 %v3014, 7
    %v3016 = vsub.s32 %v3013, %v3015
    %v3017 = vrot.slane %v3007, %v3016
    %3018 = vrot.lane.b32.xlu0 %v3017, 96
    %v3019 = vpop.permute.xlu0 %3018
    %s3021 = scalar_lea.vmem [#allocation5], 2
    %3022 = vst.msk [vmem:[%s3021] sm:$0x3] %vm1076, %v3019
    %s3023 = scalar_lea.vmem [#allocation2], 60
    %v3024 = vld [vmem:[%s3023] sm:$0xf]
    %v3025 = vld [vmem:[#allocation3] sm:$0xf]
    %v3026 = vadd.f32 %v3024, %v3025
    %v3027 = vsel %vm957, %v3007, 0
    %3029 = vmatprep.subr.mxu0 %v938
    %3030 = vmatpush1.msra.mxu0 %v937
    %3031 = vmatprep.subr.mxu0 %v940
    %3032 = vmatpush1.msra.mxu0 %v939
    %3033 = vmatprep.subr.mxu0 %v942
    %3034 = vmatpush1.msra.mxu0 %v941
    %3035 = vmatprep.subr.mxu0 %v944
    %3036 = vmatpush1.msra.mxu0 %v943
    %3037 = vmatprep.subr.mxu0 %v946
    %3038 = vmatpush1.msra.mxu0 %v945
    %3039 = vmatprep.subr.mxu0 %v948
    %3040 = vmatpush1.msra.mxu0 %v947
    %3041 = vmatprep.subr.mxu0 %v950
    %3042 = vmatpush1.msra.mxu0 %v949
    %3043 = vmatprep.subr.mxu0 %v952
    %3044 = vmatpush1.msra.mxu0 %v951
    %3045 = vmatprep.subr.mxu0 0.0
    %3046 = vmatpush1.msra.mxu0 0.0
    %3047 = vmatprep.subr.mxu0 0.0
    %3048 = vmatpush1.msra.mxu0 0.0
    %3049 = vmatprep.subr.mxu0 0.0
    %3050 = vmatpush1.msra.mxu0 0.0
    %3051 = vmatprep.subr.mxu0 0.0
    %3052 = vmatpush1.msra.mxu0 0.0
    %3053 = vmatprep.subr.mxu0 0.0
    %3054 = vmatpush1.msra.mxu0 0.0
    %3055 = vmatprep.subr.mxu0 0.0
    %3056 = vmatpush1.msra.mxu0 0.0
    %3057 = vmatprep.subr.mxu0 0.0
    %3058 = vmatpush1.msra.mxu0 0.0
    %3059 = vmatprep.subr.mxu0 0.0
    %3060 = vmatpush1.msra.mxu0 0.0
    %3061 = vmatprep.subr.mxu0 0.0
    %3062 = vmatpush1.msra.mxu0 0.0
    %3063 = vmatprep.subr.mxu0 0.0
    %3064 = vmatpush1.msra.mxu0 0.0
    %3065 = vmatprep.subr.mxu0 0.0
    %3066 = vmatpush1.msra.mxu0 0.0
    %3067 = vmatprep.subr.mxu0 0.0
    %3068 = vmatpush1.msra.mxu0 0.0
    %3069 = vmatprep.subr.mxu0 0.0
    %3070 = vmatpush1.msra.mxu0 0.0
    %3071 = vmatprep.subr.mxu0 0.0
    %3072 = vmatpush1.msra.mxu0 0.0
    %3073 = vmatprep.subr.mxu0 0.0
    %3074 = vmatpush1.msra.mxu0 0.0
    %3075 = vmatprep.subr.mxu0 0.0
    %3076 = vmatpush1.msra.mxu0 0.0
    %3077 = vmatprep.subr.mxu0 0.0
    %3078 = vmatpush1.msra.mxu0 0.0
    %3079 = vmatprep.subr.mxu0 0.0
    %3080 = vmatpush1.msra.mxu0 0.0
    %3081 = vmatprep.subr.mxu0 0.0
    %3082 = vmatpush1.msra.mxu0 0.0
    %3083 = vmatprep.subr.mxu0 0.0
    %3084 = vmatpush1.msra.mxu0 0.0
    %3085 = vmatprep.subr.mxu0 0.0
    %3086 = vmatpush1.msra.mxu0 0.0
    %3087 = vmatprep.subr.mxu0 0.0
    %3088 = vmatpush1.msra.mxu0 0.0
    %3089 = vmatprep.subr.mxu0 0.0
    %3090 = vmatpush1.msra.mxu0 0.0
    %3091 = vmatprep.subr.mxu0 0.0
    %3092 = vmatpush1.msra.mxu0 0.0
    %3093 = vmatprep.mubr.f32.mxu0 0.0
    %3094 = vmatmul.mubr.f32.gmra.mrb[0].mxu0 %v3027
    %v3095 = vpop.f32.mrb[0].mxu0
    %v3096 = vadd.f32 0.0, %v3095
    %v3097 = vpop.f32.mrb[0].mxu0
    %v3098 = vadd.f32 0.0, %v3097
    %3099 = vdwg.mxu0
    %v3102 = vcombine.low %v3096, %v3098
    %v3104 = vunpack.c.l.s4 1983009808
    %v3105 = vunpack.c.0.s8 %v3104
    %v3106 = vlaneseq
    %v3107 = vshrl.u32 %v3106, 7
    %v3108 = vsub.s32 %v3105, %v3107
    %v3109 = vrot.slane %v3102, %v3108
    %v3111 = vadd.f32 %v3026, %v3109
    %v3112 = vxor.u32 %v3111, 2147483648
    %v3113 = vmul.f32 %v3112, 1.442695
    %v3114 = vpow.pop %v3113
    %v3115 = vadd.f32 %v3114, 1.0
    %v3116 = vrcp.pop %v3115
    %v3117 = vmul.f32 1.0, %v3116
    %v3119 = vrot.slane %v3111, 2
    %v3121 = vtanh.pop %v3119
    %3122 = vrot.lane.b32.xlu0 %v3111, 64
    %v3123 = vpop.permute.xlu0 %3122
    %v3124 = vrot.slane %v3123, 2
    %v3126 = vxor.u32 %v3124, 2147483648
    %v3127 = vmul.f32 %v3126, 1.442695
    %v3128 = vpow.pop %v3127
    %v3129 = vadd.f32 %v3128, 1.0
    %v3130 = vrcp.pop %v3129
    %v3131 = vmul.f32 1.0, %v3130
    %v3132 = vmul.f32 %v3117, %v3001
    %v3133 = vmul.f32 %v3117, %v3121
    %3135 = vrot.lane.b32.xlu0 %v3133, 64
    %v3136 = vpop.permute.xlu0 %3135
    %v3138 = vadd.f32 %v3132, %v3136
    %v3139 = vtanh.pop %v3138
    %3141 = vrot.lane.b32.xlu0 %v3139, 64
    %v3142 = vpop.permute.xlu0 %3141
    %v3144 = vmul.f32 %v3131, %v3142
    %s3145 = scalar_lea.vmem [#allocation4], 30
    %3146 = vst.msk [vmem:[%s3145] sm:$0x3] %vm1076, %v3144
    %v3149 = vunpack.c.l.s4 1983009808
    %v3150 = vunpack.c.0.s8 %v3149
    %v3151 = vlaneseq
    %v3152 = vshrl.u32 %v3151, 7
    %v3153 = vsub.s32 %v3150, %v3152
    %v3154 = vrot.slane %v3144, %v3153
    %3155 = vrot.lane.b32.xlu0 %v3154, 96
    %v3156 = vpop.permute.xlu0 %3155
    %3158 = vst.msk [vmem:[#allocation5] sm:$0x3] %vm1076, %v3156
    %v3159 = vld [vmem:[#allocation4] sm:$0x3]
    %v3160 = vld [vmem:[#allocation4 + $0x2] sm:$0x3]
    %v3161 = vld [vmem:[#allocation4 + $0x4] sm:$0x3]
    %v3162 = vld [vmem:[#allocation4 + $0x6] sm:$0x3]
    %v3163 = vld [vmem:[#allocation4 + $0x8] sm:$0x3]
    %v3164 = vld [vmem:[#allocation4 + $0xa] sm:$0x3]
    %v3165 = vld [vmem:[#allocation4 + $0xc] sm:$0x3]
    %v3166 = vld [vmem:[#allocation4 + $0xe] sm:$0x3]
    %v3167 = vld [vmem:[#allocation4 + $0x10] sm:$0x3]
    %v3168 = vld [vmem:[#allocation4 + $0x12] sm:$0x3]
    %v3169 = vld [vmem:[#allocation4 + $0x14] sm:$0x3]
    %v3170 = vld [vmem:[#allocation4 + $0x16] sm:$0x3]
    %v3171 = vld [vmem:[#allocation4 + $0x18] sm:$0x3]
    %v3172 = vld [vmem:[#allocation4 + $0x1a] sm:$0x3]
    %v3173 = vld [vmem:[#allocation4 + $0x1c] sm:$0x3]
    %v3174 = vld [vmem:[#allocation4 + $0x1e] sm:$0x3]
    %v3175 = vld [vmem:[#allocation5] sm:$0x3]
    %v3176 = vld [vmem:[#allocation5 + $0x2] sm:$0x3]
    %v3177 = vld [vmem:[#allocation5 + $0x4] sm:$0x3]
    %v3178 = vld [vmem:[#allocation5 + $0x6] sm:$0x3]
    %v3179 = vld [vmem:[#allocation5 + $0x8] sm:$0x3]
    %v3180 = vld [vmem:[#allocation5 + $0xa] sm:$0x3]
    %v3181 = vld [vmem:[#allocation5 + $0xc] sm:$0x3]
    %v3182 = vld [vmem:[#allocation5 + $0xe] sm:$0x3]
    %v3183 = vld [vmem:[#allocation5 + $0x10] sm:$0x3]
    %v3184 = vld [vmem:[#allocation5 + $0x12] sm:$0x3]
    %v3185 = vld [vmem:[#allocation5 + $0x14] sm:$0x3]
    %v3186 = vld [vmem:[#allocation5 + $0x16] sm:$0x3]
    %v3187 = vld [vmem:[#allocation5 + $0x18] sm:$0x3]
    %v3188 = vld [vmem:[#allocation5 + $0x1a] sm:$0x3]
    %v3189 = vld [vmem:[#allocation5 + $0x1c] sm:$0x3]
    %v3190 = vld [vmem:[#allocation5 + $0x1e] sm:$0x3]
    %3207 = vrot.lane.b32.xlu0 %v3175, 32
    %v3208 = vpop.permute.xlu0 %3207
    %3209 = vrot.lane.b32.xlu0 %v3176, 32
    %v3210 = vpop.permute.xlu0 %3209
    %3211 = vrot.lane.b32.xlu0 %v3177, 32
    %v3212 = vpop.permute.xlu0 %3211
    %3213 = vrot.lane.b32.xlu0 %v3178, 32
    %v3214 = vpop.permute.xlu0 %3213
    %3215 = vrot.lane.b32.xlu0 %v3179, 32
    %v3216 = vpop.permute.xlu0 %3215
    %3217 = vrot.lane.b32.xlu0 %v3180, 32
    %v3218 = vpop.permute.xlu0 %3217
    %3219 = vrot.lane.b32.xlu0 %v3181, 32
    %v3220 = vpop.permute.xlu0 %3219
    %3221 = vrot.lane.b32.xlu0 %v3182, 32
    %v3222 = vpop.permute.xlu0 %3221
    %3223 = vrot.lane.b32.xlu0 %v3183, 32
    %v3224 = vpop.permute.xlu0 %3223
    %3225 = vrot.lane.b32.xlu0 %v3184, 32
    %v3226 = vpop.permute.xlu0 %3225
    %3227 = vrot.lane.b32.xlu0 %v3185, 32
    %v3228 = vpop.permute.xlu0 %3227
    %3229 = vrot.lane.b32.xlu0 %v3186, 32
    %v3230 = vpop.permute.xlu0 %3229
    %3231 = vrot.lane.b32.xlu0 %v3187, 32
    %v3232 = vpop.permute.xlu0 %3231
    %3233 = vrot.lane.b32.xlu0 %v3188, 32
    %v3234 = vpop.permute.xlu0 %3233
    %3235 = vrot.lane.b32.xlu0 %v3189, 32
    %v3236 = vpop.permute.xlu0 %3235
    %3237 = vrot.lane.b32.xlu0 %v3190, 32
    %v3238 = vpop.permute.xlu0 %3237
    %v3255 = vsel %vm514, %v3159, %v3208
    %v3256 = vsel %vm514, %v3160, %v3210
    %v3257 = vsel %vm514, %v3161, %v3212
    %v3258 = vsel %vm514, %v3162, %v3214
    %v3259 = vsel %vm514, %v3163, %v3216
    %v3260 = vsel %vm514, %v3164, %v3218
    %v3261 = vsel %vm514, %v3165, %v3220
    %v3262 = vsel %vm514, %v3166, %v3222
    %v3263 = vsel %vm514, %v3167, %v3224
    %v3264 = vsel %vm514, %v3168, %v3226
    %v3265 = vsel %vm514, %v3169, %v3228
    %v3266 = vsel %vm514, %v3170, %v3230
    %v3267 = vsel %vm514, %v3171, %v3232
    %v3268 = vsel %vm514, %v3172, %v3234
    %v3269 = vsel %vm514, %v3173, %v3236
    %v3270 = vsel %vm514, %v3174, %v3238
    %vm3271 = vcmask 517120
    %v3272 = vsel %vm3271, %v3255, 0.0
    %v3273 = vsel %vm3271, %v3256, 0.0
    %v3274 = vadd.f32 %v3272, %v3273
    %v3275 = vsel %vm3271, %v3257, 0.0
    %v3276 = vadd.f32 %v3274, %v3275
    %v3277 = vsel %vm3271, %v3258, 0.0
    %v3278 = vadd.f32 %v3276, %v3277
    %v3279 = vsel %vm3271, %v3259, 0.0
    %v3280 = vadd.f32 %v3278, %v3279
    %v3281 = vsel %vm3271, %v3260, 0.0
    %v3282 = vadd.f32 %v3280, %v3281
    %v3283 = vsel %vm3271, %v3261, 0.0
    %v3284 = vadd.f32 %v3282, %v3283
    %v3285 = vsel %vm3271, %v3262, 0.0
    %v3286 = vadd.f32 %v3284, %v3285
    %v3287 = vsel %vm3271, %v3263, 0.0
    %v3288 = vadd.f32 %v3286, %v3287
    %v3289 = vsel %vm3271, %v3264, 0.0
    %v3290 = vadd.f32 %v3288, %v3289
    %v3291 = vsel %vm3271, %v3265, 0.0
    %v3292 = vadd.f32 %v3290, %v3291
    %v3293 = vsel %vm3271, %v3266, 0.0
    %v3294 = vadd.f32 %v3292, %v3293
    %v3295 = vsel %vm3271, %v3267, 0.0
    %v3296 = vadd.f32 %v3294, %v3295
    %v3297 = vsel %vm3271, %v3268, 0.0
    %v3298 = vadd.f32 %v3296, %v3297
    %v3299 = vsel %vm3271, %v3269, 0.0
    %v3300 = vadd.f32 %v3298, %v3299
    %v3301 = vsel %vm3271, %v3270, 0.0
    %v3302 = vadd.f32 %v3300, %v3301
    %v3303 = vrcp.pop 16.0
    %v3304 = vmul.f32 %v3302, %v3303
    %v3305 = vld [vmem:[%s7] sm:$0xff]
    %v3306 = vld [vmem:[%s7 + $0x8] sm:$0xff]
    %v3307 = vld [vmem:[%s7 + $0x10] sm:$0xff]
    %v3308 = vld [vmem:[%s7 + $0x18] sm:$0xff]
    %v3309 = vld [vmem:[%s7 + $0x20] sm:$0xff]
    %v3310 = vld [vmem:[%s7 + $0x28] sm:$0xff]
    %v3311 = vld [vmem:[%s7 + $0x30] sm:$0xff]
    %v3312 = vld [vmem:[%s7 + $0x38] sm:$0xff]
    %v3313 = vld [vmem:[#allocation14] sm:$0x1]
    %v3315 = vlaneseq
    %v3316 = vshrl.u32 %v3315, 7
    %v3317 = vsub.s32 0, %v3316
    %v3318 = vrot.slane %v3313, %v3317
    %v3321 = vsel %vm957, %v3304, 0
    %3323 = vmatprep.subr.mxu0 0.0
    %3324 = vmatpush1.msra.mxu0 %v3305
    %3325 = vmatprep.subr.mxu0 0.0
    %3326 = vmatpush1.msra.mxu0 %v3306
    %3327 = vmatprep.subr.mxu0 0.0
    %3328 = vmatpush1.msra.mxu0 %v3307
    %3329 = vmatprep.subr.mxu0 0.0
    %3330 = vmatpush1.msra.mxu0 %v3308
    %3331 = vmatprep.subr.mxu0 0.0
    %3332 = vmatpush1.msra.mxu0 %v3309
    %3333 = vmatprep.subr.mxu0 0.0
    %3334 = vmatpush1.msra.mxu0 %v3310
    %3335 = vmatprep.subr.mxu0 0.0
    %3336 = vmatpush1.msra.mxu0 %v3311
    %3337 = vmatprep.subr.mxu0 0.0
    %3338 = vmatpush1.msra.mxu0 %v3312
    %3339 = vmatprep.subr.mxu0 0.0
    %3340 = vmatpush1.msra.mxu0 0.0
    %3341 = vmatprep.subr.mxu0 0.0
    %3342 = vmatpush1.msra.mxu0 0.0
    %3343 = vmatprep.subr.mxu0 0.0
    %3344 = vmatpush1.msra.mxu0 0.0
    %3345 = vmatprep.subr.mxu0 0.0
    %3346 = vmatpush1.msra.mxu0 0.0
    %3347 = vmatprep.subr.mxu0 0.0
    %3348 = vmatpush1.msra.mxu0 0.0
    %3349 = vmatprep.subr.mxu0 0.0
    %3350 = vmatpush1.msra.mxu0 0.0
    %3351 = vmatprep.subr.mxu0 0.0
    %3352 = vmatpush1.msra.mxu0 0.0
    %3353 = vmatprep.subr.mxu0 0.0
    %3354 = vmatpush1.msra.mxu0 0.0
    %3355 = vmatprep.subr.mxu0 0.0
    %3356 = vmatpush1.msra.mxu0 0.0
    %3357 = vmatprep.subr.mxu0 0.0
    %3358 = vmatpush1.msra.mxu0 0.0
    %3359 = vmatprep.subr.mxu0 0.0
    %3360 = vmatpush1.msra.mxu0 0.0
    %3361 = vmatprep.subr.mxu0 0.0
    %3362 = vmatpush1.msra.mxu0 0.0
    %3363 = vmatprep.subr.mxu0 0.0
    %3364 = vmatpush1.msra.mxu0 0.0
    %3365 = vmatprep.subr.mxu0 0.0
    %3366 = vmatpush1.msra.mxu0 0.0
    %3367 = vmatprep.subr.mxu0 0.0
    %3368 = vmatpush1.msra.mxu0 0.0
    %3369 = vmatprep.subr.mxu0 0.0
    %3370 = vmatpush1.msra.mxu0 0.0
    %3371 = vmatprep.subr.mxu0 0.0
    %3372 = vmatpush1.msra.mxu0 0.0
    %3373 = vmatprep.subr.mxu0 0.0
    %3374 = vmatpush1.msra.mxu0 0.0
    %3375 = vmatprep.subr.mxu0 0.0
    %3376 = vmatpush1.msra.mxu0 0.0
    %3377 = vmatprep.subr.mxu0 0.0
    %3378 = vmatpush1.msra.mxu0 0.0
    %3379 = vmatprep.subr.mxu0 0.0
    %3380 = vmatpush1.msra.mxu0 0.0
    %3381 = vmatprep.subr.mxu0 0.0
    %3382 = vmatpush1.msra.mxu0 0.0
    %3383 = vmatprep.subr.mxu0 0.0
    %3384 = vmatpush1.msra.mxu0 0.0
    %3385 = vmatprep.subr.mxu0 0.0
    %3386 = vmatpush1.msra.mxu0 0.0
    %3387 = vmatprep.mubr.f32.mxu0 0.0
    %3388 = vmatmul.mubr.f32.gmra.mrb[0].mxu0 %v3321
    %v3389 = vpop.f32.mrb[0].mxu0
    %v3390 = vadd.f32 %v3318, %v3389
    %v3391 = vpop.f32.mrb[0].mxu0
    %3392 = vdwg.mxu0
    %v3393 = vmax.f32 %v3390, 0.0
    %v3394 = vld [vmem:[%s9] sm:$0xf]
    %v3395 = vld [vmem:[%s10] sm:$0x1]
    %v3397 = vlaneseq
    %v3398 = vshrl.u32 %v3397, 7
    %v3399 = vsub.s32 0, %v3398
    %v3400 = vrot.slane %v3395, %v3399
    %v3403 = vsel %vm287, %v3393, 0
    %vm3405 = vcmask 1043456
    %v3407 = vsel %vm3405, %v3394, 0
    %3409 = vmatprep.subr.mxu0 0.0
    %3410 = vmatpush1.msra.mxu0 %v3407
    %3411 = vmatprep.subr.mxu0 0.0
    %3412 = vmatpush1.msra.mxu0 0.0
    %3413 = vmatprep.subr.mxu0 0.0
    %3414 = vmatpush1.msra.mxu0 0.0
    %3415 = vmatprep.subr.mxu0 0.0
    %3416 = vmatpush1.msra.mxu0 0.0
    %3417 = vmatprep.subr.mxu0 0.0
    %3418 = vmatpush1.msra.mxu0 0.0
    %3419 = vmatprep.subr.mxu0 0.0
    %3420 = vmatpush1.msra.mxu0 0.0
    %3421 = vmatprep.subr.mxu0 0.0
    %3422 = vmatpush1.msra.mxu0 0.0
    %3423 = vmatprep.subr.mxu0 0.0
    %3424 = vmatpush1.msra.mxu0 0.0
    %3425 = vmatprep.subr.mxu0 0.0
    %3426 = vmatpush1.msra.mxu0 0.0
    %3427 = vmatprep.subr.mxu0 0.0
    %3428 = vmatpush1.msra.mxu0 0.0
    %3429 = vmatprep.subr.mxu0 0.0
    %3430 = vmatpush1.msra.mxu0 0.0
    %3431 = vmatprep.subr.mxu0 0.0
    %3432 = vmatpush1.msra.mxu0 0.0
    %3433 = vmatprep.subr.mxu0 0.0
    %3434 = vmatpush1.msra.mxu0 0.0
    %3435 = vmatprep.subr.mxu0 0.0
    %3436 = vmatpush1.msra.mxu0 0.0
    %3437 = vmatprep.subr.mxu0 0.0
    %3438 = vmatpush1.msra.mxu0 0.0
    %3439 = vmatprep.subr.mxu0 0.0
    %3440 = vmatpush1.msra.mxu0 0.0
    %3441 = vmatprep.subr.mxu0 0.0
    %3442 = vmatpush1.msra.mxu0 0.0
    %3443 = vmatprep.subr.mxu0 0.0
    %3444 = vmatpush1.msra.mxu0 0.0
    %3445 = vmatprep.subr.mxu0 0.0
    %3446 = vmatpush1.msra.mxu0 0.0
    %3447 = vmatprep.subr.mxu0 0.0
    %3448 = vmatpush1.msra.mxu0 0.0
    %3449 = vmatprep.subr.mxu0 0.0
    %3450 = vmatpush1.msra.mxu0 0.0
    %3451 = vmatprep.subr.mxu0 0.0
    %3452 = vmatpush1.msra.mxu0 0.0
    %3453 = vmatprep.subr.mxu0 0.0
    %3454 = vmatpush1.msra.mxu0 0.0
    %3455 = vmatprep.subr.mxu0 0.0
    %3456 = vmatpush1.msra.mxu0 0.0
    %3457 = vmatprep.subr.mxu0 0.0
    %3458 = vmatpush1.msra.mxu0 0.0
    %3459 = vmatprep.subr.mxu0 0.0
    %3460 = vmatpush1.msra.mxu0 0.0
    %3461 = vmatprep.subr.mxu0 0.0
    %3462 = vmatpush1.msra.mxu0 0.0
    %3463 = vmatprep.subr.mxu0 0.0
    %3464 = vmatpush1.msra.mxu0 0.0
    %3465 = vmatprep.subr.mxu0 0.0
    %3466 = vmatpush1.msra.mxu0 0.0
    %3467 = vmatprep.subr.mxu0 0.0
    %3468 = vmatpush1.msra.mxu0 0.0
    %3469 = vmatprep.subr.mxu0 0.0
    %3470 = vmatpush1.msra.mxu0 0.0
    %3471 = vmatprep.subr.mxu0 0.0
    %3472 = vmatpush1.msra.mxu0 0.0
    %3473 = vmatprep.mubr.f32.mxu0 0.0
    %3474 = vmatmul.mubr.f32.gmra.mrb[0].mxu0 %v3403
    %v3475 = vpop.f32.mrb[0].mxu0
    %v3476 = vadd.f32 %v3400, %v3475
    %v3477 = vpop.f32.mrb[0].mxu0
    %3478 = vdwg.mxu0
    %v3479 = vxor.u32 %v3476, 2147483648
    %v3480 = vmul.f32 %v3479, 1.442695
    %v3481 = vpow.pop %v3480
    %v3482 = vadd.f32 %v3481, 1.0
    %v3483 = vrcp.pop %v3482
    %v3484 = vmul.f32 1.0, %v3483
    %v3485 = vmul.f32 %v3255, %v3484
    %v3486 = vmul.f32 %v3256, %v3484
    %v3487 = vmul.f32 %v3257, %v3484
    %v3488 = vmul.f32 %v3258, %v3484
    %v3489 = vmul.f32 %v3259, %v3484
    %v3490 = vmul.f32 %v3260, %v3484
    %v3491 = vmul.f32 %v3261, %v3484
    %v3492 = vmul.f32 %v3262, %v3484
    %v3493 = vmul.f32 %v3263, %v3484
    %v3494 = vmul.f32 %v3264, %v3484
    %v3495 = vmul.f32 %v3265, %v3484
    %v3496 = vmul.f32 %v3266, %v3484
    %v3497 = vmul.f32 %v3267, %v3484
    %v3498 = vmul.f32 %v3268, %v3484
    %v3499 = vmul.f32 %v3269, %v3484
    %v3500 = vmul.f32 %v3270, %v3484
    %v3501 = vld [vmem:[%s11] sm:$0xff]
    %v3502 = vld [vmem:[%s11 + $0x8] sm:$0xff]
    %v3503 = vld [vmem:[%s11 + $0x10] sm:$0xff]
    %v3504 = vld [vmem:[%s11 + $0x18] sm:$0xff]
    %v3505 = vld [vmem:[%s11 + $0x20] sm:$0xff]
    %v3506 = vld [vmem:[%s11 + $0x28] sm:$0xff]
    %v3507 = vld [vmem:[%s11 + $0x30] sm:$0xff]
    %v3508 = vld [vmem:[%s11 + $0x38] sm:$0xff]
    %v3509 = vld [vmem:[%s11 + $0x40] sm:$0xff]
    %v3510 = vld [vmem:[%s11 + $0x48] sm:$0xff]
    %v3511 = vld [vmem:[%s11 + $0x50] sm:$0xff]
    %v3512 = vld [vmem:[%s11 + $0x58] sm:$0xff]
    %v3513 = vld [vmem:[%s11 + $0x60] sm:$0xff]
    %v3514 = vld [vmem:[%s11 + $0x68] sm:$0xff]
    %v3515 = vld [vmem:[%s11 + $0x70] sm:$0xff]
    %v3516 = vld [vmem:[%s11 + $0x78] sm:$0xff]
    %v3517 = vld [vmem:[%s14] sm:$0x3]
    %v3519 = vlaneseq
    %v3520 = vshrl.u32 %v3519, 7
    %v3521 = vsub.s32 0, %v3520
    %v3522 = vrot.slane %v3517, %v3521
    %v3523 = vlaneseq
    %v3524 = vshrl.u32 %v3523, 7
    %v3525 = vsub.s32 1, %v3524
    %v3526 = vrot.slane %v3517, %v3525
    %v3545 = vcombine.low %v3485, %v3486
    %v3546 = vcombine.low %v3487, %v3488
    %v3548 = vunpack.c.l.s4 1983009808
    %v3549 = vunpack.c.0.s8 %v3548
    %v3550 = vlaneseq
    %v3551 = vshrl.u32 %v3550, 7
    %v3552 = vsub.s32 %v3549, %v3551
    %v3553 = vrot.slane %v3545, %v3552
    %v3555 = vunpack.c.l.s4 1983009808
    %v3556 = vunpack.c.0.s8 %v3555
    %v3557 = vlaneseq
    %v3558 = vshrl.u32 %v3557, 7
    %v3559 = vsub.s32 %v3556, %v3558
    %v3560 = vrot.slane %v3546, %v3559
    %v3561 = vcombine.low %v3553, %v3560
    %v3562 = vcombine.low %v3489, %v3490
    %v3563 = vcombine.low %v3491, %v3492
    %v3565 = vunpack.c.l.s4 1983009808
    %v3566 = vunpack.c.0.s8 %v3565
    %v3567 = vlaneseq
    %v3568 = vshrl.u32 %v3567, 7
    %v3569 = vsub.s32 %v3566, %v3568
    %v3570 = vrot.slane %v3562, %v3569
    %v3572 = vunpack.c.l.s4 1983009808
    %v3573 = vunpack.c.0.s8 %v3572
    %v3574 = vlaneseq
    %v3575 = vshrl.u32 %v3574, 7
    %v3576 = vsub.s32 %v3573, %v3575
    %v3577 = vrot.slane %v3563, %v3576
    %v3578 = vcombine.low %v3570, %v3577
    %v3579 = vcombine.low %v3493, %v3494
    %v3580 = vcombine.low %v3495, %v3496
    %v3582 = vunpack.c.l.s4 1983009808
    %v3583 = vunpack.c.0.s8 %v3582
    %v3584 = vlaneseq
    %v3585 = vshrl.u32 %v3584, 7
    %v3586 = vsub.s32 %v3583, %v3585
    %v3587 = vrot.slane %v3579, %v3586
    %v3589 = vunpack.c.l.s4 1983009808
    %v3590 = vunpack.c.0.s8 %v3589
    %v3591 = vlaneseq
    %v3592 = vshrl.u32 %v3591, 7
    %v3593 = vsub.s32 %v3590, %v3592
    %v3594 = vrot.slane %v3580, %v3593
    %v3595 = vcombine.low %v3587, %v3594
    %v3596 = vcombine.low %v3497, %v3498
    %v3597 = vcombine.low %v3499, %v3500
    %v3599 = vunpack.c.l.s4 1983009808
    %v3600 = vunpack.c.0.s8 %v3599
    %v3601 = vlaneseq
    %v3602 = vshrl.u32 %v3601, 7
    %v3603 = vsub.s32 %v3600, %v3602
    %v3604 = vrot.slane %v3596, %v3603
    %v3606 = vunpack.c.l.s4 1983009808
    %v3607 = vunpack.c.0.s8 %v3606
    %v3608 = vlaneseq
    %v3609 = vshrl.u32 %v3608, 7
    %v3610 = vsub.s32 %v3607, %v3609
    %v3611 = vrot.slane %v3597, %v3610
    %v3612 = vcombine.low %v3604, %v3611
    %v3613 = vsel %vm957, %v3561, 0
    %v3615 = vsel %vm957, %v3578, 0
    %v3617 = vsel %vm957, %v3595, 0
    %v3619 = vsel %vm957, %v3612, 0
    %3621 = vmatprep.subr.mxu0 %v3502
    %3622 = vmatpush1.msra.mxu0 %v3501
    %3623 = vmatprep.subr.mxu0 %v3504
    %3624 = vmatpush1.msra.mxu0 %v3503
    %3625 = vmatprep.subr.mxu0 %v3506
    %3626 = vmatpush1.msra.mxu0 %v3505
    %3627 = vmatprep.subr.mxu0 %v3508
    %3628 = vmatpush1.msra.mxu0 %v3507
    %3629 = vmatprep.subr.mxu0 %v3510
    %3630 = vmatpush1.msra.mxu0 %v3509
    %3631 = vmatprep.subr.mxu0 %v3512
    %3632 = vmatpush1.msra.mxu0 %v3511
    %3633 = vmatprep.subr.mxu0 %v3514
    %3634 = vmatpush1.msra.mxu0 %v3513
    %3635 = vmatprep.subr.mxu0 %v3516
    %3636 = vmatpush1.msra.mxu0 %v3515
    %3637 = vmatprep.subr.mxu0 0.0
    %3638 = vmatpush1.msra.mxu0 0.0
    %3639 = vmatprep.subr.mxu0 0.0
    %3640 = vmatpush1.msra.mxu0 0.0
    %3641 = vmatprep.subr.mxu0 0.0
    %3642 = vmatpush1.msra.mxu0 0.0
    %3643 = vmatprep.subr.mxu0 0.0
    %3644 = vmatpush1.msra.mxu0 0.0
    %3645 = vmatprep.subr.mxu0 0.0
    %3646 = vmatpush1.msra.mxu0 0.0
    %3647 = vmatprep.subr.mxu0 0.0
    %3648 = vmatpush1.msra.mxu0 0.0
    %3649 = vmatprep.subr.mxu0 0.0
    %3650 = vmatpush1.msra.mxu0 0.0
    %3651 = vmatprep.subr.mxu0 0.0
    %3652 = vmatpush1.msra.mxu0 0.0
    %3653 = vmatprep.subr.mxu0 0.0
    %3654 = vmatpush1.msra.mxu0 0.0
    %3655 = vmatprep.subr.mxu0 0.0
    %3656 = vmatpush1.msra.mxu0 0.0
    %3657 = vmatprep.subr.mxu0 0.0
    %3658 = vmatpush1.msra.mxu0 0.0
    %3659 = vmatprep.subr.mxu0 0.0
    %3660 = vmatpush1.msra.mxu0 0.0
    %3661 = vmatprep.subr.mxu0 0.0
    %3662 = vmatpush1.msra.mxu0 0.0
    %3663 = vmatprep.subr.mxu0 0.0
    %3664 = vmatpush1.msra.mxu0 0.0
    %3665 = vmatprep.subr.mxu0 0.0
    %3666 = vmatpush1.msra.mxu0 0.0
    %3667 = vmatprep.subr.mxu0 0.0
    %3668 = vmatpush1.msra.mxu0 0.0
    %3669 = vmatprep.subr.mxu0 0.0
    %3670 = vmatpush1.msra.mxu0 0.0
    %3671 = vmatprep.subr.mxu0 0.0
    %3672 = vmatpush1.msra.mxu0 0.0
    %3673 = vmatprep.subr.mxu0 0.0
    %3674 = vmatpush1.msra.mxu0 0.0
    %3675 = vmatprep.subr.mxu0 0.0
    %3676 = vmatpush1.msra.mxu0 0.0
    %3677 = vmatprep.subr.mxu0 0.0
    %3678 = vmatpush1.msra.mxu0 0.0
    %3679 = vmatprep.subr.mxu0 0.0
    %3680 = vmatpush1.msra.mxu0 0.0
    %3681 = vmatprep.subr.mxu0 0.0
    %3682 = vmatpush1.msra.mxu0 0.0
    %3683 = vmatprep.subr.mxu0 0.0
    %3684 = vmatpush1.msra.mxu0 0.0
    %3685 = vmatprep.mubr.f32.mxu0 0.0
    %3686 = vmatmul.mubr.f32.gmra.mrb[0].mxu0 %v3613
    %v3687 = vpop.f32.mrb[0].mxu0
    %v3688 = vadd.f32 %v3522, %v3687
    %v3689 = vpop.f32.mrb[0].mxu0
    %v3690 = vadd.f32 %v3526, %v3689
    %3691 = vmatprep.mubr.f32.mxu0 0.0
    %3692 = vmatmul.mubr.f32.gmra.mrb[0].mxu0 %v3615
    %v3693 = vpop.f32.mrb[0].mxu0
    %v3694 = vadd.f32 %v3522, %v3693
    %v3695 = vpop.f32.mrb[0].mxu0
    %v3696 = vadd.f32 %v3526, %v3695
    %3697 = vmatprep.mubr.f32.mxu0 0.0
    %3698 = vmatmul.mubr.f32.gmra.mrb[0].mxu0 %v3617
    %v3699 = vpop.f32.mrb[0].mxu0
    %v3700 = vadd.f32 %v3522, %v3699
    %v3701 = vpop.f32.mrb[0].mxu0
    %v3702 = vadd.f32 %v3526, %v3701
    %3703 = vmatprep.mubr.f32.mxu0 0.0
    %3704 = vmatmul.mubr.f32.gmra.mrb[0].mxu0 %v3619
    %v3705 = vpop.f32.mrb[0].mxu0
    %v3706 = vadd.f32 %v3522, %v3705
    %v3707 = vpop.f32.mrb[0].mxu0
    %v3708 = vadd.f32 %v3526, %v3707
    %3709 = vdwg.mxu0
    %v3718 = vcombine.low %v3688, %v3690
    %v3719 = vcombine.high %v3688, %v3690
    %v3721 = vunpack.c.l.s4 1983009808
    %v3722 = vunpack.c.0.s8 %v3721
    %v3723 = vlaneseq
    %v3724 = vshrl.u32 %v3723, 7
    %v3725 = vsub.s32 %v3722, %v3724
    %v3726 = vrot.slane %v3718, %v3725
    %v3728 = vunpack.c.l.s4 1983009808
    %v3729 = vunpack.c.0.s8 %v3728
    %v3730 = vlaneseq
    %v3731 = vshrl.u32 %v3730, 7
    %v3732 = vsub.s32 %v3729, %v3731
    %v3733 = vrot.slane %v3719, %v3732
    %v3734 = vcombine.high %v3726, %v3726
    %v3735 = vcombine.high %v3733, %v3733
    %v3736 = vcombine.low %v3694, %v3696
    %v3737 = vcombine.high %v3694, %v3696
    %v3739 = vunpack.c.l.s4 1983009808
    %v3740 = vunpack.c.0.s8 %v3739
    %v3741 = vlaneseq
    %v3742 = vshrl.u32 %v3741, 7
    %v3743 = vsub.s32 %v3740, %v3742
    %v3744 = vrot.slane %v3736, %v3743
    %v3746 = vunpack.c.l.s4 1983009808
    %v3747 = vunpack.c.0.s8 %v3746
    %v3748 = vlaneseq
    %v3749 = vshrl.u32 %v3748, 7
    %v3750 = vsub.s32 %v3747, %v3749
    %v3751 = vrot.slane %v3737, %v3750
    %v3752 = vcombine.high %v3744, %v3744
    %v3753 = vcombine.high %v3751, %v3751
    %v3754 = vcombine.low %v3700, %v3702
    %v3755 = vcombine.high %v3700, %v3702
    %v3757 = vunpack.c.l.s4 1983009808
    %v3758 = vunpack.c.0.s8 %v3757
    %v3759 = vlaneseq
    %v3760 = vshrl.u32 %v3759, 7
    %v3761 = vsub.s32 %v3758, %v3760
    %v3762 = vrot.slane %v3754, %v3761
    %v3764 = vunpack.c.l.s4 1983009808
    %v3765 = vunpack.c.0.s8 %v3764
    %v3766 = vlaneseq
    %v3767 = vshrl.u32 %v3766, 7
    %v3768 = vsub.s32 %v3765, %v3767
    %v3769 = vrot.slane %v3755, %v3768
    %v3770 = vcombine.high %v3762, %v3762
    %v3771 = vcombine.high %v3769, %v3769
    %v3772 = vcombine.low %v3706, %v3708
    %v3773 = vcombine.high %v3706, %v3708
    %v3775 = vunpack.c.l.s4 1983009808
    %v3776 = vunpack.c.0.s8 %v3775
    %v3777 = vlaneseq
    %v3778 = vshrl.u32 %v3777, 7
    %v3779 = vsub.s32 %v3776, %v3778
    %v3780 = vrot.slane %v3772, %v3779
    %v3782 = vunpack.c.l.s4 1983009808
    %v3783 = vunpack.c.0.s8 %v3782
    %v3784 = vlaneseq
    %v3785 = vshrl.u32 %v3784, 7
    %v3786 = vsub.s32 %v3783, %v3785
    %v3787 = vrot.slane %v3773, %v3786
    %v3788 = vcombine.high %v3780, %v3780
    %v3789 = vcombine.high %v3787, %v3787
    %3806 = vst [vmem:[#allocation2] sm:$0xf] %v3726
    %3807 = vst [vmem:[#allocation2 + $0x4] sm:$0xf] %v3734
    %3808 = vst [vmem:[#allocation2 + $0x8] sm:$0xf] %v3733
    %3809 = vst [vmem:[#allocation2 + $0xc] sm:$0xf] %v3735
    %3810 = vst [vmem:[#allocation2 + $0x10] sm:$0xf] %v3744
    %3811 = vst [vmem:[#allocation2 + $0x14] sm:$0xf] %v3752
    %3812 = vst [vmem:[#allocation2 + $0x18] sm:$0xf] %v3751
    %3813 = vst [vmem:[#allocation2 + $0x1c] sm:$0xf] %v3753
    %3814 = vst [vmem:[#allocation2 + $0x20] sm:$0xf] %v3762
    %3815 = vst [vmem:[#allocation2 + $0x24] sm:$0xf] %v3770
    %3816 = vst [vmem:[#allocation2 + $0x28] sm:$0xf] %v3769
    %3817 = vst [vmem:[#allocation2 + $0x2c] sm:$0xf] %v3771
    %3818 = vst [vmem:[#allocation2 + $0x30] sm:$0xf] %v3780
    %3819 = vst [vmem:[#allocation2 + $0x34] sm:$0xf] %v3788
    %3820 = vst [vmem:[#allocation2 + $0x38] sm:$0xf] %v3787
    %3821 = vst [vmem:[#allocation2 + $0x3c] sm:$0xf] %v3789
    %v3822 = vld [vmem:[%s12] sm:$0xff]
    %v3823 = vld [vmem:[%s12 + $0x8] sm:$0xff]
    %v3824 = vld [vmem:[%s12 + $0x10] sm:$0xff]
    %v3825 = vld [vmem:[%s12 + $0x18] sm:$0xff]
    %v3826 = vld [vmem:[%s12 + $0x20] sm:$0xff]
    %v3827 = vld [vmem:[%s12 + $0x28] sm:$0xff]
    %v3828 = vld [vmem:[%s12 + $0x30] sm:$0xff]
    %v3829 = vld [vmem:[%s12 + $0x38] sm:$0xff]
    %v3830 = vld [vmem:[%s12 + $0x40] sm:$0xff]
    %v3831 = vld [vmem:[%s12 + $0x48] sm:$0xff]
    %v3832 = vld [vmem:[%s12 + $0x50] sm:$0xff]
    %v3833 = vld [vmem:[%s12 + $0x58] sm:$0xff]
    %v3834 = vld [vmem:[%s12 + $0x60] sm:$0xff]
    %v3835 = vld [vmem:[%s12 + $0x68] sm:$0xff]
    %v3836 = vld [vmem:[%s12 + $0x70] sm:$0xff]
    %v3837 = vld [vmem:[%s12 + $0x78] sm:$0xff]
    %3838 = vmatprep.subr.mxu0 %v3823
    %3839 = vmatpush1.msra.mxu0 %v3822
    %3840 = vmatprep.subr.mxu0 %v3825
    %3841 = vmatpush1.msra.mxu0 %v3824
    %3842 = vmatprep.subr.mxu0 %v3827
    %3843 = vmatpush1.msra.mxu0 %v3826
    %3844 = vmatprep.subr.mxu0 %v3829
    %3845 = vmatpush1.msra.mxu0 %v3828
    %3846 = vmatprep.subr.mxu0 %v3831
    %3847 = vmatpush1.msra.mxu0 %v3830
    %3848 = vmatprep.subr.mxu0 %v3833
    %3849 = vmatpush1.msra.mxu0 %v3832
    %3850 = vmatprep.subr.mxu0 %v3835
    %3851 = vmatpush1.msra.mxu0 %v3834
    %3852 = vmatprep.subr.mxu0 %v3837
    %3853 = vmatpush1.msra.mxu0 %v3836
    %3854 = vmatprep.subr.mxu0 0.0
    %3855 = vmatpush1.msra.mxu0 0.0
    %3856 = vmatprep.subr.mxu0 0.0
    %3857 = vmatpush1.msra.mxu0 0.0
    %3858 = vmatprep.subr.mxu0 0.0
    %3859 = vmatpush1.msra.mxu0 0.0
    %3860 = vmatprep.subr.mxu0 0.0
    %3861 = vmatpush1.msra.mxu0 0.0
    %3862 = vmatprep.subr.mxu0 0.0
    %3863 = vmatpush1.msra.mxu0 0.0
    %3864 = vmatprep.subr.mxu0 0.0
    %3865 = vmatpush1.msra.mxu0 0.0
    %3866 = vmatprep.subr.mxu0 0.0
    %3867 = vmatpush1.msra.mxu0 0.0
    %3868 = vmatprep.subr.mxu0 0.0
    %3869 = vmatpush1.msra.mxu0 0.0
    %3870 = vmatprep.subr.mxu0 0.0
    %3871 = vmatpush1.msra.mxu0 0.0
    %3872 = vmatprep.subr.mxu0 0.0
    %3873 = vmatpush1.msra.mxu0 0.0
    %3874 = vmatprep.subr.mxu0 0.0
    %3875 = vmatpush1.msra.mxu0 0.0
    %3876 = vmatprep.subr.mxu0 0.0
    %3877 = vmatpush1.msra.mxu0 0.0
    %3878 = vmatprep.subr.mxu0 0.0
    %3879 = vmatpush1.msra.mxu0 0.0
    %3880 = vmatprep.subr.mxu0 0.0
    %3881 = vmatpush1.msra.mxu0 0.0
    %3882 = vmatprep.subr.mxu0 0.0
    %3883 = vmatpush1.msra.mxu0 0.0
    %3884 = vmatprep.subr.mxu0 0.0
    %3885 = vmatpush1.msra.mxu0 0.0
    %3886 = vmatprep.subr.mxu0 0.0
    %3887 = vmatpush1.msra.mxu0 0.0
    %3888 = vmatprep.subr.mxu0 0.0
    %3889 = vmatpush1.msra.mxu0 0.0
    %3890 = vmatprep.subr.mxu0 0.0
    %3891 = vmatpush1.msra.mxu0 0.0
    %3892 = vmatprep.subr.mxu0 0.0
    %3893 = vmatpush1.msra.mxu0 0.0
    %3894 = vmatprep.subr.mxu0 0.0
    %3895 = vmatpush1.msra.mxu0 0.0
    %3896 = vmatprep.subr.mxu0 0.0
    %3897 = vmatpush1.msra.mxu0 0.0
    %3898 = vmatprep.subr.mxu0 0.0
    %3899 = vmatpush1.msra.mxu0 0.0
    %3900 = vmatprep.subr.mxu0 0.0
    %3901 = vmatpush1.msra.mxu0 0.0
    %3902 = vmatprep.mubr.f32.mxu0 0.0
    %3903 = vmatmul.mubr.f32.gmra.mrb[0].mxu0 %v3613
    %v3904 = vpop.f32.mrb[0].mxu0
    %v3905 = vadd.f32 0.0, %v3904
    %v3906 = vpop.f32.mrb[0].mxu0
    %v3907 = vadd.f32 0.0, %v3906
    %3908 = vmatprep.mubr.f32.mxu0 0.0
    %3909 = vmatmul.mubr.f32.gmra.mrb[0].mxu0 %v3615
    %v3910 = vpop.f32.mrb[0].mxu0
    %v3911 = vadd.f32 0.0, %v3910
    %v3912 = vpop.f32.mrb[0].mxu0
    %v3913 = vadd.f32 0.0, %v3912
    %3914 = vmatprep.mubr.f32.mxu0 0.0
    %3915 = vmatmul.mubr.f32.gmra.mrb[0].mxu0 %v3617
    %v3916 = vpop.f32.mrb[0].mxu0
    %v3917 = vadd.f32 0.0, %v3916
    %v3918 = vpop.f32.mrb[0].mxu0
    %v3919 = vadd.f32 0.0, %v3918
    %3920 = vmatprep.mubr.f32.mxu0 0.0
    %3921 = vmatmul.mubr.f32.gmra.mrb[0].mxu0 %v3619
    %v3922 = vpop.f32.mrb[0].mxu0
    %v3923 = vadd.f32 0.0, %v3922
    %v3924 = vpop.f32.mrb[0].mxu0
    %v3925 = vadd.f32 0.0, %v3924
    %3926 = vdwg.mxu0
    %v3935 = vcombine.low %v3905, %v3907
    %v3936 = vcombine.high %v3905, %v3907
    %v3938 = vunpack.c.l.s4 1983009808
    %v3939 = vunpack.c.0.s8 %v3938
    %v3940 = vlaneseq
    %v3941 = vshrl.u32 %v3940, 7
    %v3942 = vsub.s32 %v3939, %v3941
    %v3943 = vrot.slane %v3935, %v3942
    %v3945 = vunpack.c.l.s4 1983009808
    %v3946 = vunpack.c.0.s8 %v3945
    %v3947 = vlaneseq
    %v3948 = vshrl.u32 %v3947, 7
    %v3949 = vsub.s32 %v3946, %v3948
    %v3950 = vrot.slane %v3936, %v3949
    %v3951 = vcombine.high %v3943, %v3943
    %v3952 = vcombine.high %v3950, %v3950
    %v3953 = vcombine.low %v3911, %v3913
    %v3954 = vcombine.high %v3911, %v3913
    %v3956 = vunpack.c.l.s4 1983009808
    %v3957 = vunpack.c.0.s8 %v3956
    %v3958 = vlaneseq
    %v3959 = vshrl.u32 %v3958, 7
    %v3960 = vsub.s32 %v3957, %v3959
    %v3961 = vrot.slane %v3953, %v3960
    %v3963 = vunpack.c.l.s4 1983009808
    %v3964 = vunpack.c.0.s8 %v3963
    %v3965 = vlaneseq
    %v3966 = vshrl.u32 %v3965, 7
    %v3967 = vsub.s32 %v3964, %v3966
    %v3968 = vrot.slane %v3954, %v3967
    %v3969 = vcombine.high %v3961, %v3961
    %v3970 = vcombine.high %v3968, %v3968
    %v3971 = vcombine.low %v3917, %v3919
    %v3972 = vcombine.high %v3917, %v3919
    %v3974 = vunpack.c.l.s4 1983009808
    %v3975 = vunpack.c.0.s8 %v3974
    %v3976 = vlaneseq
    %v3977 = vshrl.u32 %v3976, 7
    %v3978 = vsub.s32 %v3975, %v3977
    %v3979 = vrot.slane %v3971, %v3978
    %v3981 = vunpack.c.l.s4 1983009808
    %v3982 = vunpack.c.0.s8 %v3981
    %v3983 = vlaneseq
    %v3984 = vshrl.u32 %v3983, 7
    %v3985 = vsub.s32 %v3982, %v3984
    %v3986 = vrot.slane %v3972, %v3985
    %v3987 = vcombine.high %v3979, %v3979
    %v3988 = vcombine.high %v3986, %v3986
    %v3989 = vcombine.low %v3923, %v3925
    %v3990 = vcombine.high %v3923, %v3925
    %v3992 = vunpack.c.l.s4 1983009808
    %v3993 = vunpack.c.0.s8 %v3992
    %v3994 = vlaneseq
    %v3995 = vshrl.u32 %v3994, 7
    %v3996 = vsub.s32 %v3993, %v3995
    %v3997 = vrot.slane %v3989, %v3996
    %v3999 = vunpack.c.l.s4 1983009808
    %v4000 = vunpack.c.0.s8 %v3999
    %v4001 = vlaneseq
    %v4002 = vshrl.u32 %v4001, 7
    %v4003 = vsub.s32 %v4000, %v4002
    %v4004 = vrot.slane %v3990, %v4003
    %v4005 = vcombine.high %v3997, %v3997
    %v4006 = vcombine.high %v4004, %v4004
    %4023 = vst [vmem:[#allocation3] sm:$0xf] %v3943
    %4024 = vst [vmem:[#allocation3 + $0x4] sm:$0xf] %v3951
    %4025 = vst [vmem:[#allocation3 + $0x8] sm:$0xf] %v3950
    %4026 = vst [vmem:[#allocation3 + $0xc] sm:$0xf] %v3952
    %4027 = vst [vmem:[#allocation3 + $0x10] sm:$0xf] %v3961
    %4028 = vst [vmem:[#allocation3 + $0x14] sm:$0xf] %v3969
    %4029 = vst [vmem:[#allocation3 + $0x18] sm:$0xf] %v3968
    %4030 = vst [vmem:[#allocation3 + $0x1c] sm:$0xf] %v3970
    %4031 = vst [vmem:[#allocation3 + $0x20] sm:$0xf] %v3979
    %4032 = vst [vmem:[#allocation3 + $0x24] sm:$0xf] %v3987
    %4033 = vst [vmem:[#allocation3 + $0x28] sm:$0xf] %v3986
    %4034 = vst [vmem:[#allocation3 + $0x2c] sm:$0xf] %v3988
    %4035 = vst [vmem:[#allocation3 + $0x30] sm:$0xf] %v3997
    %4036 = vst [vmem:[#allocation3 + $0x34] sm:$0xf] %v4005
    %4037 = vst [vmem:[#allocation3 + $0x38] sm:$0xf] %v4004
    %4038 = vst [vmem:[#allocation3 + $0x3c] sm:$0xf] %v4006
    %v4039 = vld [vmem:[%s13] sm:$0xff]
    %v4040 = vld [vmem:[%s13 + $0x8] sm:$0xff]
    %v4041 = vld [vmem:[%s13 + $0x10] sm:$0xff]
    %v4042 = vld [vmem:[%s13 + $0x18] sm:$0xff]
    %v4043 = vld [vmem:[%s13 + $0x20] sm:$0xff]
    %v4044 = vld [vmem:[%s13 + $0x28] sm:$0xff]
    %v4045 = vld [vmem:[%s13 + $0x30] sm:$0xff]
    %v4046 = vld [vmem:[%s13 + $0x38] sm:$0xff]
    %v4047 = vld [vmem:[%s13 + $0x40] sm:$0xff]
    %v4048 = vld [vmem:[%s13 + $0x48] sm:$0xff]
    %v4049 = vld [vmem:[%s13 + $0x50] sm:$0xff]
    %v4050 = vld [vmem:[%s13 + $0x58] sm:$0xff]
    %v4051 = vld [vmem:[%s13 + $0x60] sm:$0xff]
    %v4052 = vld [vmem:[%s13 + $0x68] sm:$0xff]
    %v4053 = vld [vmem:[%s13 + $0x70] sm:$0xff]
    %v4054 = vld [vmem:[%s13 + $0x78] sm:$0xff]
    %v4055 = vld [vmem:[#allocation2] sm:$0xf]
    %v4056 = vld [vmem:[%s954] sm:$0xf]
    %v4057 = vadd.f32 %v4055, %v4056
    %4058 = vmatprep.subr.mxu0 %v4040
    %4059 = vmatpush1.msra.mxu0 %v4039
    %4060 = vmatprep.subr.mxu0 %v4042
    %4061 = vmatpush1.msra.mxu0 %v4041
    %4062 = vmatprep.subr.mxu0 %v4044
    %4063 = vmatpush1.msra.mxu0 %v4043
    %4064 = vmatprep.subr.mxu0 %v4046
    %4065 = vmatpush1.msra.mxu0 %v4045
    %4066 = vmatprep.subr.mxu0 %v4048
    %4067 = vmatpush1.msra.mxu0 %v4047
    %4068 = vmatprep.subr.mxu0 %v4050
    %4069 = vmatpush1.msra.mxu0 %v4049
    %4070 = vmatprep.subr.mxu0 %v4052
    %4071 = vmatpush1.msra.mxu0 %v4051
    %4072 = vmatprep.subr.mxu0 %v4054
    %4073 = vmatpush1.msra.mxu0 %v4053
    %4074 = vmatprep.subr.mxu0 0.0
    %4075 = vmatpush1.msra.mxu0 0.0
    %4076 = vmatprep.subr.mxu0 0.0
    %4077 = vmatpush1.msra.mxu0 0.0
    %4078 = vmatprep.subr.mxu0 0.0
    %4079 = vmatpush1.msra.mxu0 0.0
    %4080 = vmatprep.subr.mxu0 0.0
    %4081 = vmatpush1.msra.mxu0 0.0
    %4082 = vmatprep.subr.mxu0 0.0
    %4083 = vmatpush1.msra.mxu0 0.0
    %4084 = vmatprep.subr.mxu0 0.0
    %4085 = vmatpush1.msra.mxu0 0.0
    %4086 = vmatprep.subr.mxu0 0.0
    %4087 = vmatpush1.msra.mxu0 0.0
    %4088 = vmatprep.subr.mxu0 0.0
    %4089 = vmatpush1.msra.mxu0 0.0
    %4090 = vmatprep.subr.mxu0 0.0
    %4091 = vmatpush1.msra.mxu0 0.0
    %4092 = vmatprep.subr.mxu0 0.0
    %4093 = vmatpush1.msra.mxu0 0.0
    %4094 = vmatprep.subr.mxu0 0.0
    %4095 = vmatpush1.msra.mxu0 0.0
    %4096 = vmatprep.subr.mxu0 0.0
    %4097 = vmatpush1.msra.mxu0 0.0
    %4098 = vmatprep.subr.mxu0 0.0
    %4099 = vmatpush1.msra.mxu0 0.0
    %4100 = vmatprep.subr.mxu0 0.0
    %4101 = vmatpush1.msra.mxu0 0.0
    %4102 = vmatprep.subr.mxu0 0.0
    %4103 = vmatpush1.msra.mxu0 0.0
    %4104 = vmatprep.subr.mxu0 0.0
    %4105 = vmatpush1.msra.mxu0 0.0
    %4106 = vmatprep.subr.mxu0 0.0
    %4107 = vmatpush1.msra.mxu0 0.0
    %4108 = vmatprep.subr.mxu0 0.0
    %4109 = vmatpush1.msra.mxu0 0.0
    %4110 = vmatprep.subr.mxu0 0.0
    %4111 = vmatpush1.msra.mxu0 0.0
    %4112 = vmatprep.subr.mxu0 0.0
    %4113 = vmatpush1.msra.mxu0 0.0
    %4114 = vmatprep.subr.mxu0 0.0
    %4115 = vmatpush1.msra.mxu0 0.0
    %4116 = vmatprep.subr.mxu0 0.0
    %4117 = vmatpush1.msra.mxu0 0.0
    %4118 = vmatprep.subr.mxu0 0.0
    %4119 = vmatpush1.msra.mxu0 0.0
    %4120 = vmatprep.subr.mxu0 0.0
    %4121 = vmatpush1.msra.mxu0 0.0
    %4122 = vmatprep.mubr.f32.mxu0 0.0
    %4123 = vmatmul.mubr.f32.gmra.mrb[0].mxu0 %v958
    %v4124 = vpop.f32.mrb[0].mxu0
    %v4125 = vadd.f32 0.0, %v4124
    %v4126 = vpop.f32.mrb[0].mxu0
    %v4127 = vadd.f32 0.0, %v4126
    %4128 = vdwg.mxu0
    %v4131 = vcombine.low %v4125, %v4127
    %v4133 = vunpack.c.l.s4 1983009808
    %v4134 = vunpack.c.0.s8 %v4133
    %v4135 = vlaneseq
    %v4136 = vshrl.u32 %v4135, 7
    %v4137 = vsub.s32 %v4134, %v4136
    %v4138 = vrot.slane %v4131, %v4137
    %v4140 = vadd.f32 %v4057, %v4138
    %v4141 = vxor.u32 %v4140, 2147483648
    %v4142 = vmul.f32 %v4141, 1.442695
    %v4143 = vpow.pop %v4142
    %v4144 = vadd.f32 %v4143, 1.0
    %v4145 = vrcp.pop %v4144
    %v4146 = vmul.f32 1.0, %v4145
    %v4148 = vrot.slane %v4140, 2
    %v4150 = vtanh.pop %v4148
    %4151 = vrot.lane.b32.xlu0 %v4140, 64
    %v4152 = vpop.permute.xlu0 %4151
    %v4153 = vrot.slane %v4152, 2
    %v4155 = vxor.u32 %v4153, 2147483648
    %v4156 = vmul.f32 %v4155, 1.442695
    %v4157 = vpow.pop %v4156
    %v4158 = vadd.f32 %v4157, 1.0
    %v4159 = vrcp.pop %v4158
    %v4160 = vmul.f32 1.0, %v4159
    %v4161 = vmul.f32 %v4146, 0.0
    %v4162 = vmul.f32 %v4146, %v4150
    %4164 = vrot.lane.b32.xlu0 %v4162, 64
    %v4165 = vpop.permute.xlu0 %4164
    %v4167 = vadd.f32 %v4161, %v4165
    %v4168 = vtanh.pop %v4167
    %4170 = vrot.lane.b32.xlu0 %v4168, 64
    %v4171 = vpop.permute.xlu0 %4170
    %v4173 = vmul.f32 %v4160, %v4171
    %4174 = vst.msk [vmem:[#allocation4] sm:$0x3] %vm1076, %v4173
    %v4177 = vunpack.c.l.s4 1983009808
    %v4178 = vunpack.c.0.s8 %v4177
    %v4179 = vlaneseq
    %v4180 = vshrl.u32 %v4179, 7
    %v4181 = vsub.s32 %v4178, %v4180
    %v4182 = vrot.slane %v4173, %v4181
    %4183 = vrot.lane.b32.xlu0 %v4182, 96
    %v4184 = vpop.permute.xlu0 %4183
    %4186 = vst.msk [vmem:[%s1089] sm:$0x3] %vm1076, %v4184
    %v4187 = vld [vmem:[%s1091] sm:$0xf]
    %v4188 = vld [vmem:[%s1093] sm:$0xf]
    %v4189 = vadd.f32 %v4187, %v4188
    %v4190 = vsel %vm957, %v4173, 0
    %4192 = vmatprep.subr.mxu0 %v4040
    %4193 = vmatpush1.msra.mxu0 %v4039
    %4194 = vmatprep.subr.mxu0 %v4042
    %4195 = vmatpush1.msra.mxu0 %v4041
    %4196 = vmatprep.subr.mxu0 %v4044
    %4197 = vmatpush1.msra.mxu0 %v4043
    %4198 = vmatprep.subr.mxu0 %v4046
    %4199 = vmatpush1.msra.mxu0 %v4045
    %4200 = vmatprep.subr.mxu0 %v4048
    %4201 = vmatpush1.msra.mxu0 %v4047
    %4202 = vmatprep.subr.mxu0 %v4050
    %4203 = vmatpush1.msra.mxu0 %v4049
    %4204 = vmatprep.subr.mxu0 %v4052
    %4205 = vmatpush1.msra.mxu0 %v4051
    %4206 = vmatprep.subr.mxu0 %v4054
    %4207 = vmatpush1.msra.mxu0 %v4053
    %4208 = vmatprep.subr.mxu0 0.0
    %4209 = vmatpush1.msra.mxu0 0.0
    %4210 = vmatprep.subr.mxu0 0.0
    %4211 = vmatpush1.msra.mxu0 0.0
    %4212 = vmatprep.subr.mxu0 0.0
    %4213 = vmatpush1.msra.mxu0 0.0
    %4214 = vmatprep.subr.mxu0 0.0
    %4215 = vmatpush1.msra.mxu0 0.0
    %4216 = vmatprep.subr.mxu0 0.0
    %4217 = vmatpush1.msra.mxu0 0.0
    %4218 = vmatprep.subr.mxu0 0.0
    %4219 = vmatpush1.msra.mxu0 0.0
    %4220 = vmatprep.subr.mxu0 0.0
    %4221 = vmatpush1.msra.mxu0 0.0
    %4222 = vmatprep.subr.mxu0 0.0
    %4223 = vmatpush1.msra.mxu0 0.0
    %4224 = vmatprep.subr.mxu0 0.0
    %4225 = vmatpush1.msra.mxu0 0.0
    %4226 = vmatprep.subr.mxu0 0.0
    %4227 = vmatpush1.msra.mxu0 0.0
    %4228 = vmatprep.subr.mxu0 0.0
    %4229 = vmatpush1.msra.mxu0 0.0
    %4230 = vmatprep.subr.mxu0 0.0
    %4231 = vmatpush1.msra.mxu0 0.0
    %4232 = vmatprep.subr.mxu0 0.0
    %4233 = vmatpush1.msra.mxu0 0.0
    %4234 = vmatprep.subr.mxu0 0.0
    %4235 = vmatpush1.msra.mxu0 0.0
    %4236 = vmatprep.subr.mxu0 0.0
    %4237 = vmatpush1.msra.mxu0 0.0
    %4238 = vmatprep.subr.mxu0 0.0
    %4239 = vmatpush1.msra.mxu0 0.0
    %4240 = vmatprep.subr.mxu0 0.0
    %4241 = vmatpush1.msra.mxu0 0.0
    %4242 = vmatprep.subr.mxu0 0.0
    %4243 = vmatpush1.msra.mxu0 0.0
    %4244 = vmatprep.subr.mxu0 0.0
    %4245 = vmatpush1.msra.mxu0 0.0
    %4246 = vmatprep.subr.mxu0 0.0
    %4247 = vmatpush1.msra.mxu0 0.0
    %4248 = vmatprep.subr.mxu0 0.0
    %4249 = vmatpush1.msra.mxu0 0.0
    %4250 = vmatprep.subr.mxu0 0.0
    %4251 = vmatpush1.msra.mxu0 0.0
    %4252 = vmatprep.subr.mxu0 0.0
    %4253 = vmatpush1.msra.mxu0 0.0
    %4254 = vmatprep.subr.mxu0 0.0
    %4255 = vmatpush1.msra.mxu0 0.0
    %4256 = vmatprep.mubr.f32.mxu0 0.0
    %4257 = vmatmul.mubr.f32.gmra.mrb[0].mxu0 %v4190
    %v4258 = vpop.f32.mrb[0].mxu0
    %v4259 = vadd.f32 0.0, %v4258
    %v4260 = vpop.f32.mrb[0].mxu0
    %v4261 = vadd.f32 0.0, %v4260
    %4262 = vdwg.mxu0
    %v4265 = vcombine.low %v4259, %v4261
    %v4267 = vunpack.c.l.s4 1983009808
    %v4268 = vunpack.c.0.s8 %v4267
    %v4269 = vlaneseq
    %v4270 = vshrl.u32 %v4269, 7
    %v4271 = vsub.s32 %v4268, %v4270
    %v4272 = vrot.slane %v4265, %v4271
    %v4274 = vadd.f32 %v4189, %v4272
    %v4275 = vxor.u32 %v4274, 2147483648
    %v4276 = vmul.f32 %v4275, 1.442695
    %v4277 = vpow.pop %v4276
    %v4278 = vadd.f32 %v4277, 1.0
    %v4279 = vrcp.pop %v4278
    %v4280 = vmul.f32 1.0, %v4279
    %v4282 = vrot.slane %v4274, 2
    %v4284 = vtanh.pop %v4282
    %4285 = vrot.lane.b32.xlu0 %v4274, 64
    %v4286 = vpop.permute.xlu0 %4285
    %v4287 = vrot.slane %v4286, 2
    %v4289 = vxor.u32 %v4287, 2147483648
    %v4290 = vmul.f32 %v4289, 1.442695
    %v4291 = vpow.pop %v4290
    %v4292 = vadd.f32 %v4291, 1.0
    %v4293 = vrcp.pop %v4292
    %v4294 = vmul.f32 1.0, %v4293
    %v4295 = vmul.f32 %v4280, %v4167
    %v4296 = vmul.f32 %v4280, %v4284
    %4298 = vrot.lane.b32.xlu0 %v4296, 64
    %v4299 = vpop.permute.xlu0 %4298
    %v4301 = vadd.f32 %v4295, %v4299
    %v4302 = vtanh.pop %v4301
    %4304 = vrot.lane.b32.xlu0 %v4302, 64
    %v4305 = vpop.permute.xlu0 %4304
    %v4307 = vmul.f32 %v4294, %v4305
    %4308 = vst.msk [vmem:[%s1214] sm:$0x3] %vm1076, %v4307
    %v4311 = vunpack.c.l.s4 1983009808
    %v4312 = vunpack.c.0.s8 %v4311
    %v4313 = vlaneseq
    %v4314 = vshrl.u32 %v4313, 7
    %v4315 = vsub.s32 %v4312, %v4314
    %v4316 = vrot.slane %v4307, %v4315
    %4317 = vrot.lane.b32.xlu0 %v4316, 96
    %v4318 = vpop.permute.xlu0 %4317
    %4320 = vst.msk [vmem:[%s1227] sm:$0x3] %vm1076, %v4318
    %v4321 = vld [vmem:[%s1229] sm:$0xf]
    %v4322 = vld [vmem:[%s1231] sm:$0xf]
    %v4323 = vadd.f32 %v4321, %v4322
    %v4324 = vsel %vm957, %v4307, 0
    %4326 = vmatprep.subr.mxu0 %v4040
    %4327 = vmatpush1.msra.mxu0 %v4039
    %4328 = vmatprep.subr.mxu0 %v4042
    %4329 = vmatpush1.msra.mxu0 %v4041
    %4330 = vmatprep.subr.mxu0 %v4044
    %4331 = vmatpush1.msra.mxu0 %v4043
    %4332 = vmatprep.subr.mxu0 %v4046
    %4333 = vmatpush1.msra.mxu0 %v4045
    %4334 = vmatprep.subr.mxu0 %v4048
    %4335 = vmatpush1.msra.mxu0 %v4047
    %4336 = vmatprep.subr.mxu0 %v4050
    %4337 = vmatpush1.msra.mxu0 %v4049
    %4338 = vmatprep.subr.mxu0 %v4052
    %4339 = vmatpush1.msra.mxu0 %v4051
    %4340 = vmatprep.subr.mxu0 %v4054
    %4341 = vmatpush1.msra.mxu0 %v4053
    %4342 = vmatprep.subr.mxu0 0.0
    %4343 = vmatpush1.msra.mxu0 0.0
    %4344 = vmatprep.subr.mxu0 0.0
    %4345 = vmatpush1.msra.mxu0 0.0
    %4346 = vmatprep.subr.mxu0 0.0
    %4347 = vmatpush1.msra.mxu0 0.0
    %4348 = vmatprep.subr.mxu0 0.0
    %4349 = vmatpush1.msra.mxu0 0.0
    %4350 = vmatprep.subr.mxu0 0.0
    %4351 = vmatpush1.msra.mxu0 0.0
    %4352 = vmatprep.subr.mxu0 0.0
    %4353 = vmatpush1.msra.mxu0 0.0
    %4354 = vmatprep.subr.mxu0 0.0
    %4355 = vmatpush1.msra.mxu0 0.0
    %4356 = vmatprep.subr.mxu0 0.0
    %4357 = vmatpush1.msra.mxu0 0.0
    %4358 = vmatprep.subr.mxu0 0.0
    %4359 = vmatpush1.msra.mxu0 0.0
    %4360 = vmatprep.subr.mxu0 0.0
    %4361 = vmatpush1.msra.mxu0 0.0
    %4362 = vmatprep.subr.mxu0 0.0
    %4363 = vmatpush1.msra.mxu0 0.0
    %4364 = vmatprep.subr.mxu0 0.0
    %4365 = vmatpush1.msra.mxu0 0.0
    %4366 = vmatprep.subr.mxu0 0.0
    %4367 = vmatpush1.msra.mxu0 0.0
    %4368 = vmatprep.subr.mxu0 0.0
    %4369 = vmatpush1.msra.mxu0 0.0
    %4370 = vmatprep.subr.mxu0 0.0
    %4371 = vmatpush1.msra.mxu0 0.0
    %4372 = vmatprep.subr.mxu0 0.0
    %4373 = vmatpush1.msra.mxu0 0.0
    %4374 = vmatprep.subr.mxu0 0.0
    %4375 = vmatpush1.msra.mxu0 0.0
    %4376 = vmatprep.subr.mxu0 0.0
    %4377 = vmatpush1.msra.mxu0 0.0
    %4378 = vmatprep.subr.mxu0 0.0
    %4379 = vmatpush1.msra.mxu0 0.0
    %4380 = vmatprep.subr.mxu0 0.0
    %4381 = vmatpush1.msra.mxu0 0.0
    %4382 = vmatprep.subr.mxu0 0.0
    %4383 = vmatpush1.msra.mxu0 0.0
    %4384 = vmatprep.subr.mxu0 0.0
    %4385 = vmatpush1.msra.mxu0 0.0
    %4386 = vmatprep.subr.mxu0 0.0
    %4387 = vmatpush1.msra.mxu0 0.0
    %4388 = vmatprep.subr.mxu0 0.0
    %4389 = vmatpush1.msra.mxu0 0.0
    %4390 = vmatprep.mubr.f32.mxu0 0.0
    %4391 = vmatmul.mubr.f32.gmra.mrb[0].mxu0 %v4324
    %v4392 = vpop.f32.mrb[0].mxu0
    %v4393 = vadd.f32 0.0, %v4392
    %v4394 = vpop.f32.mrb[0].mxu0
    %v4395 = vadd.f32 0.0, %v4394
    %4396 = vdwg.mxu0
    %v4399 = vcombine.low %v4393, %v4395
    %v4401 = vunpack.c.l.s4 1983009808
    %v4402 = vunpack.c.0.s8 %v4401
    %v4403 = vlaneseq
    %v4404 = vshrl.u32 %v4403, 7
    %v4405 = vsub.s32 %v4402, %v4404
    %v4406 = vrot.slane %v4399, %v4405
    %v4408 = vadd.f32 %v4323, %v4406
    %v4409 = vxor.u32 %v4408, 2147483648
    %v4410 = vmul.f32 %v4409, 1.442695
    %v4411 = vpow.pop %v4410
    %v4412 = vadd.f32 %v4411, 1.0
    %v4413 = vrcp.pop %v4412
    %v4414 = vmul.f32 1.0, %v4413
    %v4416 = vrot.slane %v4408, 2
    %v4418 = vtanh.pop %v4416
    %4419 = vrot.lane.b32.xlu0 %v4408, 64
    %v4420 = vpop.permute.xlu0 %4419
    %v4421 = vrot.slane %v4420, 2
    %v4423 = vxor.u32 %v4421, 2147483648
    %v4424 = vmul.f32 %v4423, 1.442695
    %v4425 = vpow.pop %v4424
    %v4426 = vadd.f32 %v4425, 1.0
    %v4427 = vrcp.pop %v4426
    %v4428 = vmul.f32 1.0, %v4427
    %v4429 = vmul.f32 %v4414, %v4301
    %v4430 = vmul.f32 %v4414, %v4418
    %4432 = vrot.lane.b32.xlu0 %v4430, 64
    %v4433 = vpop.permute.xlu0 %4432
    %v4435 = vadd.f32 %v4429, %v4433
    %v4436 = vtanh.pop %v4435
    %4438 = vrot.lane.b32.xlu0 %v4436, 64
    %v4439 = vpop.permute.xlu0 %4438
    %v4441 = vmul.f32 %v4428, %v4439
    %4442 = vst.msk [vmem:[%s1352] sm:$0x3] %vm1076, %v4441
    %v4445 = vunpack.c.l.s4 1983009808
    %v4446 = vunpack.c.0.s8 %v4445
    %v4447 = vlaneseq
    %v4448 = vshrl.u32 %v4447, 7
    %v4449 = vsub.s32 %v4446, %v4448
    %v4450 = vrot.slane %v4441, %v4449
    %4451 = vrot.lane.b32.xlu0 %v4450, 96
    %v4452 = vpop.permute.xlu0 %4451
    %4454 = vst.msk [vmem:[%s1365] sm:$0x3] %vm1076, %v4452
    %v4455 = vld [vmem:[%s1367] sm:$0xf]
    %v4456 = vld [vmem:[%s1369] sm:$0xf]
    %v4457 = vadd.f32 %v4455, %v4456
    %v4458 = vsel %vm957, %v4441, 0
    %4460 = vmatprep.subr.mxu0 %v4040
    %4461 = vmatpush1.msra.mxu0 %v4039
    %4462 = vmatprep.subr.mxu0 %v4042
    %4463 = vmatpush1.msra.mxu0 %v4041
    %4464 = vmatprep.subr.mxu0 %v4044
    %4465 = vmatpush1.msra.mxu0 %v4043
    %4466 = vmatprep.subr.mxu0 %v4046
    %4467 = vmatpush1.msra.mxu0 %v4045
    %4468 = vmatprep.subr.mxu0 %v4048
    %4469 = vmatpush1.msra.mxu0 %v4047
    %4470 = vmatprep.subr.mxu0 %v4050
    %4471 = vmatpush1.msra.mxu0 %v4049
    %4472 = vmatprep.subr.mxu0 %v4052
    %4473 = vmatpush1.msra.mxu0 %v4051
    %4474 = vmatprep.subr.mxu0 %v4054
    %4475 = vmatpush1.msra.mxu0 %v4053
    %4476 = vmatprep.subr.mxu0 0.0
    %4477 = vmatpush1.msra.mxu0 0.0
    %4478 = vmatprep.subr.mxu0 0.0
    %4479 = vmatpush1.msra.mxu0 0.0
    %4480 = vmatprep.subr.mxu0 0.0
    %4481 = vmatpush1.msra.mxu0 0.0
    %4482 = vmatprep.subr.mxu0 0.0
    %4483 = vmatpush1.msra.mxu0 0.0
    %4484 = vmatprep.subr.mxu0 0.0
    %4485 = vmatpush1.msra.mxu0 0.0
    %4486 = vmatprep.subr.mxu0 0.0
    %4487 = vmatpush1.msra.mxu0 0.0
    %4488 = vmatprep.subr.mxu0 0.0
    %4489 = vmatpush1.msra.mxu0 0.0
    %4490 = vmatprep.subr.mxu0 0.0
    %4491 = vmatpush1.msra.mxu0 0.0
    %4492 = vmatprep.subr.mxu0 0.0
    %4493 = vmatpush1.msra.mxu0 0.0
    %4494 = vmatprep.subr.mxu0 0.0
    %4495 = vmatpush1.msra.mxu0 0.0
    %4496 = vmatprep.subr.mxu0 0.0
    %4497 = vmatpush1.msra.mxu0 0.0
    %4498 = vmatprep.subr.mxu0 0.0
    %4499 = vmatpush1.msra.mxu0 0.0
    %4500 = vmatprep.subr.mxu0 0.0
    %4501 = vmatpush1.msra.mxu0 0.0
    %4502 = vmatprep.subr.mxu0 0.0
    %4503 = vmatpush1.msra.mxu0 0.0
    %4504 = vmatprep.subr.mxu0 0.0
    %4505 = vmatpush1.msra.mxu0 0.0
    %4506 = vmatprep.subr.mxu0 0.0
    %4507 = vmatpush1.msra.mxu0 0.0
    %4508 = vmatprep.subr.mxu0 0.0
    %4509 = vmatpush1.msra.mxu0 0.0
    %4510 = vmatprep.subr.mxu0 0.0
    %4511 = vmatpush1.msra.mxu0 0.0
    %4512 = vmatprep.subr.mxu0 0.0
    %4513 = vmatpush1.msra.mxu0 0.0
    %4514 = vmatprep.subr.mxu0 0.0
    %4515 = vmatpush1.msra.mxu0 0.0
    %4516 = vmatprep.subr.mxu0 0.0
    %4517 = vmatpush1.msra.mxu0 0.0
    %4518 = vmatprep.subr.mxu0 0.0
    %4519 = vmatpush1.msra.mxu0 0.0
    %4520 = vmatprep.subr.mxu0 0.0
    %4521 = vmatpush1.msra.mxu0 0.0
    %4522 = vmatprep.subr.mxu0 0.0
    %4523 = vmatpush1.msra.mxu0 0.0
    %4524 = vmatprep.mubr.f32.mxu0 0.0
    %4525 = vmatmul.mubr.f32.gmra.mrb[0].mxu0 %v4458
    %v4526 = vpop.f32.mrb[0].mxu0
    %v4527 = vadd.f32 0.0, %v4526
    %v4528 = vpop.f32.mrb[0].mxu0
    %v4529 = vadd.f32 0.0, %v4528
    %4530 = vdwg.mxu0
    %v4533 = vcombine.low %v4527, %v4529
    %v4535 = vunpack.c.l.s4 1983009808
    %v4536 = vunpack.c.0.s8 %v4535
    %v4537 = vlaneseq
    %v4538 = vshrl.u32 %v4537, 7
    %v4539 = vsub.s32 %v4536, %v4538
    %v4540 = vrot.slane %v4533, %v4539
    %v4542 = vadd.f32 %v4457, %v4540
    %v4543 = vxor.u32 %v4542, 2147483648
    %v4544 = vmul.f32 %v4543, 1.442695
    %v4545 = vpow.pop %v4544
    %v4546 = vadd.f32 %v4545, 1.0
    %v4547 = vrcp.pop %v4546
    %v4548 = vmul.f32 1.0, %v4547
    %v4550 = vrot.slane %v4542, 2
    %v4552 = vtanh.pop %v4550
    %4553 = vrot.lane.b32.xlu0 %v4542, 64
    %v4554 = vpop.permute.xlu0 %4553
    %v4555 = vrot.slane %v4554, 2
    %v4557 = vxor.u32 %v4555, 2147483648
    %v4558 = vmul.f32 %v4557, 1.442695
    %v4559 = vpow.pop %v4558
    %v4560 = vadd.f32 %v4559, 1.0
    %v4561 = vrcp.pop %v4560
    %v4562 = vmul.f32 1.0, %v4561
    %v4563 = vmul.f32 %v4548, %v4435
    %v4564 = vmul.f32 %v4548, %v4552
    %4566 = vrot.lane.b32.xlu0 %v4564, 64
    %v4567 = vpop.permute.xlu0 %4566
    %v4569 = vadd.f32 %v4563, %v4567
    %v4570 = vtanh.pop %v4569
    %4572 = vrot.lane.b32.xlu0 %v4570, 64
    %v4573 = vpop.permute.xlu0 %4572
    %v4575 = vmul.f32 %v4562, %v4573
    %4576 = vst.msk [vmem:[%s1490] sm:$0x3] %vm1076, %v4575
    %v4579 = vunpack.c.l.s4 1983009808
    %v4580 = vunpack.c.0.s8 %v4579
    %v4581 = vlaneseq
    %v4582 = vshrl.u32 %v4581, 7
    %v4583 = vsub.s32 %v4580, %v4582
    %v4584 = vrot.slane %v4575, %v4583
    %4585 = vrot.lane.b32.xlu0 %v4584, 96
    %v4586 = vpop.permute.xlu0 %4585
    %4588 = vst.msk [vmem:[%s1503] sm:$0x3] %vm1076, %v4586
    %v4589 = vld [vmem:[%s1505] sm:$0xf]
    %v4590 = vld [vmem:[%s1507] sm:$0xf]
    %v4591 = vadd.f32 %v4589, %v4590
    %v4592 = vsel %vm957, %v4575, 0
    %4594 = vmatprep.subr.mxu0 %v4040
    %4595 = vmatpush1.msra.mxu0 %v4039
    %4596 = vmatprep.subr.mxu0 %v4042
    %4597 = vmatpush1.msra.mxu0 %v4041
    %4598 = vmatprep.subr.mxu0 %v4044
    %4599 = vmatpush1.msra.mxu0 %v4043
    %4600 = vmatprep.subr.mxu0 %v4046
    %4601 = vmatpush1.msra.mxu0 %v4045
    %4602 = vmatprep.subr.mxu0 %v4048
    %4603 = vmatpush1.msra.mxu0 %v4047
    %4604 = vmatprep.subr.mxu0 %v4050
    %4605 = vmatpush1.msra.mxu0 %v4049
    %4606 = vmatprep.subr.mxu0 %v4052
    %4607 = vmatpush1.msra.mxu0 %v4051
    %4608 = vmatprep.subr.mxu0 %v4054
    %4609 = vmatpush1.msra.mxu0 %v4053
    %4610 = vmatprep.subr.mxu0 0.0
    %4611 = vmatpush1.msra.mxu0 0.0
    %4612 = vmatprep.subr.mxu0 0.0
    %4613 = vmatpush1.msra.mxu0 0.0
    %4614 = vmatprep.subr.mxu0 0.0
    %4615 = vmatpush1.msra.mxu0 0.0
    %4616 = vmatprep.subr.mxu0 0.0
    %4617 = vmatpush1.msra.mxu0 0.0
    %4618 = vmatprep.subr.mxu0 0.0
    %4619 = vmatpush1.msra.mxu0 0.0
    %4620 = vmatprep.subr.mxu0 0.0
    %4621 = vmatpush1.msra.mxu0 0.0
    %4622 = vmatprep.subr.mxu0 0.0
    %4623 = vmatpush1.msra.mxu0 0.0
    %4624 = vmatprep.subr.mxu0 0.0
    %4625 = vmatpush1.msra.mxu0 0.0
    %4626 = vmatprep.subr.mxu0 0.0
    %4627 = vmatpush1.msra.mxu0 0.0
    %4628 = vmatprep.subr.mxu0 0.0
    %4629 = vmatpush1.msra.mxu0 0.0
    %4630 = vmatprep.subr.mxu0 0.0
    %4631 = vmatpush1.msra.mxu0 0.0
    %4632 = vmatprep.subr.mxu0 0.0
    %4633 = vmatpush1.msra.mxu0 0.0
    %4634 = vmatprep.subr.mxu0 0.0
    %4635 = vmatpush1.msra.mxu0 0.0
    %4636 = vmatprep.subr.mxu0 0.0
    %4637 = vmatpush1.msra.mxu0 0.0
    %4638 = vmatprep.subr.mxu0 0.0
    %4639 = vmatpush1.msra.mxu0 0.0
    %4640 = vmatprep.subr.mxu0 0.0
    %4641 = vmatpush1.msra.mxu0 0.0
    %4642 = vmatprep.subr.mxu0 0.0
    %4643 = vmatpush1.msra.mxu0 0.0
    %4644 = vmatprep.subr.mxu0 0.0
    %4645 = vmatpush1.msra.mxu0 0.0
    %4646 = vmatprep.subr.mxu0 0.0
    %4647 = vmatpush1.msra.mxu0 0.0
    %4648 = vmatprep.subr.mxu0 0.0
    %4649 = vmatpush1.msra.mxu0 0.0
    %4650 = vmatprep.subr.mxu0 0.0
    %4651 = vmatpush1.msra.mxu0 0.0
    %4652 = vmatprep.subr.mxu0 0.0
    %4653 = vmatpush1.msra.mxu0 0.0
    %4654 = vmatprep.subr.mxu0 0.0
    %4655 = vmatpush1.msra.mxu0 0.0
    %4656 = vmatprep.subr.mxu0 0.0
    %4657 = vmatpush1.msra.mxu0 0.0
    %4658 = vmatprep.mubr.f32.mxu0 0.0
    %4659 = vmatmul.mubr.f32.gmra.mrb[0].mxu0 %v4592
    %v4660 = vpop.f32.mrb[0].mxu0
    %v4661 = vadd.f32 0.0, %v4660
    %v4662 = vpop.f32.mrb[0].mxu0
    %v4663 = vadd.f32 0.0, %v4662
    %4664 = vdwg.mxu0
    %v4667 = vcombine.low %v4661, %v4663
    %v4669 = vunpack.c.l.s4 1983009808
    %v4670 = vunpack.c.0.s8 %v4669
    %v4671 = vlaneseq
    %v4672 = vshrl.u32 %v4671, 7
    %v4673 = vsub.s32 %v4670, %v4672
    %v4674 = vrot.slane %v4667, %v4673
    %v4676 = vadd.f32 %v4591, %v4674
    %v4677 = vxor.u32 %v4676, 2147483648
    %v4678 = vmul.f32 %v4677, 1.442695
    %v4679 = vpow.pop %v4678
    %v4680 = vadd.f32 %v4679, 1.0
    %v4681 = vrcp.pop %v4680
    %v4682 = vmul.f32 1.0, %v4681
    %v4684 = vrot.slane %v4676, 2
    %v4686 = vtanh.pop %v4684
    %4687 = vrot.lane.b32.xlu0 %v4676, 64
    %v4688 = vpop.permute.xlu0 %4687
    %v4689 = vrot.slane %v4688, 2
    %v4691 = vxor.u32 %v4689, 2147483648
    %v4692 = vmul.f32 %v4691, 1.442695
    %v4693 = vpow.pop %v4692
    %v4694 = vadd.f32 %v4693, 1.0
    %v4695 = vrcp.pop %v4694
    %v4696 = vmul.f32 1.0, %v4695
    %v4697 = vmul.f32 %v4682, %v4569
    %v4698 = vmul.f32 %v4682, %v4686
    %4700 = vrot.lane.b32.xlu0 %v4698, 64
    %v4701 = vpop.permute.xlu0 %4700
    %v4703 = vadd.f32 %v4697, %v4701
    %v4704 = vtanh.pop %v4703
    %4706 = vrot.lane.b32.xlu0 %v4704, 64
    %v4707 = vpop.permute.xlu0 %4706
    %v4709 = vmul.f32 %v4696, %v4707
    %4710 = vst.msk [vmem:[%s1628] sm:$0x3] %vm1076, %v4709
    %v4713 = vunpack.c.l.s4 1983009808
    %v4714 = vunpack.c.0.s8 %v4713
    %v4715 = vlaneseq
    %v4716 = vshrl.u32 %v4715, 7
    %v4717 = vsub.s32 %v4714, %v4716
    %v4718 = vrot.slane %v4709, %v4717
    %4719 = vrot.lane.b32.xlu0 %v4718, 96
    %v4720 = vpop.permute.xlu0 %4719
    %4722 = vst.msk [vmem:[%s1641] sm:$0x3] %vm1076, %v4720
    %v4723 = vld [vmem:[%s1643] sm:$0xf]
    %v4724 = vld [vmem:[%s1645] sm:$0xf]
    %v4725 = vadd.f32 %v4723, %v4724
    %v4726 = vsel %vm957, %v4709, 0
    %4728 = vmatprep.subr.mxu0 %v4040
    %4729 = vmatpush1.msra.mxu0 %v4039
    %4730 = vmatprep.subr.mxu0 %v4042
    %4731 = vmatpush1.msra.mxu0 %v4041
    %4732 = vmatprep.subr.mxu0 %v4044
    %4733 = vmatpush1.msra.mxu0 %v4043
    %4734 = vmatprep.subr.mxu0 %v4046
    %4735 = vmatpush1.msra.mxu0 %v4045
    %4736 = vmatprep.subr.mxu0 %v4048
    %4737 = vmatpush1.msra.mxu0 %v4047
    %4738 = vmatprep.subr.mxu0 %v4050
    %4739 = vmatpush1.msra.mxu0 %v4049
    %4740 = vmatprep.subr.mxu0 %v4052
    %4741 = vmatpush1.msra.mxu0 %v4051
    %4742 = vmatprep.subr.mxu0 %v4054
    %4743 = vmatpush1.msra.mxu0 %v4053
    %4744 = vmatprep.subr.mxu0 0.0
    %4745 = vmatpush1.msra.mxu0 0.0
    %4746 = vmatprep.subr.mxu0 0.0
    %4747 = vmatpush1.msra.mxu0 0.0
    %4748 = vmatprep.subr.mxu0 0.0
    %4749 = vmatpush1.msra.mxu0 0.0
    %4750 = vmatprep.subr.mxu0 0.0
    %4751 = vmatpush1.msra.mxu0 0.0
    %4752 = vmatprep.subr.mxu0 0.0
    %4753 = vmatpush1.msra.mxu0 0.0
    %4754 = vmatprep.subr.mxu0 0.0
    %4755 = vmatpush1.msra.mxu0 0.0
    %4756 = vmatprep.subr.mxu0 0.0
    %4757 = vmatpush1.msra.mxu0 0.0
    %4758 = vmatprep.subr.mxu0 0.0
    %4759 = vmatpush1.msra.mxu0 0.0
    %4760 = vmatprep.subr.mxu0 0.0
    %4761 = vmatpush1.msra.mxu0 0.0
    %4762 = vmatprep.subr.mxu0 0.0
    %4763 = vmatpush1.msra.mxu0 0.0
    %4764 = vmatprep.subr.mxu0 0.0
    %4765 = vmatpush1.msra.mxu0 0.0
    %4766 = vmatprep.subr.mxu0 0.0
    %4767 = vmatpush1.msra.mxu0 0.0
    %4768 = vmatprep.subr.mxu0 0.0
    %4769 = vmatpush1.msra.mxu0 0.0
    %4770 = vmatprep.subr.mxu0 0.0
    %4771 = vmatpush1.msra.mxu0 0.0
    %4772 = vmatprep.subr.mxu0 0.0
    %4773 = vmatpush1.msra.mxu0 0.0
    %4774 = vmatprep.subr.mxu0 0.0
    %4775 = vmatpush1.msra.mxu0 0.0
    %4776 = vmatprep.subr.mxu0 0.0
    %4777 = vmatpush1.msra.mxu0 0.0
    %4778 = vmatprep.subr.mxu0 0.0
    %4779 = vmatpush1.msra.mxu0 0.0
    %4780 = vmatprep.subr.mxu0 0.0
    %4781 = vmatpush1.msra.mxu0 0.0
    %4782 = vmatprep.subr.mxu0 0.0
    %4783 = vmatpush1.msra.mxu0 0.0
    %4784 = vmatprep.subr.mxu0 0.0
    %4785 = vmatpush1.msra.mxu0 0.0
    %4786 = vmatprep.subr.mxu0 0.0
    %4787 = vmatpush1.msra.mxu0 0.0
    %4788 = vmatprep.subr.mxu0 0.0
    %4789 = vmatpush1.msra.mxu0 0.0
    %4790 = vmatprep.subr.mxu0 0.0
    %4791 = vmatpush1.msra.mxu0 0.0
    %4792 = vmatprep.mubr.f32.mxu0 0.0
    %4793 = vmatmul.mubr.f32.gmra.mrb[0].mxu0 %v4726
    %v4794 = vpop.f32.mrb[0].mxu0
    %v4795 = vadd.f32 0.0, %v4794
    %v4796 = vpop.f32.mrb[0].mxu0
    %v4797 = vadd.f32 0.0, %v4796
    %4798 = vdwg.mxu0
    %v4801 = vcombine.low %v4795, %v4797
    %v4803 = vunpack.c.l.s4 1983009808
    %v4804 = vunpack.c.0.s8 %v4803
    %v4805 = vlaneseq
    %v4806 = vshrl.u32 %v4805, 7
    %v4807 = vsub.s32 %v4804, %v4806
    %v4808 = vrot.slane %v4801, %v4807
    %v4810 = vadd.f32 %v4725, %v4808
    %v4811 = vxor.u32 %v4810, 2147483648
    %v4812 = vmul.f32 %v4811, 1.442695
    %v4813 = vpow.pop %v4812
    %v4814 = vadd.f32 %v4813, 1.0
    %v4815 = vrcp.pop %v4814
    %v4816 = vmul.f32 1.0, %v4815
    %v4818 = vrot.slane %v4810, 2
    %v4820 = vtanh.pop %v4818
    %4821 = vrot.lane.b32.xlu0 %v4810, 64
    %v4822 = vpop.permute.xlu0 %4821
    %v4823 = vrot.slane %v4822, 2
    %v4825 = vxor.u32 %v4823, 2147483648
    %v4826 = vmul.f32 %v4825, 1.442695
    %v4827 = vpow.pop %v4826
    %v4828 = vadd.f32 %v4827, 1.0
    %v4829 = vrcp.pop %v4828
    %v4830 = vmul.f32 1.0, %v4829
    %v4831 = vmul.f32 %v4816, %v4703
    %v4832 = vmul.f32 %v4816, %v4820
    %4834 = vrot.lane.b32.xlu0 %v4832, 64
    %v4835 = vpop.permute.xlu0 %4834
    %v4837 = vadd.f32 %v4831, %v4835
    %v4838 = vtanh.pop %v4837
    %4840 = vrot.lane.b32.xlu0 %v4838, 64
    %v4841 = vpop.permute.xlu0 %4840
    %v4843 = vmul.f32 %v4830, %v4841
    %4844 = vst.msk [vmem:[%s1766] sm:$0x3] %vm1076, %v4843
    %v4847 = vunpack.c.l.s4 1983009808
    %v4848 = vunpack.c.0.s8 %v4847
    %v4849 = vlaneseq
    %v4850 = vshrl.u32 %v4849, 7
    %v4851 = vsub.s32 %v4848, %v4850
    %v4852 = vrot.slane %v4843, %v4851
    %4853 = vrot.lane.b32.xlu0 %v4852, 96
    %v4854 = vpop.permute.xlu0 %4853
    %4856 = vst.msk [vmem:[%s1779] sm:$0x3] %vm1076, %v4854
    %v4857 = vld [vmem:[%s1781] sm:$0xf]
    %v4858 = vld [vmem:[%s1783] sm:$0xf]
    %v4859 = vadd.f32 %v4857, %v4858
    %v4860 = vsel %vm957, %v4843, 0
    %4862 = vmatprep.subr.mxu0 %v4040
    %4863 = vmatpush1.msra.mxu0 %v4039
    %4864 = vmatprep.subr.mxu0 %v4042
    %4865 = vmatpush1.msra.mxu0 %v4041
    %4866 = vmatprep.subr.mxu0 %v4044
    %4867 = vmatpush1.msra.mxu0 %v4043
    %4868 = vmatprep.subr.mxu0 %v4046
    %4869 = vmatpush1.msra.mxu0 %v4045
    %4870 = vmatprep.subr.mxu0 %v4048
    %4871 = vmatpush1.msra.mxu0 %v4047
    %4872 = vmatprep.subr.mxu0 %v4050
    %4873 = vmatpush1.msra.mxu0 %v4049
    %4874 = vmatprep.subr.mxu0 %v4052
    %4875 = vmatpush1.msra.mxu0 %v4051
    %4876 = vmatprep.subr.mxu0 %v4054
    %4877 = vmatpush1.msra.mxu0 %v4053
    %4878 = vmatprep.subr.mxu0 0.0
    %4879 = vmatpush1.msra.mxu0 0.0
    %4880 = vmatprep.subr.mxu0 0.0
    %4881 = vmatpush1.msra.mxu0 0.0
    %4882 = vmatprep.subr.mxu0 0.0
    %4883 = vmatpush1.msra.mxu0 0.0
    %4884 = vmatprep.subr.mxu0 0.0
    %4885 = vmatpush1.msra.mxu0 0.0
    %4886 = vmatprep.subr.mxu0 0.0
    %4887 = vmatpush1.msra.mxu0 0.0
    %4888 = vmatprep.subr.mxu0 0.0
    %4889 = vmatpush1.msra.mxu0 0.0
    %4890 = vmatprep.subr.mxu0 0.0
    %4891 = vmatpush1.msra.mxu0 0.0
    %4892 = vmatprep.subr.mxu0 0.0
    %4893 = vmatpush1.msra.mxu0 0.0
    %4894 = vmatprep.subr.mxu0 0.0
    %4895 = vmatpush1.msra.mxu0 0.0
    %4896 = vmatprep.subr.mxu0 0.0
    %4897 = vmatpush1.msra.mxu0 0.0
    %4898 = vmatprep.subr.mxu0 0.0
    %4899 = vmatpush1.msra.mxu0 0.0
    %4900 = vmatprep.subr.mxu0 0.0
    %4901 = vmatpush1.msra.mxu0 0.0
    %4902 = vmatprep.subr.mxu0 0.0
    %4903 = vmatpush1.msra.mxu0 0.0
    %4904 = vmatprep.subr.mxu0 0.0
    %4905 = vmatpush1.msra.mxu0 0.0
    %4906 = vmatprep.subr.mxu0 0.0
    %4907 = vmatpush1.msra.mxu0 0.0
    %4908 = vmatprep.subr.mxu0 0.0
    %4909 = vmatpush1.msra.mxu0 0.0
    %4910 = vmatprep.subr.mxu0 0.0
    %4911 = vmatpush1.msra.mxu0 0.0
    %4912 = vmatprep.subr.mxu0 0.0
    %4913 = vmatpush1.msra.mxu0 0.0
    %4914 = vmatprep.subr.mxu0 0.0
    %4915 = vmatpush1.msra.mxu0 0.0
    %4916 = vmatprep.subr.mxu0 0.0
    %4917 = vmatpush1.msra.mxu0 0.0
    %4918 = vmatprep.subr.mxu0 0.0
    %4919 = vmatpush1.msra.mxu0 0.0
    %4920 = vmatprep.subr.mxu0 0.0
    %4921 = vmatpush1.msra.mxu0 0.0
    %4922 = vmatprep.subr.mxu0 0.0
    %4923 = vmatpush1.msra.mxu0 0.0
    %4924 = vmatprep.subr.mxu0 0.0
    %4925 = vmatpush1.msra.mxu0 0.0
    %4926 = vmatprep.mubr.f32.mxu0 0.0
    %4927 = vmatmul.mubr.f32.gmra.mrb[0].mxu0 %v4860
    %v4928 = vpop.f32.mrb[0].mxu0
    %v4929 = vadd.f32 0.0, %v4928
    %v4930 = vpop.f32.mrb[0].mxu0
    %v4931 = vadd.f32 0.0, %v4930
    %4932 = vdwg.mxu0
    %v4935 = vcombine.low %v4929, %v4931
    %v4937 = vunpack.c.l.s4 1983009808
    %v4938 = vunpack.c.0.s8 %v4937
    %v4939 = vlaneseq
    %v4940 = vshrl.u32 %v4939, 7
    %v4941 = vsub.s32 %v4938, %v4940
    %v4942 = vrot.slane %v4935, %v4941
    %v4944 = vadd.f32 %v4859, %v4942
    %v4945 = vxor.u32 %v4944, 2147483648
    %v4946 = vmul.f32 %v4945, 1.442695
    %v4947 = vpow.pop %v4946
    %v4948 = vadd.f32 %v4947, 1.0
    %v4949 = vrcp.pop %v4948
    %v4950 = vmul.f32 1.0, %v4949
    %v4952 = vrot.slane %v4944, 2
    %v4954 = vtanh.pop %v4952
    %4955 = vrot.lane.b32.xlu0 %v4944, 64
    %v4956 = vpop.permute.xlu0 %4955
    %v4957 = vrot.slane %v4956, 2
    %v4959 = vxor.u32 %v4957, 2147483648
    %v4960 = vmul.f32 %v4959, 1.442695
    %v4961 = vpow.pop %v4960
    %v4962 = vadd.f32 %v4961, 1.0
    %v4963 = vrcp.pop %v4962
    %v4964 = vmul.f32 1.0, %v4963
    %v4965 = vmul.f32 %v4950, %v4837
    %v4966 = vmul.f32 %v4950, %v4954
    %4968 = vrot.lane.b32.xlu0 %v4966, 64
    %v4969 = vpop.permute.xlu0 %4968
    %v4971 = vadd.f32 %v4965, %v4969
    %v4972 = vtanh.pop %v4971
    %4974 = vrot.lane.b32.xlu0 %v4972, 64
    %v4975 = vpop.permute.xlu0 %4974
    %v4977 = vmul.f32 %v4964, %v4975
    %4978 = vst.msk [vmem:[%s1904] sm:$0x3] %vm1076, %v4977
    %v4981 = vunpack.c.l.s4 1983009808
    %v4982 = vunpack.c.0.s8 %v4981
    %v4983 = vlaneseq
    %v4984 = vshrl.u32 %v4983, 7
    %v4985 = vsub.s32 %v4982, %v4984
    %v4986 = vrot.slane %v4977, %v4985
    %4987 = vrot.lane.b32.xlu0 %v4986, 96
    %v4988 = vpop.permute.xlu0 %4987
    %4990 = vst.msk [vmem:[%s1917] sm:$0x3] %vm1076, %v4988
    %v4991 = vld [vmem:[%s1919] sm:$0xf]
    %v4992 = vld [vmem:[%s1921] sm:$0xf]
    %v4993 = vadd.f32 %v4991, %v4992
    %v4994 = vsel %vm957, %v4977, 0
    %4996 = vmatprep.subr.mxu0 %v4040
    %4997 = vmatpush1.msra.mxu0 %v4039
    %4998 = vmatprep.subr.mxu0 %v4042
    %4999 = vmatpush1.msra.mxu0 %v4041
    %5000 = vmatprep.subr.mxu0 %v4044
    %5001 = vmatpush1.msra.mxu0 %v4043
    %5002 = vmatprep.subr.mxu0 %v4046
    %5003 = vmatpush1.msra.mxu0 %v4045
    %5004 = vmatprep.subr.mxu0 %v4048
    %5005 = vmatpush1.msra.mxu0 %v4047
    %5006 = vmatprep.subr.mxu0 %v4050
    %5007 = vmatpush1.msra.mxu0 %v4049
    %5008 = vmatprep.subr.mxu0 %v4052
    %5009 = vmatpush1.msra.mxu0 %v4051
    %5010 = vmatprep.subr.mxu0 %v4054
    %5011 = vmatpush1.msra.mxu0 %v4053
    %5012 = vmatprep.subr.mxu0 0.0
    %5013 = vmatpush1.msra.mxu0 0.0
    %5014 = vmatprep.subr.mxu0 0.0
    %5015 = vmatpush1.msra.mxu0 0.0
    %5016 = vmatprep.subr.mxu0 0.0
    %5017 = vmatpush1.msra.mxu0 0.0
    %5018 = vmatprep.subr.mxu0 0.0
    %5019 = vmatpush1.msra.mxu0 0.0
    %5020 = vmatprep.subr.mxu0 0.0
    %5021 = vmatpush1.msra.mxu0 0.0
    %5022 = vmatprep.subr.mxu0 0.0
    %5023 = vmatpush1.msra.mxu0 0.0
    %5024 = vmatprep.subr.mxu0 0.0
    %5025 = vmatpush1.msra.mxu0 0.0
    %5026 = vmatprep.subr.mxu0 0.0
    %5027 = vmatpush1.msra.mxu0 0.0
    %5028 = vmatprep.subr.mxu0 0.0
    %5029 = vmatpush1.msra.mxu0 0.0
    %5030 = vmatprep.subr.mxu0 0.0
    %5031 = vmatpush1.msra.mxu0 0.0
    %5032 = vmatprep.subr.mxu0 0.0
    %5033 = vmatpush1.msra.mxu0 0.0
    %5034 = vmatprep.subr.mxu0 0.0
    %5035 = vmatpush1.msra.mxu0 0.0
    %5036 = vmatprep.subr.mxu0 0.0
    %5037 = vmatpush1.msra.mxu0 0.0
    %5038 = vmatprep.subr.mxu0 0.0
    %5039 = vmatpush1.msra.mxu0 0.0
    %5040 = vmatprep.subr.mxu0 0.0
    %5041 = vmatpush1.msra.mxu0 0.0
    %5042 = vmatprep.subr.mxu0 0.0
    %5043 = vmatpush1.msra.mxu0 0.0
    %5044 = vmatprep.subr.mxu0 0.0
    %5045 = vmatpush1.msra.mxu0 0.0
    %5046 = vmatprep.subr.mxu0 0.0
    %5047 = vmatpush1.msra.mxu0 0.0
    %5048 = vmatprep.subr.mxu0 0.0
    %5049 = vmatpush1.msra.mxu0 0.0
    %5050 = vmatprep.subr.mxu0 0.0
    %5051 = vmatpush1.msra.mxu0 0.0
    %5052 = vmatprep.subr.mxu0 0.0
    %5053 = vmatpush1.msra.mxu0 0.0
    %5054 = vmatprep.subr.mxu0 0.0
    %5055 = vmatpush1.msra.mxu0 0.0
    %5056 = vmatprep.subr.mxu0 0.0
    %5057 = vmatpush1.msra.mxu0 0.0
    %5058 = vmatprep.subr.mxu0 0.0
    %5059 = vmatpush1.msra.mxu0 0.0
    %5060 = vmatprep.mubr.f32.mxu0 0.0
    %5061 = vmatmul.mubr.f32.gmra.mrb[0].mxu0 %v4994
    %v5062 = vpop.f32.mrb[0].mxu0
    %v5063 = vadd.f32 0.0, %v5062
    %v5064 = vpop.f32.mrb[0].mxu0
    %v5065 = vadd.f32 0.0, %v5064
    %5066 = vdwg.mxu0
    %v5069 = vcombine.low %v5063, %v5065
    %v5071 = vunpack.c.l.s4 1983009808
    %v5072 = vunpack.c.0.s8 %v5071
    %v5073 = vlaneseq
    %v5074 = vshrl.u32 %v5073, 7
    %v5075 = vsub.s32 %v5072, %v5074
    %v5076 = vrot.slane %v5069, %v5075
    %v5078 = vadd.f32 %v4993, %v5076
    %v5079 = vxor.u32 %v5078, 2147483648
    %v5080 = vmul.f32 %v5079, 1.442695
    %v5081 = vpow.pop %v5080
    %v5082 = vadd.f32 %v5081, 1.0
    %v5083 = vrcp.pop %v5082
    %v5084 = vmul.f32 1.0, %v5083
    %v5086 = vrot.slane %v5078, 2
    %v5088 = vtanh.pop %v5086
    %5089 = vrot.lane.b32.xlu0 %v5078, 64
    %v5090 = vpop.permute.xlu0 %5089
    %v5091 = vrot.slane %v5090, 2
    %v5093 = vxor.u32 %v5091, 2147483648
    %v5094 = vmul.f32 %v5093, 1.442695
    %v5095 = vpow.pop %v5094
    %v5096 = vadd.f32 %v5095, 1.0
    %v5097 = vrcp.pop %v5096
    %v5098 = vmul.f32 1.0, %v5097
    %v5099 = vmul.f32 %v5084, %v4971
    %v5100 = vmul.f32 %v5084, %v5088
    %5102 = vrot.lane.b32.xlu0 %v5100, 64
    %v5103 = vpop.permute.xlu0 %5102
    %v5105 = vadd.f32 %v5099, %v5103
    %v5106 = vtanh.pop %v5105
    %5108 = vrot.lane.b32.xlu0 %v5106, 64
    %v5109 = vpop.permute.xlu0 %5108
    %v5111 = vmul.f32 %v5098, %v5109
    %5112 = vst.msk [vmem:[%s2042] sm:$0x3] %vm1076, %v5111
    %v5115 = vunpack.c.l.s4 1983009808
    %v5116 = vunpack.c.0.s8 %v5115
    %v5117 = vlaneseq
    %v5118 = vshrl.u32 %v5117, 7
    %v5119 = vsub.s32 %v5116, %v5118
    %v5120 = vrot.slane %v5111, %v5119
    %5121 = vrot.lane.b32.xlu0 %v5120, 96
    %v5122 = vpop.permute.xlu0 %5121
    %5124 = vst.msk [vmem:[%s2055] sm:$0x3] %vm1076, %v5122
    %v5125 = vld [vmem:[%s2057] sm:$0xf]
    %v5126 = vld [vmem:[%s2059] sm:$0xf]
    %v5127 = vadd.f32 %v5125, %v5126
    %v5128 = vsel %vm957, %v5111, 0
    %5130 = vmatprep.subr.mxu0 %v4040
    %5131 = vmatpush1.msra.mxu0 %v4039
    %5132 = vmatprep.subr.mxu0 %v4042
    %5133 = vmatpush1.msra.mxu0 %v4041
    %5134 = vmatprep.subr.mxu0 %v4044
    %5135 = vmatpush1.msra.mxu0 %v4043
    %5136 = vmatprep.subr.mxu0 %v4046
    %5137 = vmatpush1.msra.mxu0 %v4045
    %5138 = vmatprep.subr.mxu0 %v4048
    %5139 = vmatpush1.msra.mxu0 %v4047
    %5140 = vmatprep.subr.mxu0 %v4050
    %5141 = vmatpush1.msra.mxu0 %v4049
    %5142 = vmatprep.subr.mxu0 %v4052
    %5143 = vmatpush1.msra.mxu0 %v4051
    %5144 = vmatprep.subr.mxu0 %v4054
    %5145 = vmatpush1.msra.mxu0 %v4053
    %5146 = vmatprep.subr.mxu0 0.0
    %5147 = vmatpush1.msra.mxu0 0.0
    %5148 = vmatprep.subr.mxu0 0.0
    %5149 = vmatpush1.msra.mxu0 0.0
    %5150 = vmatprep.subr.mxu0 0.0
    %5151 = vmatpush1.msra.mxu0 0.0
    %5152 = vmatprep.subr.mxu0 0.0
    %5153 = vmatpush1.msra.mxu0 0.0
    %5154 = vmatprep.subr.mxu0 0.0
    %5155 = vmatpush1.msra.mxu0 0.0
    %5156 = vmatprep.subr.mxu0 0.0
    %5157 = vmatpush1.msra.mxu0 0.0
    %5158 = vmatprep.subr.mxu0 0.0
    %5159 = vmatpush1.msra.mxu0 0.0
    %5160 = vmatprep.subr.mxu0 0.0
    %5161 = vmatpush1.msra.mxu0 0.0
    %5162 = vmatprep.subr.mxu0 0.0
    %5163 = vmatpush1.msra.mxu0 0.0
    %5164 = vmatprep.subr.mxu0 0.0
    %5165 = vmatpush1.msra.mxu0 0.0
    %5166 = vmatprep.subr.mxu0 0.0
    %5167 = vmatpush1.msra.mxu0 0.0
    %5168 = vmatprep.subr.mxu0 0.0
    %5169 = vmatpush1.msra.mxu0 0.0
    %5170 = vmatprep.subr.mxu0 0.0
    %5171 = vmatpush1.msra.mxu0 0.0
    %5172 = vmatprep.subr.mxu0 0.0
    %5173 = vmatpush1.msra.mxu0 0.0
    %5174 = vmatprep.subr.mxu0 0.0
    %5175 = vmatpush1.msra.mxu0 0.0
    %5176 = vmatprep.subr.mxu0 0.0
    %5177 = vmatpush1.msra.mxu0 0.0
    %5178 = vmatprep.subr.mxu0 0.0
    %5179 = vmatpush1.msra.mxu0 0.0
    %5180 = vmatprep.subr.mxu0 0.0
    %5181 = vmatpush1.msra.mxu0 0.0
    %5182 = vmatprep.subr.mxu0 0.0
    %5183 = vmatpush1.msra.mxu0 0.0
    %5184 = vmatprep.subr.mxu0 0.0
    %5185 = vmatpush1.msra.mxu0 0.0
    %5186 = vmatprep.subr.mxu0 0.0
    %5187 = vmatpush1.msra.mxu0 0.0
    %5188 = vmatprep.subr.mxu0 0.0
    %5189 = vmatpush1.msra.mxu0 0.0
    %5190 = vmatprep.subr.mxu0 0.0
    %5191 = vmatpush1.msra.mxu0 0.0
    %5192 = vmatprep.subr.mxu0 0.0
    %5193 = vmatpush1.msra.mxu0 0.0
    %5194 = vmatprep.mubr.f32.mxu0 0.0
    %5195 = vmatmul.mubr.f32.gmra.mrb[0].mxu0 %v5128
    %v5196 = vpop.f32.mrb[0].mxu0
    %v5197 = vadd.f32 0.0, %v5196
    %v5198 = vpop.f32.mrb[0].mxu0
    %v5199 = vadd.f32 0.0, %v5198
    %5200 = vdwg.mxu0
    %v5203 = vcombine.low %v5197, %v5199
    %v5205 = vunpack.c.l.s4 1983009808
    %v5206 = vunpack.c.0.s8 %v5205
    %v5207 = vlaneseq
    %v5208 = vshrl.u32 %v5207, 7
    %v5209 = vsub.s32 %v5206, %v5208
    %v5210 = vrot.slane %v5203, %v5209
    %v5212 = vadd.f32 %v5127, %v5210
    %v5213 = vxor.u32 %v5212, 2147483648
    %v5214 = vmul.f32 %v5213, 1.442695
    %v5215 = vpow.pop %v5214
    %v5216 = vadd.f32 %v5215, 1.0
    %v5217 = vrcp.pop %v5216
    %v5218 = vmul.f32 1.0, %v5217
    %v5220 = vrot.slane %v5212, 2
    %v5222 = vtanh.pop %v5220
    %5223 = vrot.lane.b32.xlu0 %v5212, 64
    %v5224 = vpop.permute.xlu0 %5223
    %v5225 = vrot.slane %v5224, 2
    %v5227 = vxor.u32 %v5225, 2147483648
    %v5228 = vmul.f32 %v5227, 1.442695
    %v5229 = vpow.pop %v5228
    %v5230 = vadd.f32 %v5229, 1.0
    %v5231 = vrcp.pop %v5230
    %v5232 = vmul.f32 1.0, %v5231
    %v5233 = vmul.f32 %v5218, %v5105
    %v5234 = vmul.f32 %v5218, %v5222
    %5236 = vrot.lane.b32.xlu0 %v5234, 64
    %v5237 = vpop.permute.xlu0 %5236
    %v5239 = vadd.f32 %v5233, %v5237
    %v5240 = vtanh.pop %v5239
    %5242 = vrot.lane.b32.xlu0 %v5240, 64
    %v5243 = vpop.permute.xlu0 %5242
    %v5245 = vmul.f32 %v5232, %v5243
    %5246 = vst.msk [vmem:[%s2180] sm:$0x3] %vm1076, %v5245
    %v5249 = vunpack.c.l.s4 1983009808
    %v5250 = vunpack.c.0.s8 %v5249
    %v5251 = vlaneseq
    %v5252 = vshrl.u32 %v5251, 7
    %v5253 = vsub.s32 %v5250, %v5252
    %v5254 = vrot.slane %v5245, %v5253
    %5255 = vrot.lane.b32.xlu0 %v5254, 96
    %v5256 = vpop.permute.xlu0 %5255
    %5258 = vst.msk [vmem:[%s2193] sm:$0x3] %vm1076, %v5256
    %v5259 = vld [vmem:[%s2195] sm:$0xf]
    %v5260 = vld [vmem:[%s2197] sm:$0xf]
    %v5261 = vadd.f32 %v5259, %v5260
    %v5262 = vsel %vm957, %v5245, 0
    %5264 = vmatprep.subr.mxu0 %v4040
    %5265 = vmatpush1.msra.mxu0 %v4039
    %5266 = vmatprep.subr.mxu0 %v4042
    %5267 = vmatpush1.msra.mxu0 %v4041
    %5268 = vmatprep.subr.mxu0 %v4044
    %5269 = vmatpush1.msra.mxu0 %v4043
    %5270 = vmatprep.subr.mxu0 %v4046
    %5271 = vmatpush1.msra.mxu0 %v4045
    %5272 = vmatprep.subr.mxu0 %v4048
    %5273 = vmatpush1.msra.mxu0 %v4047
    %5274 = vmatprep.subr.mxu0 %v4050
    %5275 = vmatpush1.msra.mxu0 %v4049
    %5276 = vmatprep.subr.mxu0 %v4052
    %5277 = vmatpush1.msra.mxu0 %v4051
    %5278 = vmatprep.subr.mxu0 %v4054
    %5279 = vmatpush1.msra.mxu0 %v4053
    %5280 = vmatprep.subr.mxu0 0.0
    %5281 = vmatpush1.msra.mxu0 0.0
    %5282 = vmatprep.subr.mxu0 0.0
    %5283 = vmatpush1.msra.mxu0 0.0
    %5284 = vmatprep.subr.mxu0 0.0
    %5285 = vmatpush1.msra.mxu0 0.0
    %5286 = vmatprep.subr.mxu0 0.0
    %5287 = vmatpush1.msra.mxu0 0.0
    %5288 = vmatprep.subr.mxu0 0.0
    %5289 = vmatpush1.msra.mxu0 0.0
    %5290 = vmatprep.subr.mxu0 0.0
    %5291 = vmatpush1.msra.mxu0 0.0
    %5292 = vmatprep.subr.mxu0 0.0
    %5293 = vmatpush1.msra.mxu0 0.0
    %5294 = vmatprep.subr.mxu0 0.0
    %5295 = vmatpush1.msra.mxu0 0.0
    %5296 = vmatprep.subr.mxu0 0.0
    %5297 = vmatpush1.msra.mxu0 0.0
    %5298 = vmatprep.subr.mxu0 0.0
    %5299 = vmatpush1.msra.mxu0 0.0
    %5300 = vmatprep.subr.mxu0 0.0
    %5301 = vmatpush1.msra.mxu0 0.0
    %5302 = vmatprep.subr.mxu0 0.0
    %5303 = vmatpush1.msra.mxu0 0.0
    %5304 = vmatprep.subr.mxu0 0.0
    %5305 = vmatpush1.msra.mxu0 0.0
    %5306 = vmatprep.subr.mxu0 0.0
    %5307 = vmatpush1.msra.mxu0 0.0
    %5308 = vmatprep.subr.mxu0 0.0
    %5309 = vmatpush1.msra.mxu0 0.0
    %5310 = vmatprep.subr.mxu0 0.0
    %5311 = vmatpush1.msra.mxu0 0.0
    %5312 = vmatprep.subr.mxu0 0.0
    %5313 = vmatpush1.msra.mxu0 0.0
    %5314 = vmatprep.subr.mxu0 0.0
    %5315 = vmatpush1.msra.mxu0 0.0
    %5316 = vmatprep.subr.mxu0 0.0
    %5317 = vmatpush1.msra.mxu0 0.0
    %5318 = vmatprep.subr.mxu0 0.0
    %5319 = vmatpush1.msra.mxu0 0.0
    %5320 = vmatprep.subr.mxu0 0.0
    %5321 = vmatpush1.msra.mxu0 0.0
    %5322 = vmatprep.subr.mxu0 0.0
    %5323 = vmatpush1.msra.mxu0 0.0
    %5324 = vmatprep.subr.mxu0 0.0
    %5325 = vmatpush1.msra.mxu0 0.0
    %5326 = vmatprep.subr.mxu0 0.0
    %5327 = vmatpush1.msra.mxu0 0.0
    %5328 = vmatprep.mubr.f32.mxu0 0.0
    %5329 = vmatmul.mubr.f32.gmra.mrb[0].mxu0 %v5262
    %v5330 = vpop.f32.mrb[0].mxu0
    %v5331 = vadd.f32 0.0, %v5330
    %v5332 = vpop.f32.mrb[0].mxu0
    %v5333 = vadd.f32 0.0, %v5332
    %5334 = vdwg.mxu0
    %v5337 = vcombine.low %v5331, %v5333
    %v5339 = vunpack.c.l.s4 1983009808
    %v5340 = vunpack.c.0.s8 %v5339
    %v5341 = vlaneseq
    %v5342 = vshrl.u32 %v5341, 7
    %v5343 = vsub.s32 %v5340, %v5342
    %v5344 = vrot.slane %v5337, %v5343
    %v5346 = vadd.f32 %v5261, %v5344
    %v5347 = vxor.u32 %v5346, 2147483648
    %v5348 = vmul.f32 %v5347, 1.442695
    %v5349 = vpow.pop %v5348
    %v5350 = vadd.f32 %v5349, 1.0
    %v5351 = vrcp.pop %v5350
    %v5352 = vmul.f32 1.0, %v5351
    %v5354 = vrot.slane %v5346, 2
    %v5356 = vtanh.pop %v5354
    %5357 = vrot.lane.b32.xlu0 %v5346, 64
    %v5358 = vpop.permute.xlu0 %5357
    %v5359 = vrot.slane %v5358, 2
    %v5361 = vxor.u32 %v5359, 2147483648
    %v5362 = vmul.f32 %v5361, 1.442695
    %v5363 = vpow.pop %v5362
    %v5364 = vadd.f32 %v5363, 1.0
    %v5365 = vrcp.pop %v5364
    %v5366 = vmul.f32 1.0, %v5365
    %v5367 = vmul.f32 %v5352, %v5239
    %v5368 = vmul.f32 %v5352, %v5356
    %5370 = vrot.lane.b32.xlu0 %v5368, 64
    %v5371 = vpop.permute.xlu0 %5370
    %v5373 = vadd.f32 %v5367, %v5371
    %v5374 = vtanh.pop %v5373
    %5376 = vrot.lane.b32.xlu0 %v5374, 64
    %v5377 = vpop.permute.xlu0 %5376
    %v5379 = vmul.f32 %v5366, %v5377
    %5380 = vst.msk [vmem:[%s2318] sm:$0x3] %vm1076, %v5379
    %v5383 = vunpack.c.l.s4 1983009808
    %v5384 = vunpack.c.0.s8 %v5383
    %v5385 = vlaneseq
    %v5386 = vshrl.u32 %v5385, 7
    %v5387 = vsub.s32 %v5384, %v5386
    %v5388 = vrot.slane %v5379, %v5387
    %5389 = vrot.lane.b32.xlu0 %v5388, 96
    %v5390 = vpop.permute.xlu0 %5389
    %5392 = vst.msk [vmem:[%s2331] sm:$0x3] %vm1076, %v5390
    %v5393 = vld [vmem:[%s2333] sm:$0xf]
    %v5394 = vld [vmem:[%s2335] sm:$0xf]
    %v5395 = vadd.f32 %v5393, %v5394
    %v5396 = vsel %vm957, %v5379, 0
    %5398 = vmatprep.subr.mxu0 %v4040
    %5399 = vmatpush1.msra.mxu0 %v4039
    %5400 = vmatprep.subr.mxu0 %v4042
    %5401 = vmatpush1.msra.mxu0 %v4041
    %5402 = vmatprep.subr.mxu0 %v4044
    %5403 = vmatpush1.msra.mxu0 %v4043
    %5404 = vmatprep.subr.mxu0 %v4046
    %5405 = vmatpush1.msra.mxu0 %v4045
    %5406 = vmatprep.subr.mxu0 %v4048
    %5407 = vmatpush1.msra.mxu0 %v4047
    %5408 = vmatprep.subr.mxu0 %v4050
    %5409 = vmatpush1.msra.mxu0 %v4049
    %5410 = vmatprep.subr.mxu0 %v4052
    %5411 = vmatpush1.msra.mxu0 %v4051
    %5412 = vmatprep.subr.mxu0 %v4054
    %5413 = vmatpush1.msra.mxu0 %v4053
    %5414 = vmatprep.subr.mxu0 0.0
    %5415 = vmatpush1.msra.mxu0 0.0
    %5416 = vmatprep.subr.mxu0 0.0
    %5417 = vmatpush1.msra.mxu0 0.0
    %5418 = vmatprep.subr.mxu0 0.0
    %5419 = vmatpush1.msra.mxu0 0.0
    %5420 = vmatprep.subr.mxu0 0.0
    %5421 = vmatpush1.msra.mxu0 0.0
    %5422 = vmatprep.subr.mxu0 0.0
    %5423 = vmatpush1.msra.mxu0 0.0
    %5424 = vmatprep.subr.mxu0 0.0
    %5425 = vmatpush1.msra.mxu0 0.0
    %5426 = vmatprep.subr.mxu0 0.0
    %5427 = vmatpush1.msra.mxu0 0.0
    %5428 = vmatprep.subr.mxu0 0.0
    %5429 = vmatpush1.msra.mxu0 0.0
    %5430 = vmatprep.subr.mxu0 0.0
    %5431 = vmatpush1.msra.mxu0 0.0
    %5432 = vmatprep.subr.mxu0 0.0
    %5433 = vmatpush1.msra.mxu0 0.0
    %5434 = vmatprep.subr.mxu0 0.0
    %5435 = vmatpush1.msra.mxu0 0.0
    %5436 = vmatprep.subr.mxu0 0.0
    %5437 = vmatpush1.msra.mxu0 0.0
    %5438 = vmatprep.subr.mxu0 0.0
    %5439 = vmatpush1.msra.mxu0 0.0
    %5440 = vmatprep.subr.mxu0 0.0
    %5441 = vmatpush1.msra.mxu0 0.0
    %5442 = vmatprep.subr.mxu0 0.0
    %5443 = vmatpush1.msra.mxu0 0.0
    %5444 = vmatprep.subr.mxu0 0.0
    %5445 = vmatpush1.msra.mxu0 0.0
    %5446 = vmatprep.subr.mxu0 0.0
    %5447 = vmatpush1.msra.mxu0 0.0
    %5448 = vmatprep.subr.mxu0 0.0
    %5449 = vmatpush1.msra.mxu0 0.0
    %5450 = vmatprep.subr.mxu0 0.0
    %5451 = vmatpush1.msra.mxu0 0.0
    %5452 = vmatprep.subr.mxu0 0.0
    %5453 = vmatpush1.msra.mxu0 0.0
    %5454 = vmatprep.subr.mxu0 0.0
    %5455 = vmatpush1.msra.mxu0 0.0
    %5456 = vmatprep.subr.mxu0 0.0
    %5457 = vmatpush1.msra.mxu0 0.0
    %5458 = vmatprep.subr.mxu0 0.0
    %5459 = vmatpush1.msra.mxu0 0.0
    %5460 = vmatprep.subr.mxu0 0.0
    %5461 = vmatpush1.msra.mxu0 0.0
    %5462 = vmatprep.mubr.f32.mxu0 0.0
    %5463 = vmatmul.mubr.f32.gmra.mrb[0].mxu0 %v5396
    %v5464 = vpop.f32.mrb[0].mxu0
    %v5465 = vadd.f32 0.0, %v5464
    %v5466 = vpop.f32.mrb[0].mxu0
    %v5467 = vadd.f32 0.0, %v5466
    %5468 = vdwg.mxu0
    %v5471 = vcombine.low %v5465, %v5467
    %v5473 = vunpack.c.l.s4 1983009808
    %v5474 = vunpack.c.0.s8 %v5473
    %v5475 = vlaneseq
    %v5476 = vshrl.u32 %v5475, 7
    %v5477 = vsub.s32 %v5474, %v5476
    %v5478 = vrot.slane %v5471, %v5477
    %v5480 = vadd.f32 %v5395, %v5478
    %v5481 = vxor.u32 %v5480, 2147483648
    %v5482 = vmul.f32 %v5481, 1.442695
    %v5483 = vpow.pop %v5482
    %v5484 = vadd.f32 %v5483, 1.0
    %v5485 = vrcp.pop %v5484
    %v5486 = vmul.f32 1.0, %v5485
    %v5488 = vrot.slane %v5480, 2
    %v5490 = vtanh.pop %v5488
    %5491 = vrot.lane.b32.xlu0 %v5480, 64
    %v5492 = vpop.permute.xlu0 %5491
    %v5493 = vrot.slane %v5492, 2
    %v5495 = vxor.u32 %v5493, 2147483648
    %v5496 = vmul.f32 %v5495, 1.442695
    %v5497 = vpow.pop %v5496
    %v5498 = vadd.f32 %v5497, 1.0
    %v5499 = vrcp.pop %v5498
    %v5500 = vmul.f32 1.0, %v5499
    %v5501 = vmul.f32 %v5486, %v5373
    %v5502 = vmul.f32 %v5486, %v5490
    %5504 = vrot.lane.b32.xlu0 %v5502, 64
    %v5505 = vpop.permute.xlu0 %5504
    %v5507 = vadd.f32 %v5501, %v5505
    %v5508 = vtanh.pop %v5507
    %5510 = vrot.lane.b32.xlu0 %v5508, 64
    %v5511 = vpop.permute.xlu0 %5510
    %v5513 = vmul.f32 %v5500, %v5511
    %5514 = vst.msk [vmem:[%s2456] sm:$0x3] %vm1076, %v5513
    %v5517 = vunpack.c.l.s4 1983009808
    %v5518 = vunpack.c.0.s8 %v5517
    %v5519 = vlaneseq
    %v5520 = vshrl.u32 %v5519, 7
    %v5521 = vsub.s32 %v5518, %v5520
    %v5522 = vrot.slane %v5513, %v5521
    %5523 = vrot.lane.b32.xlu0 %v5522, 96
    %v5524 = vpop.permute.xlu0 %5523
    %5526 = vst.msk [vmem:[%s2469] sm:$0x3] %vm1076, %v5524
    %v5527 = vld [vmem:[%s2471] sm:$0xf]
    %v5528 = vld [vmem:[%s2473] sm:$0xf]
    %v5529 = vadd.f32 %v5527, %v5528
    %v5530 = vsel %vm957, %v5513, 0
    %5532 = vmatprep.subr.mxu0 %v4040
    %5533 = vmatpush1.msra.mxu0 %v4039
    %5534 = vmatprep.subr.mxu0 %v4042
    %5535 = vmatpush1.msra.mxu0 %v4041
    %5536 = vmatprep.subr.mxu0 %v4044
    %5537 = vmatpush1.msra.mxu0 %v4043
    %5538 = vmatprep.subr.mxu0 %v4046
    %5539 = vmatpush1.msra.mxu0 %v4045
    %5540 = vmatprep.subr.mxu0 %v4048
    %5541 = vmatpush1.msra.mxu0 %v4047
    %5542 = vmatprep.subr.mxu0 %v4050
    %5543 = vmatpush1.msra.mxu0 %v4049
    %5544 = vmatprep.subr.mxu0 %v4052
    %5545 = vmatpush1.msra.mxu0 %v4051
    %5546 = vmatprep.subr.mxu0 %v4054
    %5547 = vmatpush1.msra.mxu0 %v4053
    %5548 = vmatprep.subr.mxu0 0.0
    %5549 = vmatpush1.msra.mxu0 0.0
    %5550 = vmatprep.subr.mxu0 0.0
    %5551 = vmatpush1.msra.mxu0 0.0
    %5552 = vmatprep.subr.mxu0 0.0
    %5553 = vmatpush1.msra.mxu0 0.0
    %5554 = vmatprep.subr.mxu0 0.0
    %5555 = vmatpush1.msra.mxu0 0.0
    %5556 = vmatprep.subr.mxu0 0.0
    %5557 = vmatpush1.msra.mxu0 0.0
    %5558 = vmatprep.subr.mxu0 0.0
    %5559 = vmatpush1.msra.mxu0 0.0
    %5560 = vmatprep.subr.mxu0 0.0
    %5561 = vmatpush1.msra.mxu0 0.0
    %5562 = vmatprep.subr.mxu0 0.0
    %5563 = vmatpush1.msra.mxu0 0.0
    %5564 = vmatprep.subr.mxu0 0.0
    %5565 = vmatpush1.msra.mxu0 0.0
    %5566 = vmatprep.subr.mxu0 0.0
    %5567 = vmatpush1.msra.mxu0 0.0
    %5568 = vmatprep.subr.mxu0 0.0
    %5569 = vmatpush1.msra.mxu0 0.0
    %5570 = vmatprep.subr.mxu0 0.0
    %5571 = vmatpush1.msra.mxu0 0.0
    %5572 = vmatprep.subr.mxu0 0.0
    %5573 = vmatpush1.msra.mxu0 0.0
    %5574 = vmatprep.subr.mxu0 0.0
    %5575 = vmatpush1.msra.mxu0 0.0
    %5576 = vmatprep.subr.mxu0 0.0
    %5577 = vmatpush1.msra.mxu0 0.0
    %5578 = vmatprep.subr.mxu0 0.0
    %5579 = vmatpush1.msra.mxu0 0.0
    %5580 = vmatprep.subr.mxu0 0.0
    %5581 = vmatpush1.msra.mxu0 0.0
    %5582 = vmatprep.subr.mxu0 0.0
    %5583 = vmatpush1.msra.mxu0 0.0
    %5584 = vmatprep.subr.mxu0 0.0
    %5585 = vmatpush1.msra.mxu0 0.0
    %5586 = vmatprep.subr.mxu0 0.0
    %5587 = vmatpush1.msra.mxu0 0.0
    %5588 = vmatprep.subr.mxu0 0.0
    %5589 = vmatpush1.msra.mxu0 0.0
    %5590 = vmatprep.subr.mxu0 0.0
    %5591 = vmatpush1.msra.mxu0 0.0
    %5592 = vmatprep.subr.mxu0 0.0
    %5593 = vmatpush1.msra.mxu0 0.0
    %5594 = vmatprep.subr.mxu0 0.0
    %5595 = vmatpush1.msra.mxu0 0.0
    %5596 = vmatprep.mubr.f32.mxu0 0.0
    %5597 = vmatmul.mubr.f32.gmra.mrb[0].mxu0 %v5530
    %v5598 = vpop.f32.mrb[0].mxu0
    %v5599 = vadd.f32 0.0, %v5598
    %v5600 = vpop.f32.mrb[0].mxu0
    %v5601 = vadd.f32 0.0, %v5600
    %5602 = vdwg.mxu0
    %v5605 = vcombine.low %v5599, %v5601
    %v5607 = vunpack.c.l.s4 1983009808
    %v5608 = vunpack.c.0.s8 %v5607
    %v5609 = vlaneseq
    %v5610 = vshrl.u32 %v5609, 7
    %v5611 = vsub.s32 %v5608, %v5610
    %v5612 = vrot.slane %v5605, %v5611
    %v5614 = vadd.f32 %v5529, %v5612
    %v5615 = vxor.u32 %v5614, 2147483648
    %v5616 = vmul.f32 %v5615, 1.442695
    %v5617 = vpow.pop %v5616
    %v5618 = vadd.f32 %v5617, 1.0
    %v5619 = vrcp.pop %v5618
    %v5620 = vmul.f32 1.0, %v5619
    %v5622 = vrot.slane %v5614, 2
    %v5624 = vtanh.pop %v5622
    %5625 = vrot.lane.b32.xlu0 %v5614, 64
    %v5626 = vpop.permute.xlu0 %5625
    %v5627 = vrot.slane %v5626, 2
    %v5629 = vxor.u32 %v5627, 2147483648
    %v5630 = vmul.f32 %v5629, 1.442695
    %v5631 = vpow.pop %v5630
    %v5632 = vadd.f32 %v5631, 1.0
    %v5633 = vrcp.pop %v5632
    %v5634 = vmul.f32 1.0, %v5633
    %v5635 = vmul.f32 %v5620, %v5507
    %v5636 = vmul.f32 %v5620, %v5624
    %5638 = vrot.lane.b32.xlu0 %v5636, 64
    %v5639 = vpop.permute.xlu0 %5638
    %v5641 = vadd.f32 %v5635, %v5639
    %v5642 = vtanh.pop %v5641
    %5644 = vrot.lane.b32.xlu0 %v5642, 64
    %v5645 = vpop.permute.xlu0 %5644
    %v5647 = vmul.f32 %v5634, %v5645
    %5648 = vst.msk [vmem:[%s2594] sm:$0x3] %vm1076, %v5647
    %v5651 = vunpack.c.l.s4 1983009808
    %v5652 = vunpack.c.0.s8 %v5651
    %v5653 = vlaneseq
    %v5654 = vshrl.u32 %v5653, 7
    %v5655 = vsub.s32 %v5652, %v5654
    %v5656 = vrot.slane %v5647, %v5655
    %5657 = vrot.lane.b32.xlu0 %v5656, 96
    %v5658 = vpop.permute.xlu0 %5657
    %5660 = vst.msk [vmem:[%s2607] sm:$0x3] %vm1076, %v5658
    %v5661 = vld [vmem:[%s2609] sm:$0xf]
    %v5662 = vld [vmem:[%s2611] sm:$0xf]
    %v5663 = vadd.f32 %v5661, %v5662
    %v5664 = vsel %vm957, %v5647, 0
    %5666 = vmatprep.subr.mxu0 %v4040
    %5667 = vmatpush1.msra.mxu0 %v4039
    %5668 = vmatprep.subr.mxu0 %v4042
    %5669 = vmatpush1.msra.mxu0 %v4041
    %5670 = vmatprep.subr.mxu0 %v4044
    %5671 = vmatpush1.msra.mxu0 %v4043
    %5672 = vmatprep.subr.mxu0 %v4046
    %5673 = vmatpush1.msra.mxu0 %v4045
    %5674 = vmatprep.subr.mxu0 %v4048
    %5675 = vmatpush1.msra.mxu0 %v4047
    %5676 = vmatprep.subr.mxu0 %v4050
    %5677 = vmatpush1.msra.mxu0 %v4049
    %5678 = vmatprep.subr.mxu0 %v4052
    %5679 = vmatpush1.msra.mxu0 %v4051
    %5680 = vmatprep.subr.mxu0 %v4054
    %5681 = vmatpush1.msra.mxu0 %v4053
    %5682 = vmatprep.subr.mxu0 0.0
    %5683 = vmatpush1.msra.mxu0 0.0
    %5684 = vmatprep.subr.mxu0 0.0
    %5685 = vmatpush1.msra.mxu0 0.0
    %5686 = vmatprep.subr.mxu0 0.0
    %5687 = vmatpush1.msra.mxu0 0.0
    %5688 = vmatprep.subr.mxu0 0.0
    %5689 = vmatpush1.msra.mxu0 0.0
    %5690 = vmatprep.subr.mxu0 0.0
    %5691 = vmatpush1.msra.mxu0 0.0
    %5692 = vmatprep.subr.mxu0 0.0
    %5693 = vmatpush1.msra.mxu0 0.0
    %5694 = vmatprep.subr.mxu0 0.0
    %5695 = vmatpush1.msra.mxu0 0.0
    %5696 = vmatprep.subr.mxu0 0.0
    %5697 = vmatpush1.msra.mxu0 0.0
    %5698 = vmatprep.subr.mxu0 0.0
    %5699 = vmatpush1.msra.mxu0 0.0
    %5700 = vmatprep.subr.mxu0 0.0
    %5701 = vmatpush1.msra.mxu0 0.0
    %5702 = vmatprep.subr.mxu0 0.0
    %5703 = vmatpush1.msra.mxu0 0.0
    %5704 = vmatprep.subr.mxu0 0.0
    %5705 = vmatpush1.msra.mxu0 0.0
    %5706 = vmatprep.subr.mxu0 0.0
    %5707 = vmatpush1.msra.mxu0 0.0
    %5708 = vmatprep.subr.mxu0 0.0
    %5709 = vmatpush1.msra.mxu0 0.0
    %5710 = vmatprep.subr.mxu0 0.0
    %5711 = vmatpush1.msra.mxu0 0.0
    %5712 = vmatprep.subr.mxu0 0.0
    %5713 = vmatpush1.msra.mxu0 0.0
    %5714 = vmatprep.subr.mxu0 0.0
    %5715 = vmatpush1.msra.mxu0 0.0
    %5716 = vmatprep.subr.mxu0 0.0
    %5717 = vmatpush1.msra.mxu0 0.0
    %5718 = vmatprep.subr.mxu0 0.0
    %5719 = vmatpush1.msra.mxu0 0.0
    %5720 = vmatprep.subr.mxu0 0.0
    %5721 = vmatpush1.msra.mxu0 0.0
    %5722 = vmatprep.subr.mxu0 0.0
    %5723 = vmatpush1.msra.mxu0 0.0
    %5724 = vmatprep.subr.mxu0 0.0
    %5725 = vmatpush1.msra.mxu0 0.0
    %5726 = vmatprep.subr.mxu0 0.0
    %5727 = vmatpush1.msra.mxu0 0.0
    %5728 = vmatprep.subr.mxu0 0.0
    %5729 = vmatpush1.msra.mxu0 0.0
    %5730 = vmatprep.mubr.f32.mxu0 0.0
    %5731 = vmatmul.mubr.f32.gmra.mrb[0].mxu0 %v5664
    %v5732 = vpop.f32.mrb[0].mxu0
    %v5733 = vadd.f32 0.0, %v5732
    %v5734 = vpop.f32.mrb[0].mxu0
    %v5735 = vadd.f32 0.0, %v5734
    %5736 = vdwg.mxu0
    %v5739 = vcombine.low %v5733, %v5735
    %v5741 = vunpack.c.l.s4 1983009808
    %v5742 = vunpack.c.0.s8 %v5741
    %v5743 = vlaneseq
    %v5744 = vshrl.u32 %v5743, 7
    %v5745 = vsub.s32 %v5742, %v5744
    %v5746 = vrot.slane %v5739, %v5745
    %v5748 = vadd.f32 %v5663, %v5746
    %v5749 = vxor.u32 %v5748, 2147483648
    %v5750 = vmul.f32 %v5749, 1.442695
    %v5751 = vpow.pop %v5750
    %v5752 = vadd.f32 %v5751, 1.0
    %v5753 = vrcp.pop %v5752
    %v5754 = vmul.f32 1.0, %v5753
    %v5756 = vrot.slane %v5748, 2
    %v5758 = vtanh.pop %v5756
    %5759 = vrot.lane.b32.xlu0 %v5748, 64
    %v5760 = vpop.permute.xlu0 %5759
    %v5761 = vrot.slane %v5760, 2
    %v5763 = vxor.u32 %v5761, 2147483648
    %v5764 = vmul.f32 %v5763, 1.442695
    %v5765 = vpow.pop %v5764
    %v5766 = vadd.f32 %v5765, 1.0
    %v5767 = vrcp.pop %v5766
    %v5768 = vmul.f32 1.0, %v5767
    %v5769 = vmul.f32 %v5754, %v5641
    %v5770 = vmul.f32 %v5754, %v5758
    %5772 = vrot.lane.b32.xlu0 %v5770, 64
    %v5773 = vpop.permute.xlu0 %5772
    %v5775 = vadd.f32 %v5769, %v5773
    %v5776 = vtanh.pop %v5775
    %5778 = vrot.lane.b32.xlu0 %v5776, 64
    %v5779 = vpop.permute.xlu0 %5778
    %v5781 = vmul.f32 %v5768, %v5779
    %5782 = vst.msk [vmem:[%s2732] sm:$0x3] %vm1076, %v5781
    %v5785 = vunpack.c.l.s4 1983009808
    %v5786 = vunpack.c.0.s8 %v5785
    %v5787 = vlaneseq
    %v5788 = vshrl.u32 %v5787, 7
    %v5789 = vsub.s32 %v5786, %v5788
    %v5790 = vrot.slane %v5781, %v5789
    %5791 = vrot.lane.b32.xlu0 %v5790, 96
    %v5792 = vpop.permute.xlu0 %5791
    %5794 = vst.msk [vmem:[%s2745] sm:$0x3] %vm1076, %v5792
    %v5795 = vld [vmem:[%s2747] sm:$0xf]
    %v5796 = vld [vmem:[%s2749] sm:$0xf]
    %v5797 = vadd.f32 %v5795, %v5796
    %v5798 = vsel %vm957, %v5781, 0
    %5800 = vmatprep.subr.mxu0 %v4040
    %5801 = vmatpush1.msra.mxu0 %v4039
    %5802 = vmatprep.subr.mxu0 %v4042
    %5803 = vmatpush1.msra.mxu0 %v4041
    %5804 = vmatprep.subr.mxu0 %v4044
    %5805 = vmatpush1.msra.mxu0 %v4043
    %5806 = vmatprep.subr.mxu0 %v4046
    %5807 = vmatpush1.msra.mxu0 %v4045
    %5808 = vmatprep.subr.mxu0 %v4048
    %5809 = vmatpush1.msra.mxu0 %v4047
    %5810 = vmatprep.subr.mxu0 %v4050
    %5811 = vmatpush1.msra.mxu0 %v4049
    %5812 = vmatprep.subr.mxu0 %v4052
    %5813 = vmatpush1.msra.mxu0 %v4051
    %5814 = vmatprep.subr.mxu0 %v4054
    %5815 = vmatpush1.msra.mxu0 %v4053
    %5816 = vmatprep.subr.mxu0 0.0
    %5817 = vmatpush1.msra.mxu0 0.0
    %5818 = vmatprep.subr.mxu0 0.0
    %5819 = vmatpush1.msra.mxu0 0.0
    %5820 = vmatprep.subr.mxu0 0.0
    %5821 = vmatpush1.msra.mxu0 0.0
    %5822 = vmatprep.subr.mxu0 0.0
    %5823 = vmatpush1.msra.mxu0 0.0
    %5824 = vmatprep.subr.mxu0 0.0
    %5825 = vmatpush1.msra.mxu0 0.0
    %5826 = vmatprep.subr.mxu0 0.0
    %5827 = vmatpush1.msra.mxu0 0.0
    %5828 = vmatprep.subr.mxu0 0.0
    %5829 = vmatpush1.msra.mxu0 0.0
    %5830 = vmatprep.subr.mxu0 0.0
    %5831 = vmatpush1.msra.mxu0 0.0
    %5832 = vmatprep.subr.mxu0 0.0
    %5833 = vmatpush1.msra.mxu0 0.0
    %5834 = vmatprep.subr.mxu0 0.0
    %5835 = vmatpush1.msra.mxu0 0.0
    %5836 = vmatprep.subr.mxu0 0.0
    %5837 = vmatpush1.msra.mxu0 0.0
    %5838 = vmatprep.subr.mxu0 0.0
    %5839 = vmatpush1.msra.mxu0 0.0
    %5840 = vmatprep.subr.mxu0 0.0
    %5841 = vmatpush1.msra.mxu0 0.0
    %5842 = vmatprep.subr.mxu0 0.0
    %5843 = vmatpush1.msra.mxu0 0.0
    %5844 = vmatprep.subr.mxu0 0.0
    %5845 = vmatpush1.msra.mxu0 0.0
    %5846 = vmatprep.subr.mxu0 0.0
    %5847 = vmatpush1.msra.mxu0 0.0
    %5848 = vmatprep.subr.mxu0 0.0
    %5849 = vmatpush1.msra.mxu0 0.0
    %5850 = vmatprep.subr.mxu0 0.0
    %5851 = vmatpush1.msra.mxu0 0.0
    %5852 = vmatprep.subr.mxu0 0.0
    %5853 = vmatpush1.msra.mxu0 0.0
    %5854 = vmatprep.subr.mxu0 0.0
    %5855 = vmatpush1.msra.mxu0 0.0
    %5856 = vmatprep.subr.mxu0 0.0
    %5857 = vmatpush1.msra.mxu0 0.0
    %5858 = vmatprep.subr.mxu0 0.0
    %5859 = vmatpush1.msra.mxu0 0.0
    %5860 = vmatprep.subr.mxu0 0.0
    %5861 = vmatpush1.msra.mxu0 0.0
    %5862 = vmatprep.subr.mxu0 0.0
    %5863 = vmatpush1.msra.mxu0 0.0
    %5864 = vmatprep.mubr.f32.mxu0 0.0
    %5865 = vmatmul.mubr.f32.gmra.mrb[0].mxu0 %v5798
    %v5866 = vpop.f32.mrb[0].mxu0
    %v5867 = vadd.f32 0.0, %v5866
    %v5868 = vpop.f32.mrb[0].mxu0
    %v5869 = vadd.f32 0.0, %v5868
    %5870 = vdwg.mxu0
    %v5873 = vcombine.low %v5867, %v5869
    %v5875 = vunpack.c.l.s4 1983009808
    %v5876 = vunpack.c.0.s8 %v5875
    %v5877 = vlaneseq
    %v5878 = vshrl.u32 %v5877, 7
    %v5879 = vsub.s32 %v5876, %v5878
    %v5880 = vrot.slane %v5873, %v5879
    %v5882 = vadd.f32 %v5797, %v5880
    %v5883 = vxor.u32 %v5882, 2147483648
    %v5884 = vmul.f32 %v5883, 1.442695
    %v5885 = vpow.pop %v5884
    %v5886 = vadd.f32 %v5885, 1.0
    %v5887 = vrcp.pop %v5886
    %v5888 = vmul.f32 1.0, %v5887
    %v5890 = vrot.slane %v5882, 2
    %v5892 = vtanh.pop %v5890
    %5893 = vrot.lane.b32.xlu0 %v5882, 64
    %v5894 = vpop.permute.xlu0 %5893
    %v5895 = vrot.slane %v5894, 2
    %v5897 = vxor.u32 %v5895, 2147483648
    %v5898 = vmul.f32 %v5897, 1.442695
    %v5899 = vpow.pop %v5898
    %v5900 = vadd.f32 %v5899, 1.0
    %v5901 = vrcp.pop %v5900
    %v5902 = vmul.f32 1.0, %v5901
    %v5903 = vmul.f32 %v5888, %v5775
    %v5904 = vmul.f32 %v5888, %v5892
    %5906 = vrot.lane.b32.xlu0 %v5904, 64
    %v5907 = vpop.permute.xlu0 %5906
    %v5909 = vadd.f32 %v5903, %v5907
    %v5910 = vtanh.pop %v5909
    %5912 = vrot.lane.b32.xlu0 %v5910, 64
    %v5913 = vpop.permute.xlu0 %5912
    %v5915 = vmul.f32 %v5902, %v5913
    %5916 = vst.msk [vmem:[%s2870] sm:$0x3] %vm1076, %v5915
    %v5919 = vunpack.c.l.s4 1983009808
    %v5920 = vunpack.c.0.s8 %v5919
    %v5921 = vlaneseq
    %v5922 = vshrl.u32 %v5921, 7
    %v5923 = vsub.s32 %v5920, %v5922
    %v5924 = vrot.slane %v5915, %v5923
    %5925 = vrot.lane.b32.xlu0 %v5924, 96
    %v5926 = vpop.permute.xlu0 %5925
    %5928 = vst.msk [vmem:[%s2883] sm:$0x3] %vm1076, %v5926
    %v5929 = vld [vmem:[%s2885] sm:$0xf]
    %v5930 = vld [vmem:[%s2887] sm:$0xf]
    %v5931 = vadd.f32 %v5929, %v5930
    %v5932 = vsel %vm957, %v5915, 0
    %5934 = vmatprep.subr.mxu0 %v4040
    %5935 = vmatpush1.msra.mxu0 %v4039
    %5936 = vmatprep.subr.mxu0 %v4042
    %5937 = vmatpush1.msra.mxu0 %v4041
    %5938 = vmatprep.subr.mxu0 %v4044
    %5939 = vmatpush1.msra.mxu0 %v4043
    %5940 = vmatprep.subr.mxu0 %v4046
    %5941 = vmatpush1.msra.mxu0 %v4045
    %5942 = vmatprep.subr.mxu0 %v4048
    %5943 = vmatpush1.msra.mxu0 %v4047
    %5944 = vmatprep.subr.mxu0 %v4050
    %5945 = vmatpush1.msra.mxu0 %v4049
    %5946 = vmatprep.subr.mxu0 %v4052
    %5947 = vmatpush1.msra.mxu0 %v4051
    %5948 = vmatprep.subr.mxu0 %v4054
    %5949 = vmatpush1.msra.mxu0 %v4053
    %5950 = vmatprep.subr.mxu0 0.0
    %5951 = vmatpush1.msra.mxu0 0.0
    %5952 = vmatprep.subr.mxu0 0.0
    %5953 = vmatpush1.msra.mxu0 0.0
    %5954 = vmatprep.subr.mxu0 0.0
    %5955 = vmatpush1.msra.mxu0 0.0
    %5956 = vmatprep.subr.mxu0 0.0
    %5957 = vmatpush1.msra.mxu0 0.0
    %5958 = vmatprep.subr.mxu0 0.0
    %5959 = vmatpush1.msra.mxu0 0.0
    %5960 = vmatprep.subr.mxu0 0.0
    %5961 = vmatpush1.msra.mxu0 0.0
    %5962 = vmatprep.subr.mxu0 0.0
    %5963 = vmatpush1.msra.mxu0 0.0
    %5964 = vmatprep.subr.mxu0 0.0
    %5965 = vmatpush1.msra.mxu0 0.0
    %5966 = vmatprep.subr.mxu0 0.0
    %5967 = vmatpush1.msra.mxu0 0.0
    %5968 = vmatprep.subr.mxu0 0.0
    %5969 = vmatpush1.msra.mxu0 0.0
    %5970 = vmatprep.subr.mxu0 0.0
    %5971 = vmatpush1.msra.mxu0 0.0
    %5972 = vmatprep.subr.mxu0 0.0
    %5973 = vmatpush1.msra.mxu0 0.0
    %5974 = vmatprep.subr.mxu0 0.0
    %5975 = vmatpush1.msra.mxu0 0.0
    %5976 = vmatprep.subr.mxu0 0.0
    %5977 = vmatpush1.msra.mxu0 0.0
    %5978 = vmatprep.subr.mxu0 0.0
    %5979 = vmatpush1.msra.mxu0 0.0
    %5980 = vmatprep.subr.mxu0 0.0
    %5981 = vmatpush1.msra.mxu0 0.0
    %5982 = vmatprep.subr.mxu0 0.0
    %5983 = vmatpush1.msra.mxu0 0.0
    %5984 = vmatprep.subr.mxu0 0.0
    %5985 = vmatpush1.msra.mxu0 0.0
    %5986 = vmatprep.subr.mxu0 0.0
    %5987 = vmatpush1.msra.mxu0 0.0
    %5988 = vmatprep.subr.mxu0 0.0
    %5989 = vmatpush1.msra.mxu0 0.0
    %5990 = vmatprep.subr.mxu0 0.0
    %5991 = vmatpush1.msra.mxu0 0.0
    %5992 = vmatprep.subr.mxu0 0.0
    %5993 = vmatpush1.msra.mxu0 0.0
    %5994 = vmatprep.subr.mxu0 0.0
    %5995 = vmatpush1.msra.mxu0 0.0
    %5996 = vmatprep.subr.mxu0 0.0
    %5997 = vmatpush1.msra.mxu0 0.0
    %5998 = vmatprep.mubr.f32.mxu0 0.0
    %5999 = vmatmul.mubr.f32.gmra.mrb[0].mxu0 %v5932
    %v6000 = vpop.f32.mrb[0].mxu0
    %v6001 = vadd.f32 0.0, %v6000
    %v6002 = vpop.f32.mrb[0].mxu0
    %v6003 = vadd.f32 0.0, %v6002
    %6004 = vdwg.mxu0
    %v6007 = vcombine.low %v6001, %v6003
    %v6009 = vunpack.c.l.s4 1983009808
    %v6010 = vunpack.c.0.s8 %v6009
    %v6011 = vlaneseq
    %v6012 = vshrl.u32 %v6011, 7
    %v6013 = vsub.s32 %v6010, %v6012
    %v6014 = vrot.slane %v6007, %v6013
    %v6016 = vadd.f32 %v5931, %v6014
    %v6017 = vxor.u32 %v6016, 2147483648
    %v6018 = vmul.f32 %v6017, 1.442695
    %v6019 = vpow.pop %v6018
    %v6020 = vadd.f32 %v6019, 1.0
    %v6021 = vrcp.pop %v6020
    %v6022 = vmul.f32 1.0, %v6021
    %v6024 = vrot.slane %v6016, 2
    %v6026 = vtanh.pop %v6024
    %6027 = vrot.lane.b32.xlu0 %v6016, 64
    %v6028 = vpop.permute.xlu0 %6027
    %v6029 = vrot.slane %v6028, 2
    %v6031 = vxor.u32 %v6029, 2147483648
    %v6032 = vmul.f32 %v6031, 1.442695
    %v6033 = vpow.pop %v6032
    %v6034 = vadd.f32 %v6033, 1.0
    %v6035 = vrcp.pop %v6034
    %v6036 = vmul.f32 1.0, %v6035
    %v6037 = vmul.f32 %v6022, %v5909
    %v6038 = vmul.f32 %v6022, %v6026
    %6040 = vrot.lane.b32.xlu0 %v6038, 64
    %v6041 = vpop.permute.xlu0 %6040
    %v6043 = vadd.f32 %v6037, %v6041
    %v6044 = vtanh.pop %v6043
    %6046 = vrot.lane.b32.xlu0 %v6044, 64
    %v6047 = vpop.permute.xlu0 %6046
    %v6049 = vmul.f32 %v6036, %v6047
    %6050 = vst.msk [vmem:[%s3008] sm:$0x3] %vm1076, %v6049
    %v6053 = vunpack.c.l.s4 1983009808
    %v6054 = vunpack.c.0.s8 %v6053
    %v6055 = vlaneseq
    %v6056 = vshrl.u32 %v6055, 7
    %v6057 = vsub.s32 %v6054, %v6056
    %v6058 = vrot.slane %v6049, %v6057
    %6059 = vrot.lane.b32.xlu0 %v6058, 96
    %v6060 = vpop.permute.xlu0 %6059
    %6062 = vst.msk [vmem:[%s3021] sm:$0x3] %vm1076, %v6060
    %v6063 = vld [vmem:[%s3023] sm:$0xf]
    %v6064 = vld [vmem:[#allocation3] sm:$0xf]
    %v6065 = vadd.f32 %v6063, %v6064
    %v6066 = vsel %vm957, %v6049, 0
    %6068 = vmatprep.subr.mxu0 %v4040
    %6069 = vmatpush1.msra.mxu0 %v4039
    %6070 = vmatprep.subr.mxu0 %v4042
    %6071 = vmatpush1.msra.mxu0 %v4041
    %6072 = vmatprep.subr.mxu0 %v4044
    %6073 = vmatpush1.msra.mxu0 %v4043
    %6074 = vmatprep.subr.mxu0 %v4046
    %6075 = vmatpush1.msra.mxu0 %v4045
    %6076 = vmatprep.subr.mxu0 %v4048
    %6077 = vmatpush1.msra.mxu0 %v4047
    %6078 = vmatprep.subr.mxu0 %v4050
    %6079 = vmatpush1.msra.mxu0 %v4049
    %6080 = vmatprep.subr.mxu0 %v4052
    %6081 = vmatpush1.msra.mxu0 %v4051
    %6082 = vmatprep.subr.mxu0 %v4054
    %6083 = vmatpush1.msra.mxu0 %v4053
    %6084 = vmatprep.subr.mxu0 0.0
    %6085 = vmatpush1.msra.mxu0 0.0
    %6086 = vmatprep.subr.mxu0 0.0
    %6087 = vmatpush1.msra.mxu0 0.0
    %6088 = vmatprep.subr.mxu0 0.0
    %6089 = vmatpush1.msra.mxu0 0.0
    %6090 = vmatprep.subr.mxu0 0.0
    %6091 = vmatpush1.msra.mxu0 0.0
    %6092 = vmatprep.subr.mxu0 0.0
    %6093 = vmatpush1.msra.mxu0 0.0
    %6094 = vmatprep.subr.mxu0 0.0
    %6095 = vmatpush1.msra.mxu0 0.0
    %6096 = vmatprep.subr.mxu0 0.0
    %6097 = vmatpush1.msra.mxu0 0.0
    %6098 = vmatprep.subr.mxu0 0.0
    %6099 = vmatpush1.msra.mxu0 0.0
    %6100 = vmatprep.subr.mxu0 0.0
    %6101 = vmatpush1.msra.mxu0 0.0
    %6102 = vmatprep.subr.mxu0 0.0
    %6103 = vmatpush1.msra.mxu0 0.0
    %6104 = vmatprep.subr.mxu0 0.0
    %6105 = vmatpush1.msra.mxu0 0.0
    %6106 = vmatprep.subr.mxu0 0.0
    %6107 = vmatpush1.msra.mxu0 0.0
    %6108 = vmatprep.subr.mxu0 0.0
    %6109 = vmatpush1.msra.mxu0 0.0
    %6110 = vmatprep.subr.mxu0 0.0
    %6111 = vmatpush1.msra.mxu0 0.0
    %6112 = vmatprep.subr.mxu0 0.0
    %6113 = vmatpush1.msra.mxu0 0.0
    %6114 = vmatprep.subr.mxu0 0.0
    %6115 = vmatpush1.msra.mxu0 0.0
    %6116 = vmatprep.subr.mxu0 0.0
    %6117 = vmatpush1.msra.mxu0 0.0
    %6118 = vmatprep.subr.mxu0 0.0
    %6119 = vmatpush1.msra.mxu0 0.0
    %6120 = vmatprep.subr.mxu0 0.0
    %6121 = vmatpush1.msra.mxu0 0.0
    %6122 = vmatprep.subr.mxu0 0.0
    %6123 = vmatpush1.msra.mxu0 0.0
    %6124 = vmatprep.subr.mxu0 0.0
    %6125 = vmatpush1.msra.mxu0 0.0
    %6126 = vmatprep.subr.mxu0 0.0
    %6127 = vmatpush1.msra.mxu0 0.0
    %6128 = vmatprep.subr.mxu0 0.0
    %6129 = vmatpush1.msra.mxu0 0.0
    %6130 = vmatprep.subr.mxu0 0.0
    %6131 = vmatpush1.msra.mxu0 0.0
    %6132 = vmatprep.mubr.f32.mxu0 0.0
    %6133 = vmatmul.mubr.f32.gmra.mrb[0].mxu0 %v6066
    %v6134 = vpop.f32.mrb[0].mxu0
    %v6135 = vadd.f32 0.0, %v6134
    %v6136 = vpop.f32.mrb[0].mxu0
    %v6137 = vadd.f32 0.0, %v6136
    %6138 = vdwg.mxu0
    %v6141 = vcombine.low %v6135, %v6137
    %v6143 = vunpack.c.l.s4 1983009808
    %v6144 = vunpack.c.0.s8 %v6143
    %v6145 = vlaneseq
    %v6146 = vshrl.u32 %v6145, 7
    %v6147 = vsub.s32 %v6144, %v6146
    %v6148 = vrot.slane %v6141, %v6147
    %v6150 = vadd.f32 %v6065, %v6148
    %v6151 = vxor.u32 %v6150, 2147483648
    %v6152 = vmul.f32 %v6151, 1.442695
    %v6153 = vpow.pop %v6152
    %v6154 = vadd.f32 %v6153, 1.0
    %v6155 = vrcp.pop %v6154
    %v6156 = vmul.f32 1.0, %v6155
    %v6158 = vrot.slane %v6150, 2
    %v6160 = vtanh.pop %v6158
    %6161 = vrot.lane.b32.xlu0 %v6150, 64
    %v6162 = vpop.permute.xlu0 %6161
    %v6163 = vrot.slane %v6162, 2
    %v6165 = vxor.u32 %v6163, 2147483648
    %v6166 = vmul.f32 %v6165, 1.442695
    %v6167 = vpow.pop %v6166
    %v6168 = vadd.f32 %v6167, 1.0
    %v6169 = vrcp.pop %v6168
    %v6170 = vmul.f32 1.0, %v6169
    %v6171 = vmul.f32 %v6156, %v6043
    %v6172 = vmul.f32 %v6156, %v6160
    %6174 = vrot.lane.b32.xlu0 %v6172, 64
    %v6175 = vpop.permute.xlu0 %6174
    %v6177 = vadd.f32 %v6171, %v6175
    %v6178 = vtanh.pop %v6177
    %6180 = vrot.lane.b32.xlu0 %v6178, 64
    %v6181 = vpop.permute.xlu0 %6180
    %v6183 = vmul.f32 %v6170, %v6181
    %6184 = vst.msk [vmem:[%s3145] sm:$0x3] %vm1076, %v6183
    %v6187 = vunpack.c.l.s4 1983009808
    %v6188 = vunpack.c.0.s8 %v6187
    %v6189 = vlaneseq
    %v6190 = vshrl.u32 %v6189, 7
    %v6191 = vsub.s32 %v6188, %v6190
    %v6192 = vrot.slane %v6183, %v6191
    %6193 = vrot.lane.b32.xlu0 %v6192, 96
    %v6194 = vpop.permute.xlu0 %6193
    %6196 = vst.msk [vmem:[#allocation5] sm:$0x3] %vm1076, %v6194
    %v6197 = vld [vmem:[#allocation4] sm:$0x3]
    %v6198 = vld [vmem:[#allocation4 + $0x2] sm:$0x3]
    %v6199 = vld [vmem:[#allocation4 + $0x4] sm:$0x3]
    %v6200 = vld [vmem:[#allocation4 + $0x6] sm:$0x3]
    %v6201 = vld [vmem:[#allocation4 + $0x8] sm:$0x3]
    %v6202 = vld [vmem:[#allocation4 + $0xa] sm:$0x3]
    %v6203 = vld [vmem:[#allocation4 + $0xc] sm:$0x3]
    %v6204 = vld [vmem:[#allocation4 + $0xe] sm:$0x3]
    %v6205 = vld [vmem:[#allocation4 + $0x10] sm:$0x3]
    %v6206 = vld [vmem:[#allocation4 + $0x12] sm:$0x3]
    %v6207 = vld [vmem:[#allocation4 + $0x14] sm:$0x3]
    %v6208 = vld [vmem:[#allocation4 + $0x16] sm:$0x3]
    %v6209 = vld [vmem:[#allocation4 + $0x18] sm:$0x3]
    %v6210 = vld [vmem:[#allocation4 + $0x1a] sm:$0x3]
    %v6211 = vld [vmem:[#allocation4 + $0x1c] sm:$0x3]
    %v6212 = vld [vmem:[#allocation4 + $0x1e] sm:$0x3]
    %v6213 = vld [vmem:[#allocation5] sm:$0x3]
    %v6214 = vld [vmem:[#allocation5 + $0x2] sm:$0x3]
    %v6215 = vld [vmem:[#allocation5 + $0x4] sm:$0x3]
    %v6216 = vld [vmem:[#allocation5 + $0x6] sm:$0x3]
    %v6217 = vld [vmem:[#allocation5 + $0x8] sm:$0x3]
    %v6218 = vld [vmem:[#allocation5 + $0xa] sm:$0x3]
    %v6219 = vld [vmem:[#allocation5 + $0xc] sm:$0x3]
    %v6220 = vld [vmem:[#allocation5 + $0xe] sm:$0x3]
    %v6221 = vld [vmem:[#allocation5 + $0x10] sm:$0x3]
    %v6222 = vld [vmem:[#allocation5 + $0x12] sm:$0x3]
    %v6223 = vld [vmem:[#allocation5 + $0x14] sm:$0x3]
    %v6224 = vld [vmem:[#allocation5 + $0x16] sm:$0x3]
    %v6225 = vld [vmem:[#allocation5 + $0x18] sm:$0x3]
    %v6226 = vld [vmem:[#allocation5 + $0x1a] sm:$0x3]
    %v6227 = vld [vmem:[#allocation5 + $0x1c] sm:$0x3]
    %v6228 = vld [vmem:[#allocation5 + $0x1e] sm:$0x3]
    %6245 = vrot.lane.b32.xlu0 %v6213, 32
    %v6246 = vpop.permute.xlu0 %6245
    %6247 = vrot.lane.b32.xlu0 %v6214, 32
    %v6248 = vpop.permute.xlu0 %6247
    %6249 = vrot.lane.b32.xlu0 %v6215, 32
    %v6250 = vpop.permute.xlu0 %6249
    %6251 = vrot.lane.b32.xlu0 %v6216, 32
    %v6252 = vpop.permute.xlu0 %6251
    %6253 = vrot.lane.b32.xlu0 %v6217, 32
    %v6254 = vpop.permute.xlu0 %6253
    %6255 = vrot.lane.b32.xlu0 %v6218, 32
    %v6256 = vpop.permute.xlu0 %6255
    %6257 = vrot.lane.b32.xlu0 %v6219, 32
    %v6258 = vpop.permute.xlu0 %6257
    %6259 = vrot.lane.b32.xlu0 %v6220, 32
    %v6260 = vpop.permute.xlu0 %6259
    %6261 = vrot.lane.b32.xlu0 %v6221, 32
    %v6262 = vpop.permute.xlu0 %6261
    %6263 = vrot.lane.b32.xlu0 %v6222, 32
    %v6264 = vpop.permute.xlu0 %6263
    %6265 = vrot.lane.b32.xlu0 %v6223, 32
    %v6266 = vpop.permute.xlu0 %6265
    %6267 = vrot.lane.b32.xlu0 %v6224, 32
    %v6268 = vpop.permute.xlu0 %6267
    %6269 = vrot.lane.b32.xlu0 %v6225, 32
    %v6270 = vpop.permute.xlu0 %6269
    %6271 = vrot.lane.b32.xlu0 %v6226, 32
    %v6272 = vpop.permute.xlu0 %6271
    %6273 = vrot.lane.b32.xlu0 %v6227, 32
    %v6274 = vpop.permute.xlu0 %6273
    %6275 = vrot.lane.b32.xlu0 %v6228, 32
    %v6276 = vpop.permute.xlu0 %6275
    %v6293 = vsel %vm514, %v6197, %v6246
    %v6294 = vsel %vm514, %v6198, %v6248
    %v6295 = vsel %vm514, %v6199, %v6250
    %v6296 = vsel %vm514, %v6200, %v6252
    %v6297 = vsel %vm514, %v6201, %v6254
    %v6298 = vsel %vm514, %v6202, %v6256
    %v6299 = vsel %vm514, %v6203, %v6258
    %v6300 = vsel %vm514, %v6204, %v6260
    %v6301 = vsel %vm514, %v6205, %v6262
    %v6302 = vsel %vm514, %v6206, %v6264
    %v6303 = vsel %vm514, %v6207, %v6266
    %v6304 = vsel %vm514, %v6208, %v6268
    %v6305 = vsel %vm514, %v6209, %v6270
    %v6306 = vsel %vm514, %v6210, %v6272
    %v6307 = vsel %vm514, %v6211, %v6274
    %v6308 = vsel %vm514, %v6212, %v6276
    %v6309 = vsel %vm3271, %v6293, 0.0
    %v6310 = vsel %vm3271, %v6294, 0.0
    %v6311 = vadd.f32 %v6309, %v6310
    %v6312 = vsel %vm3271, %v6295, 0.0
    %v6313 = vadd.f32 %v6311, %v6312
    %v6314 = vsel %vm3271, %v6296, 0.0
    %v6315 = vadd.f32 %v6313, %v6314
    %v6316 = vsel %vm3271, %v6297, 0.0
    %v6317 = vadd.f32 %v6315, %v6316
    %v6318 = vsel %vm3271, %v6298, 0.0
    %v6319 = vadd.f32 %v6317, %v6318
    %v6320 = vsel %vm3271, %v6299, 0.0
    %v6321 = vadd.f32 %v6319, %v6320
    %v6322 = vsel %vm3271, %v6300, 0.0
    %v6323 = vadd.f32 %v6321, %v6322
    %v6324 = vsel %vm3271, %v6301, 0.0
    %v6325 = vadd.f32 %v6323, %v6324
    %v6326 = vsel %vm3271, %v6302, 0.0
    %v6327 = vadd.f32 %v6325, %v6326
    %v6328 = vsel %vm3271, %v6303, 0.0
    %v6329 = vadd.f32 %v6327, %v6328
    %v6330 = vsel %vm3271, %v6304, 0.0
    %v6331 = vadd.f32 %v6329, %v6330
    %v6332 = vsel %vm3271, %v6305, 0.0
    %v6333 = vadd.f32 %v6331, %v6332
    %v6334 = vsel %vm3271, %v6306, 0.0
    %v6335 = vadd.f32 %v6333, %v6334
    %v6336 = vsel %vm3271, %v6307, 0.0
    %v6337 = vadd.f32 %v6335, %v6336
    %v6338 = vsel %vm3271, %v6308, 0.0
    %v6339 = vadd.f32 %v6337, %v6338
    %v6340 = vmul.f32 %v6339, %v3303
    %v6341 = vld [vmem:[%s15] sm:$0xff]
    %v6342 = vld [vmem:[%s15 + $0x8] sm:$0xff]
    %v6343 = vld [vmem:[%s15 + $0x10] sm:$0xff]
    %v6344 = vld [vmem:[%s15 + $0x18] sm:$0xff]
    %v6345 = vld [vmem:[%s15 + $0x20] sm:$0xff]
    %v6346 = vld [vmem:[%s15 + $0x28] sm:$0xff]
    %v6347 = vld [vmem:[%s15 + $0x30] sm:$0xff]
    %v6348 = vld [vmem:[%s15 + $0x38] sm:$0xff]
    %v6349 = vld [vmem:[%s16] sm:$0x1]
    %v6351 = vlaneseq
    %v6352 = vshrl.u32 %v6351, 7
    %v6353 = vsub.s32 0, %v6352
    %v6354 = vrot.slane %v6349, %v6353
    %v6357 = vsel %vm957, %v6340, 0
    %6359 = vmatprep.subr.mxu0 0.0
    %6360 = vmatpush1.msra.mxu0 %v6341
    %6361 = vmatprep.subr.mxu0 0.0
    %6362 = vmatpush1.msra.mxu0 %v6342
    %6363 = vmatprep.subr.mxu0 0.0
    %6364 = vmatpush1.msra.mxu0 %v6343
    %6365 = vmatprep.subr.mxu0 0.0
    %6366 = vmatpush1.msra.mxu0 %v6344
    %6367 = vmatprep.subr.mxu0 0.0
    %6368 = vmatpush1.msra.mxu0 %v6345
    %6369 = vmatprep.subr.mxu0 0.0
    %6370 = vmatpush1.msra.mxu0 %v6346
    %6371 = vmatprep.subr.mxu0 0.0
    %6372 = vmatpush1.msra.mxu0 %v6347
    %6373 = vmatprep.subr.mxu0 0.0
    %6374 = vmatpush1.msra.mxu0 %v6348
    %6375 = vmatprep.subr.mxu0 0.0
    %6376 = vmatpush1.msra.mxu0 0.0
    %6377 = vmatprep.subr.mxu0 0.0
    %6378 = vmatpush1.msra.mxu0 0.0
    %6379 = vmatprep.subr.mxu0 0.0
    %6380 = vmatpush1.msra.mxu0 0.0
    %6381 = vmatprep.subr.mxu0 0.0
    %6382 = vmatpush1.msra.mxu0 0.0
    %6383 = vmatprep.subr.mxu0 0.0
    %6384 = vmatpush1.msra.mxu0 0.0
    %6385 = vmatprep.subr.mxu0 0.0
    %6386 = vmatpush1.msra.mxu0 0.0
    %6387 = vmatprep.subr.mxu0 0.0
    %6388 = vmatpush1.msra.mxu0 0.0
    %6389 = vmatprep.subr.mxu0 0.0
    %6390 = vmatpush1.msra.mxu0 0.0
    %6391 = vmatprep.subr.mxu0 0.0
    %6392 = vmatpush1.msra.mxu0 0.0
    %6393 = vmatprep.subr.mxu0 0.0
    %6394 = vmatpush1.msra.mxu0 0.0
    %6395 = vmatprep.subr.mxu0 0.0
    %6396 = vmatpush1.msra.mxu0 0.0
    %6397 = vmatprep.subr.mxu0 0.0
    %6398 = vmatpush1.msra.mxu0 0.0
    %6399 = vmatprep.subr.mxu0 0.0
    %6400 = vmatpush1.msra.mxu0 0.0
    %6401 = vmatprep.subr.mxu0 0.0
    %6402 = vmatpush1.msra.mxu0 0.0
    %6403 = vmatprep.subr.mxu0 0.0
    %6404 = vmatpush1.msra.mxu0 0.0
    %6405 = vmatprep.subr.mxu0 0.0
    %6406 = vmatpush1.msra.mxu0 0.0
    %6407 = vmatprep.subr.mxu0 0.0
    %6408 = vmatpush1.msra.mxu0 0.0
    %6409 = vmatprep.subr.mxu0 0.0
    %6410 = vmatpush1.msra.mxu0 0.0
    %6411 = vmatprep.subr.mxu0 0.0
    %6412 = vmatpush1.msra.mxu0 0.0
    %6413 = vmatprep.subr.mxu0 0.0
    %6414 = vmatpush1.msra.mxu0 0.0
    %6415 = vmatprep.subr.mxu0 0.0
    %6416 = vmatpush1.msra.mxu0 0.0
    %6417 = vmatprep.subr.mxu0 0.0
    %6418 = vmatpush1.msra.mxu0 0.0
    %6419 = vmatprep.subr.mxu0 0.0
    %6420 = vmatpush1.msra.mxu0 0.0
    %6421 = vmatprep.subr.mxu0 0.0
    %6422 = vmatpush1.msra.mxu0 0.0
    %6423 = vmatprep.mubr.f32.mxu0 0.0
    %6424 = vmatmul.mubr.f32.gmra.mrb[0].mxu0 %v6357
    %v6425 = vpop.f32.mrb[0].mxu0
    %v6426 = vadd.f32 %v6354, %v6425
    %v6427 = vpop.f32.mrb[0].mxu0
    %6428 = vdwg.mxu0
    %v6429 = vmax.f32 %v6426, 0.0
    %v6430 = vld [vmem:[%s17] sm:$0xf]
    %v6431 = vld [vmem:[%s18] sm:$0x1]
    %v6433 = vlaneseq
    %v6434 = vshrl.u32 %v6433, 7
    %v6435 = vsub.s32 0, %v6434
    %v6436 = vrot.slane %v6431, %v6435
    %v6439 = vsel %vm287, %v6429, 0
    %v6442 = vsel %vm3405, %v6430, 0
    %6444 = vmatprep.subr.mxu0 0.0
    %6445 = vmatpush1.msra.mxu0 %v6442
    %6446 = vmatprep.subr.mxu0 0.0
    %6447 = vmatpush1.msra.mxu0 0.0
    %6448 = vmatprep.subr.mxu0 0.0
    %6449 = vmatpush1.msra.mxu0 0.0
    %6450 = vmatprep.subr.mxu0 0.0
    %6451 = vmatpush1.msra.mxu0 0.0
    %6452 = vmatprep.subr.mxu0 0.0
    %6453 = vmatpush1.msra.mxu0 0.0
    %6454 = vmatprep.subr.mxu0 0.0
    %6455 = vmatpush1.msra.mxu0 0.0
    %6456 = vmatprep.subr.mxu0 0.0
    %6457 = vmatpush1.msra.mxu0 0.0
    %6458 = vmatprep.subr.mxu0 0.0
    %6459 = vmatpush1.msra.mxu0 0.0
    %6460 = vmatprep.subr.mxu0 0.0
    %6461 = vmatpush1.msra.mxu0 0.0
    %6462 = vmatprep.subr.mxu0 0.0
    %6463 = vmatpush1.msra.mxu0 0.0
    %6464 = vmatprep.subr.mxu0 0.0
    %6465 = vmatpush1.msra.mxu0 0.0
    %6466 = vmatprep.subr.mxu0 0.0
    %6467 = vmatpush1.msra.mxu0 0.0
    %6468 = vmatprep.subr.mxu0 0.0
    %6469 = vmatpush1.msra.mxu0 0.0
    %6470 = vmatprep.subr.mxu0 0.0
    %6471 = vmatpush1.msra.mxu0 0.0
    %6472 = vmatprep.subr.mxu0 0.0
    %6473 = vmatpush1.msra.mxu0 0.0
    %6474 = vmatprep.subr.mxu0 0.0
    %6475 = vmatpush1.msra.mxu0 0.0
    %6476 = vmatprep.subr.mxu0 0.0
    %6477 = vmatpush1.msra.mxu0 0.0
    %6478 = vmatprep.subr.mxu0 0.0
    %6479 = vmatpush1.msra.mxu0 0.0
    %6480 = vmatprep.subr.mxu0 0.0
    %6481 = vmatpush1.msra.mxu0 0.0
    %6482 = vmatprep.subr.mxu0 0.0
    %6483 = vmatpush1.msra.mxu0 0.0
    %6484 = vmatprep.subr.mxu0 0.0
    %6485 = vmatpush1.msra.mxu0 0.0
    %6486 = vmatprep.subr.mxu0 0.0
    %6487 = vmatpush1.msra.mxu0 0.0
    %6488 = vmatprep.subr.mxu0 0.0
    %6489 = vmatpush1.msra.mxu0 0.0
    %6490 = vmatprep.subr.mxu0 0.0
    %6491 = vmatpush1.msra.mxu0 0.0
    %6492 = vmatprep.subr.mxu0 0.0
    %6493 = vmatpush1.msra.mxu0 0.0
    %6494 = vmatprep.subr.mxu0 0.0
    %6495 = vmatpush1.msra.mxu0 0.0
    %6496 = vmatprep.subr.mxu0 0.0
    %6497 = vmatpush1.msra.mxu0 0.0
    %6498 = vmatprep.subr.mxu0 0.0
    %6499 = vmatpush1.msra.mxu0 0.0
    %6500 = vmatprep.subr.mxu0 0.0
    %6501 = vmatpush1.msra.mxu0 0.0
    %6502 = vmatprep.subr.mxu0 0.0
    %6503 = vmatpush1.msra.mxu0 0.0
    %6504 = vmatprep.subr.mxu0 0.0
    %6505 = vmatpush1.msra.mxu0 0.0
    %6506 = vmatprep.subr.mxu0 0.0
    %6507 = vmatpush1.msra.mxu0 0.0
    %6508 = vmatprep.mubr.f32.mxu0 0.0
    %6509 = vmatmul.mubr.f32.gmra.mrb[0].mxu0 %v6439
    %v6510 = vpop.f32.mrb[0].mxu0
    %v6511 = vadd.f32 %v6436, %v6510
    %v6512 = vpop.f32.mrb[0].mxu0
    %6513 = vdwg.mxu0
    %v6514 = vxor.u32 %v6511, 2147483648
    %v6515 = vmul.f32 %v6514, 1.442695
    %v6516 = vpow.pop %v6515
    %v6517 = vadd.f32 %v6516, 1.0
    %v6518 = vrcp.pop %v6517
    %v6519 = vmul.f32 1.0, %v6518
    %v6520 = vmul.f32 %v6293, %v6519
    %v6521 = vmul.f32 %v6294, %v6519
    %v6522 = vmul.f32 %v6295, %v6519
    %v6523 = vmul.f32 %v6296, %v6519
    %v6524 = vmul.f32 %v6297, %v6519
    %v6525 = vmul.f32 %v6298, %v6519
    %v6526 = vmul.f32 %v6299, %v6519
    %v6527 = vmul.f32 %v6300, %v6519
    %v6528 = vmul.f32 %v6301, %v6519
    %v6529 = vmul.f32 %v6302, %v6519
    %v6530 = vmul.f32 %v6303, %v6519
    %v6531 = vmul.f32 %v6304, %v6519
    %v6532 = vmul.f32 %v6305, %v6519
    %v6533 = vmul.f32 %v6306, %v6519
    %v6534 = vmul.f32 %v6307, %v6519
    %v6535 = vmul.f32 %v6308, %v6519
    %6552 = vrot.lane.b32.xlu0 %v6520, 64
    %v6553 = vpop.permute.xlu0 %6552
    %6554 = vrot.lane.b32.xlu0 %v6521, 64
    %v6555 = vpop.permute.xlu0 %6554
    %6556 = vrot.lane.b32.xlu0 %v6522, 64
    %v6557 = vpop.permute.xlu0 %6556
    %6558 = vrot.lane.b32.xlu0 %v6523, 64
    %v6559 = vpop.permute.xlu0 %6558
    %6560 = vrot.lane.b32.xlu0 %v6524, 64
    %v6561 = vpop.permute.xlu0 %6560
    %6562 = vrot.lane.b32.xlu0 %v6525, 64
    %v6563 = vpop.permute.xlu0 %6562
    %6564 = vrot.lane.b32.xlu0 %v6526, 64
    %v6565 = vpop.permute.xlu0 %6564
    %6566 = vrot.lane.b32.xlu0 %v6527, 64
    %v6567 = vpop.permute.xlu0 %6566
    %6568 = vrot.lane.b32.xlu0 %v6528, 64
    %v6569 = vpop.permute.xlu0 %6568
    %6570 = vrot.lane.b32.xlu0 %v6529, 64
    %v6571 = vpop.permute.xlu0 %6570
    %6572 = vrot.lane.b32.xlu0 %v6530, 64
    %v6573 = vpop.permute.xlu0 %6572
    %6574 = vrot.lane.b32.xlu0 %v6531, 64
    %v6575 = vpop.permute.xlu0 %6574
    %6576 = vrot.lane.b32.xlu0 %v6532, 64
    %v6577 = vpop.permute.xlu0 %6576
    %6578 = vrot.lane.b32.xlu0 %v6533, 64
    %v6579 = vpop.permute.xlu0 %6578
    %6580 = vrot.lane.b32.xlu0 %v6534, 64
    %v6581 = vpop.permute.xlu0 %6580
    %6582 = vrot.lane.b32.xlu0 %v6535, 64
    %v6583 = vpop.permute.xlu0 %6582
    %v6600 = vsel %vm957, 0.0, %v6553
    %v6601 = vsel %vm957, %v6520, %v6555
    %v6602 = vsel %vm957, %v6521, %v6557
    %v6603 = vsel %vm957, %v6522, %v6559
    %v6604 = vsel %vm957, %v6523, %v6561
    %v6605 = vsel %vm957, %v6524, %v6563
    %v6606 = vsel %vm957, %v6525, %v6565
    %v6607 = vsel %vm957, %v6526, %v6567
    %v6608 = vsel %vm957, %v6527, %v6569
    %v6609 = vsel %vm957, %v6528, %v6571
    %v6610 = vsel %vm957, %v6529, %v6573
    %v6611 = vsel %vm957, %v6530, %v6575
    %v6612 = vsel %vm957, %v6531, %v6577
    %v6613 = vsel %vm957, %v6532, %v6579
    %v6614 = vsel %vm957, %v6533, %v6581
    %v6615 = vsel %vm957, %v6534, %v6583
    %v6632 = vcombine.low %v6600, %v6521
    %v6634 = vunpack.c.l.s4 1983009808
    %v6635 = vunpack.c.0.s8 %v6634
    %v6636 = vlaneseq
    %v6637 = vshrl.u32 %v6636, 7
    %v6638 = vsub.s32 %v6635, %v6637
    %v6639 = vrot.slane %v6632, %v6638
    %v6640 = vcombine.low %v6601, %v6522
    %v6642 = vunpack.c.l.s4 1983009808
    %v6643 = vunpack.c.0.s8 %v6642
    %v6644 = vlaneseq
    %v6645 = vshrl.u32 %v6644, 7
    %v6646 = vsub.s32 %v6643, %v6645
    %v6647 = vrot.slane %v6640, %v6646
    %v6648 = vcombine.low %v6602, %v6523
    %v6650 = vunpack.c.l.s4 1983009808
    %v6651 = vunpack.c.0.s8 %v6650
    %v6652 = vlaneseq
    %v6653 = vshrl.u32 %v6652, 7
    %v6654 = vsub.s32 %v6651, %v6653
    %v6655 = vrot.slane %v6648, %v6654
    %v6656 = vcombine.low %v6603, %v6524
    %v6658 = vunpack.c.l.s4 1983009808
    %v6659 = vunpack.c.0.s8 %v6658
    %v6660 = vlaneseq
    %v6661 = vshrl.u32 %v6660, 7
    %v6662 = vsub.s32 %v6659, %v6661
    %v6663 = vrot.slane %v6656, %v6662
    %v6664 = vcombine.low %v6604, %v6525
    %v6666 = vunpack.c.l.s4 1983009808
    %v6667 = vunpack.c.0.s8 %v6666
    %v6668 = vlaneseq
    %v6669 = vshrl.u32 %v6668, 7
    %v6670 = vsub.s32 %v6667, %v6669
    %v6671 = vrot.slane %v6664, %v6670
    %v6672 = vcombine.low %v6605, %v6526
    %v6674 = vunpack.c.l.s4 1983009808
    %v6675 = vunpack.c.0.s8 %v6674
    %v6676 = vlaneseq
    %v6677 = vshrl.u32 %v6676, 7
    %v6678 = vsub.s32 %v6675, %v6677
    %v6679 = vrot.slane %v6672, %v6678
    %v6680 = vcombine.low %v6606, %v6527
    %v6682 = vunpack.c.l.s4 1983009808
    %v6683 = vunpack.c.0.s8 %v6682
    %v6684 = vlaneseq
    %v6685 = vshrl.u32 %v6684, 7
    %v6686 = vsub.s32 %v6683, %v6685
    %v6687 = vrot.slane %v6680, %v6686
    %v6688 = vcombine.low %v6607, %v6528
    %v6690 = vunpack.c.l.s4 1983009808
    %v6691 = vunpack.c.0.s8 %v6690
    %v6692 = vlaneseq
    %v6693 = vshrl.u32 %v6692, 7
    %v6694 = vsub.s32 %v6691, %v6693
    %v6695 = vrot.slane %v6688, %v6694
    %v6696 = vcombine.low %v6608, %v6529
    %v6698 = vunpack.c.l.s4 1983009808
    %v6699 = vunpack.c.0.s8 %v6698
    %v6700 = vlaneseq
    %v6701 = vshrl.u32 %v6700, 7
    %v6702 = vsub.s32 %v6699, %v6701
    %v6703 = vrot.slane %v6696, %v6702
    %v6704 = vcombine.low %v6609, %v6530
    %v6706 = vunpack.c.l.s4 1983009808
    %v6707 = vunpack.c.0.s8 %v6706
    %v6708 = vlaneseq
    %v6709 = vshrl.u32 %v6708, 7
    %v6710 = vsub.s32 %v6707, %v6709
    %v6711 = vrot.slane %v6704, %v6710
    %v6712 = vcombine.low %v6610, %v6531
    %v6714 = vunpack.c.l.s4 1983009808
    %v6715 = vunpack.c.0.s8 %v6714
    %v6716 = vlaneseq
    %v6717 = vshrl.u32 %v6716, 7
    %v6718 = vsub.s32 %v6715, %v6717
    %v6719 = vrot.slane %v6712, %v6718
    %v6720 = vcombine.low %v6611, %v6532
    %v6722 = vunpack.c.l.s4 1983009808
    %v6723 = vunpack.c.0.s8 %v6722
    %v6724 = vlaneseq
    %v6725 = vshrl.u32 %v6724, 7
    %v6726 = vsub.s32 %v6723, %v6725
    %v6727 = vrot.slane %v6720, %v6726
    %v6728 = vcombine.low %v6612, %v6533
    %v6730 = vunpack.c.l.s4 1983009808
    %v6731 = vunpack.c.0.s8 %v6730
    %v6732 = vlaneseq
    %v6733 = vshrl.u32 %v6732, 7
    %v6734 = vsub.s32 %v6731, %v6733
    %v6735 = vrot.slane %v6728, %v6734
    %v6736 = vcombine.low %v6613, %v6534
    %v6738 = vunpack.c.l.s4 1983009808
    %v6739 = vunpack.c.0.s8 %v6738
    %v6740 = vlaneseq
    %v6741 = vshrl.u32 %v6740, 7
    %v6742 = vsub.s32 %v6739, %v6741
    %v6743 = vrot.slane %v6736, %v6742
    %v6744 = vcombine.low %v6614, %v6535
    %v6746 = vunpack.c.l.s4 1983009808
    %v6747 = vunpack.c.0.s8 %v6746
    %v6748 = vlaneseq
    %v6749 = vshrl.u32 %v6748, 7
    %v6750 = vsub.s32 %v6747, %v6749
    %v6751 = vrot.slane %v6744, %v6750
    %v6752 = vcombine.low %v6615, 0.0
    %v6754 = vunpack.c.l.s4 1983009808
    %v6755 = vunpack.c.0.s8 %v6754
    %v6756 = vlaneseq
    %v6757 = vshrl.u32 %v6756, 7
    %v6758 = vsub.s32 %v6755, %v6757
    %v6759 = vrot.slane %v6752, %v6758
    %v6760 = vld [vmem:[%s19] sm:$0xff]
    %v6761 = vld [vmem:[%s19 + $0x8] sm:$0xff]
    %v6762 = vld [vmem:[%s19 + $0x10] sm:$0xff]
    %v6763 = vld [vmem:[%s19 + $0x18] sm:$0xff]
    %v6764 = vld [vmem:[%s19 + $0x20] sm:$0xff]
    %v6765 = vld [vmem:[%s19 + $0x28] sm:$0xff]
    %v6766 = vld [vmem:[%s19 + $0x30] sm:$0xff]
    %v6767 = vld [vmem:[%s19 + $0x38] sm:$0xff]
    %v6768 = vld [vmem:[%s19 + $0x40] sm:$0xff]
    %v6769 = vld [vmem:[%s19 + $0x48] sm:$0xff]
    %v6770 = vld [vmem:[%s19 + $0x50] sm:$0xff]
    %v6771 = vld [vmem:[%s19 + $0x58] sm:$0xff]
    %v6772 = vld [vmem:[%s19 + $0x60] sm:$0xff]
    %v6773 = vld [vmem:[%s19 + $0x68] sm:$0xff]
    %v6774 = vld [vmem:[%s19 + $0x70] sm:$0xff]
    %v6775 = vld [vmem:[%s19 + $0x78] sm:$0xff]
    %v6776 = vld [vmem:[%s19 + $0x80] sm:$0xff]
    %v6777 = vld [vmem:[%s19 + $0x88] sm:$0xff]
    %v6778 = vld [vmem:[%s19 + $0x90] sm:$0xff]
    %v6779 = vld [vmem:[%s19 + $0x98] sm:$0xff]
    %v6780 = vld [vmem:[%s19 + $0xa0] sm:$0xff]
    %v6781 = vld [vmem:[%s19 + $0xa8] sm:$0xff]
    %v6782 = vld [vmem:[%s19 + $0xb0] sm:$0xff]
    %v6783 = vld [vmem:[%s19 + $0xb8] sm:$0xff]
    %v6784 = vld [vmem:[%s20] sm:$0x1]
    %v6786 = vlaneseq
    %v6787 = vshrl.u32 %v6786, 7
    %v6788 = vsub.s32 0, %v6787
    %v6789 = vrot.slane %v6784, %v6788
    %v6791 = vcombine.low %v6639, %v6647
    %v6792 = vcombine.low %v6655, %v6663
    %v6794 = vunpack.c.l.s4 1983009808
    %v6795 = vunpack.c.0.s8 %v6794
    %v6796 = vlaneseq
    %v6797 = vshrl.u32 %v6796, 7
    %v6798 = vsub.s32 %v6795, %v6797
    %v6799 = vrot.slane %v6791, %v6798
    %v6801 = vunpack.c.l.s4 1983009808
    %v6802 = vunpack.c.0.s8 %v6801
    %v6803 = vlaneseq
    %v6804 = vshrl.u32 %v6803, 7
    %v6805 = vsub.s32 %v6802, %v6804
    %v6806 = vrot.slane %v6792, %v6805
    %v6807 = vcombine.low %v6799, %v6806
    %v6808 = vcombine.high %v6799, %v6806
    %v6809 = vcombine.low %v6671, %v6679
    %v6810 = vcombine.low %v6687, %v6695
    %v6812 = vunpack.c.l.s4 1983009808
    %v6813 = vunpack.c.0.s8 %v6812
    %v6814 = vlaneseq
    %v6815 = vshrl.u32 %v6814, 7
    %v6816 = vsub.s32 %v6813, %v6815
    %v6817 = vrot.slane %v6809, %v6816
    %v6819 = vunpack.c.l.s4 1983009808
    %v6820 = vunpack.c.0.s8 %v6819
    %v6821 = vlaneseq
    %v6822 = vshrl.u32 %v6821, 7
    %v6823 = vsub.s32 %v6820, %v6822
    %v6824 = vrot.slane %v6810, %v6823
    %v6825 = vcombine.low %v6817, %v6824
    %v6826 = vcombine.high %v6817, %v6824
    %v6827 = vcombine.low %v6703, %v6711
    %v6828 = vcombine.low %v6719, %v6727
    %v6830 = vunpack.c.l.s4 1983009808
    %v6831 = vunpack.c.0.s8 %v6830
    %v6832 = vlaneseq
    %v6833 = vshrl.u32 %v6832, 7
    %v6834 = vsub.s32 %v6831, %v6833
    %v6835 = vrot.slane %v6827, %v6834
    %v6837 = vunpack.c.l.s4 1983009808
    %v6838 = vunpack.c.0.s8 %v6837
    %v6839 = vlaneseq
    %v6840 = vshrl.u32 %v6839, 7
    %v6841 = vsub.s32 %v6838, %v6840
    %v6842 = vrot.slane %v6828, %v6841
    %v6843 = vcombine.low %v6835, %v6842
    %v6844 = vcombine.high %v6835, %v6842
    %v6845 = vcombine.low %v6735, %v6743
    %v6846 = vcombine.low %v6751, %v6759
    %v6848 = vunpack.c.l.s4 1983009808
    %v6849 = vunpack.c.0.s8 %v6848
    %v6850 = vlaneseq
    %v6851 = vshrl.u32 %v6850, 7
    %v6852 = vsub.s32 %v6849, %v6851
    %v6853 = vrot.slane %v6845, %v6852
    %v6855 = vunpack.c.l.s4 1983009808
    %v6856 = vunpack.c.0.s8 %v6855
    %v6857 = vlaneseq
    %v6858 = vshrl.u32 %v6857, 7
    %v6859 = vsub.s32 %v6856, %v6858
    %v6860 = vrot.slane %v6846, %v6859
    %v6861 = vcombine.low %v6853, %v6860
    %v6862 = vcombine.high %v6853, %v6860
    %v6867 = vsel %vm957, %v6808, 0
    %v6869 = vsel %vm957, %v6826, 0
    %v6871 = vsel %vm957, %v6844, 0
    %v6873 = vsel %vm957, %v6862, 0
    %6875 = vmatprep.subr.mxu0 0.0
    %6876 = vmatpush1.msra.mxu0 %v6760
    %6877 = vmatprep.subr.mxu0 0.0
    %6878 = vmatpush1.msra.mxu0 %v6761
    %6879 = vmatprep.subr.mxu0 0.0
    %6880 = vmatpush1.msra.mxu0 %v6762
    %6881 = vmatprep.subr.mxu0 0.0
    %6882 = vmatpush1.msra.mxu0 %v6763
    %6883 = vmatprep.subr.mxu0 0.0
    %6884 = vmatpush1.msra.mxu0 %v6764
    %6885 = vmatprep.subr.mxu0 0.0
    %6886 = vmatpush1.msra.mxu0 %v6765
    %6887 = vmatprep.subr.mxu0 0.0
    %6888 = vmatpush1.msra.mxu0 %v6766
    %6889 = vmatprep.subr.mxu0 0.0
    %6890 = vmatpush1.msra.mxu0 %v6767
    %6891 = vmatprep.subr.mxu0 0.0
    %6892 = vmatpush1.msra.mxu0 %v6768
    %6893 = vmatprep.subr.mxu0 0.0
    %6894 = vmatpush1.msra.mxu0 %v6769
    %6895 = vmatprep.subr.mxu0 0.0
    %6896 = vmatpush1.msra.mxu0 %v6770
    %6897 = vmatprep.subr.mxu0 0.0
    %6898 = vmatpush1.msra.mxu0 %v6771
    %6899 = vmatprep.subr.mxu0 0.0
    %6900 = vmatpush1.msra.mxu0 %v6772
    %6901 = vmatprep.subr.mxu0 0.0
    %6902 = vmatpush1.msra.mxu0 %v6773
    %6903 = vmatprep.subr.mxu0 0.0
    %6904 = vmatpush1.msra.mxu0 %v6774
    %6905 = vmatprep.subr.mxu0 0.0
    %6906 = vmatpush1.msra.mxu0 %v6775
    %6907 = vmatprep.subr.mxu0 0.0
    %6908 = vmatpush1.msra.mxu0 %v6776
    %6909 = vmatprep.subr.mxu0 0.0
    %6910 = vmatpush1.msra.mxu0 %v6777
    %6911 = vmatprep.subr.mxu0 0.0
    %6912 = vmatpush1.msra.mxu0 %v6778
    %6913 = vmatprep.subr.mxu0 0.0
    %6914 = vmatpush1.msra.mxu0 %v6779
    %6915 = vmatprep.subr.mxu0 0.0
    %6916 = vmatpush1.msra.mxu0 %v6780
    %6917 = vmatprep.subr.mxu0 0.0
    %6918 = vmatpush1.msra.mxu0 %v6781
    %6919 = vmatprep.subr.mxu0 0.0
    %6920 = vmatpush1.msra.mxu0 %v6782
    %6921 = vmatprep.subr.mxu0 0.0
    %6922 = vmatpush1.msra.mxu0 %v6783
    %6923 = vmatprep.subr.mxu0 0.0
    %6924 = vmatpush1.msra.mxu0 0.0
    %6925 = vmatprep.subr.mxu0 0.0
    %6926 = vmatpush1.msra.mxu0 0.0
    %6927 = vmatprep.subr.mxu0 0.0
    %6928 = vmatpush1.msra.mxu0 0.0
    %6929 = vmatprep.subr.mxu0 0.0
    %6930 = vmatpush1.msra.mxu0 0.0
    %6931 = vmatprep.subr.mxu0 0.0
    %6932 = vmatpush1.msra.mxu0 0.0
    %6933 = vmatprep.subr.mxu0 0.0
    %6934 = vmatpush1.msra.mxu0 0.0
    %6935 = vmatprep.subr.mxu0 0.0
    %6936 = vmatpush1.msra.mxu0 0.0
    %6937 = vmatprep.subr.mxu0 0.0
    %6938 = vmatpush1.msra.mxu0 0.0
    %6939 = vmatprep.mubr.f32.mxu0 %v6867
    %6940 = vmatmul.mubr.f32.gmra.mrb[0].mxu0 %v6807
    %v6941 = vpop.f32.mrb[0].mxu0
    %v6942 = vadd.f32 %v6789, %v6941
    %v6943 = vpop.f32.mrb[0].mxu0
    %6944 = vmatprep.mubr.f32.mxu0 %v6869
    %6945 = vmatmul.mubr.f32.gmra.mrb[0].mxu0 %v6825
    %v6946 = vpop.f32.mrb[0].mxu0
    %v6947 = vadd.f32 %v6789, %v6946
    %v6948 = vpop.f32.mrb[0].mxu0
    %6949 = vmatprep.mubr.f32.mxu0 %v6871
    %6950 = vmatmul.mubr.f32.gmra.mrb[0].mxu0 %v6843
    %v6951 = vpop.f32.mrb[0].mxu0
    %v6952 = vadd.f32 %v6789, %v6951
    %v6953 = vpop.f32.mrb[0].mxu0
    %6954 = vmatprep.mubr.f32.mxu0 %v6873
    %6955 = vmatmul.mubr.f32.gmra.mrb[0].mxu0 %v6861
    %v6956 = vpop.f32.mrb[0].mxu0
    %v6957 = vadd.f32 %v6789, %v6956
    %v6958 = vpop.f32.mrb[0].mxu0
    %6959 = vdwg.mxu0
    %v6964 = vcombine.high %v6942, %v6942
    %v6966 = vunpack.c.l.s4 1983009808
    %v6967 = vunpack.c.0.s8 %v6966
    %v6968 = vlaneseq
    %v6969 = vshrl.u32 %v6968, 7
    %v6970 = vsub.s32 %v6967, %v6969
    %v6971 = vrot.slane %v6942, %v6970
    %v6973 = vunpack.c.l.s4 1983009808
    %v6974 = vunpack.c.0.s8 %v6973
    %v6975 = vlaneseq
    %v6976 = vshrl.u32 %v6975, 7
    %v6977 = vsub.s32 %v6974, %v6976
    %v6978 = vrot.slane %v6964, %v6977
    %v6979 = vcombine.high %v6971, %v6971
    %v6980 = vcombine.high %v6978, %v6978
    %v6981 = vcombine.high %v6947, %v6947
    %v6983 = vunpack.c.l.s4 1983009808
    %v6984 = vunpack.c.0.s8 %v6983
    %v6985 = vlaneseq
    %v6986 = vshrl.u32 %v6985, 7
    %v6987 = vsub.s32 %v6984, %v6986
    %v6988 = vrot.slane %v6947, %v6987
    %v6990 = vunpack.c.l.s4 1983009808
    %v6991 = vunpack.c.0.s8 %v6990
    %v6992 = vlaneseq
    %v6993 = vshrl.u32 %v6992, 7
    %v6994 = vsub.s32 %v6991, %v6993
    %v6995 = vrot.slane %v6981, %v6994
    %v6996 = vcombine.high %v6988, %v6988
    %v6997 = vcombine.high %v6995, %v6995
    %v6998 = vcombine.high %v6952, %v6952
    %v7000 = vunpack.c.l.s4 1983009808
    %v7001 = vunpack.c.0.s8 %v7000
    %v7002 = vlaneseq
    %v7003 = vshrl.u32 %v7002, 7
    %v7004 = vsub.s32 %v7001, %v7003
    %v7005 = vrot.slane %v6952, %v7004
    %v7007 = vunpack.c.l.s4 1983009808
    %v7008 = vunpack.c.0.s8 %v7007
    %v7009 = vlaneseq
    %v7010 = vshrl.u32 %v7009, 7
    %v7011 = vsub.s32 %v7008, %v7010
    %v7012 = vrot.slane %v6998, %v7011
    %v7013 = vcombine.high %v7005, %v7005
    %v7014 = vcombine.high %v7012, %v7012
    %v7015 = vcombine.high %v6957, %v6957
    %v7017 = vunpack.c.l.s4 1983009808
    %v7018 = vunpack.c.0.s8 %v7017
    %v7019 = vlaneseq
    %v7020 = vshrl.u32 %v7019, 7
    %v7021 = vsub.s32 %v7018, %v7020
    %v7022 = vrot.slane %v6957, %v7021
    %v7024 = vunpack.c.l.s4 1983009808
    %v7025 = vunpack.c.0.s8 %v7024
    %v7026 = vlaneseq
    %v7027 = vshrl.u32 %v7026, 7
    %v7028 = vsub.s32 %v7025, %v7027
    %v7029 = vrot.slane %v7015, %v7028
    %v7030 = vcombine.high %v7022, %v7022
    %v7031 = vcombine.high %v7029, %v7029
    %v7048 = vsel %vm3271, %v6971, 0.0
    %7049 = vadd.xlane.f32.xlu0 %v7048
    %v7050 = vpop.xlane.xlu0 %7049
    %v7051 = vsel %vm3271, %v6979, 0.0
    %7052 = vadd.xlane.f32.xlu0 %v7051
    %v7053 = vpop.xlane.xlu0 %7052
    %v7054 = vsel %vm3271, %v6978, 0.0
    %7055 = vadd.xlane.f32.xlu0 %v7054
    %v7056 = vpop.xlane.xlu0 %7055
    %v7057 = vsel %vm3271, %v6980, 0.0
    %7058 = vadd.xlane.f32.xlu0 %v7057
    %v7059 = vpop.xlane.xlu0 %7058
    %v7060 = vsel %vm3271, %v6988, 0.0
    %7061 = vadd.xlane.f32.xlu0 %v7060
    %v7062 = vpop.xlane.xlu0 %7061
    %v7063 = vsel %vm3271, %v6996, 0.0
    %7064 = vadd.xlane.f32.xlu0 %v7063
    %v7065 = vpop.xlane.xlu0 %7064
    %v7066 = vsel %vm3271, %v6995, 0.0
    %7067 = vadd.xlane.f32.xlu0 %v7066
    %v7068 = vpop.xlane.xlu0 %7067
    %v7069 = vsel %vm3271, %v6997, 0.0
    %7070 = vadd.xlane.f32.xlu0 %v7069
    %v7071 = vpop.xlane.xlu0 %7070
    %v7072 = vsel %vm3271, %v7005, 0.0
    %7073 = vadd.xlane.f32.xlu0 %v7072
    %v7074 = vpop.xlane.xlu0 %7073
    %v7075 = vsel %vm3271, %v7013, 0.0
    %7076 = vadd.xlane.f32.xlu0 %v7075
    %v7077 = vpop.xlane.xlu0 %7076
    %v7078 = vsel %vm3271, %v7012, 0.0
    %7079 = vadd.xlane.f32.xlu0 %v7078
    %v7080 = vpop.xlane.xlu0 %7079
    %v7081 = vsel %vm3271, %v7014, 0.0
    %7082 = vadd.xlane.f32.xlu0 %v7081
    %v7083 = vpop.xlane.xlu0 %7082
    %v7084 = vsel %vm3271, %v7022, 0.0
    %7085 = vadd.xlane.f32.xlu0 %v7084
    %v7086 = vpop.xlane.xlu0 %7085
    %v7087 = vsel %vm3271, %v7030, 0.0
    %7088 = vadd.xlane.f32.xlu0 %v7087
    %v7089 = vpop.xlane.xlu0 %7088
    %v7090 = vsel %vm3271, %v7029, 0.0
    %7091 = vadd.xlane.f32.xlu0 %v7090
    %v7092 = vpop.xlane.xlu0 %7091
    %v7093 = vsel %vm3271, %v7031, 0.0
    %7094 = vadd.xlane.f32.xlu0 %v7093
    %v7095 = vpop.xlane.xlu0 %7094
    %v7096 = vrcp.pop 64.0
    %v7097 = vmul.f32 %v7050, %v7096
    %v7098 = vmul.f32 %v7053, %v7096
    %v7099 = vmul.f32 %v7056, %v7096
    %v7100 = vmul.f32 %v7059, %v7096
    %v7101 = vmul.f32 %v7062, %v7096
    %v7102 = vmul.f32 %v7065, %v7096
    %v7103 = vmul.f32 %v7068, %v7096
    %v7104 = vmul.f32 %v7071, %v7096
    %v7105 = vmul.f32 %v7074, %v7096
    %v7106 = vmul.f32 %v7077, %v7096
    %v7107 = vmul.f32 %v7080, %v7096
    %v7108 = vmul.f32 %v7083, %v7096
    %v7109 = vmul.f32 %v7086, %v7096
    %v7110 = vmul.f32 %v7089, %v7096
    %v7111 = vmul.f32 %v7092, %v7096
    %v7112 = vmul.f32 %v7095, %v7096
    %v7113 = vsub.f32 %v6971, %v7097
    %v7114 = vsub.f32 %v6979, %v7098
    %v7115 = vsub.f32 %v6978, %v7099
    %v7116 = vsub.f32 %v6980, %v7100
    %v7117 = vsub.f32 %v6988, %v7101
    %v7118 = vsub.f32 %v6996, %v7102
    %v7119 = vsub.f32 %v6995, %v7103
    %v7120 = vsub.f32 %v6997, %v7104
    %v7121 = vsub.f32 %v7005, %v7105
    %v7122 = vsub.f32 %v7013, %v7106
    %v7123 = vsub.f32 %v7012, %v7107
    %v7124 = vsub.f32 %v7014, %v7108
    %v7125 = vsub.f32 %v7022, %v7109
    %v7126 = vsub.f32 %v7030, %v7110
    %v7127 = vsub.f32 %v7029, %v7111
    %v7128 = vsub.f32 %v7031, %v7112
    %v7129 = vmul.f32 %v7113, %v7113
    %v7130 = vmul.f32 %v7114, %v7114
    %v7131 = vmul.f32 %v7115, %v7115
    %v7132 = vmul.f32 %v7116, %v7116
    %v7133 = vmul.f32 %v7117, %v7117
    %v7134 = vmul.f32 %v7118, %v7118
    %v7135 = vmul.f32 %v7119, %v7119
    %v7136 = vmul.f32 %v7120, %v7120
    %v7137 = vmul.f32 %v7121, %v7121
    %v7138 = vmul.f32 %v7122, %v7122
    %v7139 = vmul.f32 %v7123, %v7123
    %v7140 = vmul.f32 %v7124, %v7124
    %v7141 = vmul.f32 %v7125, %v7125
    %v7142 = vmul.f32 %v7126, %v7126
    %v7143 = vmul.f32 %v7127, %v7127
    %v7144 = vmul.f32 %v7128, %v7128
    %v7145 = vsel %vm3271, %v7129, 0.0
    %7146 = vadd.xlane.f32.xlu0 %v7145
    %v7147 = vpop.xlane.xlu0 %7146
    %v7148 = vsel %vm3271, %v7130, 0.0
    %7149 = vadd.xlane.f32.xlu0 %v7148
    %v7150 = vpop.xlane.xlu0 %7149
    %v7151 = vsel %vm3271, %v7131, 0.0
    %7152 = vadd.xlane.f32.xlu0 %v7151
    %v7153 = vpop.xlane.xlu0 %7152
    %v7154 = vsel %vm3271, %v7132, 0.0
    %7155 = vadd.xlane.f32.xlu0 %v7154
    %v7156 = vpop.xlane.xlu0 %7155
    %v7157 = vsel %vm3271, %v7133, 0.0
    %7158 = vadd.xlane.f32.xlu0 %v7157
    %v7159 = vpop.xlane.xlu0 %7158
    %v7160 = vsel %vm3271, %v7134, 0.0
    %7161 = vadd.xlane.f32.xlu0 %v7160
    %v7162 = vpop.xlane.xlu0 %7161
    %v7163 = vsel %vm3271, %v7135, 0.0
    %7164 = vadd.xlane.f32.xlu0 %v7163
    %v7165 = vpop.xlane.xlu0 %7164
    %v7166 = vsel %vm3271, %v7136, 0.0
    %7167 = vadd.xlane.f32.xlu0 %v7166
    %v7168 = vpop.xlane.xlu0 %7167
    %v7169 = vsel %vm3271, %v7137, 0.0
    %7170 = vadd.xlane.f32.xlu0 %v7169
    %v7171 = vpop.xlane.xlu0 %7170
    %v7172 = vsel %vm3271, %v7138, 0.0
    %7173 = vadd.xlane.f32.xlu0 %v7172
    %v7174 = vpop.xlane.xlu0 %7173
    %v7175 = vsel %vm3271, %v7139, 0.0
    %7176 = vadd.xlane.f32.xlu0 %v7175
    %v7177 = vpop.xlane.xlu0 %7176
    %v7178 = vsel %vm3271, %v7140, 0.0
    %7179 = vadd.xlane.f32.xlu0 %v7178
    %v7180 = vpop.xlane.xlu0 %7179
    %v7181 = vsel %vm3271, %v7141, 0.0
    %7182 = vadd.xlane.f32.xlu0 %v7181
    %v7183 = vpop.xlane.xlu0 %7182
    %v7184 = vsel %vm3271, %v7142, 0.0
    %7185 = vadd.xlane.f32.xlu0 %v7184
    %v7186 = vpop.xlane.xlu0 %7185
    %v7187 = vsel %vm3271, %v7143, 0.0
    %7188 = vadd.xlane.f32.xlu0 %v7187
    %v7189 = vpop.xlane.xlu0 %7188
    %v7190 = vsel %vm3271, %v7144, 0.0
    %7191 = vadd.xlane.f32.xlu0 %v7190
    %v7192 = vpop.xlane.xlu0 %7191
    %v7193 = vmul.f32 %v7147, %v7096
    %v7194 = vmul.f32 %v7150, %v7096
    %v7195 = vmul.f32 %v7153, %v7096
    %v7196 = vmul.f32 %v7156, %v7096
    %v7197 = vmul.f32 %v7159, %v7096
    %v7198 = vmul.f32 %v7162, %v7096
    %v7199 = vmul.f32 %v7165, %v7096
    %v7200 = vmul.f32 %v7168, %v7096
    %v7201 = vmul.f32 %v7171, %v7096
    %v7202 = vmul.f32 %v7174, %v7096
    %v7203 = vmul.f32 %v7177, %v7096
    %v7204 = vmul.f32 %v7180, %v7096
    %v7205 = vmul.f32 %v7183, %v7096
    %v7206 = vmul.f32 %v7186, %v7096
    %v7207 = vmul.f32 %v7189, %v7096
    %v7208 = vmul.f32 %v7192, %v7096
    %v7209 = vadd.f32 %v7193, 1e-05
    %v7210 = vadd.f32 %v7194, 1e-05
    %v7211 = vadd.f32 %v7195, 1e-05
    %v7212 = vadd.f32 %v7196, 1e-05
    %v7213 = vadd.f32 %v7197, 1e-05
    %v7214 = vadd.f32 %v7198, 1e-05
    %v7215 = vadd.f32 %v7199, 1e-05
    %v7216 = vadd.f32 %v7200, 1e-05
    %v7217 = vadd.f32 %v7201, 1e-05
    %v7218 = vadd.f32 %v7202, 1e-05
    %v7219 = vadd.f32 %v7203, 1e-05
    %v7220 = vadd.f32 %v7204, 1e-05
    %v7221 = vadd.f32 %v7205, 1e-05
    %v7222 = vadd.f32 %v7206, 1e-05
    %v7223 = vadd.f32 %v7207, 1e-05
    %v7224 = vadd.f32 %v7208, 1e-05
    %v7225 = vrsqrt.pop %v7209
    %v7226 = vrsqrt.pop %v7210
    %v7227 = vrsqrt.pop %v7211
    %v7228 = vrsqrt.pop %v7212
    %v7229 = vrsqrt.pop %v7213
    %v7230 = vrsqrt.pop %v7214
    %v7231 = vrsqrt.pop %v7215
    %v7232 = vrsqrt.pop %v7216
    %v7233 = vrsqrt.pop %v7217
    %v7234 = vrsqrt.pop %v7218
    %v7235 = vrsqrt.pop %v7219
    %v7236 = vrsqrt.pop %v7220
    %v7237 = vrsqrt.pop %v7221
    %v7238 = vrsqrt.pop %v7222
    %v7239 = vrsqrt.pop %v7223
    %v7240 = vrsqrt.pop %v7224
    %v7241 = vmul.f32 %v7113, %v7225
    %v7242 = vmul.f32 %v7114, %v7226
    %v7243 = vmul.f32 %v7115, %v7227
    %v7244 = vmul.f32 %v7116, %v7228
    %v7245 = vmul.f32 %v7117, %v7229
    %v7246 = vmul.f32 %v7118, %v7230
    %v7247 = vmul.f32 %v7119, %v7231
    %v7248 = vmul.f32 %v7120, %v7232
    %v7249 = vmul.f32 %v7121, %v7233
    %v7250 = vmul.f32 %v7122, %v7234
    %v7251 = vmul.f32 %v7123, %v7235
    %v7252 = vmul.f32 %v7124, %v7236
    %v7253 = vmul.f32 %v7125, %v7237
    %v7254 = vmul.f32 %v7126, %v7238
    %v7255 = vmul.f32 %v7127, %v7239
    %v7256 = vmul.f32 %v7128, %v7240
    %v7257 = vld [vmem:[%s21] sm:$0x1]
    %v7259 = vlaneseq
    %v7260 = vshrl.u32 %v7259, 7
    %v7261 = vsub.s32 0, %v7260
    %v7262 = vrot.slane %v7257, %v7261
    %v7264 = vmul.f32 %v7241, %v7262
    %v7265 = vmul.f32 %v7242, %v7262
    %v7266 = vmul.f32 %v7243, %v7262
    %v7267 = vmul.f32 %v7244, %v7262
    %v7268 = vmul.f32 %v7245, %v7262
    %v7269 = vmul.f32 %v7246, %v7262
    %v7270 = vmul.f32 %v7247, %v7262
    %v7271 = vmul.f32 %v7248, %v7262
    %v7272 = vmul.f32 %v7249, %v7262
    %v7273 = vmul.f32 %v7250, %v7262
    %v7274 = vmul.f32 %v7251, %v7262
    %v7275 = vmul.f32 %v7252, %v7262
    %v7276 = vmul.f32 %v7253, %v7262
    %v7277 = vmul.f32 %v7254, %v7262
    %v7278 = vmul.f32 %v7255, %v7262
    %v7279 = vmul.f32 %v7256, %v7262
    %v7280 = vld [vmem:[%s22] sm:$0x1]
    %v7282 = vlaneseq
    %v7283 = vshrl.u32 %v7282, 7
    %v7284 = vsub.s32 0, %v7283
    %v7285 = vrot.slane %v7280, %v7284
    %v7287 = vadd.f32 %v7264, %v7285
    %v7288 = vadd.f32 %v7265, %v7285
    %v7289 = vadd.f32 %v7266, %v7285
    %v7290 = vadd.f32 %v7267, %v7285
    %v7291 = vadd.f32 %v7268, %v7285
    %v7292 = vadd.f32 %v7269, %v7285
    %v7293 = vadd.f32 %v7270, %v7285
    %v7294 = vadd.f32 %v7271, %v7285
    %v7295 = vadd.f32 %v7272, %v7285
    %v7296 = vadd.f32 %v7273, %v7285
    %v7297 = vadd.f32 %v7274, %v7285
    %v7298 = vadd.f32 %v7275, %v7285
    %v7299 = vadd.f32 %v7276, %v7285
    %v7300 = vadd.f32 %v7277, %v7285
    %v7301 = vadd.f32 %v7278, %v7285
    %v7302 = vadd.f32 %v7279, %v7285
    %v7303 = vsel %vm3271, %v7287, 0.0
    %v7304 = vsel %vm3271, %v7288, 0.0
    %v7305 = vadd.f32 %v7303, %v7304
    %v7306 = vsel %vm3271, %v7289, 0.0
    %v7307 = vadd.f32 %v7305, %v7306
    %v7308 = vsel %vm3271, %v7290, 0.0
    %v7309 = vadd.f32 %v7307, %v7308
    %v7310 = vsel %vm3271, %v7291, 0.0
    %v7311 = vadd.f32 %v7309, %v7310
    %v7312 = vsel %vm3271, %v7292, 0.0
    %v7313 = vadd.f32 %v7311, %v7312
    %v7314 = vsel %vm3271, %v7293, 0.0
    %v7315 = vadd.f32 %v7313, %v7314
    %v7316 = vsel %vm3271, %v7294, 0.0
    %v7317 = vadd.f32 %v7315, %v7316
    %v7318 = vsel %vm3271, %v7295, 0.0
    %v7319 = vadd.f32 %v7317, %v7318
    %v7320 = vsel %vm3271, %v7296, 0.0
    %v7321 = vadd.f32 %v7319, %v7320
    %v7322 = vsel %vm3271, %v7297, 0.0
    %v7323 = vadd.f32 %v7321, %v7322
    %v7324 = vsel %vm3271, %v7298, 0.0
    %v7325 = vadd.f32 %v7323, %v7324
    %v7326 = vsel %vm3271, %v7299, 0.0
    %v7327 = vadd.f32 %v7325, %v7326
    %v7328 = vsel %vm3271, %v7300, 0.0
    %v7329 = vadd.f32 %v7327, %v7328
    %v7330 = vsel %vm3271, %v7301, 0.0
    %v7331 = vadd.f32 %v7329, %v7330
    %v7332 = vsel %vm3271, %v7302, 0.0
    %v7333 = vadd.f32 %v7331, %v7332
    %v7334 = vmul.f32 %v7333, %v3303
    %v7335 = vld [vmem:[%s23] sm:$0xff]
    %v7336 = vld [vmem:[%s23 + $0x8] sm:$0xff]
    %v7337 = vld [vmem:[%s23 + $0x10] sm:$0xff]
    %v7338 = vld [vmem:[%s23 + $0x18] sm:$0xff]
    %v7339 = vld [vmem:[%s23 + $0x20] sm:$0xff]
    %v7340 = vld [vmem:[%s23 + $0x28] sm:$0xff]
    %v7341 = vld [vmem:[%s23 + $0x30] sm:$0xff]
    %v7342 = vld [vmem:[%s23 + $0x38] sm:$0xff]
    %v7343 = vld [vmem:[%s24] sm:$0x1]
    %v7345 = vlaneseq
    %v7346 = vshrl.u32 %v7345, 7
    %v7347 = vsub.s32 0, %v7346
    %v7348 = vrot.slane %v7343, %v7347
    %v7351 = vsel %vm957, %v7334, 0
    %7353 = vmatprep.subr.mxu0 0.0
    %7354 = vmatpush1.msra.mxu0 %v7335
    %7355 = vmatprep.subr.mxu0 0.0
    %7356 = vmatpush1.msra.mxu0 %v7336
    %7357 = vmatprep.subr.mxu0 0.0
    %7358 = vmatpush1.msra.mxu0 %v7337
    %7359 = vmatprep.subr.mxu0 0.0
    %7360 = vmatpush1.msra.mxu0 %v7338
    %7361 = vmatprep.subr.mxu0 0.0
    %7362 = vmatpush1.msra.mxu0 %v7339
    %7363 = vmatprep.subr.mxu0 0.0
    %7364 = vmatpush1.msra.mxu0 %v7340
    %7365 = vmatprep.subr.mxu0 0.0
    %7366 = vmatpush1.msra.mxu0 %v7341
    %7367 = vmatprep.subr.mxu0 0.0
    %7368 = vmatpush1.msra.mxu0 %v7342
    %7369 = vmatprep.subr.mxu0 0.0
    %7370 = vmatpush1.msra.mxu0 0.0
    %7371 = vmatprep.subr.mxu0 0.0
    %7372 = vmatpush1.msra.mxu0 0.0
    %7373 = vmatprep.subr.mxu0 0.0
    %7374 = vmatpush1.msra.mxu0 0.0
    %7375 = vmatprep.subr.mxu0 0.0
    %7376 = vmatpush1.msra.mxu0 0.0
    %7377 = vmatprep.subr.mxu0 0.0
    %7378 = vmatpush1.msra.mxu0 0.0
    %7379 = vmatprep.subr.mxu0 0.0
    %7380 = vmatpush1.msra.mxu0 0.0
    %7381 = vmatprep.subr.mxu0 0.0
    %7382 = vmatpush1.msra.mxu0 0.0
    %7383 = vmatprep.subr.mxu0 0.0
    %7384 = vmatpush1.msra.mxu0 0.0
    %7385 = vmatprep.subr.mxu0 0.0
    %7386 = vmatpush1.msra.mxu0 0.0
    %7387 = vmatprep.subr.mxu0 0.0
    %7388 = vmatpush1.msra.mxu0 0.0
    %7389 = vmatprep.subr.mxu0 0.0
    %7390 = vmatpush1.msra.mxu0 0.0
    %7391 = vmatprep.subr.mxu0 0.0
    %7392 = vmatpush1.msra.mxu0 0.0
    %7393 = vmatprep.subr.mxu0 0.0
    %7394 = vmatpush1.msra.mxu0 0.0
    %7395 = vmatprep.subr.mxu0 0.0
    %7396 = vmatpush1.msra.mxu0 0.0
    %7397 = vmatprep.subr.mxu0 0.0
    %7398 = vmatpush1.msra.mxu0 0.0
    %7399 = vmatprep.subr.mxu0 0.0
    %7400 = vmatpush1.msra.mxu0 0.0
    %7401 = vmatprep.subr.mxu0 0.0
    %7402 = vmatpush1.msra.mxu0 0.0
    %7403 = vmatprep.subr.mxu0 0.0
    %7404 = vmatpush1.msra.mxu0 0.0
    %7405 = vmatprep.subr.mxu0 0.0
    %7406 = vmatpush1.msra.mxu0 0.0
    %7407 = vmatprep.subr.mxu0 0.0
    %7408 = vmatpush1.msra.mxu0 0.0
    %7409 = vmatprep.subr.mxu0 0.0
    %7410 = vmatpush1.msra.mxu0 0.0
    %7411 = vmatprep.subr.mxu0 0.0
    %7412 = vmatpush1.msra.mxu0 0.0
    %7413 = vmatprep.subr.mxu0 0.0
    %7414 = vmatpush1.msra.mxu0 0.0
    %7415 = vmatprep.subr.mxu0 0.0
    %7416 = vmatpush1.msra.mxu0 0.0
    %7417 = vmatprep.mubr.f32.mxu0 0.0
    %7418 = vmatmul.mubr.f32.gmra.mrb[0].mxu0 %v7351
    %v7419 = vpop.f32.mrb[0].mxu0
    %v7420 = vadd.f32 %v7348, %v7419
    %v7421 = vpop.f32.mrb[0].mxu0
    %7422 = vdwg.mxu0
    %vm7423 = vcmask 9216
    %7424 = vst.msk [vmem:[#allocation15] sm:$0x3] %vm7423, %v7420
    // Predicated region
    $region122: #{lstm_separator_forward.1} parent=1 // pred_check
      _
    $region123: #{lstm_separator_forward.1} parent=1 // pred_check_branch
      %7426 = sbr.rel (0) target = $region125
    $region124: #{lstm_separator_forward.1} parent=1 // pred_region
      %s7428 = ssub.s32 32, 32
      %7429 = vsyncadd [#allocation8], %s7428
      %s7431 = sshll.u32 [#allocation15], 4
      %s7432 = int_to_ptr.vmem [resolvable:$true] %s7431
      %7434 = dma.vmem_to_hbm [thread:$0]  %s7432, 32, %s25, [#allocation8]
    $region125: #{lstm_separator_forward.1} parent=1 // pred_fallthru
      _
    // Predicated region
    $region126: #{lstm_separator_forward.1} parent=1 // pred_check
      _
    $region127: #{lstm_separator_forward.1} parent=1 // pred_check_branch
      %7436 = sbr.rel (0) target = $region129
    $region128: #{lstm_separator_forward.1} parent=1 // pred_region
      %7437 = dma.done [#allocation8], 32
    $region129: #{lstm_separator_forward.1} parent=1 // pred_fallthru
      _
    %7438 = vsyncpa [#allocation7], 1
    %7439 = vsyncpa [#allocation10], 1
    %7440 = vsyncpa [#allocation13], 1
    %7441 = vsyncpa [#allocation8], 1

</llo_original>
